<compile_context>
chip_gen: v5e
topology: v5e:2x2
jax: 0.10.0
libtpu: 0.0.40
codegen_flags: <defaults>
</compile_context>

<pallas_src>
import functools
import math

import jax
import jax.numpy as jnp
import numpy as np
from jax.experimental import pallas as pl

# -------------------- small synthetic config --------------------
PATCH = 4
IN_CHANS = 3
EMBED_DIM = 32
DEPTH = 2
NUM_HEADS = 4
MLP_RATIO = 4.0
TEMPLATE_SIZE = 16          # -> 4x4 = 16 template patches
SEARCH_SIZE = 32            # -> 8x8 = 64 search patches
LN_EPS = 1e-5               # nn.LayerNorm default eps
HEAD_DIM = EMBED_DIM // NUM_HEADS
MLP_HIDDEN = int(EMBED_DIM * MLP_RATIO)
K_PATCH = IN_CHANS * PATCH * PATCH
T_TOK = (TEMPLATE_SIZE // PATCH) ** 2
S_TOK = (SEARCH_SIZE // PATCH) ** 2
N_TOTAL = 2 * T_TOK + S_TOK  # template + online_template + search tokens (memory is empty)


# -------------------- fixed 2d sin-cos positional embedding --------------------
def _get_1d_sincos(embed_dim, pos):
    omega = np.arange(embed_dim // 2, dtype=np.float32)
    omega /= embed_dim / 2.0
    omega = 1.0 / 10000 ** omega
    pos = pos.reshape(-1)
    out = np.einsum("m,d->md", pos, omega)
    return np.concatenate([np.sin(out), np.cos(out)], axis=1)


def get_2d_sincos_pos_embed(embed_dim, grid_size, cls_token=False):
    grid_h = np.arange(grid_size, dtype=np.float32)
    grid_w = np.arange(grid_size, dtype=np.float32)
    grid = np.meshgrid(grid_w, grid_h)          # w first (matches reference impl)
    grid = np.stack(grid, axis=0).reshape([2, 1, grid_size, grid_size])
    emb_h = _get_1d_sincos(embed_dim // 2, grid[0])
    emb_w = _get_1d_sincos(embed_dim // 2, grid[1])
    pos = np.concatenate([emb_h, emb_w], axis=1)
    if cls_token:
        pos = np.concatenate([np.zeros([1, embed_dim], dtype=np.float32), pos], axis=0)
    return pos.astype(np.float32)


# -------------------- the single fused Pallas kernel --------------------
def _vit_fused_kernel(batch,
                      patches_ref, posb_ref, pew_ref,
                      ln1w_ref, ln1b_ref, wqkv_ref, bqkv_ref,
                      wproj_ref, bproj_ref, ln2w_ref, ln2b_ref,
                      w1_ref, b1_ref, w2_ref, b2_ref,
                      lnfw_ref, lnfb_ref,
                      o_ref):
    bf16 = jnp.bfloat16
    f32 = jnp.float32
    D = EMBED_DIM
    HD = HEAD_DIM
    N = N_TOTAL
    gelu_c = math.sqrt(2.0 / math.pi)

    def layernorm(v, w, b):
        # single-pass variance (E[x^2] - mu^2): halves the cross-lane XLU reductions
        mu = jnp.mean(v, axis=-1, keepdims=True)
        var = jnp.mean(v * v, axis=-1, keepdims=True) - mu * mu
        return (v - mu) * jax.lax.rsqrt(var + LN_EPS) * w + b

    # ---- patch-embed matmul; conv bias + positional embedding pre-fused into posb ----
    o_ref[...] = jnp.dot(patches_ref[...].astype(bf16), pew_ref[...],
                         preferred_element_type=f32) + posb_ref[...]

    for l in range(DEPTH):                # static unroll over transformer blocks
        # ---- attention branch: x = x + Proj(MHSA(LN1(x))) ----
        xn = layernorm(o_ref[...], ln1w_ref[l], ln1b_ref[l]).astype(bf16)
        # fused QKV: one lane-dense matmul; 1/sqrt(head_dim) is folded into the Q
        # columns of wqkv (and bqkv) at init time.
        qkv = (jnp.dot(xn, wqkv_ref[l], preferred_element_type=f32)
               + bqkv_ref[l]).astype(bf16)                      # (B*N, 3D)

        attn_rows = []
        for b in range(batch):            # attention is per batch element
            qkv_b = qkv[b * N:(b + 1) * N]                      # (N, 3D) sublane slice
            heads = []
            for h in range(NUM_HEADS):
                c = h * HD
                qh = qkv_b[:, c:c + HD]
                kh = qkv_b[:, D + c:D + c + HD]
                vh = qkv_b[:, 2 * D + c:2 * D + c + HD]
                s = jax.lax.dot_general(qh, kh, (((1,), (1,)), ((), ())),
                                        preferred_element_type=f32)     # (N, N)
                s = s - jnp.max(s, axis=-1, keepdims=True)
                p = jnp.exp(s)
                p = p * pl.reciprocal(jnp.sum(p, axis=-1, keepdims=True), approx=True)
                heads.append(jnp.dot(p.astype(bf16), vh,
                                     preferred_element_type=f32).astype(bf16))
            attn_rows.append(jnp.concatenate(heads, axis=-1))   # (N, D) lane concat
        attn = jnp.concatenate(attn_rows, axis=0)               # (B*N, D) bf16

        o_ref[...] = (o_ref[...]
                      + jnp.dot(attn, wproj_ref[l], preferred_element_type=f32)
                      + bproj_ref[l])

        # ---- MLP branch: x = x + FC2(GELU(FC1(LN2(x)))) ----
        xn2 = layernorm(o_ref[...], ln2w_ref[l], ln2b_ref[l]).astype(bf16)
        h1 = jnp.dot(xn2, w1_ref[l], preferred_element_type=f32) + b1_ref[l]
        # tanh-approximate GELU (EUP) instead of exact erf (VPU polynomial)
        h1 = 0.5 * h1 * (1.0 + jnp.tanh(gelu_c * (h1 + 0.044715 * h1 * h1 * h1)))
        o_ref[...] = (o_ref[...]
                      + jnp.dot(h1.astype(bf16), w2_ref[l], preferred_element_type=f32)
                      + b2_ref[l])

    # ---- final LayerNorm ----
    o_ref[...] = layernorm(o_ref[...], lnfw_ref[...], lnfb_ref[...])


def vit_fused(patches_flat, posb_full, params, batch):
    """Single grid-less pallas_call: whole arrays resident in VMEM (total < 0.5 MiB)."""
    M = patches_flat.shape[0]
    kernel = functools.partial(_vit_fused_kernel, batch)
    return pl.pallas_call(
        kernel,
        out_shape=jax.ShapeDtypeStruct((M, EMBED_DIM), jnp.float32),
    )(patches_flat, posb_full, params["pew"],
      params["ln1w"], params["ln1b"], params["wqkv"], params["bqkv"],
      params["wproj"], params["bproj"], params["ln2w"], params["ln2b"],
      params["w1"], params["b1"], params["w2"], params["b2"],
      params["lnfw"], params["lnfb"])


# -------------------- glue: im2col (stride==kernel conv as matmul rows) --------------------
def _im2col(x):
    B, C, H, W = x.shape
    gh, gw = H // PATCH, W // PATCH
    p = x.reshape(B, C, gh, PATCH, gw, PATCH)
    return p.transpose(0, 2, 4, 1, 3, 5).reshape(B, gh * gw, C * PATCH * PATCH)


# -------------------- deterministic parameter init (matches torch init scheme) --------------------
def _xavier_uniform(key, shape, fan_in, fan_out):
    bound = math.sqrt(6.0 / (fan_in + fan_out))
    return jax.random.uniform(key, shape, jnp.float32, -bound, bound)


def init_params(key):
    D, K = EMBED_DIM, K_PATCH
    scale = 1.0 / math.sqrt(HEAD_DIM)
    keys = jax.random.split(key, 1 + DEPTH * 4)

    # patch-embed conv weight, xavier on its (D, C*p*p) view; bias = 0
    pe_w = _xavier_uniform(keys[0], (D, K), K, D)
    pew = pe_w.T.astype(jnp.bfloat16)                # (K, D): kernel does patches @ pew
    pe_b = jnp.zeros((D,), jnp.float32)

    template_pos = jnp.asarray(
        get_2d_sincos_pos_embed(D, TEMPLATE_SIZE // PATCH, cls_token=True))   # (T_TOK+1, D)
    search_pos = jnp.asarray(
        get_2d_sincos_pos_embed(D, SEARCH_SIZE // PATCH, cls_token=False))    # (S_TOK, D)

    wqkv_l, wproj_l, w1_l, w2_l = [], [], [], []
    ki = 1
    for _ in range(DEPTH):
        wqkv = _xavier_uniform(keys[ki], (3 * D, D), D, 3 * D); ki += 1
        wproj = _xavier_uniform(keys[ki], (D, D), D, D); ki += 1
        w1 = _xavier_uniform(keys[ki], (MLP_HIDDEN, D), D, MLP_HIDDEN); ki += 1
        w2 = _xavier_uniform(keys[ki], (D, MLP_HIDDEN), MLP_HIDDEN, D); ki += 1

        wqkv_t = wqkv.T                              # (D, 3D): columns = [Q | K | V]
        wqkv_t = wqkv_t.at[:, :D].multiply(scale)    # fold 1/sqrt(head_dim) into Q columns
        wqkv_l.append(wqkv_t.astype(jnp.bfloat16))
        wproj_l.append(wproj.T.astype(jnp.bfloat16))
        w1_l.append(w1.T.astype(jnp.bfloat16))
        w2_l.append(w2.T.astype(jnp.bfloat16))

    f32 = jnp.float32
    return {
        "pew": pew, "pe_b": pe_b,
        "template_pos_embed": template_pos, "search_pos_embed": search_pos,
        "ln1w": jnp.ones((DEPTH, 1, D), f32), "ln1b": jnp.zeros((DEPTH, 1, D), f32),
        # qkv bias is zero per torch _init_weights; kept as one fused (1,3D) add per layer
        # (its Q part must carry the folded scale if a real checkpoint is ever loaded).
        "wqkv": jnp.stack(wqkv_l), "bqkv": jnp.zeros((DEPTH, 1, 3 * D), f32),
        "wproj": jnp.stack(wproj_l), "bproj": jnp.zeros((DEPTH, 1, D), f32),
        "ln2w": jnp.ones((DEPTH, 1, D), f32), "ln2b": jnp.zeros((DEPTH, 1, D), f32),
        "w1": jnp.stack(w1_l), "b1": jnp.zeros((DEPTH, 1, MLP_HIDDEN), f32),
        "w2": jnp.stack(w2_l), "b2": jnp.zeros((DEPTH, 1, D), f32),
        "lnfw": jnp.ones((1, D), f32), "lnfb": jnp.zeros((1, D), f32),
    }


# -------------------- forward pass (use_cls_token=False, memory=None) --------------------
@jax.jit
def vit_forward(params, template, online_template, search):
    t_B = template.shape[0]
    t_H, t_W = template.shape[2] // PATCH, template.shape[3] // PATCH
    s_H, s_W = search.shape[2] // PATCH, search.shape[3] // PATCH
    B = t_B

    # one im2col matrix for all three streams; batch folded into the row (M) dimension
    patches = jnp.concatenate(
        [_im2col(template), _im2col(online_template), _im2col(search)], axis=1)   # (B, 96, 48)
    patches_flat = patches.reshape(B * N_TOTAL, K_PATCH)

    # positional embedding + conv bias pre-fused into one additive term, tiled over batch
    posb = jnp.concatenate(
        [params["template_pos_embed"][1:],
         params["template_pos_embed"][1:],
         params["search_pos_embed"]], axis=0) + params["pe_b"][None, :]
    posb_full = jnp.tile(posb, (B, 1))                                            # (B*96, 32)

    # memory is None -> zero-length memory tokens (online_size = 1), pos_drop is identity
    x = vit_fused(patches_flat, posb_full, params, B).reshape(B, N_TOTAL, EMBED_DIM)

    tN, sN = t_H * t_W, s_H * s_W
    memory_o = x[:, :0]                       # empty memory split
    template_o = x[:, :tN]
    online_o = x[:, tN:2 * tN]
    search_o = x[:, 2 * tN:2 * tN + sN]

    # TODO(synk): reference does memory0.detach() which errors when memory is None;
    # we report m0=None instead of faking a tensor.
    m_dict = {
        "m0": None,
        "x": search_o,
        "z": jnp.concatenate([template_o, online_o], axis=-2),
        "m": memory_o,
    }

    template_img = template_o.reshape(t_B, t_H, t_W, EMBED_DIM).transpose(0, 3, 1, 2)
    online_img = online_o.reshape(t_B, t_H, t_W, EMBED_DIM).transpose(0, 3, 1, 2)
    search_img = search_o.reshape(t_B, s_H, s_W, EMBED_DIM).transpose(0, 3, 1, 2)
    return template_img, online_img, search_img, m_dict, None


# -------------------- main --------------------
if __name__ == "__main__":
    root_key = jax.random.PRNGKey(0)
    pkey, k1, k2, k3 = jax.random.split(root_key, 4)
    params = init_params(pkey)

    B = 2
    template = jax.random.normal(k1, (B, IN_CHANS, TEMPLATE_SIZE, TEMPLATE_SIZE), jnp.float32)
    online_template = jax.random.normal(k2, (B, IN_CHANS, TEMPLATE_SIZE, TEMPLATE_SIZE), jnp.float32)
    search = jax.random.normal(k3, (B, IN_CHANS, SEARCH_SIZE, SEARCH_SIZE), jnp.float32)

    t_img, o_img, s_img, m_dict, cls_tok = vit_forward(params, template, online_template, search)
    jax.block_until_ready((t_img, o_img, s_img, m_dict["x"], m_dict["z"]))

    assert t_img.shape == (B, EMBED_DIM, TEMPLATE_SIZE // PATCH, TEMPLATE_SIZE // PATCH)
    assert o_img.shape == (B, EMBED_DIM, TEMPLATE_SIZE // PATCH, TEMPLATE_SIZE // PATCH)
    assert s_img.shape == (B, EMBED_DIM, SEARCH_SIZE // PATCH, SEARCH_SIZE // PATCH)
    assert m_dict["z"].shape == (B, 2 * (TEMPLATE_SIZE // PATCH) ** 2, EMBED_DIM)
    assert m_dict["m"].shape == (B, 0, EMBED_DIM)
    assert cls_tok is None
    assert bool(jnp.all(jnp.isfinite(t_img))) and bool(jnp.all(jnp.isfinite(s_img)))
    assert bool(jnp.all(jnp.isfinite(o_img)))

    print("KERNEL_OK")
</pallas_src>

<mosaic_0001>
module attributes {stable_mosaic.version = 11 : i64} {
  func.func @_vit_fused_kernel(%arg0: memref<192x48xf32, #tpu.memory_space<vmem>>, %arg1: memref<192x32xf32, #tpu.memory_space<vmem>>, %arg2: memref<48x32xbf16, #tpu.memory_space<vmem>>, %arg3: memref<2x1x32xf32, #tpu.memory_space<vmem>>, %arg4: memref<2x1x32xf32, #tpu.memory_space<vmem>>, %arg5: memref<2x32x96xbf16, #tpu.memory_space<vmem>>, %arg6: memref<2x1x96xf32, #tpu.memory_space<vmem>>, %arg7: memref<2x32x32xbf16, #tpu.memory_space<vmem>>, %arg8: memref<2x1x32xf32, #tpu.memory_space<vmem>>, %arg9: memref<2x1x32xf32, #tpu.memory_space<vmem>>, %arg10: memref<2x1x32xf32, #tpu.memory_space<vmem>>, %arg11: memref<2x32x128xbf16, #tpu.memory_space<vmem>>, %arg12: memref<2x1x128xf32, #tpu.memory_space<vmem>>, %arg13: memref<2x128x32xbf16, #tpu.memory_space<vmem>>, %arg14: memref<2x1x32xf32, #tpu.memory_space<vmem>>, %arg15: memref<1x32xf32, #tpu.memory_space<vmem>>, %arg16: memref<1x32xf32, #tpu.memory_space<vmem>>, %arg17: memref<192x32xf32, #tpu.memory_space<vmem>>) attributes {dimension_semantics = [], scalar_prefetch = 0 : i64, scratch_operands = 0 : i64, tpu.core_type = #tpu.core_type<tc>} {
    %c0 = arith.constant 0 : index
    %c0_0 = arith.constant 0 : index
    %0 = vector.load %arg0[%c0, %c0_0] : memref<192x48xf32, #tpu.memory_space<vmem>>, vector<192x48xf32>
    %1 = arith.truncf %0 : vector<192x48xf32> to vector<192x48xbf16>
    %c0_1 = arith.constant 0 : index
    %c0_2 = arith.constant 0 : index
    %2 = vector.load %arg2[%c0_1, %c0_2] : memref<48x32xbf16, #tpu.memory_space<vmem>>, vector<48x32xbf16>
    %cst = arith.constant dense<0.000000e+00> : vector<192x32xf32>
    %3 = tpu.matmul %1, %2, %cst {dimension_numbers = #tpu.dot_dimension_numbers<[1], [0], [0], [1], [0, 0, 1, 1], [], []>} : vector<192x48xbf16>, vector<48x32xbf16>, vector<192x32xf32> -> vector<192x32xf32>
    %c0_3 = arith.constant 0 : index
    %c0_4 = arith.constant 0 : index
    %4 = vector.load %arg1[%c0_3, %c0_4] : memref<192x32xf32, #tpu.memory_space<vmem>>, vector<192x32xf32>
    %5 = arith.addf %3, %4 : vector<192x32xf32>
    %c0_5 = arith.constant 0 : index
    %c0_6 = arith.constant 0 : index
    %6 = vector.load %arg17[%c0_5, %c0_6] : memref<192x32xf32, #tpu.memory_space<vmem>>, vector<192x32xf32>
    tpu.vector_store %arg17[%c0_5, %c0_6], %5 {strides = array<i32>} : memref<192x32xf32, #tpu.memory_space<vmem>>, vector<192x32xf32>,
    %c0_7 = arith.constant 0 : index
    %c0_8 = arith.constant 0 : index
    %7 = vector.load %arg17[%c0_7, %c0_8] : memref<192x32xf32, #tpu.memory_space<vmem>>, vector<192x32xf32>
    %c0_9 = arith.constant 0 : index
    %c0_10 = arith.constant 0 : index
    %c0_11 = arith.constant 0 : index
    %8 = vector.load %arg3[%c0_9, %c0_10, %c0_11] : memref<2x1x32xf32, #tpu.memory_space<vmem>>, vector<1x1x32xf32>
    %9 = vector.shape_cast %8 : vector<1x1x32xf32> to vector<1x32xf32>
    %c0_12 = arith.constant 0 : index
    %c0_13 = arith.constant 0 : index
    %c0_14 = arith.constant 0 : index
    %10 = vector.load %arg4[%c0_12, %c0_13, %c0_14] : memref<2x1x32xf32, #tpu.memory_space<vmem>>, vector<1x1x32xf32>
    %11 = vector.shape_cast %10 : vector<1x1x32xf32> to vector<1x32xf32>
    %cst_15 = arith.constant dense<0.000000e+00> : vector<192xf32>
    %12 = vector.multi_reduction <add>, %7, %cst_15 [1] : vector<192x32xf32> to vector<192xf32>
    %13 = vector.shape_cast %12 : vector<192xf32> to vector<192x1xf32>
    %cst_16 = arith.constant 3.200000e+01 : f32
    %14 = vector.broadcast %cst_16 : f32 to vector<192x1xf32>
    %15 = arith.divf %13, %14 : vector<192x1xf32>
    %16 = arith.mulf %7, %7 : vector<192x32xf32>
    %cst_17 = arith.constant dense<0.000000e+00> : vector<192xf32>
    %17 = vector.multi_reduction <add>, %16, %cst_17 [1] : vector<192x32xf32> to vector<192xf32>
    %18 = vector.shape_cast %17 : vector<192xf32> to vector<192x1xf32>
    %cst_18 = arith.constant 3.200000e+01 : f32
    %19 = vector.broadcast %cst_18 : f32 to vector<192x1xf32>
    %20 = arith.divf %18, %19 : vector<192x1xf32>
    %21 = arith.mulf %15, %15 : vector<192x1xf32>
    %22 = arith.subf %20, %21 : vector<192x1xf32>
    %23 = vector.broadcast %15 : vector<192x1xf32> to vector<192x32xf32>
    %24 = arith.subf %7, %23 : vector<192x32xf32>
    %cst_19 = arith.constant 9.99999974E-6 : f32
    %25 = vector.broadcast %cst_19 : f32 to vector<192x1xf32>
    %26 = arith.addf %22, %25 : vector<192x1xf32>
    %27 = math.rsqrt %26 : vector<192x1xf32>
    %28 = vector.broadcast %27 : vector<192x1xf32> to vector<192x32xf32>
    %29 = arith.mulf %24, %28 : vector<192x32xf32>
    %30 = vector.broadcast %9 : vector<1x32xf32> to vector<192x32xf32>
    %31 = arith.mulf %29, %30 : vector<192x32xf32>
    %32 = vector.broadcast %11 : vector<1x32xf32> to vector<192x32xf32>
    %33 = arith.addf %31, %32 : vector<192x32xf32>
    %34 = arith.truncf %33 : vector<192x32xf32> to vector<192x32xbf16>
    %c0_20 = arith.constant 0 : index
    %c0_21 = arith.constant 0 : index
    %c0_22 = arith.constant 0 : index
    %35 = vector.load %arg5[%c0_20, %c0_21, %c0_22] : memref<2x32x96xbf16, #tpu.memory_space<vmem>>, vector<1x32x96xbf16>
    %36 = vector.shape_cast %35 : vector<1x32x96xbf16> to vector<32x96xbf16>
    %cst_23 = arith.constant dense<0.000000e+00> : vector<192x96xf32>
    %37 = tpu.matmul %34, %36, %cst_23 {dimension_numbers = #tpu.dot_dimension_numbers<[1], [0], [0], [1], [0, 0, 1, 1], [], []>} : vector<192x32xbf16>, vector<32x96xbf16>, vector<192x96xf32> -> vector<192x96xf32>
    %c0_24 = arith.constant 0 : index
    %c0_25 = arith.constant 0 : index
    %c0_26 = arith.constant 0 : index
    %38 = vector.load %arg6[%c0_24, %c0_25, %c0_26] : memref<2x1x96xf32, #tpu.memory_space<vmem>>, vector<1x1x96xf32>
    %39 = vector.shape_cast %38 : vector<1x1x96xf32> to vector<1x96xf32>
    %40 = vector.broadcast %39 : vector<1x96xf32> to vector<192x96xf32>
    %41 = arith.addf %37, %40 : vector<192x96xf32>
    %42 = arith.truncf %41 : vector<192x96xf32> to vector<192x96xbf16>
    %43 = vector.extract_strided_slice %42 {offsets = [0, 0], sizes = [96, 96], strides = [1, 1]} : vector<192x96xbf16> to vector<96x96xbf16>
    %44 = vector.extract_strided_slice %43 {offsets = [0, 0], sizes = [96, 8], strides = [1, 1]} : vector<96x96xbf16> to vector<96x8xbf16>
    %45 = vector.extract_strided_slice %43 {offsets = [0, 32], sizes = [96, 8], strides = [1, 1]} : vector<96x96xbf16> to vector<96x8xbf16>
    %46 = vector.extract_strided_slice %43 {offsets = [0, 64], sizes = [96, 8], strides = [1, 1]} : vector<96x96xbf16> to vector<96x8xbf16>
    %cst_27 = arith.constant dense<0.000000e+00> : vector<96x96xf32>
    %47 = tpu.matmul %44, %45, %cst_27 {dimension_numbers = #tpu.dot_dimension_numbers<[1], [1], [0], [0], [0, 0, 1, 0], [], []>} : vector<96x8xbf16>, vector<96x8xbf16>, vector<96x96xf32> -> vector<96x96xf32>
    %cst_28 = arith.constant dense<0xFF800000> : vector<96xf32>
    %48 = vector.multi_reduction <maximumf>, %47, %cst_28 [1] : vector<96x96xf32> to vector<96xf32>
    %49 = vector.shape_cast %48 : vector<96xf32> to vector<96x1xf32>
    %50 = vector.broadcast %49 : vector<96x1xf32> to vector<96x96xf32>
    %51 = arith.subf %47, %50 : vector<96x96xf32>
    %52 = math.exp %51 : vector<96x96xf32>
    %cst_29 = arith.constant dense<0.000000e+00> : vector<96xf32>
    %53 = vector.multi_reduction <add>, %52, %cst_29 [1] : vector<96x96xf32> to vector<96xf32>
    %54 = vector.shape_cast %53 : vector<96xf32> to vector<96x1xf32>
    %55 = tpu.reciprocal %54 {approx = true} : vector<96x1xf32> -> vector<96x1xf32>
    %56 = vector.broadcast %55 : vector<96x1xf32> to vector<96x96xf32>
    %57 = arith.mulf %52, %56 : vector<96x96xf32>
    %58 = arith.truncf %57 : vector<96x96xf32> to vector<96x96xbf16>
    %cst_30 = arith.constant dense<0.000000e+00> : vector<96x8xf32>
    %59 = tpu.matmul %58, %46, %cst_30 {dimension_numbers = #tpu.dot_dimension_numbers<[1], [0], [0], [1], [0, 0, 1, 1], [], []>} : vector<96x96xbf16>, vector<96x8xbf16>, vector<96x8xf32> -> vector<96x8xf32>
    %60 = arith.truncf %59 : vector<96x8xf32> to vector<96x8xbf16>
    %61 = vector.extract_strided_slice %43 {offsets = [0, 8], sizes = [96, 8], strides = [1, 1]} : vector<96x96xbf16> to vector<96x8xbf16>
    %62 = vector.extract_strided_slice %43 {offsets = [0, 40], sizes = [96, 8], strides = [1, 1]} : vector<96x96xbf16> to vector<96x8xbf16>
    %63 = vector.extract_strided_slice %43 {offsets = [0, 72], sizes = [96, 8], strides = [1, 1]} : vector<96x96xbf16> to vector<96x8xbf16>
    %cst_31 = arith.constant dense<0.000000e+00> : vector<96x96xf32>
    %64 = tpu.matmul %61, %62, %cst_31 {dimension_numbers = #tpu.dot_dimension_numbers<[1], [1], [0], [0], [0, 0, 1, 0], [], []>} : vector<96x8xbf16>, vector<96x8xbf16>, vector<96x96xf32> -> vector<96x96xf32>
    %cst_32 = arith.constant dense<0xFF800000> : vector<96xf32>
    %65 = vector.multi_reduction <maximumf>, %64, %cst_32 [1] : vector<96x96xf32> to vector<96xf32>
    %66 = vector.shape_cast %65 : vector<96xf32> to vector<96x1xf32>
    %67 = vector.broadcast %66 : vector<96x1xf32> to vector<96x96xf32>
    %68 = arith.subf %64, %67 : vector<96x96xf32>
    %69 = math.exp %68 : vector<96x96xf32>
    %cst_33 = arith.constant dense<0.000000e+00> : vector<96xf32>
    %70 = vector.multi_reduction <add>, %69, %cst_33 [1] : vector<96x96xf32> to vector<96xf32>
    %71 = vector.shape_cast %70 : vector<96xf32> to vector<96x1xf32>
    %72 = tpu.reciprocal %71 {approx = true} : vector<96x1xf32> -> vector<96x1xf32>
    %73 = vector.broadcast %72 : vector<96x1xf32> to vector<96x96xf32>
    %74 = arith.mulf %69, %73 : vector<96x96xf32>
    %75 = arith.truncf %74 : vector<96x96xf32> to vector<96x96xbf16>
    %cst_34 = arith.constant dense<0.000000e+00> : vector<96x8xf32>
    %76 = tpu.matmul %75, %63, %cst_34 {dimension_numbers = #tpu.dot_dimension_numbers<[1], [0], [0], [1], [0, 0, 1, 1], [], []>} : vector<96x96xbf16>, vector<96x8xbf16>, vector<96x8xf32> -> vector<96x8xf32>
    %77 = arith.truncf %76 : vector<96x8xf32> to vector<96x8xbf16>
    %78 = vector.extract_strided_slice %43 {offsets = [0, 16], sizes = [96, 8], strides = [1, 1]} : vector<96x96xbf16> to vector<96x8xbf16>
    %79 = vector.extract_strided_slice %43 {offsets = [0, 48], sizes = [96, 8], strides = [1, 1]} : vector<96x96xbf16> to vector<96x8xbf16>
    %80 = vector.extract_strided_slice %43 {offsets = [0, 80], sizes = [96, 8], strides = [1, 1]} : vector<96x96xbf16> to vector<96x8xbf16>
    %cst_35 = arith.constant dense<0.000000e+00> : vector<96x96xf32>
    %81 = tpu.matmul %78, %79, %cst_35 {dimension_numbers = #tpu.dot_dimension_numbers<[1], [1], [0], [0], [0, 0, 1, 0], [], []>} : vector<96x8xbf16>, vector<96x8xbf16>, vector<96x96xf32> -> vector<96x96xf32>
    %cst_36 = arith.constant dense<0xFF800000> : vector<96xf32>
    %82 = vector.multi_reduction <maximumf>, %81, %cst_36 [1] : vector<96x96xf32> to vector<96xf32>
    %83 = vector.shape_cast %82 : vector<96xf32> to vector<96x1xf32>
    %84 = vector.broadcast %83 : vector<96x1xf32> to vector<96x96xf32>
    %85 = arith.subf %81, %84 : vector<96x96xf32>
    %86 = math.exp %85 : vector<96x96xf32>
    %cst_37 = arith.constant dense<0.000000e+00> : vector<96xf32>
    %87 = vector.multi_reduction <add>, %86, %cst_37 [1] : vector<96x96xf32> to vector<96xf32>
    %88 = vector.shape_cast %87 : vector<96xf32> to vector<96x1xf32>
    %89 = tpu.reciprocal %88 {approx = true} : vector<96x1xf32> -> vector<96x1xf32>
    %90 = vector.broadcast %89 : vector<96x1xf32> to vector<96x96xf32>
    %91 = arith.mulf %86, %90 : vector<96x96xf32>
    %92 = arith.truncf %91 : vector<96x96xf32> to vector<96x96xbf16>
    %cst_38 = arith.constant dense<0.000000e+00> : vector<96x8xf32>
    %93 = tpu.matmul %92, %80, %cst_38 {dimension_numbers = #tpu.dot_dimension_numbers<[1], [0], [0], [1], [0, 0, 1, 1], [], []>} : vector<96x96xbf16>, vector<96x8xbf16>, vector<96x8xf32> -> vector<96x8xf32>
    %94 = arith.truncf %93 : vector<96x8xf32> to vector<96x8xbf16>
    %95 = vector.extract_strided_slice %43 {offsets = [0, 24], sizes = [96, 8], strides = [1, 1]} : vector<96x96xbf16> to vector<96x8xbf16>
    %96 = vector.extract_strided_slice %43 {offsets = [0, 56], sizes = [96, 8], strides = [1, 1]} : vector<96x96xbf16> to vector<96x8xbf16>
    %97 = vector.extract_strided_slice %43 {offsets = [0, 88], sizes = [96, 8], strides = [1, 1]} : vector<96x96xbf16> to vector<96x8xbf16>
    %cst_39 = arith.constant dense<0.000000e+00> : vector<96x96xf32>
    %98 = tpu.matmul %95, %96, %cst_39 {dimension_numbers = #tpu.dot_dimension_numbers<[1], [1], [0], [0], [0, 0, 1, 0], [], []>} : vector<96x8xbf16>, vector<96x8xbf16>, vector<96x96xf32> -> vector<96x96xf32>
    %cst_40 = arith.constant dense<0xFF800000> : vector<96xf32>
    %99 = vector.multi_reduction <maximumf>, %98, %cst_40 [1] : vector<96x96xf32> to vector<96xf32>
    %100 = vector.shape_cast %99 : vector<96xf32> to vector<96x1xf32>
    %101 = vector.broadcast %100 : vector<96x1xf32> to vector<96x96xf32>
    %102 = arith.subf %98, %101 : vector<96x96xf32>
    %103 = math.exp %102 : vector<96x96xf32>
    %cst_41 = arith.constant dense<0.000000e+00> : vector<96xf32>
    %104 = vector.multi_reduction <add>, %103, %cst_41 [1] : vector<96x96xf32> to vector<96xf32>
    %105 = vector.shape_cast %104 : vector<96xf32> to vector<96x1xf32>
    %106 = tpu.reciprocal %105 {approx = true} : vector<96x1xf32> -> vector<96x1xf32>
    %107 = vector.broadcast %106 : vector<96x1xf32> to vector<96x96xf32>
    %108 = arith.mulf %103, %107 : vector<96x96xf32>
    %109 = arith.truncf %108 : vector<96x96xf32> to vector<96x96xbf16>
    %cst_42 = arith.constant dense<0.000000e+00> : vector<96x8xf32>
    %110 = tpu.matmul %109, %97, %cst_42 {dimension_numbers = #tpu.dot_dimension_numbers<[1], [0], [0], [1], [0, 0, 1, 1], [], []>} : vector<96x96xbf16>, vector<96x8xbf16>, vector<96x8xf32> -> vector<96x8xf32>
    %111 = arith.truncf %110 : vector<96x8xf32> to vector<96x8xbf16>
    %112 = tpu.concatenate %60, %77, %94, %111 in 1 : vector<96x8xbf16>, vector<96x8xbf16>, vector<96x8xbf16>, vector<96x8xbf16> -> vector<96x32xbf16>
    %113 = vector.extract_strided_slice %42 {offsets = [96, 0], sizes = [96, 96], strides = [1, 1]} : vector<192x96xbf16> to vector<96x96xbf16>
    %114 = vector.extract_strided_slice %113 {offsets = [0, 0], sizes = [96, 8], strides = [1, 1]} : vector<96x96xbf16> to vector<96x8xbf16>
    %115 = vector.extract_strided_slice %113 {offsets = [0, 32], sizes = [96, 8], strides = [1, 1]} : vector<96x96xbf16> to vector<96x8xbf16>
    %116 = vector.extract_strided_slice %113 {offsets = [0, 64], sizes = [96, 8], strides = [1, 1]} : vector<96x96xbf16> to vector<96x8xbf16>
    %cst_43 = arith.constant dense<0.000000e+00> : vector<96x96xf32>
    %117 = tpu.matmul %114, %115, %cst_43 {dimension_numbers = #tpu.dot_dimension_numbers<[1], [1], [0], [0], [0, 0, 1, 0], [], []>} : vector<96x8xbf16>, vector<96x8xbf16>, vector<96x96xf32> -> vector<96x96xf32>
    %cst_44 = arith.constant dense<0xFF800000> : vector<96xf32>
    %118 = vector.multi_reduction <maximumf>, %117, %cst_44 [1] : vector<96x96xf32> to vector<96xf32>
    %119 = vector.shape_cast %118 : vector<96xf32> to vector<96x1xf32>
    %120 = vector.broadcast %119 : vector<96x1xf32> to vector<96x96xf32>
    %121 = arith.subf %117, %120 : vector<96x96xf32>
    %122 = math.exp %121 : vector<96x96xf32>
    %cst_45 = arith.constant dense<0.000000e+00> : vector<96xf32>
    %123 = vector.multi_reduction <add>, %122, %cst_45 [1] : vector<96x96xf32> to vector<96xf32>
    %124 = vector.shape_cast %123 : vector<96xf32> to vector<96x1xf32>
    %125 = tpu.reciprocal %124 {approx = true} : vector<96x1xf32> -> vector<96x1xf32>
    %126 = vector.broadcast %125 : vector<96x1xf32> to vector<96x96xf32>
    %127 = arith.mulf %122, %126 : vector<96x96xf32>
    %128 = arith.truncf %127 : vector<96x96xf32> to vector<96x96xbf16>
    %cst_46 = arith.constant dense<0.000000e+00> : vector<96x8xf32>
    %129 = tpu.matmul %128, %116, %cst_46 {dimension_numbers = #tpu.dot_dimension_numbers<[1], [0], [0], [1], [0, 0, 1, 1], [], []>} : vector<96x96xbf16>, vector<96x8xbf16>, vector<96x8xf32> -> vector<96x8xf32>
    %130 = arith.truncf %129 : vector<96x8xf32> to vector<96x8xbf16>
    %131 = vector.extract_strided_slice %113 {offsets = [0, 8], sizes = [96, 8], strides = [1, 1]} : vector<96x96xbf16> to vector<96x8xbf16>
    %132 = vector.extract_strided_slice %113 {offsets = [0, 40], sizes = [96, 8], strides = [1, 1]} : vector<96x96xbf16> to vector<96x8xbf16>
    %133 = vector.extract_strided_slice %113 {offsets = [0, 72], sizes = [96, 8], strides = [1, 1]} : vector<96x96xbf16> to vector<96x8xbf16>
    %cst_47 = arith.constant dense<0.000000e+00> : vector<96x96xf32>
    %134 = tpu.matmul %131, %132, %cst_47 {dimension_numbers = #tpu.dot_dimension_numbers<[1], [1], [0], [0], [0, 0, 1, 0], [], []>} : vector<96x8xbf16>, vector<96x8xbf16>, vector<96x96xf32> -> vector<96x96xf32>
    %cst_48 = arith.constant dense<0xFF800000> : vector<96xf32>
    %135 = vector.multi_reduction <maximumf>, %134, %cst_48 [1] : vector<96x96xf32> to vector<96xf32>
    %136 = vector.shape_cast %135 : vector<96xf32> to vector<96x1xf32>
    %137 = vector.broadcast %136 : vector<96x1xf32> to vector<96x96xf32>
    %138 = arith.subf %134, %137 : vector<96x96xf32>
    %139 = math.exp %138 : vector<96x96xf32>
    %cst_49 = arith.constant dense<0.000000e+00> : vector<96xf32>
    %140 = vector.multi_reduction <add>, %139, %cst_49 [1] : vector<96x96xf32> to vector<96xf32>
    %141 = vector.shape_cast %140 : vector<96xf32> to vector<96x1xf32>
    %142 = tpu.reciprocal %141 {approx = true} : vector<96x1xf32> -> vector<96x1xf32>
    %143 = vector.broadcast %142 : vector<96x1xf32> to vector<96x96xf32>
    %144 = arith.mulf %139, %143 : vector<96x96xf32>
    %145 = arith.truncf %144 : vector<96x96xf32> to vector<96x96xbf16>
    %cst_50 = arith.constant dense<0.000000e+00> : vector<96x8xf32>
    %146 = tpu.matmul %145, %133, %cst_50 {dimension_numbers = #tpu.dot_dimension_numbers<[1], [0], [0], [1], [0, 0, 1, 1], [], []>} : vector<96x96xbf16>, vector<96x8xbf16>, vector<96x8xf32> -> vector<96x8xf32>
    %147 = arith.truncf %146 : vector<96x8xf32> to vector<96x8xbf16>
    %148 = vector.extract_strided_slice %113 {offsets = [0, 16], sizes = [96, 8], strides = [1, 1]} : vector<96x96xbf16> to vector<96x8xbf16>
    %149 = vector.extract_strided_slice %113 {offsets = [0, 48], sizes = [96, 8], strides = [1, 1]} : vector<96x96xbf16> to vector<96x8xbf16>
    %150 = vector.extract_strided_slice %113 {offsets = [0, 80], sizes = [96, 8], strides = [1, 1]} : vector<96x96xbf16> to vector<96x8xbf16>
    %cst_51 = arith.constant dense<0.000000e+00> : vector<96x96xf32>
    %151 = tpu.matmul %148, %149, %cst_51 {dimension_numbers = #tpu.dot_dimension_numbers<[1], [1], [0], [0], [0, 0, 1, 0], [], []>} : vector<96x8xbf16>, vector<96x8xbf16>, vector<96x96xf32> -> vector<96x96xf32>
    %cst_52 = arith.constant dense<0xFF800000> : vector<96xf32>
    %152 = vector.multi_reduction <maximumf>, %151, %cst_52 [1] : vector<96x96xf32> to vector<96xf32>
    %153 = vector.shape_cast %152 : vector<96xf32> to vector<96x1xf32>
    %154 = vector.broadcast %153 : vector<96x1xf32> to vector<96x96xf32>
    %155 = arith.subf %151, %154 : vector<96x96xf32>
    %156 = math.exp %155 : vector<96x96xf32>
    %cst_53 = arith.constant dense<0.000000e+00> : vector<96xf32>
    %157 = vector.multi_reduction <add>, %156, %cst_53 [1] : vector<96x96xf32> to vector<96xf32>
    %158 = vector.shape_cast %157 : vector<96xf32> to vector<96x1xf32>
    %159 = tpu.reciprocal %158 {approx = true} : vector<96x1xf32> -> vector<96x1xf32>
    %160 = vector.broadcast %159 : vector<96x1xf32> to vector<96x96xf32>
    %161 = arith.mulf %156, %160 : vector<96x96xf32>
    %162 = arith.truncf %161 : vector<96x96xf32> to vector<96x96xbf16>
    %cst_54 = arith.constant dense<0.000000e+00> : vector<96x8xf32>
    %163 = tpu.matmul %162, %150, %cst_54 {dimension_numbers = #tpu.dot_dimension_numbers<[1], [0], [0], [1], [0, 0, 1, 1], [], []>} : vector<96x96xbf16>, vector<96x8xbf16>, vector<96x8xf32> -> vector<96x8xf32>
    %164 = arith.truncf %163 : vector<96x8xf32> to vector<96x8xbf16>
    %165 = vector.extract_strided_slice %113 {offsets = [0, 24], sizes = [96, 8], strides = [1, 1]} : vector<96x96xbf16> to vector<96x8xbf16>
    %166 = vector.extract_strided_slice %113 {offsets = [0, 56], sizes = [96, 8], strides = [1, 1]} : vector<96x96xbf16> to vector<96x8xbf16>
    %167 = vector.extract_strided_slice %113 {offsets = [0, 88], sizes = [96, 8], strides = [1, 1]} : vector<96x96xbf16> to vector<96x8xbf16>
    %cst_55 = arith.constant dense<0.000000e+00> : vector<96x96xf32>
    %168 = tpu.matmul %165, %166, %cst_55 {dimension_numbers = #tpu.dot_dimension_numbers<[1], [1], [0], [0], [0, 0, 1, 0], [], []>} : vector<96x8xbf16>, vector<96x8xbf16>, vector<96x96xf32> -> vector<96x96xf32>
    %cst_56 = arith.constant dense<0xFF800000> : vector<96xf32>
    %169 = vector.multi_reduction <maximumf>, %168, %cst_56 [1] : vector<96x96xf32> to vector<96xf32>
    %170 = vector.shape_cast %169 : vector<96xf32> to vector<96x1xf32>
    %171 = vector.broadcast %170 : vector<96x1xf32> to vector<96x96xf32>
    %172 = arith.subf %168, %171 : vector<96x96xf32>
    %173 = math.exp %172 : vector<96x96xf32>
    %cst_57 = arith.constant dense<0.000000e+00> : vector<96xf32>
    %174 = vector.multi_reduction <add>, %173, %cst_57 [1] : vector<96x96xf32> to vector<96xf32>
    %175 = vector.shape_cast %174 : vector<96xf32> to vector<96x1xf32>
    %176 = tpu.reciprocal %175 {approx = true} : vector<96x1xf32> -> vector<96x1xf32>
    %177 = vector.broadcast %176 : vector<96x1xf32> to vector<96x96xf32>
    %178 = arith.mulf %173, %177 : vector<96x96xf32>
    %179 = arith.truncf %178 : vector<96x96xf32> to vector<96x96xbf16>
    %cst_58 = arith.constant dense<0.000000e+00> : vector<96x8xf32>
    %180 = tpu.matmul %179, %167, %cst_58 {dimension_numbers = #tpu.dot_dimension_numbers<[1], [0], [0], [1], [0, 0, 1, 1], [], []>} : vector<96x96xbf16>, vector<96x8xbf16>, vector<96x8xf32> -> vector<96x8xf32>
    %181 = arith.truncf %180 : vector<96x8xf32> to vector<96x8xbf16>
    %182 = tpu.concatenate %130, %147, %164, %181 in 1 : vector<96x8xbf16>, vector<96x8xbf16>, vector<96x8xbf16>, vector<96x8xbf16> -> vector<96x32xbf16>
    %183 = tpu.concatenate %112, %182 in 0 : vector<96x32xbf16>, vector<96x32xbf16> -> vector<192x32xbf16>
    %c0_59 = arith.constant 0 : index
    %c0_60 = arith.constant 0 : index
    %184 = vector.load %arg17[%c0_59, %c0_60] : memref<192x32xf32, #tpu.memory_space<vmem>>, vector<192x32xf32>
    %c0_61 = arith.constant 0 : index
    %c0_62 = arith.constant 0 : index
    %c0_63 = arith.constant 0 : index
    %185 = vector.load %arg7[%c0_61, %c0_62, %c0_63] : memref<2x32x32xbf16, #tpu.memory_space<vmem>>, vector<1x32x32xbf16>
    %186 = vector.shape_cast %185 : vector<1x32x32xbf16> to vector<32x32xbf16>
    %cst_64 = arith.constant dense<0.000000e+00> : vector<192x32xf32>
    %187 = tpu.matmul %183, %186, %cst_64 {dimension_numbers = #tpu.dot_dimension_numbers<[1], [0], [0], [1], [0, 0, 1, 1], [], []>} : vector<192x32xbf16>, vector<32x32xbf16>, vector<192x32xf32> -> vector<192x32xf32>
    %188 = arith.addf %184, %187 : vector<192x32xf32>
    %c0_65 = arith.constant 0 : index
    %c0_66 = arith.constant 0 : index
    %c0_67 = arith.constant 0 : index
    %189 = vector.load %arg8[%c0_65, %c0_66, %c0_67] : memref<2x1x32xf32, #tpu.memory_space<vmem>>, vector<1x1x32xf32>
    %190 = vector.shape_cast %189 : vector<1x1x32xf32> to vector<1x32xf32>
    %191 = vector.broadcast %190 : vector<1x32xf32> to vector<192x32xf32>
    %192 = arith.addf %188, %191 : vector<192x32xf32>
    %c0_68 = arith.constant 0 : index
    %c0_69 = arith.constant 0 : index
    %193 = vector.load %arg17[%c0_68, %c0_69] : memref<192x32xf32, #tpu.memory_space<vmem>>, vector<192x32xf32>
    tpu.vector_store %arg17[%c0_68, %c0_69], %192 {strides = array<i32>} : memref<192x32xf32, #tpu.memory_space<vmem>>, vector<192x32xf32>,
    %c0_70 = arith.constant 0 : index
    %c0_71 = arith.constant 0 : index
    %194 = vector.load %arg17[%c0_70, %c0_71] : memref<192x32xf32, #tpu.memory_space<vmem>>, vector<192x32xf32>
    %c0_72 = arith.constant 0 : index
    %c0_73 = arith.constant 0 : index
    %c0_74 = arith.constant 0 : index
    %195 = vector.load %arg9[%c0_72, %c0_73, %c0_74] : memref<2x1x32xf32, #tpu.memory_space<vmem>>, vector<1x1x32xf32>
    %196 = vector.shape_cast %195 : vector<1x1x32xf32> to vector<1x32xf32>
    %c0_75 = arith.constant 0 : index
    %c0_76 = arith.constant 0 : index
    %c0_77 = arith.constant 0 : index
    %197 = vector.load %arg10[%c0_75, %c0_76, %c0_77] : memref<2x1x32xf32, #tpu.memory_space<vmem>>, vector<1x1x32xf32>
    %198 = vector.shape_cast %197 : vector<1x1x32xf32> to vector<1x32xf32>
    %cst_78 = arith.constant dense<0.000000e+00> : vector<192xf32>
    %199 = vector.multi_reduction <add>, %194, %cst_78 [1] : vector<192x32xf32> to vector<192xf32>
    %200 = vector.shape_cast %199 : vector<192xf32> to vector<192x1xf32>
    %cst_79 = arith.constant 3.200000e+01 : f32
    %201 = vector.broadcast %cst_79 : f32 to vector<192x1xf32>
    %202 = arith.divf %200, %201 : vector<192x1xf32>
    %203 = arith.mulf %194, %194 : vector<192x32xf32>
    %cst_80 = arith.constant dense<0.000000e+00> : vector<192xf32>
    %204 = vector.multi_reduction <add>, %203, %cst_80 [1] : vector<192x32xf32> to vector<192xf32>
    %205 = vector.shape_cast %204 : vector<192xf32> to vector<192x1xf32>
    %cst_81 = arith.constant 3.200000e+01 : f32
    %206 = vector.broadcast %cst_81 : f32 to vector<192x1xf32>
    %207 = arith.divf %205, %206 : vector<192x1xf32>
    %208 = arith.mulf %202, %202 : vector<192x1xf32>
    %209 = arith.subf %207, %208 : vector<192x1xf32>
    %210 = vector.broadcast %202 : vector<192x1xf32> to vector<192x32xf32>
    %211 = arith.subf %194, %210 : vector<192x32xf32>
    %cst_82 = arith.constant 9.99999974E-6 : f32
    %212 = vector.broadcast %cst_82 : f32 to vector<192x1xf32>
    %213 = arith.addf %209, %212 : vector<192x1xf32>
    %214 = math.rsqrt %213 : vector<192x1xf32>
    %215 = vector.broadcast %214 : vector<192x1xf32> to vector<192x32xf32>
    %216 = arith.mulf %211, %215 : vector<192x32xf32>
    %217 = vector.broadcast %196 : vector<1x32xf32> to vector<192x32xf32>
    %218 = arith.mulf %216, %217 : vector<192x32xf32>
    %219 = vector.broadcast %198 : vector<1x32xf32> to vector<192x32xf32>
    %220 = arith.addf %218, %219 : vector<192x32xf32>
    %221 = arith.truncf %220 : vector<192x32xf32> to vector<192x32xbf16>
    %c0_83 = arith.constant 0 : index
    %c0_84 = arith.constant 0 : index
    %c0_85 = arith.constant 0 : index
    %222 = vector.load %arg11[%c0_83, %c0_84, %c0_85] : memref<2x32x128xbf16, #tpu.memory_space<vmem>>, vector<1x32x128xbf16>
    %223 = vector.shape_cast %222 : vector<1x32x128xbf16> to vector<32x128xbf16>
    %cst_86 = arith.constant dense<0.000000e+00> : vector<192x128xf32>
    %224 = tpu.matmul %221, %223, %cst_86 {dimension_numbers = #tpu.dot_dimension_numbers<[1], [0], [0], [1], [0, 0, 1, 1], [], []>} : vector<192x32xbf16>, vector<32x128xbf16>, vector<192x128xf32> -> vector<192x128xf32>
    %c0_87 = arith.constant 0 : index
    %c0_88 = arith.constant 0 : index
    %c0_89 = arith.constant 0 : index
    %225 = vector.load %arg12[%c0_87, %c0_88, %c0_89] : memref<2x1x128xf32, #tpu.memory_space<vmem>>, vector<1x1x128xf32>
    %226 = vector.shape_cast %225 : vector<1x1x128xf32> to vector<1x128xf32>
    %227 = vector.broadcast %226 : vector<1x128xf32> to vector<192x128xf32>
    %228 = arith.addf %224, %227 : vector<192x128xf32>
    %cst_90 = arith.constant 5.000000e-01 : f32
    %229 = vector.broadcast %cst_90 : f32 to vector<192x128xf32>
    %230 = arith.mulf %229, %228 : vector<192x128xf32>
    %cst_91 = arith.constant 4.471500e-02 : f32
    %231 = vector.broadcast %cst_91 : f32 to vector<192x128xf32>
    %232 = arith.mulf %231, %228 : vector<192x128xf32>
    %233 = arith.mulf %232, %228 : vector<192x128xf32>
    %234 = arith.mulf %233, %228 : vector<192x128xf32>
    %235 = arith.addf %228, %234 : vector<192x128xf32>
    %cst_92 = arith.constant 0.797884583 : f32
    %236 = vector.broadcast %cst_92 : f32 to vector<192x128xf32>
    %237 = arith.mulf %236, %235 : vector<192x128xf32>
    %238 = math.tanh %237 : vector<192x128xf32>
    %cst_93 = arith.constant 1.000000e+00 : f32
    %239 = vector.broadcast %cst_93 : f32 to vector<192x128xf32>
    %240 = arith.addf %239, %238 : vector<192x128xf32>
    %241 = arith.mulf %230, %240 : vector<192x128xf32>
    %c0_94 = arith.constant 0 : index
    %c0_95 = arith.constant 0 : index
    %242 = vector.load %arg17[%c0_94, %c0_95] : memref<192x32xf32, #tpu.memory_space<vmem>>, vector<192x32xf32>
    %243 = arith.truncf %241 : vector<192x128xf32> to vector<192x128xbf16>
    %c0_96 = arith.constant 0 : index
    %c0_97 = arith.constant 0 : index
    %c0_98 = arith.constant 0 : index
    %244 = vector.load %arg13[%c0_96, %c0_97, %c0_98] : memref<2x128x32xbf16, #tpu.memory_space<vmem>>, vector<1x128x32xbf16>
    %245 = vector.shape_cast %244 : vector<1x128x32xbf16> to vector<128x32xbf16>
    %cst_99 = arith.constant dense<0.000000e+00> : vector<192x32xf32>
    %246 = tpu.matmul %243, %245, %cst_99 {dimension_numbers = #tpu.dot_dimension_numbers<[1], [0], [0], [1], [0, 0, 1, 1], [], []>} : vector<192x128xbf16>, vector<128x32xbf16>, vector<192x32xf32> -> vector<192x32xf32>
    %247 = arith.addf %242, %246 : vector<192x32xf32>
    %c0_100 = arith.constant 0 : index
    %c0_101 = arith.constant 0 : index
    %c0_102 = arith.constant 0 : index
    %248 = vector.load %arg14[%c0_100, %c0_101, %c0_102] : memref<2x1x32xf32, #tpu.memory_space<vmem>>, vector<1x1x32xf32>
    %249 = vector.shape_cast %248 : vector<1x1x32xf32> to vector<1x32xf32>
    %250 = vector.broadcast %249 : vector<1x32xf32> to vector<192x32xf32>
    %251 = arith.addf %247, %250 : vector<192x32xf32>
    %c0_103 = arith.constant 0 : index
    %c0_104 = arith.constant 0 : index
    %252 = vector.load %arg17[%c0_103, %c0_104] : memref<192x32xf32, #tpu.memory_space<vmem>>, vector<192x32xf32>
    tpu.vector_store %arg17[%c0_103, %c0_104], %251 {strides = array<i32>} : memref<192x32xf32, #tpu.memory_space<vmem>>, vector<192x32xf32>,
    %c0_105 = arith.constant 0 : index
    %c0_106 = arith.constant 0 : index
    %253 = vector.load %arg17[%c0_105, %c0_106] : memref<192x32xf32, #tpu.memory_space<vmem>>, vector<192x32xf32>
    %c1 = arith.constant 1 : index
    %c0_107 = arith.constant 0 : index
    %c0_108 = arith.constant 0 : index
    %254 = vector.load %arg3[%c1, %c0_107, %c0_108] : memref<2x1x32xf32, #tpu.memory_space<vmem>>, vector<1x1x32xf32>
    %255 = vector.shape_cast %254 : vector<1x1x32xf32> to vector<1x32xf32>
    %c1_109 = arith.constant 1 : index
    %c0_110 = arith.constant 0 : index
    %c0_111 = arith.constant 0 : index
    %256 = vector.load %arg4[%c1_109, %c0_110, %c0_111] : memref<2x1x32xf32, #tpu.memory_space<vmem>>, vector<1x1x32xf32>
    %257 = vector.shape_cast %256 : vector<1x1x32xf32> to vector<1x32xf32>
    %cst_112 = arith.constant dense<0.000000e+00> : vector<192xf32>
    %258 = vector.multi_reduction <add>, %253, %cst_112 [1] : vector<192x32xf32> to vector<192xf32>
    %259 = vector.shape_cast %258 : vector<192xf32> to vector<192x1xf32>
    %cst_113 = arith.constant 3.200000e+01 : f32
    %260 = vector.broadcast %cst_113 : f32 to vector<192x1xf32>
    %261 = arith.divf %259, %260 : vector<192x1xf32>
    %262 = arith.mulf %253, %253 : vector<192x32xf32>
    %cst_114 = arith.constant dense<0.000000e+00> : vector<192xf32>
    %263 = vector.multi_reduction <add>, %262, %cst_114 [1] : vector<192x32xf32> to vector<192xf32>
    %264 = vector.shape_cast %263 : vector<192xf32> to vector<192x1xf32>
    %cst_115 = arith.constant 3.200000e+01 : f32
    %265 = vector.broadcast %cst_115 : f32 to vector<192x1xf32>
    %266 = arith.divf %264, %265 : vector<192x1xf32>
    %267 = arith.mulf %261, %261 : vector<192x1xf32>
    %268 = arith.subf %266, %267 : vector<192x1xf32>
    %269 = vector.broadcast %261 : vector<192x1xf32> to vector<192x32xf32>
    %270 = arith.subf %253, %269 : vector<192x32xf32>
    %cst_116 = arith.constant 9.99999974E-6 : f32
    %271 = vector.broadcast %cst_116 : f32 to vector<192x1xf32>
    %272 = arith.addf %268, %271 : vector<192x1xf32>
    %273 = math.rsqrt %272 : vector<192x1xf32>
    %274 = vector.broadcast %273 : vector<192x1xf32> to vector<192x32xf32>
    %275 = arith.mulf %270, %274 : vector<192x32xf32>
    %276 = vector.broadcast %255 : vector<1x32xf32> to vector<192x32xf32>
    %277 = arith.mulf %275, %276 : vector<192x32xf32>
    %278 = vector.broadcast %257 : vector<1x32xf32> to vector<192x32xf32>
    %279 = arith.addf %277, %278 : vector<192x32xf32>
    %280 = arith.truncf %279 : vector<192x32xf32> to vector<192x32xbf16>
    %c1_117 = arith.constant 1 : index
    %c0_118 = arith.constant 0 : index
    %c0_119 = arith.constant 0 : index
    %281 = vector.load %arg5[%c1_117, %c0_118, %c0_119] : memref<2x32x96xbf16, #tpu.memory_space<vmem>>, vector<1x32x96xbf16>
    %282 = vector.shape_cast %281 : vector<1x32x96xbf16> to vector<32x96xbf16>
    %cst_120 = arith.constant dense<0.000000e+00> : vector<192x96xf32>
    %283 = tpu.matmul %280, %282, %cst_120 {dimension_numbers = #tpu.dot_dimension_numbers<[1], [0], [0], [1], [0, 0, 1, 1], [], []>} : vector<192x32xbf16>, vector<32x96xbf16>, vector<192x96xf32> -> vector<192x96xf32>
    %c1_121 = arith.constant 1 : index
    %c0_122 = arith.constant 0 : index
    %c0_123 = arith.constant 0 : index
    %284 = vector.load %arg6[%c1_121, %c0_122, %c0_123] : memref<2x1x96xf32, #tpu.memory_space<vmem>>, vector<1x1x96xf32>
    %285 = vector.shape_cast %284 : vector<1x1x96xf32> to vector<1x96xf32>
    %286 = vector.broadcast %285 : vector<1x96xf32> to vector<192x96xf32>
    %287 = arith.addf %283, %286 : vector<192x96xf32>
    %288 = arith.truncf %287 : vector<192x96xf32> to vector<192x96xbf16>
    %289 = vector.extract_strided_slice %288 {offsets = [0, 0], sizes = [96, 96], strides = [1, 1]} : vector<192x96xbf16> to vector<96x96xbf16>
    %290 = vector.extract_strided_slice %289 {offsets = [0, 0], sizes = [96, 8], strides = [1, 1]} : vector<96x96xbf16> to vector<96x8xbf16>
    %291 = vector.extract_strided_slice %289 {offsets = [0, 32], sizes = [96, 8], strides = [1, 1]} : vector<96x96xbf16> to vector<96x8xbf16>
    %292 = vector.extract_strided_slice %289 {offsets = [0, 64], sizes = [96, 8], strides = [1, 1]} : vector<96x96xbf16> to vector<96x8xbf16>
    %cst_124 = arith.constant dense<0.000000e+00> : vector<96x96xf32>
    %293 = tpu.matmul %290, %291, %cst_124 {dimension_numbers = #tpu.dot_dimension_numbers<[1], [1], [0], [0], [0, 0, 1, 0], [], []>} : vector<96x8xbf16>, vector<96x8xbf16>, vector<96x96xf32> -> vector<96x96xf32>
    %cst_125 = arith.constant dense<0xFF800000> : vector<96xf32>
    %294 = vector.multi_reduction <maximumf>, %293, %cst_125 [1] : vector<96x96xf32> to vector<96xf32>
    %295 = vector.shape_cast %294 : vector<96xf32> to vector<96x1xf32>
    %296 = vector.broadcast %295 : vector<96x1xf32> to vector<96x96xf32>
    %297 = arith.subf %293, %296 : vector<96x96xf32>
    %298 = math.exp %297 : vector<96x96xf32>
    %cst_126 = arith.constant dense<0.000000e+00> : vector<96xf32>
    %299 = vector.multi_reduction <add>, %298, %cst_126 [1] : vector<96x96xf32> to vector<96xf32>
    %300 = vector.shape_cast %299 : vector<96xf32> to vector<96x1xf32>
    %301 = tpu.reciprocal %300 {approx = true} : vector<96x1xf32> -> vector<96x1xf32>
    %302 = vector.broadcast %301 : vector<96x1xf32> to vector<96x96xf32>
    %303 = arith.mulf %298, %302 : vector<96x96xf32>
    %304 = arith.truncf %303 : vector<96x96xf32> to vector<96x96xbf16>
    %cst_127 = arith.constant dense<0.000000e+00> : vector<96x8xf32>
    %305 = tpu.matmul %304, %292, %cst_127 {dimension_numbers = #tpu.dot_dimension_numbers<[1], [0], [0], [1], [0, 0, 1, 1], [], []>} : vector<96x96xbf16>, vector<96x8xbf16>, vector<96x8xf32> -> vector<96x8xf32>
    %306 = arith.truncf %305 : vector<96x8xf32> to vector<96x8xbf16>
    %307 = vector.extract_strided_slice %289 {offsets = [0, 8], sizes = [96, 8], strides = [1, 1]} : vector<96x96xbf16> to vector<96x8xbf16>
    %308 = vector.extract_strided_slice %289 {offsets = [0, 40], sizes = [96, 8], strides = [1, 1]} : vector<96x96xbf16> to vector<96x8xbf16>
    %309 = vector.extract_strided_slice %289 {offsets = [0, 72], sizes = [96, 8], strides = [1, 1]} : vector<96x96xbf16> to vector<96x8xbf16>
    %cst_128 = arith.constant dense<0.000000e+00> : vector<96x96xf32>
    %310 = tpu.matmul %307, %308, %cst_128 {dimension_numbers = #tpu.dot_dimension_numbers<[1], [1], [0], [0], [0, 0, 1, 0], [], []>} : vector<96x8xbf16>, vector<96x8xbf16>, vector<96x96xf32> -> vector<96x96xf32>
    %cst_129 = arith.constant dense<0xFF800000> : vector<96xf32>
    %311 = vector.multi_reduction <maximumf>, %310, %cst_129 [1] : vector<96x96xf32> to vector<96xf32>
    %312 = vector.shape_cast %311 : vector<96xf32> to vector<96x1xf32>
    %313 = vector.broadcast %312 : vector<96x1xf32> to vector<96x96xf32>
    %314 = arith.subf %310, %313 : vector<96x96xf32>
    %315 = math.exp %314 : vector<96x96xf32>
    %cst_130 = arith.constant dense<0.000000e+00> : vector<96xf32>
    %316 = vector.multi_reduction <add>, %315, %cst_130 [1] : vector<96x96xf32> to vector<96xf32>
    %317 = vector.shape_cast %316 : vector<96xf32> to vector<96x1xf32>
    %318 = tpu.reciprocal %317 {approx = true} : vector<96x1xf32> -> vector<96x1xf32>
    %319 = vector.broadcast %318 : vector<96x1xf32> to vector<96x96xf32>
    %320 = arith.mulf %315, %319 : vector<96x96xf32>
    %321 = arith.truncf %320 : vector<96x96xf32> to vector<96x96xbf16>
    %cst_131 = arith.constant dense<0.000000e+00> : vector<96x8xf32>
    %322 = tpu.matmul %321, %309, %cst_131 {dimension_numbers = #tpu.dot_dimension_numbers<[1], [0], [0], [1], [0, 0, 1, 1], [], []>} : vector<96x96xbf16>, vector<96x8xbf16>, vector<96x8xf32> -> vector<96x8xf32>
    %323 = arith.truncf %322 : vector<96x8xf32> to vector<96x8xbf16>
    %324 = vector.extract_strided_slice %289 {offsets = [0, 16], sizes = [96, 8], strides = [1, 1]} : vector<96x96xbf16> to vector<96x8xbf16>
    %325 = vector.extract_strided_slice %289 {offsets = [0, 48], sizes = [96, 8], strides = [1, 1]} : vector<96x96xbf16> to vector<96x8xbf16>
    %326 = vector.extract_strided_slice %289 {offsets = [0, 80], sizes = [96, 8], strides = [1, 1]} : vector<96x96xbf16> to vector<96x8xbf16>
    %cst_132 = arith.constant dense<0.000000e+00> : vector<96x96xf32>
    %327 = tpu.matmul %324, %325, %cst_132 {dimension_numbers = #tpu.dot_dimension_numbers<[1], [1], [0], [0], [0, 0, 1, 0], [], []>} : vector<96x8xbf16>, vector<96x8xbf16>, vector<96x96xf32> -> vector<96x96xf32>
    %cst_133 = arith.constant dense<0xFF800000> : vector<96xf32>
    %328 = vector.multi_reduction <maximumf>, %327, %cst_133 [1] : vector<96x96xf32> to vector<96xf32>
    %329 = vector.shape_cast %328 : vector<96xf32> to vector<96x1xf32>
    %330 = vector.broadcast %329 : vector<96x1xf32> to vector<96x96xf32>
    %331 = arith.subf %327, %330 : vector<96x96xf32>
    %332 = math.exp %331 : vector<96x96xf32>
    %cst_134 = arith.constant dense<0.000000e+00> : vector<96xf32>
    %333 = vector.multi_reduction <add>, %332, %cst_134 [1] : vector<96x96xf32> to vector<96xf32>
    %334 = vector.shape_cast %333 : vector<96xf32> to vector<96x1xf32>
    %335 = tpu.reciprocal %334 {approx = true} : vector<96x1xf32> -> vector<96x1xf32>
    %336 = vector.broadcast %335 : vector<96x1xf32> to vector<96x96xf32>
    %337 = arith.mulf %332, %336 : vector<96x96xf32>
    %338 = arith.truncf %337 : vector<96x96xf32> to vector<96x96xbf16>
    %cst_135 = arith.constant dense<0.000000e+00> : vector<96x8xf32>
    %339 = tpu.matmul %338, %326, %cst_135 {dimension_numbers = #tpu.dot_dimension_numbers<[1], [0], [0], [1], [0, 0, 1, 1], [], []>} : vector<96x96xbf16>, vector<96x8xbf16>, vector<96x8xf32> -> vector<96x8xf32>
    %340 = arith.truncf %339 : vector<96x8xf32> to vector<96x8xbf16>
    %341 = vector.extract_strided_slice %289 {offsets = [0, 24], sizes = [96, 8], strides = [1, 1]} : vector<96x96xbf16> to vector<96x8xbf16>
    %342 = vector.extract_strided_slice %289 {offsets = [0, 56], sizes = [96, 8], strides = [1, 1]} : vector<96x96xbf16> to vector<96x8xbf16>
    %343 = vector.extract_strided_slice %289 {offsets = [0, 88], sizes = [96, 8], strides = [1, 1]} : vector<96x96xbf16> to vector<96x8xbf16>
    %cst_136 = arith.constant dense<0.000000e+00> : vector<96x96xf32>
    %344 = tpu.matmul %341, %342, %cst_136 {dimension_numbers = #tpu.dot_dimension_numbers<[1], [1], [0], [0], [0, 0, 1, 0], [], []>} : vector<96x8xbf16>, vector<96x8xbf16>, vector<96x96xf32> -> vector<96x96xf32>
    %cst_137 = arith.constant dense<0xFF800000> : vector<96xf32>
    %345 = vector.multi_reduction <maximumf>, %344, %cst_137 [1] : vector<96x96xf32> to vector<96xf32>
    %346 = vector.shape_cast %345 : vector<96xf32> to vector<96x1xf32>
    %347 = vector.broadcast %346 : vector<96x1xf32> to vector<96x96xf32>
    %348 = arith.subf %344, %347 : vector<96x96xf32>
    %349 = math.exp %348 : vector<96x96xf32>
    %cst_138 = arith.constant dense<0.000000e+00> : vector<96xf32>
    %350 = vector.multi_reduction <add>, %349, %cst_138 [1] : vector<96x96xf32> to vector<96xf32>
    %351 = vector.shape_cast %350 : vector<96xf32> to vector<96x1xf32>
    %352 = tpu.reciprocal %351 {approx = true} : vector<96x1xf32> -> vector<96x1xf32>
    %353 = vector.broadcast %352 : vector<96x1xf32> to vector<96x96xf32>
    %354 = arith.mulf %349, %353 : vector<96x96xf32>
    %355 = arith.truncf %354 : vector<96x96xf32> to vector<96x96xbf16>
    %cst_139 = arith.constant dense<0.000000e+00> : vector<96x8xf32>
    %356 = tpu.matmul %355, %343, %cst_139 {dimension_numbers = #tpu.dot_dimension_numbers<[1], [0], [0], [1], [0, 0, 1, 1], [], []>} : vector<96x96xbf16>, vector<96x8xbf16>, vector<96x8xf32> -> vector<96x8xf32>
    %357 = arith.truncf %356 : vector<96x8xf32> to vector<96x8xbf16>
    %358 = tpu.concatenate %306, %323, %340, %357 in 1 : vector<96x8xbf16>, vector<96x8xbf16>, vector<96x8xbf16>, vector<96x8xbf16> -> vector<96x32xbf16>
    %359 = vector.extract_strided_slice %288 {offsets = [96, 0], sizes = [96, 96], strides = [1, 1]} : vector<192x96xbf16> to vector<96x96xbf16>
    %360 = vector.extract_strided_slice %359 {offsets = [0, 0], sizes = [96, 8], strides = [1, 1]} : vector<96x96xbf16> to vector<96x8xbf16>
    %361 = vector.extract_strided_slice %359 {offsets = [0, 32], sizes = [96, 8], strides = [1, 1]} : vector<96x96xbf16> to vector<96x8xbf16>
    %362 = vector.extract_strided_slice %359 {offsets = [0, 64], sizes = [96, 8], strides = [1, 1]} : vector<96x96xbf16> to vector<96x8xbf16>
    %cst_140 = arith.constant dense<0.000000e+00> : vector<96x96xf32>
    %363 = tpu.matmul %360, %361, %cst_140 {dimension_numbers = #tpu.dot_dimension_numbers<[1], [1], [0], [0], [0, 0, 1, 0], [], []>} : vector<96x8xbf16>, vector<96x8xbf16>, vector<96x96xf32> -> vector<96x96xf32>
    %cst_141 = arith.constant dense<0xFF800000> : vector<96xf32>
    %364 = vector.multi_reduction <maximumf>, %363, %cst_141 [1] : vector<96x96xf32> to vector<96xf32>
    %365 = vector.shape_cast %364 : vector<96xf32> to vector<96x1xf32>
    %366 = vector.broadcast %365 : vector<96x1xf32> to vector<96x96xf32>
    %367 = arith.subf %363, %366 : vector<96x96xf32>
    %368 = math.exp %367 : vector<96x96xf32>
    %cst_142 = arith.constant dense<0.000000e+00> : vector<96xf32>
    %369 = vector.multi_reduction <add>, %368, %cst_142 [1] : vector<96x96xf32> to vector<96xf32>
    %370 = vector.shape_cast %369 : vector<96xf32> to vector<96x1xf32>
    %371 = tpu.reciprocal %370 {approx = true} : vector<96x1xf32> -> vector<96x1xf32>
    %372 = vector.broadcast %371 : vector<96x1xf32> to vector<96x96xf32>
    %373 = arith.mulf %368, %372 : vector<96x96xf32>
    %374 = arith.truncf %373 : vector<96x96xf32> to vector<96x96xbf16>
    %cst_143 = arith.constant dense<0.000000e+00> : vector<96x8xf32>
    %375 = tpu.matmul %374, %362, %cst_143 {dimension_numbers = #tpu.dot_dimension_numbers<[1], [0], [0], [1], [0, 0, 1, 1], [], []>} : vector<96x96xbf16>, vector<96x8xbf16>, vector<96x8xf32> -> vector<96x8xf32>
    %376 = arith.truncf %375 : vector<96x8xf32> to vector<96x8xbf16>
    %377 = vector.extract_strided_slice %359 {offsets = [0, 8], sizes = [96, 8], strides = [1, 1]} : vector<96x96xbf16> to vector<96x8xbf16>
    %378 = vector.extract_strided_slice %359 {offsets = [0, 40], sizes = [96, 8], strides = [1, 1]} : vector<96x96xbf16> to vector<96x8xbf16>
    %379 = vector.extract_strided_slice %359 {offsets = [0, 72], sizes = [96, 8], strides = [1, 1]} : vector<96x96xbf16> to vector<96x8xbf16>
    %cst_144 = arith.constant dense<0.000000e+00> : vector<96x96xf32>
    %380 = tpu.matmul %377, %378, %cst_144 {dimension_numbers = #tpu.dot_dimension_numbers<[1], [1], [0], [0], [0, 0, 1, 0], [], []>} : vector<96x8xbf16>, vector<96x8xbf16>, vector<96x96xf32> -> vector<96x96xf32>
    %cst_145 = arith.constant dense<0xFF800000> : vector<96xf32>
    %381 = vector.multi_reduction <maximumf>, %380, %cst_145 [1] : vector<96x96xf32> to vector<96xf32>
    %382 = vector.shape_cast %381 : vector<96xf32> to vector<96x1xf32>
    %383 = vector.broadcast %382 : vector<96x1xf32> to vector<96x96xf32>
    %384 = arith.subf %380, %383 : vector<96x96xf32>
    %385 = math.exp %384 : vector<96x96xf32>
    %cst_146 = arith.constant dense<0.000000e+00> : vector<96xf32>
    %386 = vector.multi_reduction <add>, %385, %cst_146 [1] : vector<96x96xf32> to vector<96xf32>
    %387 = vector.shape_cast %386 : vector<96xf32> to vector<96x1xf32>
    %388 = tpu.reciprocal %387 {approx = true} : vector<96x1xf32> -> vector<96x1xf32>
    %389 = vector.broadcast %388 : vector<96x1xf32> to vector<96x96xf32>
    %390 = arith.mulf %385, %389 : vector<96x96xf32>
    %391 = arith.truncf %390 : vector<96x96xf32> to vector<96x96xbf16>
    %cst_147 = arith.constant dense<0.000000e+00> : vector<96x8xf32>
    %392 = tpu.matmul %391, %379, %cst_147 {dimension_numbers = #tpu.dot_dimension_numbers<[1], [0], [0], [1], [0, 0, 1, 1], [], []>} : vector<96x96xbf16>, vector<96x8xbf16>, vector<96x8xf32> -> vector<96x8xf32>
    %393 = arith.truncf %392 : vector<96x8xf32> to vector<96x8xbf16>
    %394 = vector.extract_strided_slice %359 {offsets = [0, 16], sizes = [96, 8], strides = [1, 1]} : vector<96x96xbf16> to vector<96x8xbf16>
    %395 = vector.extract_strided_slice %359 {offsets = [0, 48], sizes = [96, 8], strides = [1, 1]} : vector<96x96xbf16> to vector<96x8xbf16>
    %396 = vector.extract_strided_slice %359 {offsets = [0, 80], sizes = [96, 8], strides = [1, 1]} : vector<96x96xbf16> to vector<96x8xbf16>
    %cst_148 = arith.constant dense<0.000000e+00> : vector<96x96xf32>
    %397 = tpu.matmul %394, %395, %cst_148 {dimension_numbers = #tpu.dot_dimension_numbers<[1], [1], [0], [0], [0, 0, 1, 0], [], []>} : vector<96x8xbf16>, vector<96x8xbf16>, vector<96x96xf32> -> vector<96x96xf32>
    %cst_149 = arith.constant dense<0xFF800000> : vector<96xf32>
    %398 = vector.multi_reduction <maximumf>, %397, %cst_149 [1] : vector<96x96xf32> to vector<96xf32>
    %399 = vector.shape_cast %398 : vector<96xf32> to vector<96x1xf32>
    %400 = vector.broadcast %399 : vector<96x1xf32> to vector<96x96xf32>
    %401 = arith.subf %397, %400 : vector<96x96xf32>
    %402 = math.exp %401 : vector<96x96xf32>
    %cst_150 = arith.constant dense<0.000000e+00> : vector<96xf32>
    %403 = vector.multi_reduction <add>, %402, %cst_150 [1] : vector<96x96xf32> to vector<96xf32>
    %404 = vector.shape_cast %403 : vector<96xf32> to vector<96x1xf32>
    %405 = tpu.reciprocal %404 {approx = true} : vector<96x1xf32> -> vector<96x1xf32>
    %406 = vector.broadcast %405 : vector<96x1xf32> to vector<96x96xf32>
    %407 = arith.mulf %402, %406 : vector<96x96xf32>
    %408 = arith.truncf %407 : vector<96x96xf32> to vector<96x96xbf16>
    %cst_151 = arith.constant dense<0.000000e+00> : vector<96x8xf32>
    %409 = tpu.matmul %408, %396, %cst_151 {dimension_numbers = #tpu.dot_dimension_numbers<[1], [0], [0], [1], [0, 0, 1, 1], [], []>} : vector<96x96xbf16>, vector<96x8xbf16>, vector<96x8xf32> -> vector<96x8xf32>
    %410 = arith.truncf %409 : vector<96x8xf32> to vector<96x8xbf16>
    %411 = vector.extract_strided_slice %359 {offsets = [0, 24], sizes = [96, 8], strides = [1, 1]} : vector<96x96xbf16> to vector<96x8xbf16>
    %412 = vector.extract_strided_slice %359 {offsets = [0, 56], sizes = [96, 8], strides = [1, 1]} : vector<96x96xbf16> to vector<96x8xbf16>
    %413 = vector.extract_strided_slice %359 {offsets = [0, 88], sizes = [96, 8], strides = [1, 1]} : vector<96x96xbf16> to vector<96x8xbf16>
    %cst_152 = arith.constant dense<0.000000e+00> : vector<96x96xf32>
    %414 = tpu.matmul %411, %412, %cst_152 {dimension_numbers = #tpu.dot_dimension_numbers<[1], [1], [0], [0], [0, 0, 1, 0], [], []>} : vector<96x8xbf16>, vector<96x8xbf16>, vector<96x96xf32> -> vector<96x96xf32>
    %cst_153 = arith.constant dense<0xFF800000> : vector<96xf32>
    %415 = vector.multi_reduction <maximumf>, %414, %cst_153 [1] : vector<96x96xf32> to vector<96xf32>
    %416 = vector.shape_cast %415 : vector<96xf32> to vector<96x1xf32>
    %417 = vector.broadcast %416 : vector<96x1xf32> to vector<96x96xf32>
    %418 = arith.subf %414, %417 : vector<96x96xf32>
    %419 = math.exp %418 : vector<96x96xf32>
    %cst_154 = arith.constant dense<0.000000e+00> : vector<96xf32>
    %420 = vector.multi_reduction <add>, %419, %cst_154 [1] : vector<96x96xf32> to vector<96xf32>
    %421 = vector.shape_cast %420 : vector<96xf32> to vector<96x1xf32>
    %422 = tpu.reciprocal %421 {approx = true} : vector<96x1xf32> -> vector<96x1xf32>
    %423 = vector.broadcast %422 : vector<96x1xf32> to vector<96x96xf32>
    %424 = arith.mulf %419, %423 : vector<96x96xf32>
    %425 = arith.truncf %424 : vector<96x96xf32> to vector<96x96xbf16>
    %cst_155 = arith.constant dense<0.000000e+00> : vector<96x8xf32>
    %426 = tpu.matmul %425, %413, %cst_155 {dimension_numbers = #tpu.dot_dimension_numbers<[1], [0], [0], [1], [0, 0, 1, 1], [], []>} : vector<96x96xbf16>, vector<96x8xbf16>, vector<96x8xf32> -> vector<96x8xf32>
    %427 = arith.truncf %426 : vector<96x8xf32> to vector<96x8xbf16>
    %428 = tpu.concatenate %376, %393, %410, %427 in 1 : vector<96x8xbf16>, vector<96x8xbf16>, vector<96x8xbf16>, vector<96x8xbf16> -> vector<96x32xbf16>
    %429 = tpu.concatenate %358, %428 in 0 : vector<96x32xbf16>, vector<96x32xbf16> -> vector<192x32xbf16>
    %c0_156 = arith.constant 0 : index
    %c0_157 = arith.constant 0 : index
    %430 = vector.load %arg17[%c0_156, %c0_157] : memref<192x32xf32, #tpu.memory_space<vmem>>, vector<192x32xf32>
    %c1_158 = arith.constant 1 : index
    %c0_159 = arith.constant 0 : index
    %c0_160 = arith.constant 0 : index
    %431 = vector.load %arg7[%c1_158, %c0_159, %c0_160] : memref<2x32x32xbf16, #tpu.memory_space<vmem>>, vector<1x32x32xbf16>
    %432 = vector.shape_cast %431 : vector<1x32x32xbf16> to vector<32x32xbf16>
    %cst_161 = arith.constant dense<0.000000e+00> : vector<192x32xf32>
    %433 = tpu.matmul %429, %432, %cst_161 {dimension_numbers = #tpu.dot_dimension_numbers<[1], [0], [0], [1], [0, 0, 1, 1], [], []>} : vector<192x32xbf16>, vector<32x32xbf16>, vector<192x32xf32> -> vector<192x32xf32>
    %434 = arith.addf %430, %433 : vector<192x32xf32>
    %c1_162 = arith.constant 1 : index
    %c0_163 = arith.constant 0 : index
    %c0_164 = arith.constant 0 : index
    %435 = vector.load %arg8[%c1_162, %c0_163, %c0_164] : memref<2x1x32xf32, #tpu.memory_space<vmem>>, vector<1x1x32xf32>
    %436 = vector.shape_cast %435 : vector<1x1x32xf32> to vector<1x32xf32>
    %437 = vector.broadcast %436 : vector<1x32xf32> to vector<192x32xf32>
    %438 = arith.addf %434, %437 : vector<192x32xf32>
    %c0_165 = arith.constant 0 : index
    %c0_166 = arith.constant 0 : index
    %439 = vector.load %arg17[%c0_165, %c0_166] : memref<192x32xf32, #tpu.memory_space<vmem>>, vector<192x32xf32>
    tpu.vector_store %arg17[%c0_165, %c0_166], %438 {strides = array<i32>} : memref<192x32xf32, #tpu.memory_space<vmem>>, vector<192x32xf32>,
    %c0_167 = arith.constant 0 : index
    %c0_168 = arith.constant 0 : index
    %440 = vector.load %arg17[%c0_167, %c0_168] : memref<192x32xf32, #tpu.memory_space<vmem>>, vector<192x32xf32>
    %c1_169 = arith.constant 1 : index
    %c0_170 = arith.constant 0 : index
    %c0_171 = arith.constant 0 : index
    %441 = vector.load %arg9[%c1_169, %c0_170, %c0_171] : memref<2x1x32xf32, #tpu.memory_space<vmem>>, vector<1x1x32xf32>
    %442 = vector.shape_cast %441 : vector<1x1x32xf32> to vector<1x32xf32>
    %c1_172 = arith.constant 1 : index
    %c0_173 = arith.constant 0 : index
    %c0_174 = arith.constant 0 : index
    %443 = vector.load %arg10[%c1_172, %c0_173, %c0_174] : memref<2x1x32xf32, #tpu.memory_space<vmem>>, vector<1x1x32xf32>
    %444 = vector.shape_cast %443 : vector<1x1x32xf32> to vector<1x32xf32>
    %cst_175 = arith.constant dense<0.000000e+00> : vector<192xf32>
    %445 = vector.multi_reduction <add>, %440, %cst_175 [1] : vector<192x32xf32> to vector<192xf32>
    %446 = vector.shape_cast %445 : vector<192xf32> to vector<192x1xf32>
    %cst_176 = arith.constant 3.200000e+01 : f32
    %447 = vector.broadcast %cst_176 : f32 to vector<192x1xf32>
    %448 = arith.divf %446, %447 : vector<192x1xf32>
    %449 = arith.mulf %440, %440 : vector<192x32xf32>
    %cst_177 = arith.constant dense<0.000000e+00> : vector<192xf32>
    %450 = vector.multi_reduction <add>, %449, %cst_177 [1] : vector<192x32xf32> to vector<192xf32>
    %451 = vector.shape_cast %450 : vector<192xf32> to vector<192x1xf32>
    %cst_178 = arith.constant 3.200000e+01 : f32
    %452 = vector.broadcast %cst_178 : f32 to vector<192x1xf32>
    %453 = arith.divf %451, %452 : vector<192x1xf32>
    %454 = arith.mulf %448, %448 : vector<192x1xf32>
    %455 = arith.subf %453, %454 : vector<192x1xf32>
    %456 = vector.broadcast %448 : vector<192x1xf32> to vector<192x32xf32>
    %457 = arith.subf %440, %456 : vector<192x32xf32>
    %cst_179 = arith.constant 9.99999974E-6 : f32
    %458 = vector.broadcast %cst_179 : f32 to vector<192x1xf32>
    %459 = arith.addf %455, %458 : vector<192x1xf32>
    %460 = math.rsqrt %459 : vector<192x1xf32>
    %461 = vector.broadcast %460 : vector<192x1xf32> to vector<192x32xf32>
    %462 = arith.mulf %457, %461 : vector<192x32xf32>
    %463 = vector.broadcast %442 : vector<1x32xf32> to vector<192x32xf32>
    %464 = arith.mulf %462, %463 : vector<192x32xf32>
    %465 = vector.broadcast %444 : vector<1x32xf32> to vector<192x32xf32>
    %466 = arith.addf %464, %465 : vector<192x32xf32>
    %467 = arith.truncf %466 : vector<192x32xf32> to vector<192x32xbf16>
    %c1_180 = arith.constant 1 : index
    %c0_181 = arith.constant 0 : index
    %c0_182 = arith.constant 0 : index
    %468 = vector.load %arg11[%c1_180, %c0_181, %c0_182] : memref<2x32x128xbf16, #tpu.memory_space<vmem>>, vector<1x32x128xbf16>
    %469 = vector.shape_cast %468 : vector<1x32x128xbf16> to vector<32x128xbf16>
    %cst_183 = arith.constant dense<0.000000e+00> : vector<192x128xf32>
    %470 = tpu.matmul %467, %469, %cst_183 {dimension_numbers = #tpu.dot_dimension_numbers<[1], [0], [0], [1], [0, 0, 1, 1], [], []>} : vector<192x32xbf16>, vector<32x128xbf16>, vector<192x128xf32> -> vector<192x128xf32>
    %c1_184 = arith.constant 1 : index
    %c0_185 = arith.constant 0 : index
    %c0_186 = arith.constant 0 : index
    %471 = vector.load %arg12[%c1_184, %c0_185, %c0_186] : memref<2x1x128xf32, #tpu.memory_space<vmem>>, vector<1x1x128xf32>
    %472 = vector.shape_cast %471 : vector<1x1x128xf32> to vector<1x128xf32>
    %473 = vector.broadcast %472 : vector<1x128xf32> to vector<192x128xf32>
    %474 = arith.addf %470, %473 : vector<192x128xf32>
    %cst_187 = arith.constant 5.000000e-01 : f32
    %475 = vector.broadcast %cst_187 : f32 to vector<192x128xf32>
    %476 = arith.mulf %475, %474 : vector<192x128xf32>
    %cst_188 = arith.constant 4.471500e-02 : f32
    %477 = vector.broadcast %cst_188 : f32 to vector<192x128xf32>
    %478 = arith.mulf %477, %474 : vector<192x128xf32>
    %479 = arith.mulf %478, %474 : vector<192x128xf32>
    %480 = arith.mulf %479, %474 : vector<192x128xf32>
    %481 = arith.addf %474, %480 : vector<192x128xf32>
    %cst_189 = arith.constant 0.797884583 : f32
    %482 = vector.broadcast %cst_189 : f32 to vector<192x128xf32>
    %483 = arith.mulf %482, %481 : vector<192x128xf32>
    %484 = math.tanh %483 : vector<192x128xf32>
    %cst_190 = arith.constant 1.000000e+00 : f32
    %485 = vector.broadcast %cst_190 : f32 to vector<192x128xf32>
    %486 = arith.addf %485, %484 : vector<192x128xf32>
    %487 = arith.mulf %476, %486 : vector<192x128xf32>
    %c0_191 = arith.constant 0 : index
    %c0_192 = arith.constant 0 : index
    %488 = vector.load %arg17[%c0_191, %c0_192] : memref<192x32xf32, #tpu.memory_space<vmem>>, vector<192x32xf32>
    %489 = arith.truncf %487 : vector<192x128xf32> to vector<192x128xbf16>
    %c1_193 = arith.constant 1 : index
    %c0_194 = arith.constant 0 : index
    %c0_195 = arith.constant 0 : index
    %490 = vector.load %arg13[%c1_193, %c0_194, %c0_195] : memref<2x128x32xbf16, #tpu.memory_space<vmem>>, vector<1x128x32xbf16>
    %491 = vector.shape_cast %490 : vector<1x128x32xbf16> to vector<128x32xbf16>
    %cst_196 = arith.constant dense<0.000000e+00> : vector<192x32xf32>
    %492 = tpu.matmul %489, %491, %cst_196 {dimension_numbers = #tpu.dot_dimension_numbers<[1], [0], [0], [1], [0, 0, 1, 1], [], []>} : vector<192x128xbf16>, vector<128x32xbf16>, vector<192x32xf32> -> vector<192x32xf32>
    %493 = arith.addf %488, %492 : vector<192x32xf32>
    %c1_197 = arith.constant 1 : index
    %c0_198 = arith.constant 0 : index
    %c0_199 = arith.constant 0 : index
    %494 = vector.load %arg14[%c1_197, %c0_198, %c0_199] : memref<2x1x32xf32, #tpu.memory_space<vmem>>, vector<1x1x32xf32>
    %495 = vector.shape_cast %494 : vector<1x1x32xf32> to vector<1x32xf32>
    %496 = vector.broadcast %495 : vector<1x32xf32> to vector<192x32xf32>
    %497 = arith.addf %493, %496 : vector<192x32xf32>
    %c0_200 = arith.constant 0 : index
    %c0_201 = arith.constant 0 : index
    %498 = vector.load %arg17[%c0_200, %c0_201] : memref<192x32xf32, #tpu.memory_space<vmem>>, vector<192x32xf32>
    tpu.vector_store %arg17[%c0_200, %c0_201], %497 {strides = array<i32>} : memref<192x32xf32, #tpu.memory_space<vmem>>, vector<192x32xf32>,
    %c0_202 = arith.constant 0 : index
    %c0_203 = arith.constant 0 : index
    %499 = vector.load %arg17[%c0_202, %c0_203] : memref<192x32xf32, #tpu.memory_space<vmem>>, vector<192x32xf32>
    %c0_204 = arith.constant 0 : index
    %c0_205 = arith.constant 0 : index
    %500 = vector.load %arg15[%c0_204, %c0_205] : memref<1x32xf32, #tpu.memory_space<vmem>>, vector<1x32xf32>
    %c0_206 = arith.constant 0 : index
    %c0_207 = arith.constant 0 : index
    %501 = vector.load %arg16[%c0_206, %c0_207] : memref<1x32xf32, #tpu.memory_space<vmem>>, vector<1x32xf32>
    %cst_208 = arith.constant dense<0.000000e+00> : vector<192xf32>
    %502 = vector.multi_reduction <add>, %499, %cst_208 [1] : vector<192x32xf32> to vector<192xf32>
    %503 = vector.shape_cast %502 : vector<192xf32> to vector<192x1xf32>
    %cst_209 = arith.constant 3.200000e+01 : f32
    %504 = vector.broadcast %cst_209 : f32 to vector<192x1xf32>
    %505 = arith.divf %503, %504 : vector<192x1xf32>
    %506 = arith.mulf %499, %499 : vector<192x32xf32>
    %cst_210 = arith.constant dense<0.000000e+00> : vector<192xf32>
    %507 = vector.multi_reduction <add>, %506, %cst_210 [1] : vector<192x32xf32> to vector<192xf32>
    %508 = vector.shape_cast %507 : vector<192xf32> to vector<192x1xf32>
    %cst_211 = arith.constant 3.200000e+01 : f32
    %509 = vector.broadcast %cst_211 : f32 to vector<192x1xf32>
    %510 = arith.divf %508, %509 : vector<192x1xf32>
    %511 = arith.mulf %505, %505 : vector<192x1xf32>
    %512 = arith.subf %510, %511 : vector<192x1xf32>
    %513 = vector.broadcast %505 : vector<192x1xf32> to vector<192x32xf32>
    %514 = arith.subf %499, %513 : vector<192x32xf32>
    %cst_212 = arith.constant 9.99999974E-6 : f32
    %515 = vector.broadcast %cst_212 : f32 to vector<192x1xf32>
    %516 = arith.addf %512, %515 : vector<192x1xf32>
    %517 = math.rsqrt %516 : vector<192x1xf32>
    %518 = vector.broadcast %517 : vector<192x1xf32> to vector<192x32xf32>
    %519 = arith.mulf %514, %518 : vector<192x32xf32>
    %520 = vector.broadcast %500 : vector<1x32xf32> to vector<192x32xf32>
    %521 = arith.mulf %519, %520 : vector<192x32xf32>
    %522 = vector.broadcast %501 : vector<1x32xf32> to vector<192x32xf32>
    %523 = arith.addf %521, %522 : vector<192x32xf32>
    %c0_213 = arith.constant 0 : index
    %c0_214 = arith.constant 0 : index
    %524 = vector.load %arg17[%c0_213, %c0_214] : memref<192x32xf32, #tpu.memory_space<vmem>>, vector<192x32xf32>
    tpu.vector_store %arg17[%c0_213, %c0_214], %523 {strides = array<i32>} : memref<192x32xf32, #tpu.memory_space<vmem>>, vector<192x32xf32>,
    return
  }
}

</mosaic_0001>

<llo_original>
// kernel: vit_forward.1
$region0: #{vit_forward.1}
  #allocation0 [shape = 'u32[]', space=smem, size = 0x4, offset = 0x4, fixed_abs, tag = 'smem constant byte address 0x4 - core index']
  #allocation1 [shape = 'u32[72,128]{1,0:T(1,128)}', space=vmem, size = 0x9000, scoped, tag = 'internal scratch']
  %s0 = inlined_call_operand.vmem [shape: f32[192,48], index: 0, kind: input, shape index: {}]
  %s1 = inlined_call_operand.vmem [shape: f32[192,32], index: 1, kind: input, shape index: {}]
  %s2 = inlined_call_operand.vmem [shape: bf16[48,32], index: 2, kind: input, shape index: {}]
  %s3 = inlined_call_operand.vmem [shape: f32[2,1,32], index: 3, kind: input, shape index: {}]
  %s4 = inlined_call_operand.vmem [shape: f32[2,1,32], index: 4, kind: input, shape index: {}]
  %s5 = inlined_call_operand.vmem [shape: bf16[2,32,96], index: 5, kind: input, shape index: {}]
  %s6 = inlined_call_operand.vmem [shape: f32[2,1,96], index: 6, kind: input, shape index: {}]
  %s7 = inlined_call_operand.vmem [shape: bf16[2,32,32], index: 7, kind: input, shape index: {}]
  %s8 = inlined_call_operand.vmem [shape: f32[2,1,32], index: 8, kind: input, shape index: {}]
  %s9 = inlined_call_operand.vmem [shape: f32[2,1,32], index: 9, kind: input, shape index: {}]
  %s10 = inlined_call_operand.vmem [shape: f32[2,1,32], index: 10, kind: input, shape index: {}]
  %s11 = inlined_call_operand.vmem [shape: bf16[2,32,128], index: 11, kind: input, shape index: {}]
  %s12 = inlined_call_operand.vmem [shape: f32[2,1,128], index: 12, kind: input, shape index: {}]
  %s13 = inlined_call_operand.vmem [shape: bf16[2,128,32], index: 13, kind: input, shape index: {}]
  %s14 = inlined_call_operand.vmem [shape: f32[2,1,32], index: 14, kind: input, shape index: {}]
  %s15 = inlined_call_operand.vmem [shape: f32[1,32], index: 15, kind: input, shape index: {}]
  %s16 = inlined_call_operand.vmem [shape: f32[1,32], index: 16, kind: input, shape index: {}]
  %s17 = inlined_call_operand.vmem [shape: f32[192,32], index: 17, kind: output, shape index: {}]
  %s18 = sld [smem:[#allocation0]]
  $region78: #{vit_forward.1} parent=0
    _
  %s20 = ssub.s32 1, %s18
  %s21 = scalar_select 0, %s20, %s18
  // Predicated region
  $region2: #{vit_forward.1} parent=0 // pred_check
    _
  $region3: #{vit_forward.1} parent=0 // pred_check_branch
    %23 = sbr.rel (0) target = $region5
  $region4: #{vit_forward.1} parent=0 // pred_region
    _
  $region5: #{vit_forward.1} parent=0 // pred_fallthru
    _
  // Predicated region
  $region6: #{vit_forward.1} parent=0 // pred_check
    _
  $region7: #{vit_forward.1} parent=0 // pred_check_branch
    %25 = sbr.rel (0) target = $region9
  $region8: #{vit_forward.1} parent=0 // pred_region
    _
  $region9: #{vit_forward.1} parent=0 // pred_fallthru
    _
  // Predicated region
  $region10: #{vit_forward.1} parent=0 // pred_check
    _
  $region11: #{vit_forward.1} parent=0 // pred_check_branch
    %27 = sbr.rel (0) target = $region13
  $region12: #{vit_forward.1} parent=0 // pred_region
    _
  $region13: #{vit_forward.1} parent=0 // pred_fallthru
    _
  // Predicated region
  $region14: #{vit_forward.1} parent=0 // pred_check
    _
  $region15: #{vit_forward.1} parent=0 // pred_check_branch
    %29 = sbr.rel (0) target = $region17
  $region16: #{vit_forward.1} parent=0 // pred_region
    _
  $region17: #{vit_forward.1} parent=0 // pred_fallthru
    _
  // Predicated region
  $region18: #{vit_forward.1} parent=0 // pred_check
    _
  $region19: #{vit_forward.1} parent=0 // pred_check_branch
    %31 = sbr.rel (0) target = $region21
  $region20: #{vit_forward.1} parent=0 // pred_region
    _
  $region21: #{vit_forward.1} parent=0 // pred_fallthru
    _
  // Predicated region
  $region22: #{vit_forward.1} parent=0 // pred_check
    _
  $region23: #{vit_forward.1} parent=0 // pred_check_branch
    %33 = sbr.rel (0) target = $region25
  $region24: #{vit_forward.1} parent=0 // pred_region
    _
  $region25: #{vit_forward.1} parent=0 // pred_fallthru
    _
  // Predicated region
  $region26: #{vit_forward.1} parent=0 // pred_check
    _
  $region27: #{vit_forward.1} parent=0 // pred_check_branch
    %35 = sbr.rel (0) target = $region29
  $region28: #{vit_forward.1} parent=0 // pred_region
    _
  $region29: #{vit_forward.1} parent=0 // pred_fallthru
    _
  // Predicated region
  $region30: #{vit_forward.1} parent=0 // pred_check
    _
  $region31: #{vit_forward.1} parent=0 // pred_check_branch
    %37 = sbr.rel (0) target = $region33
  $region32: #{vit_forward.1} parent=0 // pred_region
    _
  $region33: #{vit_forward.1} parent=0 // pred_fallthru
    _
  // Predicated region
  $region34: #{vit_forward.1} parent=0 // pred_check
    _
  $region35: #{vit_forward.1} parent=0 // pred_check_branch
    %39 = sbr.rel (0) target = $region37
  $region36: #{vit_forward.1} parent=0 // pred_region
    _
  $region37: #{vit_forward.1} parent=0 // pred_fallthru
    _
  // Predicated region
  $region38: #{vit_forward.1} parent=0 // pred_check
    _
  $region39: #{vit_forward.1} parent=0 // pred_check_branch
    %41 = sbr.rel (0) target = $region41
  $region40: #{vit_forward.1} parent=0 // pred_region
    _
  $region41: #{vit_forward.1} parent=0 // pred_fallthru
    _
  // Predicated region
  $region42: #{vit_forward.1} parent=0 // pred_check
    _
  $region43: #{vit_forward.1} parent=0 // pred_check_branch
    %43 = sbr.rel (0) target = $region45
  $region44: #{vit_forward.1} parent=0 // pred_region
    _
  $region45: #{vit_forward.1} parent=0 // pred_fallthru
    _
  // Predicated region
  $region46: #{vit_forward.1} parent=0 // pred_check
    _
  $region47: #{vit_forward.1} parent=0 // pred_check_branch
    %45 = sbr.rel (0) target = $region49
  $region48: #{vit_forward.1} parent=0 // pred_region
    _
  $region49: #{vit_forward.1} parent=0 // pred_fallthru
    _
  // Predicated region
  $region50: #{vit_forward.1} parent=0 // pred_check
    _
  $region51: #{vit_forward.1} parent=0 // pred_check_branch
    %47 = sbr.rel (0) target = $region53
  $region52: #{vit_forward.1} parent=0 // pred_region
    _
  $region53: #{vit_forward.1} parent=0 // pred_fallthru
    _
  // Predicated region
  $region54: #{vit_forward.1} parent=0 // pred_check
    _
  $region55: #{vit_forward.1} parent=0 // pred_check_branch
    %49 = sbr.rel (0) target = $region57
  $region56: #{vit_forward.1} parent=0 // pred_region
    _
  $region57: #{vit_forward.1} parent=0 // pred_fallthru
    _
  // Predicated region
  $region58: #{vit_forward.1} parent=0 // pred_check
    _
  $region59: #{vit_forward.1} parent=0 // pred_check_branch
    %51 = sbr.rel (0) target = $region61
  $region60: #{vit_forward.1} parent=0 // pred_region
    _
  $region61: #{vit_forward.1} parent=0 // pred_fallthru
    _
  // Predicated region
  $region62: #{vit_forward.1} parent=0 // pred_check
    _
  $region63: #{vit_forward.1} parent=0 // pred_check_branch
    %53 = sbr.rel (0) target = $region65
  $region64: #{vit_forward.1} parent=0 // pred_region
    _
  $region65: #{vit_forward.1} parent=0 // pred_fallthru
    _
  // Predicated region
  $region66: #{vit_forward.1} parent=0 // pred_check
    _
  $region67: #{vit_forward.1} parent=0 // pred_check_branch
    %55 = sbr.rel (0) target = $region69
  $region68: #{vit_forward.1} parent=0 // pred_region
    _
  $region69: #{vit_forward.1} parent=0 // pred_fallthru
    _
  %v57 = vld [vmem:[%s0] sm:$0xff]
  %v58 = vld [vmem:[%s0 + $0x8] sm:$0xff]
  %v59 = vld [vmem:[%s0 + $0x10] sm:$0xff]
  %v60 = vld [vmem:[%s0 + $0x18] sm:$0xff]
  %v61 = vld [vmem:[%s0 + $0x20] sm:$0xff]
  %v62 = vld [vmem:[%s0 + $0x28] sm:$0xff]
  %v63 = vld [vmem:[%s0 + $0x30] sm:$0xff]
  %v64 = vld [vmem:[%s0 + $0x38] sm:$0xff]
  %v65 = vld [vmem:[%s0 + $0x40] sm:$0xff]
  %v66 = vld [vmem:[%s0 + $0x48] sm:$0xff]
  %v67 = vld [vmem:[%s0 + $0x50] sm:$0xff]
  %v68 = vld [vmem:[%s0 + $0x58] sm:$0xff]
  %v69 = vld [vmem:[%s0 + $0x60] sm:$0xff]
  %v70 = vld [vmem:[%s0 + $0x68] sm:$0xff]
  %v71 = vld [vmem:[%s0 + $0x70] sm:$0xff]
  %v72 = vld [vmem:[%s0 + $0x78] sm:$0xff]
  %v73 = vld [vmem:[%s0 + $0x80] sm:$0xff]
  %v74 = vld [vmem:[%s0 + $0x88] sm:$0xff]
  %v75 = vld [vmem:[%s0 + $0x90] sm:$0xff]
  %v76 = vld [vmem:[%s0 + $0x98] sm:$0xff]
  %v77 = vld [vmem:[%s0 + $0xa0] sm:$0xff]
  %v78 = vld [vmem:[%s0 + $0xa8] sm:$0xff]
  %v79 = vld [vmem:[%s0 + $0xb0] sm:$0xff]
  %v80 = vld [vmem:[%s0 + $0xb8] sm:$0xff]
  %v81 = vpack.c.bf16 %v58, %v57
  %v82 = vpack.c.bf16 %v60, %v59
  %v83 = vpack.c.bf16 %v62, %v61
  %v84 = vpack.c.bf16 %v64, %v63
  %v85 = vpack.c.bf16 %v66, %v65
  %v86 = vpack.c.bf16 %v68, %v67
  %v87 = vpack.c.bf16 %v70, %v69
  %v88 = vpack.c.bf16 %v72, %v71
  %v89 = vpack.c.bf16 %v74, %v73
  %v90 = vpack.c.bf16 %v76, %v75
  %v91 = vpack.c.bf16 %v78, %v77
  %v92 = vpack.c.bf16 %v80, %v79
  %v93 = vld [vmem:[%s2] sm:$0xf]
  %v94 = vld [vmem:[%s2 + $0x4] sm:$0xf]
  %v95 = vld [vmem:[%s2 + $0x8] sm:$0xf]
  %v96 = vld [vmem:[%s2 + $0xc] sm:$0xf]
  %v97 = vld [vmem:[%s2 + $0x10] sm:$0xf]
  %v98 = vld [vmem:[%s2 + $0x14] sm:$0xf]
  %v99 = vld [vmem:[%s1] sm:$0xff]
  %v100 = vld [vmem:[%s1 + $0x8] sm:$0xff]
  %v101 = vld [vmem:[%s1 + $0x10] sm:$0xff]
  %v102 = vld [vmem:[%s1 + $0x18] sm:$0xff]
  %v103 = vld [vmem:[%s1 + $0x20] sm:$0xff]
  %v104 = vld [vmem:[%s1 + $0x28] sm:$0xff]
  %v105 = vld [vmem:[%s1 + $0x30] sm:$0xff]
  %v106 = vld [vmem:[%s1 + $0x38] sm:$0xff]
  %v107 = vld [vmem:[%s1 + $0x40] sm:$0xff]
  %v108 = vld [vmem:[%s1 + $0x48] sm:$0xff]
  %v109 = vld [vmem:[%s1 + $0x50] sm:$0xff]
  %v110 = vld [vmem:[%s1 + $0x58] sm:$0xff]
  %v111 = vld [vmem:[%s1 + $0x60] sm:$0xff]
  %v112 = vld [vmem:[%s1 + $0x68] sm:$0xff]
  %v113 = vld [vmem:[%s1 + $0x70] sm:$0xff]
  %v114 = vld [vmem:[%s1 + $0x78] sm:$0xff]
  %v115 = vld [vmem:[%s1 + $0x80] sm:$0xff]
  %v116 = vld [vmem:[%s1 + $0x88] sm:$0xff]
  %v117 = vld [vmem:[%s1 + $0x90] sm:$0xff]
  %v118 = vld [vmem:[%s1 + $0x98] sm:$0xff]
  %v119 = vld [vmem:[%s1 + $0xa0] sm:$0xff]
  %v120 = vld [vmem:[%s1 + $0xa8] sm:$0xff]
  %v121 = vld [vmem:[%s1 + $0xb0] sm:$0xff]
  %v122 = vld [vmem:[%s1 + $0xb8] sm:$0xff]
  %v129 = vunpack.c.l.b16 %v93
  %v130 = vunpack.c.l.b16 %v94
  %v131 = vunpack.c.l.b16 %v95
  %v132 = vunpack.c.l.b16 %v96
  %v133 = vunpack.c.l.b16 %v97
  %v134 = vunpack.c.l.b16 %v98
  %v135 = vpack.c.b16 %v130, %v129
  %v136 = vpack.c.b16 %v132, %v131
  %v137 = vpack.c.b16 %v134, %v133
  %vm141 = vcmask 392192
  %v143 = vsel %vm141, %v81, 0
  %v146 = vsel %vm141, %v82, 0
  %v149 = vsel %vm141, %v83, 0
  %v152 = vsel %vm141, %v84, 0
  %v155 = vsel %vm141, %v85, 0
  %v158 = vsel %vm141, %v86, 0
  %v161 = vsel %vm141, %v87, 0
  %v164 = vsel %vm141, %v88, 0
  %v167 = vsel %vm141, %v89, 0
  %v170 = vsel %vm141, %v90, 0
  %v173 = vsel %vm141, %v91, 0
  %v176 = vsel %vm141, %v92, 0
  %178 = vmatpush.bf16.msra.mxu0 0
  %179 = vmatpush.bf16.msra.mxu0 0
  %180 = vmatpush.bf16.msra.mxu0 0
  %181 = vmatpush.bf16.msra.mxu0 0
  %182 = vmatpush.bf16.msra.mxu0 0
  %183 = vmatpush.bf16.msra.mxu0 %v137
  %184 = vmatpush.bf16.msra.mxu0 %v136
  %185 = vmatpush.bf16.msra.mxu0 %v135
  %186 = vmatmul.bf16.gmra.mxu0 %v143
  %v187 = vpop.f32.mrf.mxu0
  %v188 = vadd.f32 %v99, %v187
  %v189 = vpop.f32.mrf.mxu0
  %v190 = vadd.f32 %v100, %v189
  %191 = vmatmul.bf16.gmra.mxu0 %v146
  %v192 = vpop.f32.mrf.mxu0
  %v193 = vadd.f32 %v101, %v192
  %v194 = vpop.f32.mrf.mxu0
  %v195 = vadd.f32 %v102, %v194
  %196 = vmatmul.bf16.gmra.mxu0 %v149
  %v197 = vpop.f32.mrf.mxu0
  %v198 = vadd.f32 %v103, %v197
  %v199 = vpop.f32.mrf.mxu0
  %v200 = vadd.f32 %v104, %v199
  %201 = vmatmul.bf16.gmra.mxu0 %v152
  %v202 = vpop.f32.mrf.mxu0
  %v203 = vadd.f32 %v105, %v202
  %v204 = vpop.f32.mrf.mxu0
  %v205 = vadd.f32 %v106, %v204
  %206 = vmatmul.bf16.gmra.mxu0 %v155
  %v207 = vpop.f32.mrf.mxu0
  %v208 = vadd.f32 %v107, %v207
  %v209 = vpop.f32.mrf.mxu0
  %v210 = vadd.f32 %v108, %v209
  %211 = vmatmul.bf16.gmra.mxu0 %v158
  %v212 = vpop.f32.mrf.mxu0
  %v213 = vadd.f32 %v109, %v212
  %v214 = vpop.f32.mrf.mxu0
  %v215 = vadd.f32 %v110, %v214
  %216 = vmatmul.bf16.gmra.mxu0 %v161
  %v217 = vpop.f32.mrf.mxu0
  %v218 = vadd.f32 %v111, %v217
  %v219 = vpop.f32.mrf.mxu0
  %v220 = vadd.f32 %v112, %v219
  %221 = vmatmul.bf16.gmra.mxu0 %v164
  %v222 = vpop.f32.mrf.mxu0
  %v223 = vadd.f32 %v113, %v222
  %v224 = vpop.f32.mrf.mxu0
  %v225 = vadd.f32 %v114, %v224
  %226 = vmatmul.bf16.gmra.mxu0 %v167
  %v227 = vpop.f32.mrf.mxu0
  %v228 = vadd.f32 %v115, %v227
  %v229 = vpop.f32.mrf.mxu0
  %v230 = vadd.f32 %v116, %v229
  %231 = vmatmul.bf16.gmra.mxu0 %v170
  %v232 = vpop.f32.mrf.mxu0
  %v233 = vadd.f32 %v117, %v232
  %v234 = vpop.f32.mrf.mxu0
  %v235 = vadd.f32 %v118, %v234
  %236 = vmatmul.bf16.gmra.mxu0 %v173
  %v237 = vpop.f32.mrf.mxu0
  %v238 = vadd.f32 %v119, %v237
  %v239 = vpop.f32.mrf.mxu0
  %v240 = vadd.f32 %v120, %v239
  %241 = vmatmul.bf16.gmra.mxu0 %v176
  %v242 = vpop.f32.mrf.mxu0
  %v243 = vadd.f32 %v121, %v242
  %v244 = vpop.f32.mrf.mxu0
  %v245 = vadd.f32 %v122, %v244
  %246 = vdwg.mxu0
  %vm247 = vcmask 261120
  %248 = vst.msk [vmem:[%s17] sm:$0xff] %vm247, %v188
  %249 = vst.msk [vmem:[%s17 + $0x8] sm:$0xff] %vm247, %v190
  %250 = vst.msk [vmem:[%s17 + $0x10] sm:$0xff] %vm247, %v193
  %251 = vst.msk [vmem:[%s17 + $0x18] sm:$0xff] %vm247, %v195
  %252 = vst.msk [vmem:[%s17 + $0x20] sm:$0xff] %vm247, %v198
  %253 = vst.msk [vmem:[%s17 + $0x28] sm:$0xff] %vm247, %v200
  %254 = vst.msk [vmem:[%s17 + $0x30] sm:$0xff] %vm247, %v203
  %255 = vst.msk [vmem:[%s17 + $0x38] sm:$0xff] %vm247, %v205
  %256 = vst.msk [vmem:[%s17 + $0x40] sm:$0xff] %vm247, %v208
  %257 = vst.msk [vmem:[%s17 + $0x48] sm:$0xff] %vm247, %v210
  %258 = vst.msk [vmem:[%s17 + $0x50] sm:$0xff] %vm247, %v213
  %259 = vst.msk [vmem:[%s17 + $0x58] sm:$0xff] %vm247, %v215
  %260 = vst.msk [vmem:[%s17 + $0x60] sm:$0xff] %vm247, %v218
  %261 = vst.msk [vmem:[%s17 + $0x68] sm:$0xff] %vm247, %v220
  %262 = vst.msk [vmem:[%s17 + $0x70] sm:$0xff] %vm247, %v223
  %263 = vst.msk [vmem:[%s17 + $0x78] sm:$0xff] %vm247, %v225
  %264 = vst.msk [vmem:[%s17 + $0x80] sm:$0xff] %vm247, %v228
  %265 = vst.msk [vmem:[%s17 + $0x88] sm:$0xff] %vm247, %v230
  %266 = vst.msk [vmem:[%s17 + $0x90] sm:$0xff] %vm247, %v233
  %267 = vst.msk [vmem:[%s17 + $0x98] sm:$0xff] %vm247, %v235
  %268 = vst.msk [vmem:[%s17 + $0xa0] sm:$0xff] %vm247, %v238
  %269 = vst.msk [vmem:[%s17 + $0xa8] sm:$0xff] %vm247, %v240
  %270 = vst.msk [vmem:[%s17 + $0xb0] sm:$0xff] %vm247, %v243
  %271 = vst.msk [vmem:[%s17 + $0xb8] sm:$0xff] %vm247, %v245
  %v272 = vld [vmem:[%s17] sm:$0xff]
  %v273 = vld [vmem:[%s17 + $0x8] sm:$0xff]
  %v274 = vld [vmem:[%s17 + $0x10] sm:$0xff]
  %v275 = vld [vmem:[%s17 + $0x18] sm:$0xff]
  %v276 = vld [vmem:[%s17 + $0x20] sm:$0xff]
  %v277 = vld [vmem:[%s17 + $0x28] sm:$0xff]
  %v278 = vld [vmem:[%s17 + $0x30] sm:$0xff]
  %v279 = vld [vmem:[%s17 + $0x38] sm:$0xff]
  %v280 = vld [vmem:[%s17 + $0x40] sm:$0xff]
  %v281 = vld [vmem:[%s17 + $0x48] sm:$0xff]
  %v282 = vld [vmem:[%s17 + $0x50] sm:$0xff]
  %v283 = vld [vmem:[%s17 + $0x58] sm:$0xff]
  %v284 = vld [vmem:[%s17 + $0x60] sm:$0xff]
  %v285 = vld [vmem:[%s17 + $0x68] sm:$0xff]
  %v286 = vld [vmem:[%s17 + $0x70] sm:$0xff]
  %v287 = vld [vmem:[%s17 + $0x78] sm:$0xff]
  %v288 = vld [vmem:[%s17 + $0x80] sm:$0xff]
  %v289 = vld [vmem:[%s17 + $0x88] sm:$0xff]
  %v290 = vld [vmem:[%s17 + $0x90] sm:$0xff]
  %v291 = vld [vmem:[%s17 + $0x98] sm:$0xff]
  %v292 = vld [vmem:[%s17 + $0xa0] sm:$0xff]
  %v293 = vld [vmem:[%s17 + $0xa8] sm:$0xff]
  %v294 = vld [vmem:[%s17 + $0xb0] sm:$0xff]
  %v295 = vld [vmem:[%s17 + $0xb8] sm:$0xff]
  %v296 = vld [vmem:[%s3] sm:$0x1]
  %v297 = vld [vmem:[%s4] sm:$0x1]
  %v298 = vsel %vm247, %v272, 0.0
  %299 = vadd.xlane.f32.xlu0 %v298
  %v300 = vpop.xlane.xlu0 %299
  %v301 = vsel %vm247, %v273, 0.0
  %302 = vadd.xlane.f32.xlu0 %v301
  %v303 = vpop.xlane.xlu0 %302
  %v304 = vsel %vm247, %v274, 0.0
  %305 = vadd.xlane.f32.xlu0 %v304
  %v306 = vpop.xlane.xlu0 %305
  %v307 = vsel %vm247, %v275, 0.0
  %308 = vadd.xlane.f32.xlu0 %v307
  %v309 = vpop.xlane.xlu0 %308
  %v310 = vsel %vm247, %v276, 0.0
  %311 = vadd.xlane.f32.xlu0 %v310
  %v312 = vpop.xlane.xlu0 %311
  %v313 = vsel %vm247, %v277, 0.0
  %314 = vadd.xlane.f32.xlu0 %v313
  %v315 = vpop.xlane.xlu0 %314
  %v316 = vsel %vm247, %v278, 0.0
  %317 = vadd.xlane.f32.xlu0 %v316
  %v318 = vpop.xlane.xlu0 %317
  %v319 = vsel %vm247, %v279, 0.0
  %320 = vadd.xlane.f32.xlu0 %v319
  %v321 = vpop.xlane.xlu0 %320
  %v322 = vsel %vm247, %v280, 0.0
  %323 = vadd.xlane.f32.xlu0 %v322
  %v324 = vpop.xlane.xlu0 %323
  %v325 = vsel %vm247, %v281, 0.0
  %326 = vadd.xlane.f32.xlu0 %v325
  %v327 = vpop.xlane.xlu0 %326
  %v328 = vsel %vm247, %v282, 0.0
  %329 = vadd.xlane.f32.xlu0 %v328
  %v330 = vpop.xlane.xlu0 %329
  %v331 = vsel %vm247, %v283, 0.0
  %332 = vadd.xlane.f32.xlu0 %v331
  %v333 = vpop.xlane.xlu0 %332
  %v334 = vsel %vm247, %v284, 0.0
  %335 = vadd.xlane.f32.xlu0 %v334
  %v336 = vpop.xlane.xlu0 %335
  %v337 = vsel %vm247, %v285, 0.0
  %338 = vadd.xlane.f32.xlu0 %v337
  %v339 = vpop.xlane.xlu0 %338
  %v340 = vsel %vm247, %v286, 0.0
  %341 = vadd.xlane.f32.xlu0 %v340
  %v342 = vpop.xlane.xlu0 %341
  %v343 = vsel %vm247, %v287, 0.0
  %344 = vadd.xlane.f32.xlu0 %v343
  %v345 = vpop.xlane.xlu0 %344
  %v346 = vsel %vm247, %v288, 0.0
  %347 = vadd.xlane.f32.xlu0 %v346
  %v348 = vpop.xlane.xlu0 %347
  %v349 = vsel %vm247, %v289, 0.0
  %350 = vadd.xlane.f32.xlu0 %v349
  %v351 = vpop.xlane.xlu0 %350
  %v352 = vsel %vm247, %v290, 0.0
  %353 = vadd.xlane.f32.xlu0 %v352
  %v354 = vpop.xlane.xlu0 %353
  %v355 = vsel %vm247, %v291, 0.0
  %356 = vadd.xlane.f32.xlu0 %v355
  %v357 = vpop.xlane.xlu0 %356
  %v358 = vsel %vm247, %v292, 0.0
  %359 = vadd.xlane.f32.xlu0 %v358
  %v360 = vpop.xlane.xlu0 %359
  %v361 = vsel %vm247, %v293, 0.0
  %362 = vadd.xlane.f32.xlu0 %v361
  %v363 = vpop.xlane.xlu0 %362
  %v364 = vsel %vm247, %v294, 0.0
  %365 = vadd.xlane.f32.xlu0 %v364
  %v366 = vpop.xlane.xlu0 %365
  %v367 = vsel %vm247, %v295, 0.0
  %368 = vadd.xlane.f32.xlu0 %v367
  %v369 = vpop.xlane.xlu0 %368
  %v370 = vrcp.pop 32.0
  %v371 = vmul.f32 32.0, %v370
  %v372 = vsub.f32 1.0, %v371
  %v373 = vmul.f32 %v370, %v372
  %v374 = vadd.f32 %v370, %v373
  %vm375 = vweird.f32 %v370
  %v376 = vsel %vm375, %v370, %v374
  %v377 = vmul.f32 %v300, %v376
  %v378 = vmul.f32 %v303, %v376
  %v379 = vmul.f32 %v306, %v376
  %v380 = vmul.f32 %v309, %v376
  %v381 = vmul.f32 %v312, %v376
  %v382 = vmul.f32 %v315, %v376
  %v383 = vmul.f32 %v318, %v376
  %v384 = vmul.f32 %v321, %v376
  %v385 = vmul.f32 %v324, %v376
  %v386 = vmul.f32 %v327, %v376
  %v387 = vmul.f32 %v330, %v376
  %v388 = vmul.f32 %v333, %v376
  %v389 = vmul.f32 %v336, %v376
  %v390 = vmul.f32 %v339, %v376
  %v391 = vmul.f32 %v342, %v376
  %v392 = vmul.f32 %v345, %v376
  %v393 = vmul.f32 %v348, %v376
  %v394 = vmul.f32 %v351, %v376
  %v395 = vmul.f32 %v354, %v376
  %v396 = vmul.f32 %v357, %v376
  %v397 = vmul.f32 %v360, %v376
  %v398 = vmul.f32 %v363, %v376
  %v399 = vmul.f32 %v366, %v376
  %v400 = vmul.f32 %v369, %v376
  %v401 = vmul.f32 %v272, %v272
  %v402 = vmul.f32 %v273, %v273
  %v403 = vmul.f32 %v274, %v274
  %v404 = vmul.f32 %v275, %v275
  %v405 = vmul.f32 %v276, %v276
  %v406 = vmul.f32 %v277, %v277
  %v407 = vmul.f32 %v278, %v278
  %v408 = vmul.f32 %v279, %v279
  %v409 = vmul.f32 %v280, %v280
  %v410 = vmul.f32 %v281, %v281
  %v411 = vmul.f32 %v282, %v282
  %v412 = vmul.f32 %v283, %v283
  %v413 = vmul.f32 %v284, %v284
  %v414 = vmul.f32 %v285, %v285
  %v415 = vmul.f32 %v286, %v286
  %v416 = vmul.f32 %v287, %v287
  %v417 = vmul.f32 %v288, %v288
  %v418 = vmul.f32 %v289, %v289
  %v419 = vmul.f32 %v290, %v290
  %v420 = vmul.f32 %v291, %v291
  %v421 = vmul.f32 %v292, %v292
  %v422 = vmul.f32 %v293, %v293
  %v423 = vmul.f32 %v294, %v294
  %v424 = vmul.f32 %v295, %v295
  %v425 = vsel %vm247, %v401, 0.0
  %426 = vadd.xlane.f32.xlu0 %v425
  %v427 = vpop.xlane.xlu0 %426
  %v428 = vsel %vm247, %v402, 0.0
  %429 = vadd.xlane.f32.xlu0 %v428
  %v430 = vpop.xlane.xlu0 %429
  %v431 = vsel %vm247, %v403, 0.0
  %432 = vadd.xlane.f32.xlu0 %v431
  %v433 = vpop.xlane.xlu0 %432
  %v434 = vsel %vm247, %v404, 0.0
  %435 = vadd.xlane.f32.xlu0 %v434
  %v436 = vpop.xlane.xlu0 %435
  %v437 = vsel %vm247, %v405, 0.0
  %438 = vadd.xlane.f32.xlu0 %v437
  %v439 = vpop.xlane.xlu0 %438
  %v440 = vsel %vm247, %v406, 0.0
  %441 = vadd.xlane.f32.xlu0 %v440
  %v442 = vpop.xlane.xlu0 %441
  %v443 = vsel %vm247, %v407, 0.0
  %444 = vadd.xlane.f32.xlu0 %v443
  %v445 = vpop.xlane.xlu0 %444
  %v446 = vsel %vm247, %v408, 0.0
  %447 = vadd.xlane.f32.xlu0 %v446
  %v448 = vpop.xlane.xlu0 %447
  %v449 = vsel %vm247, %v409, 0.0
  %450 = vadd.xlane.f32.xlu0 %v449
  %v451 = vpop.xlane.xlu0 %450
  %v452 = vsel %vm247, %v410, 0.0
  %453 = vadd.xlane.f32.xlu0 %v452
  %v454 = vpop.xlane.xlu0 %453
  %v455 = vsel %vm247, %v411, 0.0
  %456 = vadd.xlane.f32.xlu0 %v455
  %v457 = vpop.xlane.xlu0 %456
  %v458 = vsel %vm247, %v412, 0.0
  %459 = vadd.xlane.f32.xlu0 %v458
  %v460 = vpop.xlane.xlu0 %459
  %v461 = vsel %vm247, %v413, 0.0
  %462 = vadd.xlane.f32.xlu0 %v461
  %v463 = vpop.xlane.xlu0 %462
  %v464 = vsel %vm247, %v414, 0.0
  %465 = vadd.xlane.f32.xlu0 %v464
  %v466 = vpop.xlane.xlu0 %465
  %v467 = vsel %vm247, %v415, 0.0
  %468 = vadd.xlane.f32.xlu0 %v467
  %v469 = vpop.xlane.xlu0 %468
  %v470 = vsel %vm247, %v416, 0.0
  %471 = vadd.xlane.f32.xlu0 %v470
  %v472 = vpop.xlane.xlu0 %471
  %v473 = vsel %vm247, %v417, 0.0
  %474 = vadd.xlane.f32.xlu0 %v473
  %v475 = vpop.xlane.xlu0 %474
  %v476 = vsel %vm247, %v418, 0.0
  %477 = vadd.xlane.f32.xlu0 %v476
  %v478 = vpop.xlane.xlu0 %477
  %v479 = vsel %vm247, %v419, 0.0
  %480 = vadd.xlane.f32.xlu0 %v479
  %v481 = vpop.xlane.xlu0 %480
  %v482 = vsel %vm247, %v420, 0.0
  %483 = vadd.xlane.f32.xlu0 %v482
  %v484 = vpop.xlane.xlu0 %483
  %v485 = vsel %vm247, %v421, 0.0
  %486 = vadd.xlane.f32.xlu0 %v485
  %v487 = vpop.xlane.xlu0 %486
  %v488 = vsel %vm247, %v422, 0.0
  %489 = vadd.xlane.f32.xlu0 %v488
  %v490 = vpop.xlane.xlu0 %489
  %v491 = vsel %vm247, %v423, 0.0
  %492 = vadd.xlane.f32.xlu0 %v491
  %v493 = vpop.xlane.xlu0 %492
  %v494 = vsel %vm247, %v424, 0.0
  %495 = vadd.xlane.f32.xlu0 %v494
  %v496 = vpop.xlane.xlu0 %495
  %v497 = vmul.f32 %v427, %v376
  %v498 = vmul.f32 %v430, %v376
  %v499 = vmul.f32 %v433, %v376
  %v500 = vmul.f32 %v436, %v376
  %v501 = vmul.f32 %v439, %v376
  %v502 = vmul.f32 %v442, %v376
  %v503 = vmul.f32 %v445, %v376
  %v504 = vmul.f32 %v448, %v376
  %v505 = vmul.f32 %v451, %v376
  %v506 = vmul.f32 %v454, %v376
  %v507 = vmul.f32 %v457, %v376
  %v508 = vmul.f32 %v460, %v376
  %v509 = vmul.f32 %v463, %v376
  %v510 = vmul.f32 %v466, %v376
  %v511 = vmul.f32 %v469, %v376
  %v512 = vmul.f32 %v472, %v376
  %v513 = vmul.f32 %v475, %v376
  %v514 = vmul.f32 %v478, %v376
  %v515 = vmul.f32 %v481, %v376
  %v516 = vmul.f32 %v484, %v376
  %v517 = vmul.f32 %v487, %v376
  %v518 = vmul.f32 %v490, %v376
  %v519 = vmul.f32 %v493, %v376
  %v520 = vmul.f32 %v496, %v376
  %v521 = vmul.f32 %v377, %v377
  %v522 = vmul.f32 %v378, %v378
  %v523 = vmul.f32 %v379, %v379
  %v524 = vmul.f32 %v380, %v380
  %v525 = vmul.f32 %v381, %v381
  %v526 = vmul.f32 %v382, %v382
  %v527 = vmul.f32 %v383, %v383
  %v528 = vmul.f32 %v384, %v384
  %v529 = vmul.f32 %v385, %v385
  %v530 = vmul.f32 %v386, %v386
  %v531 = vmul.f32 %v387, %v387
  %v532 = vmul.f32 %v388, %v388
  %v533 = vmul.f32 %v389, %v389
  %v534 = vmul.f32 %v390, %v390
  %v535 = vmul.f32 %v391, %v391
  %v536 = vmul.f32 %v392, %v392
  %v537 = vmul.f32 %v393, %v393
  %v538 = vmul.f32 %v394, %v394
  %v539 = vmul.f32 %v395, %v395
  %v540 = vmul.f32 %v396, %v396
  %v541 = vmul.f32 %v397, %v397
  %v542 = vmul.f32 %v398, %v398
  %v543 = vmul.f32 %v399, %v399
  %v544 = vmul.f32 %v400, %v400
  %v545 = vsub.f32 %v497, %v521
  %v546 = vsub.f32 %v498, %v522
  %v547 = vsub.f32 %v499, %v523
  %v548 = vsub.f32 %v500, %v524
  %v549 = vsub.f32 %v501, %v525
  %v550 = vsub.f32 %v502, %v526
  %v551 = vsub.f32 %v503, %v527
  %v552 = vsub.f32 %v504, %v528
  %v553 = vsub.f32 %v505, %v529
  %v554 = vsub.f32 %v506, %v530
  %v555 = vsub.f32 %v507, %v531
  %v556 = vsub.f32 %v508, %v532
  %v557 = vsub.f32 %v509, %v533
  %v558 = vsub.f32 %v510, %v534
  %v559 = vsub.f32 %v511, %v535
  %v560 = vsub.f32 %v512, %v536
  %v561 = vsub.f32 %v513, %v537
  %v562 = vsub.f32 %v514, %v538
  %v563 = vsub.f32 %v515, %v539
  %v564 = vsub.f32 %v516, %v540
  %v565 = vsub.f32 %v517, %v541
  %v566 = vsub.f32 %v518, %v542
  %v567 = vsub.f32 %v519, %v543
  %v568 = vsub.f32 %v520, %v544
  %v569 = vsub.f32 %v272, %v377
  %v570 = vsub.f32 %v273, %v378
  %v571 = vsub.f32 %v274, %v379
  %v572 = vsub.f32 %v275, %v380
  %v573 = vsub.f32 %v276, %v381
  %v574 = vsub.f32 %v277, %v382
  %v575 = vsub.f32 %v278, %v383
  %v576 = vsub.f32 %v279, %v384
  %v577 = vsub.f32 %v280, %v385
  %v578 = vsub.f32 %v281, %v386
  %v579 = vsub.f32 %v282, %v387
  %v580 = vsub.f32 %v283, %v388
  %v581 = vsub.f32 %v284, %v389
  %v582 = vsub.f32 %v285, %v390
  %v583 = vsub.f32 %v286, %v391
  %v584 = vsub.f32 %v287, %v392
  %v585 = vsub.f32 %v288, %v393
  %v586 = vsub.f32 %v289, %v394
  %v587 = vsub.f32 %v290, %v395
  %v588 = vsub.f32 %v291, %v396
  %v589 = vsub.f32 %v292, %v397
  %v590 = vsub.f32 %v293, %v398
  %v591 = vsub.f32 %v294, %v399
  %v592 = vsub.f32 %v295, %v400
  %v593 = vadd.f32 %v545, 1e-05
  %v594 = vadd.f32 %v546, 1e-05
  %v595 = vadd.f32 %v547, 1e-05
  %v596 = vadd.f32 %v548, 1e-05
  %v597 = vadd.f32 %v549, 1e-05
  %v598 = vadd.f32 %v550, 1e-05
  %v599 = vadd.f32 %v551, 1e-05
  %v600 = vadd.f32 %v552, 1e-05
  %v601 = vadd.f32 %v553, 1e-05
  %v602 = vadd.f32 %v554, 1e-05
  %v603 = vadd.f32 %v555, 1e-05
  %v604 = vadd.f32 %v556, 1e-05
  %v605 = vadd.f32 %v557, 1e-05
  %v606 = vadd.f32 %v558, 1e-05
  %v607 = vadd.f32 %v559, 1e-05
  %v608 = vadd.f32 %v560, 1e-05
  %v609 = vadd.f32 %v561, 1e-05
  %v610 = vadd.f32 %v562, 1e-05
  %v611 = vadd.f32 %v563, 1e-05
  %v612 = vadd.f32 %v564, 1e-05
  %v613 = vadd.f32 %v565, 1e-05
  %v614 = vadd.f32 %v566, 1e-05
  %v615 = vadd.f32 %v567, 1e-05
  %v616 = vadd.f32 %v568, 1e-05
  %v617 = vrsqrt.pop %v593
  %v618 = vmul.f32 %v617, %v593
  %v619 = vmul.f32 %v618, %v617
  %v620 = vmul.f32 0.5, %v619
  %v621 = vsub.f32 1.5, %v620
  %v622 = vmul.f32 %v617, %v621
  %vm623 = vweird.f32 %v593
  %vm624 = vweird.f32 %v617
  %vm625 = vmor %vm623, %vm624
  %v626 = vsel %vm625, %v617, %v622
  %v627 = vrsqrt.pop %v594
  %v628 = vmul.f32 %v627, %v594
  %v629 = vmul.f32 %v628, %v627
  %v630 = vmul.f32 0.5, %v629
  %v631 = vsub.f32 1.5, %v630
  %v632 = vmul.f32 %v627, %v631
  %vm633 = vweird.f32 %v594
  %vm634 = vweird.f32 %v627
  %vm635 = vmor %vm633, %vm634
  %v636 = vsel %vm635, %v627, %v632
  %v637 = vrsqrt.pop %v595
  %v638 = vmul.f32 %v637, %v595
  %v639 = vmul.f32 %v638, %v637
  %v640 = vmul.f32 0.5, %v639
  %v641 = vsub.f32 1.5, %v640
  %v642 = vmul.f32 %v637, %v641
  %vm643 = vweird.f32 %v595
  %vm644 = vweird.f32 %v637
  %vm645 = vmor %vm643, %vm644
  %v646 = vsel %vm645, %v637, %v642
  %v647 = vrsqrt.pop %v596
  %v648 = vmul.f32 %v647, %v596
  %v649 = vmul.f32 %v648, %v647
  %v650 = vmul.f32 0.5, %v649
  %v651 = vsub.f32 1.5, %v650
  %v652 = vmul.f32 %v647, %v651
  %vm653 = vweird.f32 %v596
  %vm654 = vweird.f32 %v647
  %vm655 = vmor %vm653, %vm654
  %v656 = vsel %vm655, %v647, %v652
  %v657 = vrsqrt.pop %v597
  %v658 = vmul.f32 %v657, %v597
  %v659 = vmul.f32 %v658, %v657
  %v660 = vmul.f32 0.5, %v659
  %v661 = vsub.f32 1.5, %v660
  %v662 = vmul.f32 %v657, %v661
  %vm663 = vweird.f32 %v597
  %vm664 = vweird.f32 %v657
  %vm665 = vmor %vm663, %vm664
  %v666 = vsel %vm665, %v657, %v662
  %v667 = vrsqrt.pop %v598
  %v668 = vmul.f32 %v667, %v598
  %v669 = vmul.f32 %v668, %v667
  %v670 = vmul.f32 0.5, %v669
  %v671 = vsub.f32 1.5, %v670
  %v672 = vmul.f32 %v667, %v671
  %vm673 = vweird.f32 %v598
  %vm674 = vweird.f32 %v667
  %vm675 = vmor %vm673, %vm674
  %v676 = vsel %vm675, %v667, %v672
  %v677 = vrsqrt.pop %v599
  %v678 = vmul.f32 %v677, %v599
  %v679 = vmul.f32 %v678, %v677
  %v680 = vmul.f32 0.5, %v679
  %v681 = vsub.f32 1.5, %v680
  %v682 = vmul.f32 %v677, %v681
  %vm683 = vweird.f32 %v599
  %vm684 = vweird.f32 %v677
  %vm685 = vmor %vm683, %vm684
  %v686 = vsel %vm685, %v677, %v682
  %v687 = vrsqrt.pop %v600
  %v688 = vmul.f32 %v687, %v600
  %v689 = vmul.f32 %v688, %v687
  %v690 = vmul.f32 0.5, %v689
  %v691 = vsub.f32 1.5, %v690
  %v692 = vmul.f32 %v687, %v691
  %vm693 = vweird.f32 %v600
  %vm694 = vweird.f32 %v687
  %vm695 = vmor %vm693, %vm694
  %v696 = vsel %vm695, %v687, %v692
  %v697 = vrsqrt.pop %v601
  %v698 = vmul.f32 %v697, %v601
  %v699 = vmul.f32 %v698, %v697
  %v700 = vmul.f32 0.5, %v699
  %v701 = vsub.f32 1.5, %v700
  %v702 = vmul.f32 %v697, %v701
  %vm703 = vweird.f32 %v601
  %vm704 = vweird.f32 %v697
  %vm705 = vmor %vm703, %vm704
  %v706 = vsel %vm705, %v697, %v702
  %v707 = vrsqrt.pop %v602
  %v708 = vmul.f32 %v707, %v602
  %v709 = vmul.f32 %v708, %v707
  %v710 = vmul.f32 0.5, %v709
  %v711 = vsub.f32 1.5, %v710
  %v712 = vmul.f32 %v707, %v711
  %vm713 = vweird.f32 %v602
  %vm714 = vweird.f32 %v707
  %vm715 = vmor %vm713, %vm714
  %v716 = vsel %vm715, %v707, %v712
  %v717 = vrsqrt.pop %v603
  %v718 = vmul.f32 %v717, %v603
  %v719 = vmul.f32 %v718, %v717
  %v720 = vmul.f32 0.5, %v719
  %v721 = vsub.f32 1.5, %v720
  %v722 = vmul.f32 %v717, %v721
  %vm723 = vweird.f32 %v603
  %vm724 = vweird.f32 %v717
  %vm725 = vmor %vm723, %vm724
  %v726 = vsel %vm725, %v717, %v722
  %v727 = vrsqrt.pop %v604
  %v728 = vmul.f32 %v727, %v604
  %v729 = vmul.f32 %v728, %v727
  %v730 = vmul.f32 0.5, %v729
  %v731 = vsub.f32 1.5, %v730
  %v732 = vmul.f32 %v727, %v731
  %vm733 = vweird.f32 %v604
  %vm734 = vweird.f32 %v727
  %vm735 = vmor %vm733, %vm734
  %v736 = vsel %vm735, %v727, %v732
  %v737 = vrsqrt.pop %v605
  %v738 = vmul.f32 %v737, %v605
  %v739 = vmul.f32 %v738, %v737
  %v740 = vmul.f32 0.5, %v739
  %v741 = vsub.f32 1.5, %v740
  %v742 = vmul.f32 %v737, %v741
  %vm743 = vweird.f32 %v605
  %vm744 = vweird.f32 %v737
  %vm745 = vmor %vm743, %vm744
  %v746 = vsel %vm745, %v737, %v742
  %v747 = vrsqrt.pop %v606
  %v748 = vmul.f32 %v747, %v606
  %v749 = vmul.f32 %v748, %v747
  %v750 = vmul.f32 0.5, %v749
  %v751 = vsub.f32 1.5, %v750
  %v752 = vmul.f32 %v747, %v751
  %vm753 = vweird.f32 %v606
  %vm754 = vweird.f32 %v747
  %vm755 = vmor %vm753, %vm754
  %v756 = vsel %vm755, %v747, %v752
  %v757 = vrsqrt.pop %v607
  %v758 = vmul.f32 %v757, %v607
  %v759 = vmul.f32 %v758, %v757
  %v760 = vmul.f32 0.5, %v759
  %v761 = vsub.f32 1.5, %v760
  %v762 = vmul.f32 %v757, %v761
  %vm763 = vweird.f32 %v607
  %vm764 = vweird.f32 %v757
  %vm765 = vmor %vm763, %vm764
  %v766 = vsel %vm765, %v757, %v762
  %v767 = vrsqrt.pop %v608
  %v768 = vmul.f32 %v767, %v608
  %v769 = vmul.f32 %v768, %v767
  %v770 = vmul.f32 0.5, %v769
  %v771 = vsub.f32 1.5, %v770
  %v772 = vmul.f32 %v767, %v771
  %vm773 = vweird.f32 %v608
  %vm774 = vweird.f32 %v767
  %vm775 = vmor %vm773, %vm774
  %v776 = vsel %vm775, %v767, %v772
  %v777 = vrsqrt.pop %v609
  %v778 = vmul.f32 %v777, %v609
  %v779 = vmul.f32 %v778, %v777
  %v780 = vmul.f32 0.5, %v779
  %v781 = vsub.f32 1.5, %v780
  %v782 = vmul.f32 %v777, %v781
  %vm783 = vweird.f32 %v609
  %vm784 = vweird.f32 %v777
  %vm785 = vmor %vm783, %vm784
  %v786 = vsel %vm785, %v777, %v782
  %v787 = vrsqrt.pop %v610
  %v788 = vmul.f32 %v787, %v610
  %v789 = vmul.f32 %v788, %v787
  %v790 = vmul.f32 0.5, %v789
  %v791 = vsub.f32 1.5, %v790
  %v792 = vmul.f32 %v787, %v791
  %vm793 = vweird.f32 %v610
  %vm794 = vweird.f32 %v787
  %vm795 = vmor %vm793, %vm794
  %v796 = vsel %vm795, %v787, %v792
  %v797 = vrsqrt.pop %v611
  %v798 = vmul.f32 %v797, %v611
  %v799 = vmul.f32 %v798, %v797
  %v800 = vmul.f32 0.5, %v799
  %v801 = vsub.f32 1.5, %v800
  %v802 = vmul.f32 %v797, %v801
  %vm803 = vweird.f32 %v611
  %vm804 = vweird.f32 %v797
  %vm805 = vmor %vm803, %vm804
  %v806 = vsel %vm805, %v797, %v802
  %v807 = vrsqrt.pop %v612
  %v808 = vmul.f32 %v807, %v612
  %v809 = vmul.f32 %v808, %v807
  %v810 = vmul.f32 0.5, %v809
  %v811 = vsub.f32 1.5, %v810
  %v812 = vmul.f32 %v807, %v811
  %vm813 = vweird.f32 %v612
  %vm814 = vweird.f32 %v807
  %vm815 = vmor %vm813, %vm814
  %v816 = vsel %vm815, %v807, %v812
  %v817 = vrsqrt.pop %v613
  %v818 = vmul.f32 %v817, %v613
  %v819 = vmul.f32 %v818, %v817
  %v820 = vmul.f32 0.5, %v819
  %v821 = vsub.f32 1.5, %v820
  %v822 = vmul.f32 %v817, %v821
  %vm823 = vweird.f32 %v613
  %vm824 = vweird.f32 %v817
  %vm825 = vmor %vm823, %vm824
  %v826 = vsel %vm825, %v817, %v822
  %v827 = vrsqrt.pop %v614
  %v828 = vmul.f32 %v827, %v614
  %v829 = vmul.f32 %v828, %v827
  %v830 = vmul.f32 0.5, %v829
  %v831 = vsub.f32 1.5, %v830
  %v832 = vmul.f32 %v827, %v831
  %vm833 = vweird.f32 %v614
  %vm834 = vweird.f32 %v827
  %vm835 = vmor %vm833, %vm834
  %v836 = vsel %vm835, %v827, %v832
  %v837 = vrsqrt.pop %v615
  %v838 = vmul.f32 %v837, %v615
  %v839 = vmul.f32 %v838, %v837
  %v840 = vmul.f32 0.5, %v839
  %v841 = vsub.f32 1.5, %v840
  %v842 = vmul.f32 %v837, %v841
  %vm843 = vweird.f32 %v615
  %vm844 = vweird.f32 %v837
  %vm845 = vmor %vm843, %vm844
  %v846 = vsel %vm845, %v837, %v842
  %v847 = vrsqrt.pop %v616
  %v848 = vmul.f32 %v847, %v616
  %v849 = vmul.f32 %v848, %v847
  %v850 = vmul.f32 0.5, %v849
  %v851 = vsub.f32 1.5, %v850
  %v852 = vmul.f32 %v847, %v851
  %vm853 = vweird.f32 %v616
  %vm854 = vweird.f32 %v847
  %vm855 = vmor %vm853, %vm854
  %v856 = vsel %vm855, %v847, %v852
  %v857 = vmul.f32 %v569, %v626
  %v858 = vmul.f32 %v570, %v636
  %v859 = vmul.f32 %v571, %v646
  %v860 = vmul.f32 %v572, %v656
  %v861 = vmul.f32 %v573, %v666
  %v862 = vmul.f32 %v574, %v676
  %v863 = vmul.f32 %v575, %v686
  %v864 = vmul.f32 %v576, %v696
  %v865 = vmul.f32 %v577, %v706
  %v866 = vmul.f32 %v578, %v716
  %v867 = vmul.f32 %v579, %v726
  %v868 = vmul.f32 %v580, %v736
  %v869 = vmul.f32 %v581, %v746
  %v870 = vmul.f32 %v582, %v756
  %v871 = vmul.f32 %v583, %v766
  %v872 = vmul.f32 %v584, %v776
  %v873 = vmul.f32 %v585, %v786
  %v874 = vmul.f32 %v586, %v796
  %v875 = vmul.f32 %v587, %v806
  %v876 = vmul.f32 %v588, %v816
  %v877 = vmul.f32 %v589, %v826
  %v878 = vmul.f32 %v590, %v836
  %v879 = vmul.f32 %v591, %v846
  %v880 = vmul.f32 %v592, %v856
  %v882 = vperm.slane %v296, 0
  %v884 = vmul.f32 %v857, %v882
  %v885 = vmul.f32 %v858, %v882
  %v886 = vmul.f32 %v859, %v882
  %v887 = vmul.f32 %v860, %v882
  %v888 = vmul.f32 %v861, %v882
  %v889 = vmul.f32 %v862, %v882
  %v890 = vmul.f32 %v863, %v882
  %v891 = vmul.f32 %v864, %v882
  %v892 = vmul.f32 %v865, %v882
  %v893 = vmul.f32 %v866, %v882
  %v894 = vmul.f32 %v867, %v882
  %v895 = vmul.f32 %v868, %v882
  %v896 = vmul.f32 %v869, %v882
  %v897 = vmul.f32 %v870, %v882
  %v898 = vmul.f32 %v871, %v882
  %v899 = vmul.f32 %v872, %v882
  %v900 = vmul.f32 %v873, %v882
  %v901 = vmul.f32 %v874, %v882
  %v902 = vmul.f32 %v875, %v882
  %v903 = vmul.f32 %v876, %v882
  %v904 = vmul.f32 %v877, %v882
  %v905 = vmul.f32 %v878, %v882
  %v906 = vmul.f32 %v879, %v882
  %v907 = vmul.f32 %v880, %v882
  %v909 = vperm.slane %v297, 0
  %v911 = vadd.f32 %v884, %v909
  %v912 = vadd.f32 %v885, %v909
  %v913 = vadd.f32 %v886, %v909
  %v914 = vadd.f32 %v887, %v909
  %v915 = vadd.f32 %v888, %v909
  %v916 = vadd.f32 %v889, %v909
  %v917 = vadd.f32 %v890, %v909
  %v918 = vadd.f32 %v891, %v909
  %v919 = vadd.f32 %v892, %v909
  %v920 = vadd.f32 %v893, %v909
  %v921 = vadd.f32 %v894, %v909
  %v922 = vadd.f32 %v895, %v909
  %v923 = vadd.f32 %v896, %v909
  %v924 = vadd.f32 %v897, %v909
  %v925 = vadd.f32 %v898, %v909
  %v926 = vadd.f32 %v899, %v909
  %v927 = vadd.f32 %v900, %v909
  %v928 = vadd.f32 %v901, %v909
  %v929 = vadd.f32 %v902, %v909
  %v930 = vadd.f32 %v903, %v909
  %v931 = vadd.f32 %v904, %v909
  %v932 = vadd.f32 %v905, %v909
  %v933 = vadd.f32 %v906, %v909
  %v934 = vadd.f32 %v907, %v909
  %v935 = vpack.c.bf16 %v912, %v911
  %v936 = vpack.c.bf16 %v914, %v913
  %v937 = vpack.c.bf16 %v916, %v915
  %v938 = vpack.c.bf16 %v918, %v917
  %v939 = vpack.c.bf16 %v920, %v919
  %v940 = vpack.c.bf16 %v922, %v921
  %v941 = vpack.c.bf16 %v924, %v923
  %v942 = vpack.c.bf16 %v926, %v925
  %v943 = vpack.c.bf16 %v928, %v927
  %v944 = vpack.c.bf16 %v930, %v929
  %v945 = vpack.c.bf16 %v932, %v931
  %v946 = vpack.c.bf16 %v934, %v933
  %v947 = vld [vmem:[%s5] sm:$0xf]
  %v948 = vld [vmem:[%s5 + $0x4] sm:$0xf]
  %v949 = vld [vmem:[%s5 + $0x8] sm:$0xf]
  %v950 = vld [vmem:[%s5 + $0xc] sm:$0xf]
  %v951 = vld [vmem:[%s6] sm:$0x1]
  %v953 = vperm.slane %v951, 0
  %v959 = vunpack.c.l.b16 %v947
  %v960 = vunpack.c.l.b16 %v948
  %v961 = vunpack.c.l.b16 %v949
  %v962 = vunpack.c.l.b16 %v950
  %v963 = vpack.c.b16 %v960, %v959
  %v964 = vpack.c.b16 %v962, %v961
  %v968 = vsel %vm247, %v935, 0
  %v971 = vsel %vm247, %v936, 0
  %v974 = vsel %vm247, %v937, 0
  %v977 = vsel %vm247, %v938, 0
  %v980 = vsel %vm247, %v939, 0
  %v983 = vsel %vm247, %v940, 0
  %v986 = vsel %vm247, %v941, 0
  %v989 = vsel %vm247, %v942, 0
  %v992 = vsel %vm247, %v943, 0
  %v995 = vsel %vm247, %v944, 0
  %v998 = vsel %vm247, %v945, 0
  %v1001 = vsel %vm247, %v946, 0
  %1003 = vmatpush.bf16.msra.mxu0 0
  %1004 = vmatpush.bf16.msra.mxu0 0
  %1005 = vmatpush.bf16.msra.mxu0 0
  %1006 = vmatpush.bf16.msra.mxu0 0
  %1007 = vmatpush.bf16.msra.mxu0 0
  %1008 = vmatpush.bf16.msra.mxu0 0
  %1009 = vmatpush.bf16.msra.mxu0 %v964
  %1010 = vmatpush.bf16.msra.mxu0 %v963
  %1011 = vmatmul.bf16.gmra.mxu0 %v968
  %v1012 = vpop.f32.mrf.mxu0
  %v1013 = vadd.f32 %v953, %v1012
  %v1014 = vpop.f32.mrf.mxu0
  %v1015 = vadd.f32 %v953, %v1014
  %1016 = vmatmul.bf16.gmra.mxu0 %v971
  %v1017 = vpop.f32.mrf.mxu0
  %v1018 = vadd.f32 %v953, %v1017
  %v1019 = vpop.f32.mrf.mxu0
  %v1020 = vadd.f32 %v953, %v1019
  %1021 = vmatmul.bf16.gmra.mxu0 %v974
  %v1022 = vpop.f32.mrf.mxu0
  %v1023 = vadd.f32 %v953, %v1022
  %v1024 = vpop.f32.mrf.mxu0
  %v1025 = vadd.f32 %v953, %v1024
  %1026 = vmatmul.bf16.gmra.mxu0 %v977
  %v1027 = vpop.f32.mrf.mxu0
  %v1028 = vadd.f32 %v953, %v1027
  %v1029 = vpop.f32.mrf.mxu0
  %v1030 = vadd.f32 %v953, %v1029
  %1031 = vmatmul.bf16.gmra.mxu0 %v980
  %v1032 = vpop.f32.mrf.mxu0
  %v1033 = vadd.f32 %v953, %v1032
  %v1034 = vpop.f32.mrf.mxu0
  %v1035 = vadd.f32 %v953, %v1034
  %1036 = vmatmul.bf16.gmra.mxu0 %v983
  %v1037 = vpop.f32.mrf.mxu0
  %v1038 = vadd.f32 %v953, %v1037
  %v1039 = vpop.f32.mrf.mxu0
  %v1040 = vadd.f32 %v953, %v1039
  %1041 = vmatmul.bf16.gmra.mxu0 %v986
  %v1042 = vpop.f32.mrf.mxu0
  %v1043 = vadd.f32 %v953, %v1042
  %v1044 = vpop.f32.mrf.mxu0
  %v1045 = vadd.f32 %v953, %v1044
  %1046 = vmatmul.bf16.gmra.mxu0 %v989
  %v1047 = vpop.f32.mrf.mxu0
  %v1048 = vadd.f32 %v953, %v1047
  %v1049 = vpop.f32.mrf.mxu0
  %v1050 = vadd.f32 %v953, %v1049
  %1051 = vmatmul.bf16.gmra.mxu0 %v992
  %v1052 = vpop.f32.mrf.mxu0
  %v1053 = vadd.f32 %v953, %v1052
  %v1054 = vpop.f32.mrf.mxu0
  %v1055 = vadd.f32 %v953, %v1054
  %1056 = vmatmul.bf16.gmra.mxu0 %v995
  %v1057 = vpop.f32.mrf.mxu0
  %v1058 = vadd.f32 %v953, %v1057
  %v1059 = vpop.f32.mrf.mxu0
  %v1060 = vadd.f32 %v953, %v1059
  %1061 = vmatmul.bf16.gmra.mxu0 %v998
  %v1062 = vpop.f32.mrf.mxu0
  %v1063 = vadd.f32 %v953, %v1062
  %v1064 = vpop.f32.mrf.mxu0
  %v1065 = vadd.f32 %v953, %v1064
  %1066 = vmatmul.bf16.gmra.mxu0 %v1001
  %v1067 = vpop.f32.mrf.mxu0
  %v1068 = vadd.f32 %v953, %v1067
  %v1069 = vpop.f32.mrf.mxu0
  %v1070 = vadd.f32 %v953, %v1069
  %1071 = vdwg.mxu0
  %v1072 = vpack.c.bf16 %v1013, %v1013
  %v1073 = vpack.c.bf16 %v1015, %v1015
  %v1074 = vpack.c.bf16 %v1018, %v1018
  %v1075 = vpack.c.bf16 %v1020, %v1020
  %v1076 = vpack.c.bf16 %v1023, %v1023
  %v1077 = vpack.c.bf16 %v1025, %v1025
  %v1078 = vpack.c.bf16 %v1028, %v1028
  %v1079 = vpack.c.bf16 %v1030, %v1030
  %v1080 = vpack.c.bf16 %v1033, %v1033
  %v1081 = vpack.c.bf16 %v1035, %v1035
  %v1082 = vpack.c.bf16 %v1038, %v1038
  %v1083 = vpack.c.bf16 %v1040, %v1040
  %v1084 = vpack.c.bf16 %v1043, %v1043
  %v1085 = vpack.c.bf16 %v1045, %v1045
  %v1086 = vpack.c.bf16 %v1048, %v1048
  %v1087 = vpack.c.bf16 %v1050, %v1050
  %v1088 = vpack.c.bf16 %v1053, %v1053
  %v1089 = vpack.c.bf16 %v1055, %v1055
  %v1090 = vpack.c.bf16 %v1058, %v1058
  %v1091 = vpack.c.bf16 %v1060, %v1060
  %v1092 = vpack.c.bf16 %v1063, %v1063
  %v1093 = vpack.c.bf16 %v1065, %v1065
  %v1094 = vpack.c.bf16 %v1068, %v1068
  %v1095 = vpack.c.bf16 %v1070, %v1070
  %v1108 = vunpack.c.l.b16 %v1072
  %v1109 = vunpack.c.l.b16 %v1073
  %v1110 = vunpack.c.l.b16 %v1074
  %v1111 = vunpack.c.l.b16 %v1075
  %v1112 = vunpack.c.l.b16 %v1076
  %v1113 = vunpack.c.l.b16 %v1077
  %v1114 = vunpack.c.l.b16 %v1078
  %v1115 = vunpack.c.l.b16 %v1079
  %v1116 = vunpack.c.l.b16 %v1080
  %v1117 = vunpack.c.l.b16 %v1081
  %v1118 = vunpack.c.l.b16 %v1082
  %v1119 = vunpack.c.l.b16 %v1083
  %v1120 = vpack.c.b16 %v1109, %v1108
  %v1121 = vpack.c.b16 %v1111, %v1110
  %v1122 = vpack.c.b16 %v1113, %v1112
  %v1123 = vpack.c.b16 %v1115, %v1114
  %v1124 = vpack.c.b16 %v1117, %v1116
  %v1125 = vpack.c.b16 %v1119, %v1118
  %1126 = vrot.lane.b32.xlu0 %v1120, 96
  %v1127 = vpop.permute.xlu0 %1126
  %1128 = vrot.lane.b32.xlu0 %v1121, 96
  %v1129 = vpop.permute.xlu0 %1128
  %1130 = vrot.lane.b32.xlu0 %v1122, 96
  %v1131 = vpop.permute.xlu0 %1130
  %1132 = vrot.lane.b32.xlu0 %v1123, 96
  %v1133 = vpop.permute.xlu0 %1132
  %1134 = vrot.lane.b32.xlu0 %v1124, 96
  %v1135 = vpop.permute.xlu0 %1134
  %1136 = vrot.lane.b32.xlu0 %v1125, 96
  %v1137 = vpop.permute.xlu0 %1136
  %vm1138 = vcmask 64512
  %v1140 = vsel %vm1138, %v1120, 0
  %v1143 = vsel %vm1138, %v1121, 0
  %v1146 = vsel %vm1138, %v1122, 0
  %v1149 = vsel %vm1138, %v1123, 0
  %v1152 = vsel %vm1138, %v1124, 0
  %v1155 = vsel %vm1138, %v1125, 0
  %v1158 = vsel %vm1138, %v1127, 0
  %v1161 = vsel %vm1138, %v1129, 0
  %v1164 = vsel %vm1138, %v1131, 0
  %v1167 = vsel %vm1138, %v1133, 0
  %v1170 = vsel %vm1138, %v1135, 0
  %v1173 = vsel %vm1138, %v1137, 0
  %1175 = vmatpush.bf16.xpose.msra.mxu0 0
  %1176 = vmatpush.bf16.xpose.msra.mxu0 0
  %1177 = vmatpush.bf16.xpose.msra.mxu0 %v1173
  %1178 = vmatpush.bf16.xpose.msra.mxu0 %v1170
  %1179 = vmatpush.bf16.xpose.msra.mxu0 %v1167
  %1180 = vmatpush.bf16.xpose.msra.mxu0 %v1164
  %1181 = vmatpush.bf16.xpose.msra.mxu0 %v1161
  %1182 = vmatpush.bf16.xpose.msra.mxu0 %v1158
  %1183 = vmatmul.bf16.gmra.mxu0 %v1140
  %v1184 = vpop.f32.mrf.mxu0
  %v1185 = vadd.f32 0.0, %v1184
  %v1186 = vpop.f32.mrf.mxu0
  %v1187 = vadd.f32 0.0, %v1186
  %1188 = vmatmul.bf16.gmra.mxu0 %v1143
  %v1189 = vpop.f32.mrf.mxu0
  %v1190 = vadd.f32 0.0, %v1189
  %v1191 = vpop.f32.mrf.mxu0
  %v1192 = vadd.f32 0.0, %v1191
  %1193 = vmatmul.bf16.gmra.mxu0 %v1146
  %v1194 = vpop.f32.mrf.mxu0
  %v1195 = vadd.f32 0.0, %v1194
  %v1196 = vpop.f32.mrf.mxu0
  %v1197 = vadd.f32 0.0, %v1196
  %1198 = vmatmul.bf16.gmra.mxu0 %v1149
  %v1199 = vpop.f32.mrf.mxu0
  %v1200 = vadd.f32 0.0, %v1199
  %v1201 = vpop.f32.mrf.mxu0
  %v1202 = vadd.f32 0.0, %v1201
  %1203 = vmatmul.bf16.gmra.mxu0 %v1152
  %v1204 = vpop.f32.mrf.mxu0
  %v1205 = vadd.f32 0.0, %v1204
  %v1206 = vpop.f32.mrf.mxu0
  %v1207 = vadd.f32 0.0, %v1206
  %1208 = vmatmul.bf16.gmra.mxu0 %v1155
  %v1209 = vpop.f32.mrf.mxu0
  %v1210 = vadd.f32 0.0, %v1209
  %v1211 = vpop.f32.mrf.mxu0
  %v1212 = vadd.f32 0.0, %v1211
  %1213 = vdwg.mxu0
  %vm1214 = vcmask 785408
  %v1215 = vsel %vm1214, %v1185, -inf
  %1216 = vmax.xlane.f32.xlu0 %v1215
  %v1217 = vpop.xlane.xlu0 %1216
  %v1218 = vsel %vm1214, %v1187, -inf
  %1219 = vmax.xlane.f32.xlu0 %v1218
  %v1220 = vpop.xlane.xlu0 %1219
  %v1221 = vsel %vm1214, %v1190, -inf
  %1222 = vmax.xlane.f32.xlu0 %v1221
  %v1223 = vpop.xlane.xlu0 %1222
  %v1224 = vsel %vm1214, %v1192, -inf
  %1225 = vmax.xlane.f32.xlu0 %v1224
  %v1226 = vpop.xlane.xlu0 %1225
  %v1227 = vsel %vm1214, %v1195, -inf
  %1228 = vmax.xlane.f32.xlu0 %v1227
  %v1229 = vpop.xlane.xlu0 %1228
  %v1230 = vsel %vm1214, %v1197, -inf
  %1231 = vmax.xlane.f32.xlu0 %v1230
  %v1232 = vpop.xlane.xlu0 %1231
  %v1233 = vsel %vm1214, %v1200, -inf
  %1234 = vmax.xlane.f32.xlu0 %v1233
  %v1235 = vpop.xlane.xlu0 %1234
  %v1236 = vsel %vm1214, %v1202, -inf
  %1237 = vmax.xlane.f32.xlu0 %v1236
  %v1238 = vpop.xlane.xlu0 %1237
  %v1239 = vsel %vm1214, %v1205, -inf
  %1240 = vmax.xlane.f32.xlu0 %v1239
  %v1241 = vpop.xlane.xlu0 %1240
  %v1242 = vsel %vm1214, %v1207, -inf
  %1243 = vmax.xlane.f32.xlu0 %v1242
  %v1244 = vpop.xlane.xlu0 %1243
  %v1245 = vsel %vm1214, %v1210, -inf
  %1246 = vmax.xlane.f32.xlu0 %v1245
  %v1247 = vpop.xlane.xlu0 %1246
  %v1248 = vsel %vm1214, %v1212, -inf
  %1249 = vmax.xlane.f32.xlu0 %v1248
  %v1250 = vpop.xlane.xlu0 %1249
  %v1251 = vsub.f32 %v1185, %v1217
  %v1252 = vsub.f32 %v1187, %v1220
  %v1253 = vsub.f32 %v1190, %v1223
  %v1254 = vsub.f32 %v1192, %v1226
  %v1255 = vsub.f32 %v1195, %v1229
  %v1256 = vsub.f32 %v1197, %v1232
  %v1257 = vsub.f32 %v1200, %v1235
  %v1258 = vsub.f32 %v1202, %v1238
  %v1259 = vsub.f32 %v1205, %v1241
  %v1260 = vsub.f32 %v1207, %v1244
  %v1261 = vsub.f32 %v1210, %v1247
  %v1262 = vsub.f32 %v1212, %v1250
  %v1263 = vmul.f32 %v1251, 1.442695
  %v1264 = vpow.pop %v1263
  %v1265 = vmul.f32 %v1252, 1.442695
  %v1266 = vpow.pop %v1265
  %v1267 = vmul.f32 %v1253, 1.442695
  %v1268 = vpow.pop %v1267
  %v1269 = vmul.f32 %v1254, 1.442695
  %v1270 = vpow.pop %v1269
  %v1271 = vmul.f32 %v1255, 1.442695
  %v1272 = vpow.pop %v1271
  %v1273 = vmul.f32 %v1256, 1.442695
  %v1274 = vpow.pop %v1273
  %v1275 = vmul.f32 %v1257, 1.442695
  %v1276 = vpow.pop %v1275
  %v1277 = vmul.f32 %v1258, 1.442695
  %v1278 = vpow.pop %v1277
  %v1279 = vmul.f32 %v1259, 1.442695
  %v1280 = vpow.pop %v1279
  %v1281 = vmul.f32 %v1260, 1.442695
  %v1282 = vpow.pop %v1281
  %v1283 = vmul.f32 %v1261, 1.442695
  %v1284 = vpow.pop %v1283
  %v1285 = vmul.f32 %v1262, 1.442695
  %v1286 = vpow.pop %v1285
  %v1287 = vsel %vm1214, %v1264, 0.0
  %1288 = vadd.xlane.f32.xlu0 %v1287
  %v1289 = vpop.xlane.xlu0 %1288
  %v1290 = vsel %vm1214, %v1266, 0.0
  %1291 = vadd.xlane.f32.xlu0 %v1290
  %v1292 = vpop.xlane.xlu0 %1291
  %v1293 = vsel %vm1214, %v1268, 0.0
  %1294 = vadd.xlane.f32.xlu0 %v1293
  %v1295 = vpop.xlane.xlu0 %1294
  %v1296 = vsel %vm1214, %v1270, 0.0
  %1297 = vadd.xlane.f32.xlu0 %v1296
  %v1298 = vpop.xlane.xlu0 %1297
  %v1299 = vsel %vm1214, %v1272, 0.0
  %1300 = vadd.xlane.f32.xlu0 %v1299
  %v1301 = vpop.xlane.xlu0 %1300
  %v1302 = vsel %vm1214, %v1274, 0.0
  %1303 = vadd.xlane.f32.xlu0 %v1302
  %v1304 = vpop.xlane.xlu0 %1303
  %v1305 = vsel %vm1214, %v1276, 0.0
  %1306 = vadd.xlane.f32.xlu0 %v1305
  %v1307 = vpop.xlane.xlu0 %1306
  %v1308 = vsel %vm1214, %v1278, 0.0
  %1309 = vadd.xlane.f32.xlu0 %v1308
  %v1310 = vpop.xlane.xlu0 %1309
  %v1311 = vsel %vm1214, %v1280, 0.0
  %1312 = vadd.xlane.f32.xlu0 %v1311
  %v1313 = vpop.xlane.xlu0 %1312
  %v1314 = vsel %vm1214, %v1282, 0.0
  %1315 = vadd.xlane.f32.xlu0 %v1314
  %v1316 = vpop.xlane.xlu0 %1315
  %v1317 = vsel %vm1214, %v1284, 0.0
  %1318 = vadd.xlane.f32.xlu0 %v1317
  %v1319 = vpop.xlane.xlu0 %1318
  %v1320 = vsel %vm1214, %v1286, 0.0
  %1321 = vadd.xlane.f32.xlu0 %v1320
  %v1322 = vpop.xlane.xlu0 %1321
  %v1323 = vrcp.pop %v1289
  %v1324 = vrcp.pop %v1292
  %v1325 = vrcp.pop %v1295
  %v1326 = vrcp.pop %v1298
  %v1327 = vrcp.pop %v1301
  %v1328 = vrcp.pop %v1304
  %v1329 = vrcp.pop %v1307
  %v1330 = vrcp.pop %v1310
  %v1331 = vrcp.pop %v1313
  %v1332 = vrcp.pop %v1316
  %v1333 = vrcp.pop %v1319
  %v1334 = vrcp.pop %v1322
  %v1335 = vmul.f32 %v1264, %v1323
  %v1336 = vmul.f32 %v1266, %v1324
  %v1337 = vmul.f32 %v1268, %v1325
  %v1338 = vmul.f32 %v1270, %v1326
  %v1339 = vmul.f32 %v1272, %v1327
  %v1340 = vmul.f32 %v1274, %v1328
  %v1341 = vmul.f32 %v1276, %v1329
  %v1342 = vmul.f32 %v1278, %v1330
  %v1343 = vmul.f32 %v1280, %v1331
  %v1344 = vmul.f32 %v1282, %v1332
  %v1345 = vmul.f32 %v1284, %v1333
  %v1346 = vmul.f32 %v1286, %v1334
  %v1347 = vpack.c.bf16 %v1336, %v1335
  %v1348 = vpack.c.bf16 %v1338, %v1337
  %v1349 = vpack.c.bf16 %v1340, %v1339
  %v1350 = vpack.c.bf16 %v1342, %v1341
  %v1351 = vpack.c.bf16 %v1344, %v1343
  %v1352 = vpack.c.bf16 %v1346, %v1345
  %1353 = vrot.lane.b32.xlu0 %v1120, 64
  %v1354 = vpop.permute.xlu0 %1353
  %1355 = vrot.lane.b32.xlu0 %v1121, 64
  %v1356 = vpop.permute.xlu0 %1355
  %1357 = vrot.lane.b32.xlu0 %v1122, 64
  %v1358 = vpop.permute.xlu0 %1357
  %1359 = vrot.lane.b32.xlu0 %v1123, 64
  %v1360 = vpop.permute.xlu0 %1359
  %1361 = vrot.lane.b32.xlu0 %v1124, 64
  %v1362 = vpop.permute.xlu0 %1361
  %1363 = vrot.lane.b32.xlu0 %v1125, 64
  %v1364 = vpop.permute.xlu0 %1363
  %v1372 = vsel %vm1214, %v1347, 0
  %v1375 = vsel %vm1214, %v1348, 0
  %v1378 = vsel %vm1214, %v1349, 0
  %v1381 = vsel %vm1214, %v1350, 0
  %v1384 = vsel %vm1214, %v1351, 0
  %v1387 = vsel %vm1214, %v1352, 0
  %1389 = vmatpush.bf16.msra.mxu0 0
  %1390 = vmatpush.bf16.msra.mxu0 0
  %1391 = vmatpush.bf16.msra.mxu0 %v1364
  %1392 = vmatpush.bf16.msra.mxu0 %v1362
  %1393 = vmatpush.bf16.msra.mxu0 %v1360
  %1394 = vmatpush.bf16.msra.mxu0 %v1358
  %1395 = vmatpush.bf16.msra.mxu0 %v1356
  %1396 = vmatpush.bf16.msra.mxu0 %v1354
  %1397 = vmatmul.bf16.gmra.mxu0 %v1372
  %v1398 = vpop.f32.mrf.mxu0
  %v1399 = vadd.f32 0.0, %v1398
  %v1400 = vpop.f32.mrf.mxu0
  %v1401 = vadd.f32 0.0, %v1400
  %1402 = vmatmul.bf16.gmra.mxu0 %v1375
  %v1403 = vpop.f32.mrf.mxu0
  %v1404 = vadd.f32 0.0, %v1403
  %v1405 = vpop.f32.mrf.mxu0
  %v1406 = vadd.f32 0.0, %v1405
  %1407 = vmatmul.bf16.gmra.mxu0 %v1378
  %v1408 = vpop.f32.mrf.mxu0
  %v1409 = vadd.f32 0.0, %v1408
  %v1410 = vpop.f32.mrf.mxu0
  %v1411 = vadd.f32 0.0, %v1410
  %1412 = vmatmul.bf16.gmra.mxu0 %v1381
  %v1413 = vpop.f32.mrf.mxu0
  %v1414 = vadd.f32 0.0, %v1413
  %v1415 = vpop.f32.mrf.mxu0
  %v1416 = vadd.f32 0.0, %v1415
  %1417 = vmatmul.bf16.gmra.mxu0 %v1384
  %v1418 = vpop.f32.mrf.mxu0
  %v1419 = vadd.f32 0.0, %v1418
  %v1420 = vpop.f32.mrf.mxu0
  %v1421 = vadd.f32 0.0, %v1420
  %1422 = vmatmul.bf16.gmra.mxu0 %v1387
  %v1423 = vpop.f32.mrf.mxu0
  %v1424 = vadd.f32 0.0, %v1423
  %v1425 = vpop.f32.mrf.mxu0
  %v1426 = vadd.f32 0.0, %v1425
  %1427 = vdwg.mxu0
  %v1428 = vpack.c.bf16 %v1399, %v1399
  %v1429 = vpack.c.bf16 %v1401, %v1401
  %v1430 = vpack.c.bf16 %v1404, %v1404
  %v1431 = vpack.c.bf16 %v1406, %v1406
  %v1432 = vpack.c.bf16 %v1409, %v1409
  %v1433 = vpack.c.bf16 %v1411, %v1411
  %v1434 = vpack.c.bf16 %v1414, %v1414
  %v1435 = vpack.c.bf16 %v1416, %v1416
  %v1436 = vpack.c.bf16 %v1419, %v1419
  %v1437 = vpack.c.bf16 %v1421, %v1421
  %v1438 = vpack.c.bf16 %v1424, %v1424
  %v1439 = vpack.c.bf16 %v1426, %v1426
  %1440 = vrot.lane.b32.xlu0 %v1120, 120
  %v1441 = vpop.permute.xlu0 %1440
  %1442 = vrot.lane.b32.xlu0 %v1121, 120
  %v1443 = vpop.permute.xlu0 %1442
  %1444 = vrot.lane.b32.xlu0 %v1122, 120
  %v1445 = vpop.permute.xlu0 %1444
  %1446 = vrot.lane.b32.xlu0 %v1123, 120
  %v1447 = vpop.permute.xlu0 %1446
  %1448 = vrot.lane.b32.xlu0 %v1124, 120
  %v1449 = vpop.permute.xlu0 %1448
  %1450 = vrot.lane.b32.xlu0 %v1125, 120
  %v1451 = vpop.permute.xlu0 %1450
  %1452 = vrot.lane.b32.xlu0 %v1120, 88
  %v1453 = vpop.permute.xlu0 %1452
  %1454 = vrot.lane.b32.xlu0 %v1121, 88
  %v1455 = vpop.permute.xlu0 %1454
  %1456 = vrot.lane.b32.xlu0 %v1122, 88
  %v1457 = vpop.permute.xlu0 %1456
  %1458 = vrot.lane.b32.xlu0 %v1123, 88
  %v1459 = vpop.permute.xlu0 %1458
  %1460 = vrot.lane.b32.xlu0 %v1124, 88
  %v1461 = vpop.permute.xlu0 %1460
  %1462 = vrot.lane.b32.xlu0 %v1125, 88
  %v1463 = vpop.permute.xlu0 %1462
  %v1465 = vsel %vm1138, %v1441, 0
  %v1468 = vsel %vm1138, %v1443, 0
  %v1471 = vsel %vm1138, %v1445, 0
  %v1474 = vsel %vm1138, %v1447, 0
  %v1477 = vsel %vm1138, %v1449, 0
  %v1480 = vsel %vm1138, %v1451, 0
  %v1483 = vsel %vm1138, %v1453, 0
  %v1486 = vsel %vm1138, %v1455, 0
  %v1489 = vsel %vm1138, %v1457, 0
  %v1492 = vsel %vm1138, %v1459, 0
  %v1495 = vsel %vm1138, %v1461, 0
  %v1498 = vsel %vm1138, %v1463, 0
  %1500 = vmatpush.bf16.xpose.msra.mxu0 0
  %1501 = vmatpush.bf16.xpose.msra.mxu0 0
  %1502 = vmatpush.bf16.xpose.msra.mxu0 %v1498
  %1503 = vmatpush.bf16.xpose.msra.mxu0 %v1495
  %1504 = vmatpush.bf16.xpose.msra.mxu0 %v1492
  %1505 = vmatpush.bf16.xpose.msra.mxu0 %v1489
  %1506 = vmatpush.bf16.xpose.msra.mxu0 %v1486
  %1507 = vmatpush.bf16.xpose.msra.mxu0 %v1483
  %1508 = vmatmul.bf16.gmra.mxu0 %v1465
  %v1509 = vpop.f32.mrf.mxu0
  %v1510 = vadd.f32 0.0, %v1509
  %v1511 = vpop.f32.mrf.mxu0
  %v1512 = vadd.f32 0.0, %v1511
  %1513 = vmatmul.bf16.gmra.mxu0 %v1468
  %v1514 = vpop.f32.mrf.mxu0
  %v1515 = vadd.f32 0.0, %v1514
  %v1516 = vpop.f32.mrf.mxu0
  %v1517 = vadd.f32 0.0, %v1516
  %1518 = vmatmul.bf16.gmra.mxu0 %v1471
  %v1519 = vpop.f32.mrf.mxu0
  %v1520 = vadd.f32 0.0, %v1519
  %v1521 = vpop.f32.mrf.mxu0
  %v1522 = vadd.f32 0.0, %v1521
  %1523 = vmatmul.bf16.gmra.mxu0 %v1474
  %v1524 = vpop.f32.mrf.mxu0
  %v1525 = vadd.f32 0.0, %v1524
  %v1526 = vpop.f32.mrf.mxu0
  %v1527 = vadd.f32 0.0, %v1526
  %1528 = vmatmul.bf16.gmra.mxu0 %v1477
  %v1529 = vpop.f32.mrf.mxu0
  %v1530 = vadd.f32 0.0, %v1529
  %v1531 = vpop.f32.mrf.mxu0
  %v1532 = vadd.f32 0.0, %v1531
  %1533 = vmatmul.bf16.gmra.mxu0 %v1480
  %v1534 = vpop.f32.mrf.mxu0
  %v1535 = vadd.f32 0.0, %v1534
  %v1536 = vpop.f32.mrf.mxu0
  %v1537 = vadd.f32 0.0, %v1536
  %1538 = vdwg.mxu0
  %v1539 = vsel %vm1214, %v1510, -inf
  %1540 = vmax.xlane.f32.xlu0 %v1539
  %v1541 = vpop.xlane.xlu0 %1540
  %v1542 = vsel %vm1214, %v1512, -inf
  %1543 = vmax.xlane.f32.xlu0 %v1542
  %v1544 = vpop.xlane.xlu0 %1543
  %v1545 = vsel %vm1214, %v1515, -inf
  %1546 = vmax.xlane.f32.xlu0 %v1545
  %v1547 = vpop.xlane.xlu0 %1546
  %v1548 = vsel %vm1214, %v1517, -inf
  %1549 = vmax.xlane.f32.xlu0 %v1548
  %v1550 = vpop.xlane.xlu0 %1549
  %v1551 = vsel %vm1214, %v1520, -inf
  %1552 = vmax.xlane.f32.xlu0 %v1551
  %v1553 = vpop.xlane.xlu0 %1552
  %v1554 = vsel %vm1214, %v1522, -inf
  %1555 = vmax.xlane.f32.xlu0 %v1554
  %v1556 = vpop.xlane.xlu0 %1555
  %v1557 = vsel %vm1214, %v1525, -inf
  %1558 = vmax.xlane.f32.xlu0 %v1557
  %v1559 = vpop.xlane.xlu0 %1558
  %v1560 = vsel %vm1214, %v1527, -inf
  %1561 = vmax.xlane.f32.xlu0 %v1560
  %v1562 = vpop.xlane.xlu0 %1561
  %v1563 = vsel %vm1214, %v1530, -inf
  %1564 = vmax.xlane.f32.xlu0 %v1563
  %v1565 = vpop.xlane.xlu0 %1564
  %v1566 = vsel %vm1214, %v1532, -inf
  %1567 = vmax.xlane.f32.xlu0 %v1566
  %v1568 = vpop.xlane.xlu0 %1567
  %v1569 = vsel %vm1214, %v1535, -inf
  %1570 = vmax.xlane.f32.xlu0 %v1569
  %v1571 = vpop.xlane.xlu0 %1570
  %v1572 = vsel %vm1214, %v1537, -inf
  %1573 = vmax.xlane.f32.xlu0 %v1572
  %v1574 = vpop.xlane.xlu0 %1573
  %v1575 = vsub.f32 %v1510, %v1541
  %v1576 = vsub.f32 %v1512, %v1544
  %v1577 = vsub.f32 %v1515, %v1547
  %v1578 = vsub.f32 %v1517, %v1550
  %v1579 = vsub.f32 %v1520, %v1553
  %v1580 = vsub.f32 %v1522, %v1556
  %v1581 = vsub.f32 %v1525, %v1559
  %v1582 = vsub.f32 %v1527, %v1562
  %v1583 = vsub.f32 %v1530, %v1565
  %v1584 = vsub.f32 %v1532, %v1568
  %v1585 = vsub.f32 %v1535, %v1571
  %v1586 = vsub.f32 %v1537, %v1574
  %v1587 = vmul.f32 %v1575, 1.442695
  %v1588 = vpow.pop %v1587
  %v1589 = vmul.f32 %v1576, 1.442695
  %v1590 = vpow.pop %v1589
  %v1591 = vmul.f32 %v1577, 1.442695
  %v1592 = vpow.pop %v1591
  %v1593 = vmul.f32 %v1578, 1.442695
  %v1594 = vpow.pop %v1593
  %v1595 = vmul.f32 %v1579, 1.442695
  %v1596 = vpow.pop %v1595
  %v1597 = vmul.f32 %v1580, 1.442695
  %v1598 = vpow.pop %v1597
  %v1599 = vmul.f32 %v1581, 1.442695
  %v1600 = vpow.pop %v1599
  %v1601 = vmul.f32 %v1582, 1.442695
  %v1602 = vpow.pop %v1601
  %v1603 = vmul.f32 %v1583, 1.442695
  %v1604 = vpow.pop %v1603
  %v1605 = vmul.f32 %v1584, 1.442695
  %v1606 = vpow.pop %v1605
  %v1607 = vmul.f32 %v1585, 1.442695
  %v1608 = vpow.pop %v1607
  %v1609 = vmul.f32 %v1586, 1.442695
  %v1610 = vpow.pop %v1609
  %v1611 = vsel %vm1214, %v1588, 0.0
  %1612 = vadd.xlane.f32.xlu0 %v1611
  %v1613 = vpop.xlane.xlu0 %1612
  %v1614 = vsel %vm1214, %v1590, 0.0
  %1615 = vadd.xlane.f32.xlu0 %v1614
  %v1616 = vpop.xlane.xlu0 %1615
  %v1617 = vsel %vm1214, %v1592, 0.0
  %1618 = vadd.xlane.f32.xlu0 %v1617
  %v1619 = vpop.xlane.xlu0 %1618
  %v1620 = vsel %vm1214, %v1594, 0.0
  %1621 = vadd.xlane.f32.xlu0 %v1620
  %v1622 = vpop.xlane.xlu0 %1621
  %v1623 = vsel %vm1214, %v1596, 0.0
  %1624 = vadd.xlane.f32.xlu0 %v1623
  %v1625 = vpop.xlane.xlu0 %1624
  %v1626 = vsel %vm1214, %v1598, 0.0
  %1627 = vadd.xlane.f32.xlu0 %v1626
  %v1628 = vpop.xlane.xlu0 %1627
  %v1629 = vsel %vm1214, %v1600, 0.0
  %1630 = vadd.xlane.f32.xlu0 %v1629
  %v1631 = vpop.xlane.xlu0 %1630
  %v1632 = vsel %vm1214, %v1602, 0.0
  %1633 = vadd.xlane.f32.xlu0 %v1632
  %v1634 = vpop.xlane.xlu0 %1633
  %v1635 = vsel %vm1214, %v1604, 0.0
  %1636 = vadd.xlane.f32.xlu0 %v1635
  %v1637 = vpop.xlane.xlu0 %1636
  %v1638 = vsel %vm1214, %v1606, 0.0
  %1639 = vadd.xlane.f32.xlu0 %v1638
  %v1640 = vpop.xlane.xlu0 %1639
  %v1641 = vsel %vm1214, %v1608, 0.0
  %1642 = vadd.xlane.f32.xlu0 %v1641
  %v1643 = vpop.xlane.xlu0 %1642
  %v1644 = vsel %vm1214, %v1610, 0.0
  %1645 = vadd.xlane.f32.xlu0 %v1644
  %v1646 = vpop.xlane.xlu0 %1645
  %v1647 = vrcp.pop %v1613
  %v1648 = vrcp.pop %v1616
  %v1649 = vrcp.pop %v1619
  %v1650 = vrcp.pop %v1622
  %v1651 = vrcp.pop %v1625
  %v1652 = vrcp.pop %v1628
  %v1653 = vrcp.pop %v1631
  %v1654 = vrcp.pop %v1634
  %v1655 = vrcp.pop %v1637
  %v1656 = vrcp.pop %v1640
  %v1657 = vrcp.pop %v1643
  %v1658 = vrcp.pop %v1646
  %v1659 = vmul.f32 %v1588, %v1647
  %v1660 = vmul.f32 %v1590, %v1648
  %v1661 = vmul.f32 %v1592, %v1649
  %v1662 = vmul.f32 %v1594, %v1650
  %v1663 = vmul.f32 %v1596, %v1651
  %v1664 = vmul.f32 %v1598, %v1652
  %v1665 = vmul.f32 %v1600, %v1653
  %v1666 = vmul.f32 %v1602, %v1654
  %v1667 = vmul.f32 %v1604, %v1655
  %v1668 = vmul.f32 %v1606, %v1656
  %v1669 = vmul.f32 %v1608, %v1657
  %v1670 = vmul.f32 %v1610, %v1658
  %v1671 = vpack.c.bf16 %v1660, %v1659
  %v1672 = vpack.c.bf16 %v1662, %v1661
  %v1673 = vpack.c.bf16 %v1664, %v1663
  %v1674 = vpack.c.bf16 %v1666, %v1665
  %v1675 = vpack.c.bf16 %v1668, %v1667
  %v1676 = vpack.c.bf16 %v1670, %v1669
  %1677 = vrot.lane.b32.xlu0 %v1120, 56
  %v1678 = vpop.permute.xlu0 %1677
  %1679 = vrot.lane.b32.xlu0 %v1121, 56
  %v1680 = vpop.permute.xlu0 %1679
  %1681 = vrot.lane.b32.xlu0 %v1122, 56
  %v1682 = vpop.permute.xlu0 %1681
  %1683 = vrot.lane.b32.xlu0 %v1123, 56
  %v1684 = vpop.permute.xlu0 %1683
  %1685 = vrot.lane.b32.xlu0 %v1124, 56
  %v1686 = vpop.permute.xlu0 %1685
  %1687 = vrot.lane.b32.xlu0 %v1125, 56
  %v1688 = vpop.permute.xlu0 %1687
  %v1696 = vsel %vm1214, %v1671, 0
  %v1699 = vsel %vm1214, %v1672, 0
  %v1702 = vsel %vm1214, %v1673, 0
  %v1705 = vsel %vm1214, %v1674, 0
  %v1708 = vsel %vm1214, %v1675, 0
  %v1711 = vsel %vm1214, %v1676, 0
  %1713 = vmatpush.bf16.msra.mxu0 0
  %1714 = vmatpush.bf16.msra.mxu0 0
  %1715 = vmatpush.bf16.msra.mxu0 %v1688
  %1716 = vmatpush.bf16.msra.mxu0 %v1686
  %1717 = vmatpush.bf16.msra.mxu0 %v1684
  %1718 = vmatpush.bf16.msra.mxu0 %v1682
  %1719 = vmatpush.bf16.msra.mxu0 %v1680
  %1720 = vmatpush.bf16.msra.mxu0 %v1678
  %1721 = vmatmul.bf16.gmra.mxu0 %v1696
  %v1722 = vpop.f32.mrf.mxu0
  %v1723 = vadd.f32 0.0, %v1722
  %v1724 = vpop.f32.mrf.mxu0
  %v1725 = vadd.f32 0.0, %v1724
  %1726 = vmatmul.bf16.gmra.mxu0 %v1699
  %v1727 = vpop.f32.mrf.mxu0
  %v1728 = vadd.f32 0.0, %v1727
  %v1729 = vpop.f32.mrf.mxu0
  %v1730 = vadd.f32 0.0, %v1729
  %1731 = vmatmul.bf16.gmra.mxu0 %v1702
  %v1732 = vpop.f32.mrf.mxu0
  %v1733 = vadd.f32 0.0, %v1732
  %v1734 = vpop.f32.mrf.mxu0
  %v1735 = vadd.f32 0.0, %v1734
  %1736 = vmatmul.bf16.gmra.mxu0 %v1705
  %v1737 = vpop.f32.mrf.mxu0
  %v1738 = vadd.f32 0.0, %v1737
  %v1739 = vpop.f32.mrf.mxu0
  %v1740 = vadd.f32 0.0, %v1739
  %1741 = vmatmul.bf16.gmra.mxu0 %v1708
  %v1742 = vpop.f32.mrf.mxu0
  %v1743 = vadd.f32 0.0, %v1742
  %v1744 = vpop.f32.mrf.mxu0
  %v1745 = vadd.f32 0.0, %v1744
  %1746 = vmatmul.bf16.gmra.mxu0 %v1711
  %v1747 = vpop.f32.mrf.mxu0
  %v1748 = vadd.f32 0.0, %v1747
  %v1749 = vpop.f32.mrf.mxu0
  %v1750 = vadd.f32 0.0, %v1749
  %1751 = vdwg.mxu0
  %v1752 = vpack.c.bf16 %v1723, %v1723
  %v1753 = vpack.c.bf16 %v1725, %v1725
  %v1754 = vpack.c.bf16 %v1728, %v1728
  %v1755 = vpack.c.bf16 %v1730, %v1730
  %v1756 = vpack.c.bf16 %v1733, %v1733
  %v1757 = vpack.c.bf16 %v1735, %v1735
  %v1758 = vpack.c.bf16 %v1738, %v1738
  %v1759 = vpack.c.bf16 %v1740, %v1740
  %v1760 = vpack.c.bf16 %v1743, %v1743
  %v1761 = vpack.c.bf16 %v1745, %v1745
  %v1762 = vpack.c.bf16 %v1748, %v1748
  %v1763 = vpack.c.bf16 %v1750, %v1750
  %1764 = vrot.lane.b32.xlu0 %v1120, 112
  %v1765 = vpop.permute.xlu0 %1764
  %1766 = vrot.lane.b32.xlu0 %v1121, 112
  %v1767 = vpop.permute.xlu0 %1766
  %1768 = vrot.lane.b32.xlu0 %v1122, 112
  %v1769 = vpop.permute.xlu0 %1768
  %1770 = vrot.lane.b32.xlu0 %v1123, 112
  %v1771 = vpop.permute.xlu0 %1770
  %1772 = vrot.lane.b32.xlu0 %v1124, 112
  %v1773 = vpop.permute.xlu0 %1772
  %1774 = vrot.lane.b32.xlu0 %v1125, 112
  %v1775 = vpop.permute.xlu0 %1774
  %1776 = vrot.lane.b32.xlu0 %v1120, 80
  %v1777 = vpop.permute.xlu0 %1776
  %1778 = vrot.lane.b32.xlu0 %v1121, 80
  %v1779 = vpop.permute.xlu0 %1778
  %1780 = vrot.lane.b32.xlu0 %v1122, 80
  %v1781 = vpop.permute.xlu0 %1780
  %1782 = vrot.lane.b32.xlu0 %v1123, 80
  %v1783 = vpop.permute.xlu0 %1782
  %1784 = vrot.lane.b32.xlu0 %v1124, 80
  %v1785 = vpop.permute.xlu0 %1784
  %1786 = vrot.lane.b32.xlu0 %v1125, 80
  %v1787 = vpop.permute.xlu0 %1786
  %v1789 = vsel %vm1138, %v1765, 0
  %v1792 = vsel %vm1138, %v1767, 0
  %v1795 = vsel %vm1138, %v1769, 0
  %v1798 = vsel %vm1138, %v1771, 0
  %v1801 = vsel %vm1138, %v1773, 0
  %v1804 = vsel %vm1138, %v1775, 0
  %v1807 = vsel %vm1138, %v1777, 0
  %v1810 = vsel %vm1138, %v1779, 0
  %v1813 = vsel %vm1138, %v1781, 0
  %v1816 = vsel %vm1138, %v1783, 0
  %v1819 = vsel %vm1138, %v1785, 0
  %v1822 = vsel %vm1138, %v1787, 0
  %1824 = vmatpush.bf16.xpose.msra.mxu0 0
  %1825 = vmatpush.bf16.xpose.msra.mxu0 0
  %1826 = vmatpush.bf16.xpose.msra.mxu0 %v1822
  %1827 = vmatpush.bf16.xpose.msra.mxu0 %v1819
  %1828 = vmatpush.bf16.xpose.msra.mxu0 %v1816
  %1829 = vmatpush.bf16.xpose.msra.mxu0 %v1813
  %1830 = vmatpush.bf16.xpose.msra.mxu0 %v1810
  %1831 = vmatpush.bf16.xpose.msra.mxu0 %v1807
  %1832 = vmatmul.bf16.gmra.mxu0 %v1789
  %v1833 = vpop.f32.mrf.mxu0
  %v1834 = vadd.f32 0.0, %v1833
  %v1835 = vpop.f32.mrf.mxu0
  %v1836 = vadd.f32 0.0, %v1835
  %1837 = vmatmul.bf16.gmra.mxu0 %v1792
  %v1838 = vpop.f32.mrf.mxu0
  %v1839 = vadd.f32 0.0, %v1838
  %v1840 = vpop.f32.mrf.mxu0
  %v1841 = vadd.f32 0.0, %v1840
  %1842 = vmatmul.bf16.gmra.mxu0 %v1795
  %v1843 = vpop.f32.mrf.mxu0
  %v1844 = vadd.f32 0.0, %v1843
  %v1845 = vpop.f32.mrf.mxu0
  %v1846 = vadd.f32 0.0, %v1845
  %1847 = vmatmul.bf16.gmra.mxu0 %v1798
  %v1848 = vpop.f32.mrf.mxu0
  %v1849 = vadd.f32 0.0, %v1848
  %v1850 = vpop.f32.mrf.mxu0
  %v1851 = vadd.f32 0.0, %v1850
  %1852 = vmatmul.bf16.gmra.mxu0 %v1801
  %v1853 = vpop.f32.mrf.mxu0
  %v1854 = vadd.f32 0.0, %v1853
  %v1855 = vpop.f32.mrf.mxu0
  %v1856 = vadd.f32 0.0, %v1855
  %1857 = vmatmul.bf16.gmra.mxu0 %v1804
  %v1858 = vpop.f32.mrf.mxu0
  %v1859 = vadd.f32 0.0, %v1858
  %v1860 = vpop.f32.mrf.mxu0
  %v1861 = vadd.f32 0.0, %v1860
  %1862 = vdwg.mxu0
  %v1863 = vsel %vm1214, %v1834, -inf
  %1864 = vmax.xlane.f32.xlu0 %v1863
  %v1865 = vpop.xlane.xlu0 %1864
  %v1866 = vsel %vm1214, %v1836, -inf
  %1867 = vmax.xlane.f32.xlu0 %v1866
  %v1868 = vpop.xlane.xlu0 %1867
  %v1869 = vsel %vm1214, %v1839, -inf
  %1870 = vmax.xlane.f32.xlu0 %v1869
  %v1871 = vpop.xlane.xlu0 %1870
  %v1872 = vsel %vm1214, %v1841, -inf
  %1873 = vmax.xlane.f32.xlu0 %v1872
  %v1874 = vpop.xlane.xlu0 %1873
  %v1875 = vsel %vm1214, %v1844, -inf
  %1876 = vmax.xlane.f32.xlu0 %v1875
  %v1877 = vpop.xlane.xlu0 %1876
  %v1878 = vsel %vm1214, %v1846, -inf
  %1879 = vmax.xlane.f32.xlu0 %v1878
  %v1880 = vpop.xlane.xlu0 %1879
  %v1881 = vsel %vm1214, %v1849, -inf
  %1882 = vmax.xlane.f32.xlu0 %v1881
  %v1883 = vpop.xlane.xlu0 %1882
  %v1884 = vsel %vm1214, %v1851, -inf
  %1885 = vmax.xlane.f32.xlu0 %v1884
  %v1886 = vpop.xlane.xlu0 %1885
  %v1887 = vsel %vm1214, %v1854, -inf
  %1888 = vmax.xlane.f32.xlu0 %v1887
  %v1889 = vpop.xlane.xlu0 %1888
  %v1890 = vsel %vm1214, %v1856, -inf
  %1891 = vmax.xlane.f32.xlu0 %v1890
  %v1892 = vpop.xlane.xlu0 %1891
  %v1893 = vsel %vm1214, %v1859, -inf
  %1894 = vmax.xlane.f32.xlu0 %v1893
  %v1895 = vpop.xlane.xlu0 %1894
  %v1896 = vsel %vm1214, %v1861, -inf
  %1897 = vmax.xlane.f32.xlu0 %v1896
  %v1898 = vpop.xlane.xlu0 %1897
  %v1899 = vsub.f32 %v1834, %v1865
  %v1900 = vsub.f32 %v1836, %v1868
  %v1901 = vsub.f32 %v1839, %v1871
  %v1902 = vsub.f32 %v1841, %v1874
  %v1903 = vsub.f32 %v1844, %v1877
  %v1904 = vsub.f32 %v1846, %v1880
  %v1905 = vsub.f32 %v1849, %v1883
  %v1906 = vsub.f32 %v1851, %v1886
  %v1907 = vsub.f32 %v1854, %v1889
  %v1908 = vsub.f32 %v1856, %v1892
  %v1909 = vsub.f32 %v1859, %v1895
  %v1910 = vsub.f32 %v1861, %v1898
  %v1911 = vmul.f32 %v1899, 1.442695
  %v1912 = vpow.pop %v1911
  %v1913 = vmul.f32 %v1900, 1.442695
  %v1914 = vpow.pop %v1913
  %v1915 = vmul.f32 %v1901, 1.442695
  %v1916 = vpow.pop %v1915
  %v1917 = vmul.f32 %v1902, 1.442695
  %v1918 = vpow.pop %v1917
  %v1919 = vmul.f32 %v1903, 1.442695
  %v1920 = vpow.pop %v1919
  %v1921 = vmul.f32 %v1904, 1.442695
  %v1922 = vpow.pop %v1921
  %v1923 = vmul.f32 %v1905, 1.442695
  %v1924 = vpow.pop %v1923
  %v1925 = vmul.f32 %v1906, 1.442695
  %v1926 = vpow.pop %v1925
  %v1927 = vmul.f32 %v1907, 1.442695
  %v1928 = vpow.pop %v1927
  %v1929 = vmul.f32 %v1908, 1.442695
  %v1930 = vpow.pop %v1929
  %v1931 = vmul.f32 %v1909, 1.442695
  %v1932 = vpow.pop %v1931
  %v1933 = vmul.f32 %v1910, 1.442695
  %v1934 = vpow.pop %v1933
  %v1935 = vsel %vm1214, %v1912, 0.0
  %1936 = vadd.xlane.f32.xlu0 %v1935
  %v1937 = vpop.xlane.xlu0 %1936
  %v1938 = vsel %vm1214, %v1914, 0.0
  %1939 = vadd.xlane.f32.xlu0 %v1938
  %v1940 = vpop.xlane.xlu0 %1939
  %v1941 = vsel %vm1214, %v1916, 0.0
  %1942 = vadd.xlane.f32.xlu0 %v1941
  %v1943 = vpop.xlane.xlu0 %1942
  %v1944 = vsel %vm1214, %v1918, 0.0
  %1945 = vadd.xlane.f32.xlu0 %v1944
  %v1946 = vpop.xlane.xlu0 %1945
  %v1947 = vsel %vm1214, %v1920, 0.0
  %1948 = vadd.xlane.f32.xlu0 %v1947
  %v1949 = vpop.xlane.xlu0 %1948
  %v1950 = vsel %vm1214, %v1922, 0.0
  %1951 = vadd.xlane.f32.xlu0 %v1950
  %v1952 = vpop.xlane.xlu0 %1951
  %v1953 = vsel %vm1214, %v1924, 0.0
  %1954 = vadd.xlane.f32.xlu0 %v1953
  %v1955 = vpop.xlane.xlu0 %1954
  %v1956 = vsel %vm1214, %v1926, 0.0
  %1957 = vadd.xlane.f32.xlu0 %v1956
  %v1958 = vpop.xlane.xlu0 %1957
  %v1959 = vsel %vm1214, %v1928, 0.0
  %1960 = vadd.xlane.f32.xlu0 %v1959
  %v1961 = vpop.xlane.xlu0 %1960
  %v1962 = vsel %vm1214, %v1930, 0.0
  %1963 = vadd.xlane.f32.xlu0 %v1962
  %v1964 = vpop.xlane.xlu0 %1963
  %v1965 = vsel %vm1214, %v1932, 0.0
  %1966 = vadd.xlane.f32.xlu0 %v1965
  %v1967 = vpop.xlane.xlu0 %1966
  %v1968 = vsel %vm1214, %v1934, 0.0
  %1969 = vadd.xlane.f32.xlu0 %v1968
  %v1970 = vpop.xlane.xlu0 %1969
  %v1971 = vrcp.pop %v1937
  %v1972 = vrcp.pop %v1940
  %v1973 = vrcp.pop %v1943
  %v1974 = vrcp.pop %v1946
  %v1975 = vrcp.pop %v1949
  %v1976 = vrcp.pop %v1952
  %v1977 = vrcp.pop %v1955
  %v1978 = vrcp.pop %v1958
  %v1979 = vrcp.pop %v1961
  %v1980 = vrcp.pop %v1964
  %v1981 = vrcp.pop %v1967
  %v1982 = vrcp.pop %v1970
  %v1983 = vmul.f32 %v1912, %v1971
  %v1984 = vmul.f32 %v1914, %v1972
  %v1985 = vmul.f32 %v1916, %v1973
  %v1986 = vmul.f32 %v1918, %v1974
  %v1987 = vmul.f32 %v1920, %v1975
  %v1988 = vmul.f32 %v1922, %v1976
  %v1989 = vmul.f32 %v1924, %v1977
  %v1990 = vmul.f32 %v1926, %v1978
  %v1991 = vmul.f32 %v1928, %v1979
  %v1992 = vmul.f32 %v1930, %v1980
  %v1993 = vmul.f32 %v1932, %v1981
  %v1994 = vmul.f32 %v1934, %v1982
  %v1995 = vpack.c.bf16 %v1984, %v1983
  %v1996 = vpack.c.bf16 %v1986, %v1985
  %v1997 = vpack.c.bf16 %v1988, %v1987
  %v1998 = vpack.c.bf16 %v1990, %v1989
  %v1999 = vpack.c.bf16 %v1992, %v1991
  %v2000 = vpack.c.bf16 %v1994, %v1993
  %2001 = vrot.lane.b32.xlu0 %v1120, 48
  %v2002 = vpop.permute.xlu0 %2001
  %2003 = vrot.lane.b32.xlu0 %v1121, 48
  %v2004 = vpop.permute.xlu0 %2003
  %2005 = vrot.lane.b32.xlu0 %v1122, 48
  %v2006 = vpop.permute.xlu0 %2005
  %2007 = vrot.lane.b32.xlu0 %v1123, 48
  %v2008 = vpop.permute.xlu0 %2007
  %2009 = vrot.lane.b32.xlu0 %v1124, 48
  %v2010 = vpop.permute.xlu0 %2009
  %2011 = vrot.lane.b32.xlu0 %v1125, 48
  %v2012 = vpop.permute.xlu0 %2011
  %v2020 = vsel %vm1214, %v1995, 0
  %v2023 = vsel %vm1214, %v1996, 0
  %v2026 = vsel %vm1214, %v1997, 0
  %v2029 = vsel %vm1214, %v1998, 0
  %v2032 = vsel %vm1214, %v1999, 0
  %v2035 = vsel %vm1214, %v2000, 0
  %2037 = vmatpush.bf16.msra.mxu0 0
  %2038 = vmatpush.bf16.msra.mxu0 0
  %2039 = vmatpush.bf16.msra.mxu0 %v2012
  %2040 = vmatpush.bf16.msra.mxu0 %v2010
  %2041 = vmatpush.bf16.msra.mxu0 %v2008
  %2042 = vmatpush.bf16.msra.mxu0 %v2006
  %2043 = vmatpush.bf16.msra.mxu0 %v2004
  %2044 = vmatpush.bf16.msra.mxu0 %v2002
  %2045 = vmatmul.bf16.gmra.mxu0 %v2020
  %v2046 = vpop.f32.mrf.mxu0
  %v2047 = vadd.f32 0.0, %v2046
  %v2048 = vpop.f32.mrf.mxu0
  %v2049 = vadd.f32 0.0, %v2048
  %2050 = vmatmul.bf16.gmra.mxu0 %v2023
  %v2051 = vpop.f32.mrf.mxu0
  %v2052 = vadd.f32 0.0, %v2051
  %v2053 = vpop.f32.mrf.mxu0
  %v2054 = vadd.f32 0.0, %v2053
  %2055 = vmatmul.bf16.gmra.mxu0 %v2026
  %v2056 = vpop.f32.mrf.mxu0
  %v2057 = vadd.f32 0.0, %v2056
  %v2058 = vpop.f32.mrf.mxu0
  %v2059 = vadd.f32 0.0, %v2058
  %2060 = vmatmul.bf16.gmra.mxu0 %v2029
  %v2061 = vpop.f32.mrf.mxu0
  %v2062 = vadd.f32 0.0, %v2061
  %v2063 = vpop.f32.mrf.mxu0
  %v2064 = vadd.f32 0.0, %v2063
  %2065 = vmatmul.bf16.gmra.mxu0 %v2032
  %v2066 = vpop.f32.mrf.mxu0
  %v2067 = vadd.f32 0.0, %v2066
  %v2068 = vpop.f32.mrf.mxu0
  %v2069 = vadd.f32 0.0, %v2068
  %2070 = vmatmul.bf16.gmra.mxu0 %v2035
  %v2071 = vpop.f32.mrf.mxu0
  %v2072 = vadd.f32 0.0, %v2071
  %v2073 = vpop.f32.mrf.mxu0
  %v2074 = vadd.f32 0.0, %v2073
  %2075 = vdwg.mxu0
  %v2076 = vpack.c.bf16 %v2047, %v2047
  %v2077 = vpack.c.bf16 %v2049, %v2049
  %v2078 = vpack.c.bf16 %v2052, %v2052
  %v2079 = vpack.c.bf16 %v2054, %v2054
  %v2080 = vpack.c.bf16 %v2057, %v2057
  %v2081 = vpack.c.bf16 %v2059, %v2059
  %v2082 = vpack.c.bf16 %v2062, %v2062
  %v2083 = vpack.c.bf16 %v2064, %v2064
  %v2084 = vpack.c.bf16 %v2067, %v2067
  %v2085 = vpack.c.bf16 %v2069, %v2069
  %v2086 = vpack.c.bf16 %v2072, %v2072
  %v2087 = vpack.c.bf16 %v2074, %v2074
  %2088 = vrot.lane.b32.xlu0 %v1120, 104
  %v2089 = vpop.permute.xlu0 %2088
  %2090 = vrot.lane.b32.xlu0 %v1121, 104
  %v2091 = vpop.permute.xlu0 %2090
  %2092 = vrot.lane.b32.xlu0 %v1122, 104
  %v2093 = vpop.permute.xlu0 %2092
  %2094 = vrot.lane.b32.xlu0 %v1123, 104
  %v2095 = vpop.permute.xlu0 %2094
  %2096 = vrot.lane.b32.xlu0 %v1124, 104
  %v2097 = vpop.permute.xlu0 %2096
  %2098 = vrot.lane.b32.xlu0 %v1125, 104
  %v2099 = vpop.permute.xlu0 %2098
  %2100 = vrot.lane.b32.xlu0 %v1120, 72
  %v2101 = vpop.permute.xlu0 %2100
  %2102 = vrot.lane.b32.xlu0 %v1121, 72
  %v2103 = vpop.permute.xlu0 %2102
  %2104 = vrot.lane.b32.xlu0 %v1122, 72
  %v2105 = vpop.permute.xlu0 %2104
  %2106 = vrot.lane.b32.xlu0 %v1123, 72
  %v2107 = vpop.permute.xlu0 %2106
  %2108 = vrot.lane.b32.xlu0 %v1124, 72
  %v2109 = vpop.permute.xlu0 %2108
  %2110 = vrot.lane.b32.xlu0 %v1125, 72
  %v2111 = vpop.permute.xlu0 %2110
  %v2113 = vsel %vm1138, %v2089, 0
  %v2116 = vsel %vm1138, %v2091, 0
  %v2119 = vsel %vm1138, %v2093, 0
  %v2122 = vsel %vm1138, %v2095, 0
  %v2125 = vsel %vm1138, %v2097, 0
  %v2128 = vsel %vm1138, %v2099, 0
  %v2131 = vsel %vm1138, %v2101, 0
  %v2134 = vsel %vm1138, %v2103, 0
  %v2137 = vsel %vm1138, %v2105, 0
  %v2140 = vsel %vm1138, %v2107, 0
  %v2143 = vsel %vm1138, %v2109, 0
  %v2146 = vsel %vm1138, %v2111, 0
  %2148 = vmatpush.bf16.xpose.msra.mxu0 0
  %2149 = vmatpush.bf16.xpose.msra.mxu0 0
  %2150 = vmatpush.bf16.xpose.msra.mxu0 %v2146
  %2151 = vmatpush.bf16.xpose.msra.mxu0 %v2143
  %2152 = vmatpush.bf16.xpose.msra.mxu0 %v2140
  %2153 = vmatpush.bf16.xpose.msra.mxu0 %v2137
  %2154 = vmatpush.bf16.xpose.msra.mxu0 %v2134
  %2155 = vmatpush.bf16.xpose.msra.mxu0 %v2131
  %2156 = vmatmul.bf16.gmra.mxu0 %v2113
  %v2157 = vpop.f32.mrf.mxu0
  %v2158 = vadd.f32 0.0, %v2157
  %v2159 = vpop.f32.mrf.mxu0
  %v2160 = vadd.f32 0.0, %v2159
  %2161 = vmatmul.bf16.gmra.mxu0 %v2116
  %v2162 = vpop.f32.mrf.mxu0
  %v2163 = vadd.f32 0.0, %v2162
  %v2164 = vpop.f32.mrf.mxu0
  %v2165 = vadd.f32 0.0, %v2164
  %2166 = vmatmul.bf16.gmra.mxu0 %v2119
  %v2167 = vpop.f32.mrf.mxu0
  %v2168 = vadd.f32 0.0, %v2167
  %v2169 = vpop.f32.mrf.mxu0
  %v2170 = vadd.f32 0.0, %v2169
  %2171 = vmatmul.bf16.gmra.mxu0 %v2122
  %v2172 = vpop.f32.mrf.mxu0
  %v2173 = vadd.f32 0.0, %v2172
  %v2174 = vpop.f32.mrf.mxu0
  %v2175 = vadd.f32 0.0, %v2174
  %2176 = vmatmul.bf16.gmra.mxu0 %v2125
  %v2177 = vpop.f32.mrf.mxu0
  %v2178 = vadd.f32 0.0, %v2177
  %v2179 = vpop.f32.mrf.mxu0
  %v2180 = vadd.f32 0.0, %v2179
  %2181 = vmatmul.bf16.gmra.mxu0 %v2128
  %v2182 = vpop.f32.mrf.mxu0
  %v2183 = vadd.f32 0.0, %v2182
  %v2184 = vpop.f32.mrf.mxu0
  %v2185 = vadd.f32 0.0, %v2184
  %2186 = vdwg.mxu0
  %v2187 = vsel %vm1214, %v2158, -inf
  %2188 = vmax.xlane.f32.xlu0 %v2187
  %v2189 = vpop.xlane.xlu0 %2188
  %v2190 = vsel %vm1214, %v2160, -inf
  %2191 = vmax.xlane.f32.xlu0 %v2190
  %v2192 = vpop.xlane.xlu0 %2191
  %v2193 = vsel %vm1214, %v2163, -inf
  %2194 = vmax.xlane.f32.xlu0 %v2193
  %v2195 = vpop.xlane.xlu0 %2194
  %v2196 = vsel %vm1214, %v2165, -inf
  %2197 = vmax.xlane.f32.xlu0 %v2196
  %v2198 = vpop.xlane.xlu0 %2197
  %v2199 = vsel %vm1214, %v2168, -inf
  %2200 = vmax.xlane.f32.xlu0 %v2199
  %v2201 = vpop.xlane.xlu0 %2200
  %v2202 = vsel %vm1214, %v2170, -inf
  %2203 = vmax.xlane.f32.xlu0 %v2202
  %v2204 = vpop.xlane.xlu0 %2203
  %v2205 = vsel %vm1214, %v2173, -inf
  %2206 = vmax.xlane.f32.xlu0 %v2205
  %v2207 = vpop.xlane.xlu0 %2206
  %v2208 = vsel %vm1214, %v2175, -inf
  %2209 = vmax.xlane.f32.xlu0 %v2208
  %v2210 = vpop.xlane.xlu0 %2209
  %v2211 = vsel %vm1214, %v2178, -inf
  %2212 = vmax.xlane.f32.xlu0 %v2211
  %v2213 = vpop.xlane.xlu0 %2212
  %v2214 = vsel %vm1214, %v2180, -inf
  %2215 = vmax.xlane.f32.xlu0 %v2214
  %v2216 = vpop.xlane.xlu0 %2215
  %v2217 = vsel %vm1214, %v2183, -inf
  %2218 = vmax.xlane.f32.xlu0 %v2217
  %v2219 = vpop.xlane.xlu0 %2218
  %v2220 = vsel %vm1214, %v2185, -inf
  %2221 = vmax.xlane.f32.xlu0 %v2220
  %v2222 = vpop.xlane.xlu0 %2221
  %v2223 = vsub.f32 %v2158, %v2189
  %v2224 = vsub.f32 %v2160, %v2192
  %v2225 = vsub.f32 %v2163, %v2195
  %v2226 = vsub.f32 %v2165, %v2198
  %v2227 = vsub.f32 %v2168, %v2201
  %v2228 = vsub.f32 %v2170, %v2204
  %v2229 = vsub.f32 %v2173, %v2207
  %v2230 = vsub.f32 %v2175, %v2210
  %v2231 = vsub.f32 %v2178, %v2213
  %v2232 = vsub.f32 %v2180, %v2216
  %v2233 = vsub.f32 %v2183, %v2219
  %v2234 = vsub.f32 %v2185, %v2222
  %v2235 = vmul.f32 %v2223, 1.442695
  %v2236 = vpow.pop %v2235
  %v2237 = vmul.f32 %v2224, 1.442695
  %v2238 = vpow.pop %v2237
  %v2239 = vmul.f32 %v2225, 1.442695
  %v2240 = vpow.pop %v2239
  %v2241 = vmul.f32 %v2226, 1.442695
  %v2242 = vpow.pop %v2241
  %v2243 = vmul.f32 %v2227, 1.442695
  %v2244 = vpow.pop %v2243
  %v2245 = vmul.f32 %v2228, 1.442695
  %v2246 = vpow.pop %v2245
  %v2247 = vmul.f32 %v2229, 1.442695
  %v2248 = vpow.pop %v2247
  %v2249 = vmul.f32 %v2230, 1.442695
  %v2250 = vpow.pop %v2249
  %v2251 = vmul.f32 %v2231, 1.442695
  %v2252 = vpow.pop %v2251
  %v2253 = vmul.f32 %v2232, 1.442695
  %v2254 = vpow.pop %v2253
  %v2255 = vmul.f32 %v2233, 1.442695
  %v2256 = vpow.pop %v2255
  %v2257 = vmul.f32 %v2234, 1.442695
  %v2258 = vpow.pop %v2257
  %v2259 = vsel %vm1214, %v2236, 0.0
  %2260 = vadd.xlane.f32.xlu0 %v2259
  %v2261 = vpop.xlane.xlu0 %2260
  %v2262 = vsel %vm1214, %v2238, 0.0
  %2263 = vadd.xlane.f32.xlu0 %v2262
  %v2264 = vpop.xlane.xlu0 %2263
  %v2265 = vsel %vm1214, %v2240, 0.0
  %2266 = vadd.xlane.f32.xlu0 %v2265
  %v2267 = vpop.xlane.xlu0 %2266
  %v2268 = vsel %vm1214, %v2242, 0.0
  %2269 = vadd.xlane.f32.xlu0 %v2268
  %v2270 = vpop.xlane.xlu0 %2269
  %v2271 = vsel %vm1214, %v2244, 0.0
  %2272 = vadd.xlane.f32.xlu0 %v2271
  %v2273 = vpop.xlane.xlu0 %2272
  %v2274 = vsel %vm1214, %v2246, 0.0
  %2275 = vadd.xlane.f32.xlu0 %v2274
  %v2276 = vpop.xlane.xlu0 %2275
  %v2277 = vsel %vm1214, %v2248, 0.0
  %2278 = vadd.xlane.f32.xlu0 %v2277
  %v2279 = vpop.xlane.xlu0 %2278
  %v2280 = vsel %vm1214, %v2250, 0.0
  %2281 = vadd.xlane.f32.xlu0 %v2280
  %v2282 = vpop.xlane.xlu0 %2281
  %v2283 = vsel %vm1214, %v2252, 0.0
  %2284 = vadd.xlane.f32.xlu0 %v2283
  %v2285 = vpop.xlane.xlu0 %2284
  %v2286 = vsel %vm1214, %v2254, 0.0
  %2287 = vadd.xlane.f32.xlu0 %v2286
  %v2288 = vpop.xlane.xlu0 %2287
  %v2289 = vsel %vm1214, %v2256, 0.0
  %2290 = vadd.xlane.f32.xlu0 %v2289
  %v2291 = vpop.xlane.xlu0 %2290
  %v2292 = vsel %vm1214, %v2258, 0.0
  %2293 = vadd.xlane.f32.xlu0 %v2292
  %v2294 = vpop.xlane.xlu0 %2293
  %v2295 = vrcp.pop %v2261
  %v2296 = vrcp.pop %v2264
  %v2297 = vrcp.pop %v2267
  %v2298 = vrcp.pop %v2270
  %v2299 = vrcp.pop %v2273
  %v2300 = vrcp.pop %v2276
  %v2301 = vrcp.pop %v2279
  %v2302 = vrcp.pop %v2282
  %v2303 = vrcp.pop %v2285
  %v2304 = vrcp.pop %v2288
  %v2305 = vrcp.pop %v2291
  %v2306 = vrcp.pop %v2294
  %v2307 = vmul.f32 %v2236, %v2295
  %v2308 = vmul.f32 %v2238, %v2296
  %v2309 = vmul.f32 %v2240, %v2297
  %v2310 = vmul.f32 %v2242, %v2298
  %v2311 = vmul.f32 %v2244, %v2299
  %v2312 = vmul.f32 %v2246, %v2300
  %v2313 = vmul.f32 %v2248, %v2301
  %v2314 = vmul.f32 %v2250, %v2302
  %v2315 = vmul.f32 %v2252, %v2303
  %v2316 = vmul.f32 %v2254, %v2304
  %v2317 = vmul.f32 %v2256, %v2305
  %v2318 = vmul.f32 %v2258, %v2306
  %v2319 = vpack.c.bf16 %v2308, %v2307
  %v2320 = vpack.c.bf16 %v2310, %v2309
  %v2321 = vpack.c.bf16 %v2312, %v2311
  %v2322 = vpack.c.bf16 %v2314, %v2313
  %v2323 = vpack.c.bf16 %v2316, %v2315
  %v2324 = vpack.c.bf16 %v2318, %v2317
  %2325 = vrot.lane.b32.xlu0 %v1120, 40
  %v2326 = vpop.permute.xlu0 %2325
  %2327 = vrot.lane.b32.xlu0 %v1121, 40
  %v2328 = vpop.permute.xlu0 %2327
  %2329 = vrot.lane.b32.xlu0 %v1122, 40
  %v2330 = vpop.permute.xlu0 %2329
  %2331 = vrot.lane.b32.xlu0 %v1123, 40
  %v2332 = vpop.permute.xlu0 %2331
  %2333 = vrot.lane.b32.xlu0 %v1124, 40
  %v2334 = vpop.permute.xlu0 %2333
  %2335 = vrot.lane.b32.xlu0 %v1125, 40
  %v2336 = vpop.permute.xlu0 %2335
  %v2344 = vsel %vm1214, %v2319, 0
  %v2347 = vsel %vm1214, %v2320, 0
  %v2350 = vsel %vm1214, %v2321, 0
  %v2353 = vsel %vm1214, %v2322, 0
  %v2356 = vsel %vm1214, %v2323, 0
  %v2359 = vsel %vm1214, %v2324, 0
  %2361 = vmatpush.bf16.msra.mxu0 0
  %2362 = vmatpush.bf16.msra.mxu0 0
  %2363 = vmatpush.bf16.msra.mxu0 %v2336
  %2364 = vmatpush.bf16.msra.mxu0 %v2334
  %2365 = vmatpush.bf16.msra.mxu0 %v2332
  %2366 = vmatpush.bf16.msra.mxu0 %v2330
  %2367 = vmatpush.bf16.msra.mxu0 %v2328
  %2368 = vmatpush.bf16.msra.mxu0 %v2326
  %2369 = vmatmul.bf16.gmra.mxu0 %v2344
  %v2370 = vpop.f32.mrf.mxu0
  %v2371 = vadd.f32 0.0, %v2370
  %v2372 = vpop.f32.mrf.mxu0
  %v2373 = vadd.f32 0.0, %v2372
  %2374 = vmatmul.bf16.gmra.mxu0 %v2347
  %v2375 = vpop.f32.mrf.mxu0
  %v2376 = vadd.f32 0.0, %v2375
  %v2377 = vpop.f32.mrf.mxu0
  %v2378 = vadd.f32 0.0, %v2377
  %2379 = vmatmul.bf16.gmra.mxu0 %v2350
  %v2380 = vpop.f32.mrf.mxu0
  %v2381 = vadd.f32 0.0, %v2380
  %v2382 = vpop.f32.mrf.mxu0
  %v2383 = vadd.f32 0.0, %v2382
  %2384 = vmatmul.bf16.gmra.mxu0 %v2353
  %v2385 = vpop.f32.mrf.mxu0
  %v2386 = vadd.f32 0.0, %v2385
  %v2387 = vpop.f32.mrf.mxu0
  %v2388 = vadd.f32 0.0, %v2387
  %2389 = vmatmul.bf16.gmra.mxu0 %v2356
  %v2390 = vpop.f32.mrf.mxu0
  %v2391 = vadd.f32 0.0, %v2390
  %v2392 = vpop.f32.mrf.mxu0
  %v2393 = vadd.f32 0.0, %v2392
  %2394 = vmatmul.bf16.gmra.mxu0 %v2359
  %v2395 = vpop.f32.mrf.mxu0
  %v2396 = vadd.f32 0.0, %v2395
  %v2397 = vpop.f32.mrf.mxu0
  %v2398 = vadd.f32 0.0, %v2397
  %2399 = vdwg.mxu0
  %v2400 = vpack.c.bf16 %v2371, %v2371
  %v2401 = vpack.c.bf16 %v2373, %v2373
  %v2402 = vpack.c.bf16 %v2376, %v2376
  %v2403 = vpack.c.bf16 %v2378, %v2378
  %v2404 = vpack.c.bf16 %v2381, %v2381
  %v2405 = vpack.c.bf16 %v2383, %v2383
  %v2406 = vpack.c.bf16 %v2386, %v2386
  %v2407 = vpack.c.bf16 %v2388, %v2388
  %v2408 = vpack.c.bf16 %v2391, %v2391
  %v2409 = vpack.c.bf16 %v2393, %v2393
  %v2410 = vpack.c.bf16 %v2396, %v2396
  %v2411 = vpack.c.bf16 %v2398, %v2398
  %v2424 = vunpack.c.l.b16 %v1428
  %v2425 = vunpack.c.l.b16 %v1429
  %v2426 = vunpack.c.l.b16 %v1430
  %v2427 = vunpack.c.l.b16 %v1431
  %v2428 = vunpack.c.l.b16 %v1432
  %v2429 = vunpack.c.l.b16 %v1433
  %v2430 = vunpack.c.l.b16 %v1434
  %v2431 = vunpack.c.l.b16 %v1435
  %v2432 = vunpack.c.l.b16 %v1436
  %v2433 = vunpack.c.l.b16 %v1437
  %v2434 = vunpack.c.l.b16 %v1438
  %v2435 = vunpack.c.l.b16 %v1439
  %v2436 = vpack.c.b16 %v2425, %v2424
  %v2437 = vpack.c.b16 %v2427, %v2426
  %v2438 = vpack.c.b16 %v2429, %v2428
  %v2439 = vpack.c.b16 %v2431, %v2430
  %v2440 = vpack.c.b16 %v2433, %v2432
  %v2441 = vpack.c.b16 %v2435, %v2434
  %v2454 = vunpack.c.l.b16 %v1752
  %v2455 = vunpack.c.l.b16 %v1753
  %v2456 = vunpack.c.l.b16 %v1754
  %v2457 = vunpack.c.l.b16 %v1755
  %v2458 = vunpack.c.l.b16 %v1756
  %v2459 = vunpack.c.l.b16 %v1757
  %v2460 = vunpack.c.l.b16 %v1758
  %v2461 = vunpack.c.l.b16 %v1759
  %v2462 = vunpack.c.l.b16 %v1760
  %v2463 = vunpack.c.l.b16 %v1761
  %v2464 = vunpack.c.l.b16 %v1762
  %v2465 = vunpack.c.l.b16 %v1763
  %v2466 = vpack.c.b16 %v2455, %v2454
  %v2467 = vpack.c.b16 %v2457, %v2456
  %v2468 = vpack.c.b16 %v2459, %v2458
  %v2469 = vpack.c.b16 %v2461, %v2460
  %v2470 = vpack.c.b16 %v2463, %v2462
  %v2471 = vpack.c.b16 %v2465, %v2464
  %2472 = vrot.lane.b32.xlu0 %v2466, 8
  %v2473 = vpop.permute.xlu0 %2472
  %2474 = vrot.lane.b32.xlu0 %v2467, 8
  %v2475 = vpop.permute.xlu0 %2474
  %2476 = vrot.lane.b32.xlu0 %v2468, 8
  %v2477 = vpop.permute.xlu0 %2476
  %2478 = vrot.lane.b32.xlu0 %v2469, 8
  %v2479 = vpop.permute.xlu0 %2478
  %2480 = vrot.lane.b32.xlu0 %v2470, 8
  %v2481 = vpop.permute.xlu0 %2480
  %2482 = vrot.lane.b32.xlu0 %v2471, 8
  %v2483 = vpop.permute.xlu0 %2482
  %v2496 = vunpack.c.l.b16 %v2076
  %v2497 = vunpack.c.l.b16 %v2077
  %v2498 = vunpack.c.l.b16 %v2078
  %v2499 = vunpack.c.l.b16 %v2079
  %v2500 = vunpack.c.l.b16 %v2080
  %v2501 = vunpack.c.l.b16 %v2081
  %v2502 = vunpack.c.l.b16 %v2082
  %v2503 = vunpack.c.l.b16 %v2083
  %v2504 = vunpack.c.l.b16 %v2084
  %v2505 = vunpack.c.l.b16 %v2085
  %v2506 = vunpack.c.l.b16 %v2086
  %v2507 = vunpack.c.l.b16 %v2087
  %v2508 = vpack.c.b16 %v2497, %v2496
  %v2509 = vpack.c.b16 %v2499, %v2498
  %v2510 = vpack.c.b16 %v2501, %v2500
  %v2511 = vpack.c.b16 %v2503, %v2502
  %v2512 = vpack.c.b16 %v2505, %v2504
  %v2513 = vpack.c.b16 %v2507, %v2506
  %2514 = vrot.lane.b32.xlu0 %v2508, 16
  %v2515 = vpop.permute.xlu0 %2514
  %2516 = vrot.lane.b32.xlu0 %v2509, 16
  %v2517 = vpop.permute.xlu0 %2516
  %2518 = vrot.lane.b32.xlu0 %v2510, 16
  %v2519 = vpop.permute.xlu0 %2518
  %2520 = vrot.lane.b32.xlu0 %v2511, 16
  %v2521 = vpop.permute.xlu0 %2520
  %2522 = vrot.lane.b32.xlu0 %v2512, 16
  %v2523 = vpop.permute.xlu0 %2522
  %2524 = vrot.lane.b32.xlu0 %v2513, 16
  %v2525 = vpop.permute.xlu0 %2524
  %v2538 = vunpack.c.l.b16 %v2400
  %v2539 = vunpack.c.l.b16 %v2401
  %v2540 = vunpack.c.l.b16 %v2402
  %v2541 = vunpack.c.l.b16 %v2403
  %v2542 = vunpack.c.l.b16 %v2404
  %v2543 = vunpack.c.l.b16 %v2405
  %v2544 = vunpack.c.l.b16 %v2406
  %v2545 = vunpack.c.l.b16 %v2407
  %v2546 = vunpack.c.l.b16 %v2408
  %v2547 = vunpack.c.l.b16 %v2409
  %v2548 = vunpack.c.l.b16 %v2410
  %v2549 = vunpack.c.l.b16 %v2411
  %v2550 = vpack.c.b16 %v2539, %v2538
  %v2551 = vpack.c.b16 %v2541, %v2540
  %v2552 = vpack.c.b16 %v2543, %v2542
  %v2553 = vpack.c.b16 %v2545, %v2544
  %v2554 = vpack.c.b16 %v2547, %v2546
  %v2555 = vpack.c.b16 %v2549, %v2548
  %2556 = vrot.lane.b32.xlu0 %v2550, 24
  %v2557 = vpop.permute.xlu0 %2556
  %2558 = vrot.lane.b32.xlu0 %v2551, 24
  %v2559 = vpop.permute.xlu0 %2558
  %2560 = vrot.lane.b32.xlu0 %v2552, 24
  %v2561 = vpop.permute.xlu0 %2560
  %2562 = vrot.lane.b32.xlu0 %v2553, 24
  %v2563 = vpop.permute.xlu0 %2562
  %2564 = vrot.lane.b32.xlu0 %v2554, 24
  %v2565 = vpop.permute.xlu0 %2564
  %2566 = vrot.lane.b32.xlu0 %v2555, 24
  %v2567 = vpop.permute.xlu0 %2566
  %v2570 = vsel %vm1138, %v2436, %v2473
  %v2573 = vsel %vm1138, %v2437, %v2475
  %v2576 = vsel %vm1138, %v2438, %v2477
  %v2579 = vsel %vm1138, %v2439, %v2479
  %v2582 = vsel %vm1138, %v2440, %v2481
  %v2585 = vsel %vm1138, %v2441, %v2483
  %vm2586 = vcmask 130048
  %v2588 = vsel %vm2586, %v2570, %v2515
  %v2590 = vsel %vm2586, %v2573, %v2517
  %v2592 = vsel %vm2586, %v2576, %v2519
  %v2594 = vsel %vm2586, %v2579, %v2521
  %v2596 = vsel %vm2586, %v2582, %v2523
  %v2598 = vsel %vm2586, %v2585, %v2525
  %vm2599 = vcmask 195584
  %v2601 = vsel %vm2599, %v2588, %v2557
  %v2603 = vsel %vm2599, %v2590, %v2559
  %v2605 = vsel %vm2599, %v2592, %v2561
  %v2607 = vsel %vm2599, %v2594, %v2563
  %v2609 = vsel %vm2599, %v2596, %v2565
  %v2611 = vsel %vm2599, %v2598, %v2567
  %v2624 = vunpack.c.l.b16 %v1084
  %v2625 = vunpack.c.l.b16 %v1085
  %v2626 = vunpack.c.l.b16 %v1086
  %v2627 = vunpack.c.l.b16 %v1087
  %v2628 = vunpack.c.l.b16 %v1088
  %v2629 = vunpack.c.l.b16 %v1089
  %v2630 = vunpack.c.l.b16 %v1090
  %v2631 = vunpack.c.l.b16 %v1091
  %v2632 = vunpack.c.l.b16 %v1092
  %v2633 = vunpack.c.l.b16 %v1093
  %v2634 = vunpack.c.l.b16 %v1094
  %v2635 = vunpack.c.l.b16 %v1095
  %v2636 = vpack.c.b16 %v2625, %v2624
  %v2637 = vpack.c.b16 %v2627, %v2626
  %v2638 = vpack.c.b16 %v2629, %v2628
  %v2639 = vpack.c.b16 %v2631, %v2630
  %v2640 = vpack.c.b16 %v2633, %v2632
  %v2641 = vpack.c.b16 %v2635, %v2634
  %2642 = vrot.lane.b32.xlu0 %v2636, 96
  %v2643 = vpop.permute.xlu0 %2642
  %2644 = vrot.lane.b32.xlu0 %v2637, 96
  %v2645 = vpop.permute.xlu0 %2644
  %2646 = vrot.lane.b32.xlu0 %v2638, 96
  %v2647 = vpop.permute.xlu0 %2646
  %2648 = vrot.lane.b32.xlu0 %v2639, 96
  %v2649 = vpop.permute.xlu0 %2648
  %2650 = vrot.lane.b32.xlu0 %v2640, 96
  %v2651 = vpop.permute.xlu0 %2650
  %2652 = vrot.lane.b32.xlu0 %v2641, 96
  %v2653 = vpop.permute.xlu0 %2652
  %v2655 = vsel %vm1138, %v2636, 0
  %v2658 = vsel %vm1138, %v2637, 0
  %v2661 = vsel %vm1138, %v2638, 0
  %v2664 = vsel %vm1138, %v2639, 0
  %v2667 = vsel %vm1138, %v2640, 0
  %v2670 = vsel %vm1138, %v2641, 0
  %v2673 = vsel %vm1138, %v2643, 0
  %v2676 = vsel %vm1138, %v2645, 0
  %v2679 = vsel %vm1138, %v2647, 0
  %v2682 = vsel %vm1138, %v2649, 0
  %v2685 = vsel %vm1138, %v2651, 0
  %v2688 = vsel %vm1138, %v2653, 0
  %2690 = vmatpush.bf16.xpose.msra.mxu0 0
  %2691 = vmatpush.bf16.xpose.msra.mxu0 0
  %2692 = vmatpush.bf16.xpose.msra.mxu0 %v2688
  %2693 = vmatpush.bf16.xpose.msra.mxu0 %v2685
  %2694 = vmatpush.bf16.xpose.msra.mxu0 %v2682
  %2695 = vmatpush.bf16.xpose.msra.mxu0 %v2679
  %2696 = vmatpush.bf16.xpose.msra.mxu0 %v2676
  %2697 = vmatpush.bf16.xpose.msra.mxu0 %v2673
  %2698 = vmatmul.bf16.gmra.mxu0 %v2655
  %v2699 = vpop.f32.mrf.mxu0
  %v2700 = vadd.f32 0.0, %v2699
  %v2701 = vpop.f32.mrf.mxu0
  %v2702 = vadd.f32 0.0, %v2701
  %2703 = vmatmul.bf16.gmra.mxu0 %v2658
  %v2704 = vpop.f32.mrf.mxu0
  %v2705 = vadd.f32 0.0, %v2704
  %v2706 = vpop.f32.mrf.mxu0
  %v2707 = vadd.f32 0.0, %v2706
  %2708 = vmatmul.bf16.gmra.mxu0 %v2661
  %v2709 = vpop.f32.mrf.mxu0
  %v2710 = vadd.f32 0.0, %v2709
  %v2711 = vpop.f32.mrf.mxu0
  %v2712 = vadd.f32 0.0, %v2711
  %2713 = vmatmul.bf16.gmra.mxu0 %v2664
  %v2714 = vpop.f32.mrf.mxu0
  %v2715 = vadd.f32 0.0, %v2714
  %v2716 = vpop.f32.mrf.mxu0
  %v2717 = vadd.f32 0.0, %v2716
  %2718 = vmatmul.bf16.gmra.mxu0 %v2667
  %v2719 = vpop.f32.mrf.mxu0
  %v2720 = vadd.f32 0.0, %v2719
  %v2721 = vpop.f32.mrf.mxu0
  %v2722 = vadd.f32 0.0, %v2721
  %2723 = vmatmul.bf16.gmra.mxu0 %v2670
  %v2724 = vpop.f32.mrf.mxu0
  %v2725 = vadd.f32 0.0, %v2724
  %v2726 = vpop.f32.mrf.mxu0
  %v2727 = vadd.f32 0.0, %v2726
  %2728 = vdwg.mxu0
  %v2729 = vsel %vm1214, %v2700, -inf
  %2730 = vmax.xlane.f32.xlu0 %v2729
  %v2731 = vpop.xlane.xlu0 %2730
  %v2732 = vsel %vm1214, %v2702, -inf
  %2733 = vmax.xlane.f32.xlu0 %v2732
  %v2734 = vpop.xlane.xlu0 %2733
  %v2735 = vsel %vm1214, %v2705, -inf
  %2736 = vmax.xlane.f32.xlu0 %v2735
  %v2737 = vpop.xlane.xlu0 %2736
  %v2738 = vsel %vm1214, %v2707, -inf
  %2739 = vmax.xlane.f32.xlu0 %v2738
  %v2740 = vpop.xlane.xlu0 %2739
  %v2741 = vsel %vm1214, %v2710, -inf
  %2742 = vmax.xlane.f32.xlu0 %v2741
  %v2743 = vpop.xlane.xlu0 %2742
  %v2744 = vsel %vm1214, %v2712, -inf
  %2745 = vmax.xlane.f32.xlu0 %v2744
  %v2746 = vpop.xlane.xlu0 %2745
  %v2747 = vsel %vm1214, %v2715, -inf
  %2748 = vmax.xlane.f32.xlu0 %v2747
  %v2749 = vpop.xlane.xlu0 %2748
  %v2750 = vsel %vm1214, %v2717, -inf
  %2751 = vmax.xlane.f32.xlu0 %v2750
  %v2752 = vpop.xlane.xlu0 %2751
  %v2753 = vsel %vm1214, %v2720, -inf
  %2754 = vmax.xlane.f32.xlu0 %v2753
  %v2755 = vpop.xlane.xlu0 %2754
  %v2756 = vsel %vm1214, %v2722, -inf
  %2757 = vmax.xlane.f32.xlu0 %v2756
  %v2758 = vpop.xlane.xlu0 %2757
  %v2759 = vsel %vm1214, %v2725, -inf
  %2760 = vmax.xlane.f32.xlu0 %v2759
  %v2761 = vpop.xlane.xlu0 %2760
  %v2762 = vsel %vm1214, %v2727, -inf
  %2763 = vmax.xlane.f32.xlu0 %v2762
  %v2764 = vpop.xlane.xlu0 %2763
  %v2765 = vsub.f32 %v2700, %v2731
  %v2766 = vsub.f32 %v2702, %v2734
  %v2767 = vsub.f32 %v2705, %v2737
  %v2768 = vsub.f32 %v2707, %v2740
  %v2769 = vsub.f32 %v2710, %v2743
  %v2770 = vsub.f32 %v2712, %v2746
  %v2771 = vsub.f32 %v2715, %v2749
  %v2772 = vsub.f32 %v2717, %v2752
  %v2773 = vsub.f32 %v2720, %v2755
  %v2774 = vsub.f32 %v2722, %v2758
  %v2775 = vsub.f32 %v2725, %v2761
  %v2776 = vsub.f32 %v2727, %v2764
  %v2777 = vmul.f32 %v2765, 1.442695
  %v2778 = vpow.pop %v2777
  %v2779 = vmul.f32 %v2766, 1.442695
  %v2780 = vpow.pop %v2779
  %v2781 = vmul.f32 %v2767, 1.442695
  %v2782 = vpow.pop %v2781
  %v2783 = vmul.f32 %v2768, 1.442695
  %v2784 = vpow.pop %v2783
  %v2785 = vmul.f32 %v2769, 1.442695
  %v2786 = vpow.pop %v2785
  %v2787 = vmul.f32 %v2770, 1.442695
  %v2788 = vpow.pop %v2787
  %v2789 = vmul.f32 %v2771, 1.442695
  %v2790 = vpow.pop %v2789
  %v2791 = vmul.f32 %v2772, 1.442695
  %v2792 = vpow.pop %v2791
  %v2793 = vmul.f32 %v2773, 1.442695
  %v2794 = vpow.pop %v2793
  %v2795 = vmul.f32 %v2774, 1.442695
  %v2796 = vpow.pop %v2795
  %v2797 = vmul.f32 %v2775, 1.442695
  %v2798 = vpow.pop %v2797
  %v2799 = vmul.f32 %v2776, 1.442695
  %v2800 = vpow.pop %v2799
  %v2801 = vsel %vm1214, %v2778, 0.0
  %2802 = vadd.xlane.f32.xlu0 %v2801
  %v2803 = vpop.xlane.xlu0 %2802
  %v2804 = vsel %vm1214, %v2780, 0.0
  %2805 = vadd.xlane.f32.xlu0 %v2804
  %v2806 = vpop.xlane.xlu0 %2805
  %v2807 = vsel %vm1214, %v2782, 0.0
  %2808 = vadd.xlane.f32.xlu0 %v2807
  %v2809 = vpop.xlane.xlu0 %2808
  %v2810 = vsel %vm1214, %v2784, 0.0
  %2811 = vadd.xlane.f32.xlu0 %v2810
  %v2812 = vpop.xlane.xlu0 %2811
  %v2813 = vsel %vm1214, %v2786, 0.0
  %2814 = vadd.xlane.f32.xlu0 %v2813
  %v2815 = vpop.xlane.xlu0 %2814
  %v2816 = vsel %vm1214, %v2788, 0.0
  %2817 = vadd.xlane.f32.xlu0 %v2816
  %v2818 = vpop.xlane.xlu0 %2817
  %v2819 = vsel %vm1214, %v2790, 0.0
  %2820 = vadd.xlane.f32.xlu0 %v2819
  %v2821 = vpop.xlane.xlu0 %2820
  %v2822 = vsel %vm1214, %v2792, 0.0
  %2823 = vadd.xlane.f32.xlu0 %v2822
  %v2824 = vpop.xlane.xlu0 %2823
  %v2825 = vsel %vm1214, %v2794, 0.0
  %2826 = vadd.xlane.f32.xlu0 %v2825
  %v2827 = vpop.xlane.xlu0 %2826
  %v2828 = vsel %vm1214, %v2796, 0.0
  %2829 = vadd.xlane.f32.xlu0 %v2828
  %v2830 = vpop.xlane.xlu0 %2829
  %v2831 = vsel %vm1214, %v2798, 0.0
  %2832 = vadd.xlane.f32.xlu0 %v2831
  %v2833 = vpop.xlane.xlu0 %2832
  %v2834 = vsel %vm1214, %v2800, 0.0
  %2835 = vadd.xlane.f32.xlu0 %v2834
  %v2836 = vpop.xlane.xlu0 %2835
  %v2837 = vrcp.pop %v2803
  %v2838 = vrcp.pop %v2806
  %v2839 = vrcp.pop %v2809
  %v2840 = vrcp.pop %v2812
  %v2841 = vrcp.pop %v2815
  %v2842 = vrcp.pop %v2818
  %v2843 = vrcp.pop %v2821
  %v2844 = vrcp.pop %v2824
  %v2845 = vrcp.pop %v2827
  %v2846 = vrcp.pop %v2830
  %v2847 = vrcp.pop %v2833
  %v2848 = vrcp.pop %v2836
  %v2849 = vmul.f32 %v2778, %v2837
  %v2850 = vmul.f32 %v2780, %v2838
  %v2851 = vmul.f32 %v2782, %v2839
  %v2852 = vmul.f32 %v2784, %v2840
  %v2853 = vmul.f32 %v2786, %v2841
  %v2854 = vmul.f32 %v2788, %v2842
  %v2855 = vmul.f32 %v2790, %v2843
  %v2856 = vmul.f32 %v2792, %v2844
  %v2857 = vmul.f32 %v2794, %v2845
  %v2858 = vmul.f32 %v2796, %v2846
  %v2859 = vmul.f32 %v2798, %v2847
  %v2860 = vmul.f32 %v2800, %v2848
  %v2861 = vpack.c.bf16 %v2850, %v2849
  %v2862 = vpack.c.bf16 %v2852, %v2851
  %v2863 = vpack.c.bf16 %v2854, %v2853
  %v2864 = vpack.c.bf16 %v2856, %v2855
  %v2865 = vpack.c.bf16 %v2858, %v2857
  %v2866 = vpack.c.bf16 %v2860, %v2859
  %2867 = vrot.lane.b32.xlu0 %v2636, 64
  %v2868 = vpop.permute.xlu0 %2867
  %2869 = vrot.lane.b32.xlu0 %v2637, 64
  %v2870 = vpop.permute.xlu0 %2869
  %2871 = vrot.lane.b32.xlu0 %v2638, 64
  %v2872 = vpop.permute.xlu0 %2871
  %2873 = vrot.lane.b32.xlu0 %v2639, 64
  %v2874 = vpop.permute.xlu0 %2873
  %2875 = vrot.lane.b32.xlu0 %v2640, 64
  %v2876 = vpop.permute.xlu0 %2875
  %2877 = vrot.lane.b32.xlu0 %v2641, 64
  %v2878 = vpop.permute.xlu0 %2877
  %v2886 = vsel %vm1214, %v2861, 0
  %v2889 = vsel %vm1214, %v2862, 0
  %v2892 = vsel %vm1214, %v2863, 0
  %v2895 = vsel %vm1214, %v2864, 0
  %v2898 = vsel %vm1214, %v2865, 0
  %v2901 = vsel %vm1214, %v2866, 0
  %2903 = vmatpush.bf16.msra.mxu0 0
  %2904 = vmatpush.bf16.msra.mxu0 0
  %2905 = vmatpush.bf16.msra.mxu0 %v2878
  %2906 = vmatpush.bf16.msra.mxu0 %v2876
  %2907 = vmatpush.bf16.msra.mxu0 %v2874
  %2908 = vmatpush.bf16.msra.mxu0 %v2872
  %2909 = vmatpush.bf16.msra.mxu0 %v2870
  %2910 = vmatpush.bf16.msra.mxu0 %v2868
  %2911 = vmatmul.bf16.gmra.mxu0 %v2886
  %v2912 = vpop.f32.mrf.mxu0
  %v2913 = vadd.f32 0.0, %v2912
  %v2914 = vpop.f32.mrf.mxu0
  %v2915 = vadd.f32 0.0, %v2914
  %2916 = vmatmul.bf16.gmra.mxu0 %v2889
  %v2917 = vpop.f32.mrf.mxu0
  %v2918 = vadd.f32 0.0, %v2917
  %v2919 = vpop.f32.mrf.mxu0
  %v2920 = vadd.f32 0.0, %v2919
  %2921 = vmatmul.bf16.gmra.mxu0 %v2892
  %v2922 = vpop.f32.mrf.mxu0
  %v2923 = vadd.f32 0.0, %v2922
  %v2924 = vpop.f32.mrf.mxu0
  %v2925 = vadd.f32 0.0, %v2924
  %2926 = vmatmul.bf16.gmra.mxu0 %v2895
  %v2927 = vpop.f32.mrf.mxu0
  %v2928 = vadd.f32 0.0, %v2927
  %v2929 = vpop.f32.mrf.mxu0
  %v2930 = vadd.f32 0.0, %v2929
  %2931 = vmatmul.bf16.gmra.mxu0 %v2898
  %v2932 = vpop.f32.mrf.mxu0
  %v2933 = vadd.f32 0.0, %v2932
  %v2934 = vpop.f32.mrf.mxu0
  %v2935 = vadd.f32 0.0, %v2934
  %2936 = vmatmul.bf16.gmra.mxu0 %v2901
  %v2937 = vpop.f32.mrf.mxu0
  %v2938 = vadd.f32 0.0, %v2937
  %v2939 = vpop.f32.mrf.mxu0
  %v2940 = vadd.f32 0.0, %v2939
  %2941 = vdwg.mxu0
  %v2942 = vpack.c.bf16 %v2913, %v2913
  %v2943 = vpack.c.bf16 %v2915, %v2915
  %v2944 = vpack.c.bf16 %v2918, %v2918
  %v2945 = vpack.c.bf16 %v2920, %v2920
  %v2946 = vpack.c.bf16 %v2923, %v2923
  %v2947 = vpack.c.bf16 %v2925, %v2925
  %v2948 = vpack.c.bf16 %v2928, %v2928
  %v2949 = vpack.c.bf16 %v2930, %v2930
  %v2950 = vpack.c.bf16 %v2933, %v2933
  %v2951 = vpack.c.bf16 %v2935, %v2935
  %v2952 = vpack.c.bf16 %v2938, %v2938
  %v2953 = vpack.c.bf16 %v2940, %v2940
  %2954 = vrot.lane.b32.xlu0 %v2636, 120
  %v2955 = vpop.permute.xlu0 %2954
  %2956 = vrot.lane.b32.xlu0 %v2637, 120
  %v2957 = vpop.permute.xlu0 %2956
  %2958 = vrot.lane.b32.xlu0 %v2638, 120
  %v2959 = vpop.permute.xlu0 %2958
  %2960 = vrot.lane.b32.xlu0 %v2639, 120
  %v2961 = vpop.permute.xlu0 %2960
  %2962 = vrot.lane.b32.xlu0 %v2640, 120
  %v2963 = vpop.permute.xlu0 %2962
  %2964 = vrot.lane.b32.xlu0 %v2641, 120
  %v2965 = vpop.permute.xlu0 %2964
  %2966 = vrot.lane.b32.xlu0 %v2636, 88
  %v2967 = vpop.permute.xlu0 %2966
  %2968 = vrot.lane.b32.xlu0 %v2637, 88
  %v2969 = vpop.permute.xlu0 %2968
  %2970 = vrot.lane.b32.xlu0 %v2638, 88
  %v2971 = vpop.permute.xlu0 %2970
  %2972 = vrot.lane.b32.xlu0 %v2639, 88
  %v2973 = vpop.permute.xlu0 %2972
  %2974 = vrot.lane.b32.xlu0 %v2640, 88
  %v2975 = vpop.permute.xlu0 %2974
  %2976 = vrot.lane.b32.xlu0 %v2641, 88
  %v2977 = vpop.permute.xlu0 %2976
  %v2979 = vsel %vm1138, %v2955, 0
  %v2982 = vsel %vm1138, %v2957, 0
  %v2985 = vsel %vm1138, %v2959, 0
  %v2988 = vsel %vm1138, %v2961, 0
  %v2991 = vsel %vm1138, %v2963, 0
  %v2994 = vsel %vm1138, %v2965, 0
  %v2997 = vsel %vm1138, %v2967, 0
  %v3000 = vsel %vm1138, %v2969, 0
  %v3003 = vsel %vm1138, %v2971, 0
  %v3006 = vsel %vm1138, %v2973, 0
  %v3009 = vsel %vm1138, %v2975, 0
  %v3012 = vsel %vm1138, %v2977, 0
  %3014 = vmatpush.bf16.xpose.msra.mxu0 0
  %3015 = vmatpush.bf16.xpose.msra.mxu0 0
  %3016 = vmatpush.bf16.xpose.msra.mxu0 %v3012
  %3017 = vmatpush.bf16.xpose.msra.mxu0 %v3009
  %3018 = vmatpush.bf16.xpose.msra.mxu0 %v3006
  %3019 = vmatpush.bf16.xpose.msra.mxu0 %v3003
  %3020 = vmatpush.bf16.xpose.msra.mxu0 %v3000
  %3021 = vmatpush.bf16.xpose.msra.mxu0 %v2997
  %3022 = vmatmul.bf16.gmra.mxu0 %v2979
  %v3023 = vpop.f32.mrf.mxu0
  %v3024 = vadd.f32 0.0, %v3023
  %v3025 = vpop.f32.mrf.mxu0
  %v3026 = vadd.f32 0.0, %v3025
  %3027 = vmatmul.bf16.gmra.mxu0 %v2982
  %v3028 = vpop.f32.mrf.mxu0
  %v3029 = vadd.f32 0.0, %v3028
  %v3030 = vpop.f32.mrf.mxu0
  %v3031 = vadd.f32 0.0, %v3030
  %3032 = vmatmul.bf16.gmra.mxu0 %v2985
  %v3033 = vpop.f32.mrf.mxu0
  %v3034 = vadd.f32 0.0, %v3033
  %v3035 = vpop.f32.mrf.mxu0
  %v3036 = vadd.f32 0.0, %v3035
  %3037 = vmatmul.bf16.gmra.mxu0 %v2988
  %v3038 = vpop.f32.mrf.mxu0
  %v3039 = vadd.f32 0.0, %v3038
  %v3040 = vpop.f32.mrf.mxu0
  %v3041 = vadd.f32 0.0, %v3040
  %3042 = vmatmul.bf16.gmra.mxu0 %v2991
  %v3043 = vpop.f32.mrf.mxu0
  %v3044 = vadd.f32 0.0, %v3043
  %v3045 = vpop.f32.mrf.mxu0
  %v3046 = vadd.f32 0.0, %v3045
  %3047 = vmatmul.bf16.gmra.mxu0 %v2994
  %v3048 = vpop.f32.mrf.mxu0
  %v3049 = vadd.f32 0.0, %v3048
  %v3050 = vpop.f32.mrf.mxu0
  %v3051 = vadd.f32 0.0, %v3050
  %3052 = vdwg.mxu0
  %v3053 = vsel %vm1214, %v3024, -inf
  %3054 = vmax.xlane.f32.xlu0 %v3053
  %v3055 = vpop.xlane.xlu0 %3054
  %v3056 = vsel %vm1214, %v3026, -inf
  %3057 = vmax.xlane.f32.xlu0 %v3056
  %v3058 = vpop.xlane.xlu0 %3057
  %v3059 = vsel %vm1214, %v3029, -inf
  %3060 = vmax.xlane.f32.xlu0 %v3059
  %v3061 = vpop.xlane.xlu0 %3060
  %v3062 = vsel %vm1214, %v3031, -inf
  %3063 = vmax.xlane.f32.xlu0 %v3062
  %v3064 = vpop.xlane.xlu0 %3063
  %v3065 = vsel %vm1214, %v3034, -inf
  %3066 = vmax.xlane.f32.xlu0 %v3065
  %v3067 = vpop.xlane.xlu0 %3066
  %v3068 = vsel %vm1214, %v3036, -inf
  %3069 = vmax.xlane.f32.xlu0 %v3068
  %v3070 = vpop.xlane.xlu0 %3069
  %v3071 = vsel %vm1214, %v3039, -inf
  %3072 = vmax.xlane.f32.xlu0 %v3071
  %v3073 = vpop.xlane.xlu0 %3072
  %v3074 = vsel %vm1214, %v3041, -inf
  %3075 = vmax.xlane.f32.xlu0 %v3074
  %v3076 = vpop.xlane.xlu0 %3075
  %v3077 = vsel %vm1214, %v3044, -inf
  %3078 = vmax.xlane.f32.xlu0 %v3077
  %v3079 = vpop.xlane.xlu0 %3078
  %v3080 = vsel %vm1214, %v3046, -inf
  %3081 = vmax.xlane.f32.xlu0 %v3080
  %v3082 = vpop.xlane.xlu0 %3081
  %v3083 = vsel %vm1214, %v3049, -inf
  %3084 = vmax.xlane.f32.xlu0 %v3083
  %v3085 = vpop.xlane.xlu0 %3084
  %v3086 = vsel %vm1214, %v3051, -inf
  %3087 = vmax.xlane.f32.xlu0 %v3086
  %v3088 = vpop.xlane.xlu0 %3087
  %v3089 = vsub.f32 %v3024, %v3055
  %v3090 = vsub.f32 %v3026, %v3058
  %v3091 = vsub.f32 %v3029, %v3061
  %v3092 = vsub.f32 %v3031, %v3064
  %v3093 = vsub.f32 %v3034, %v3067
  %v3094 = vsub.f32 %v3036, %v3070
  %v3095 = vsub.f32 %v3039, %v3073
  %v3096 = vsub.f32 %v3041, %v3076
  %v3097 = vsub.f32 %v3044, %v3079
  %v3098 = vsub.f32 %v3046, %v3082
  %v3099 = vsub.f32 %v3049, %v3085
  %v3100 = vsub.f32 %v3051, %v3088
  %v3101 = vmul.f32 %v3089, 1.442695
  %v3102 = vpow.pop %v3101
  %v3103 = vmul.f32 %v3090, 1.442695
  %v3104 = vpow.pop %v3103
  %v3105 = vmul.f32 %v3091, 1.442695
  %v3106 = vpow.pop %v3105
  %v3107 = vmul.f32 %v3092, 1.442695
  %v3108 = vpow.pop %v3107
  %v3109 = vmul.f32 %v3093, 1.442695
  %v3110 = vpow.pop %v3109
  %v3111 = vmul.f32 %v3094, 1.442695
  %v3112 = vpow.pop %v3111
  %v3113 = vmul.f32 %v3095, 1.442695
  %v3114 = vpow.pop %v3113
  %v3115 = vmul.f32 %v3096, 1.442695
  %v3116 = vpow.pop %v3115
  %v3117 = vmul.f32 %v3097, 1.442695
  %v3118 = vpow.pop %v3117
  %v3119 = vmul.f32 %v3098, 1.442695
  %v3120 = vpow.pop %v3119
  %v3121 = vmul.f32 %v3099, 1.442695
  %v3122 = vpow.pop %v3121
  %v3123 = vmul.f32 %v3100, 1.442695
  %v3124 = vpow.pop %v3123
  %v3125 = vsel %vm1214, %v3102, 0.0
  %3126 = vadd.xlane.f32.xlu0 %v3125
  %v3127 = vpop.xlane.xlu0 %3126
  %v3128 = vsel %vm1214, %v3104, 0.0
  %3129 = vadd.xlane.f32.xlu0 %v3128
  %v3130 = vpop.xlane.xlu0 %3129
  %v3131 = vsel %vm1214, %v3106, 0.0
  %3132 = vadd.xlane.f32.xlu0 %v3131
  %v3133 = vpop.xlane.xlu0 %3132
  %v3134 = vsel %vm1214, %v3108, 0.0
  %3135 = vadd.xlane.f32.xlu0 %v3134
  %v3136 = vpop.xlane.xlu0 %3135
  %v3137 = vsel %vm1214, %v3110, 0.0
  %3138 = vadd.xlane.f32.xlu0 %v3137
  %v3139 = vpop.xlane.xlu0 %3138
  %v3140 = vsel %vm1214, %v3112, 0.0
  %3141 = vadd.xlane.f32.xlu0 %v3140
  %v3142 = vpop.xlane.xlu0 %3141
  %v3143 = vsel %vm1214, %v3114, 0.0
  %3144 = vadd.xlane.f32.xlu0 %v3143
  %v3145 = vpop.xlane.xlu0 %3144
  %v3146 = vsel %vm1214, %v3116, 0.0
  %3147 = vadd.xlane.f32.xlu0 %v3146
  %v3148 = vpop.xlane.xlu0 %3147
  %v3149 = vsel %vm1214, %v3118, 0.0
  %3150 = vadd.xlane.f32.xlu0 %v3149
  %v3151 = vpop.xlane.xlu0 %3150
  %v3152 = vsel %vm1214, %v3120, 0.0
  %3153 = vadd.xlane.f32.xlu0 %v3152
  %v3154 = vpop.xlane.xlu0 %3153
  %v3155 = vsel %vm1214, %v3122, 0.0
  %3156 = vadd.xlane.f32.xlu0 %v3155
  %v3157 = vpop.xlane.xlu0 %3156
  %v3158 = vsel %vm1214, %v3124, 0.0
  %3159 = vadd.xlane.f32.xlu0 %v3158
  %v3160 = vpop.xlane.xlu0 %3159
  %v3161 = vrcp.pop %v3127
  %v3162 = vrcp.pop %v3130
  %v3163 = vrcp.pop %v3133
  %v3164 = vrcp.pop %v3136
  %v3165 = vrcp.pop %v3139
  %v3166 = vrcp.pop %v3142
  %v3167 = vrcp.pop %v3145
  %v3168 = vrcp.pop %v3148
  %v3169 = vrcp.pop %v3151
  %v3170 = vrcp.pop %v3154
  %v3171 = vrcp.pop %v3157
  %v3172 = vrcp.pop %v3160
  %v3173 = vmul.f32 %v3102, %v3161
  %v3174 = vmul.f32 %v3104, %v3162
  %v3175 = vmul.f32 %v3106, %v3163
  %v3176 = vmul.f32 %v3108, %v3164
  %v3177 = vmul.f32 %v3110, %v3165
  %v3178 = vmul.f32 %v3112, %v3166
  %v3179 = vmul.f32 %v3114, %v3167
  %v3180 = vmul.f32 %v3116, %v3168
  %v3181 = vmul.f32 %v3118, %v3169
  %v3182 = vmul.f32 %v3120, %v3170
  %v3183 = vmul.f32 %v3122, %v3171
  %v3184 = vmul.f32 %v3124, %v3172
  %v3185 = vpack.c.bf16 %v3174, %v3173
  %v3186 = vpack.c.bf16 %v3176, %v3175
  %v3187 = vpack.c.bf16 %v3178, %v3177
  %v3188 = vpack.c.bf16 %v3180, %v3179
  %v3189 = vpack.c.bf16 %v3182, %v3181
  %v3190 = vpack.c.bf16 %v3184, %v3183
  %3191 = vrot.lane.b32.xlu0 %v2636, 56
  %v3192 = vpop.permute.xlu0 %3191
  %3193 = vrot.lane.b32.xlu0 %v2637, 56
  %v3194 = vpop.permute.xlu0 %3193
  %3195 = vrot.lane.b32.xlu0 %v2638, 56
  %v3196 = vpop.permute.xlu0 %3195
  %3197 = vrot.lane.b32.xlu0 %v2639, 56
  %v3198 = vpop.permute.xlu0 %3197
  %3199 = vrot.lane.b32.xlu0 %v2640, 56
  %v3200 = vpop.permute.xlu0 %3199
  %3201 = vrot.lane.b32.xlu0 %v2641, 56
  %v3202 = vpop.permute.xlu0 %3201
  %v3210 = vsel %vm1214, %v3185, 0
  %v3213 = vsel %vm1214, %v3186, 0
  %v3216 = vsel %vm1214, %v3187, 0
  %v3219 = vsel %vm1214, %v3188, 0
  %v3222 = vsel %vm1214, %v3189, 0
  %v3225 = vsel %vm1214, %v3190, 0
  %3227 = vmatpush.bf16.msra.mxu0 0
  %3228 = vmatpush.bf16.msra.mxu0 0
  %3229 = vmatpush.bf16.msra.mxu0 %v3202
  %3230 = vmatpush.bf16.msra.mxu0 %v3200
  %3231 = vmatpush.bf16.msra.mxu0 %v3198
  %3232 = vmatpush.bf16.msra.mxu0 %v3196
  %3233 = vmatpush.bf16.msra.mxu0 %v3194
  %3234 = vmatpush.bf16.msra.mxu0 %v3192
  %3235 = vmatmul.bf16.gmra.mxu0 %v3210
  %v3236 = vpop.f32.mrf.mxu0
  %v3237 = vadd.f32 0.0, %v3236
  %v3238 = vpop.f32.mrf.mxu0
  %v3239 = vadd.f32 0.0, %v3238
  %3240 = vmatmul.bf16.gmra.mxu0 %v3213
  %v3241 = vpop.f32.mrf.mxu0
  %v3242 = vadd.f32 0.0, %v3241
  %v3243 = vpop.f32.mrf.mxu0
  %v3244 = vadd.f32 0.0, %v3243
  %3245 = vmatmul.bf16.gmra.mxu0 %v3216
  %v3246 = vpop.f32.mrf.mxu0
  %v3247 = vadd.f32 0.0, %v3246
  %v3248 = vpop.f32.mrf.mxu0
  %v3249 = vadd.f32 0.0, %v3248
  %3250 = vmatmul.bf16.gmra.mxu0 %v3219
  %v3251 = vpop.f32.mrf.mxu0
  %v3252 = vadd.f32 0.0, %v3251
  %v3253 = vpop.f32.mrf.mxu0
  %v3254 = vadd.f32 0.0, %v3253
  %3255 = vmatmul.bf16.gmra.mxu0 %v3222
  %v3256 = vpop.f32.mrf.mxu0
  %v3257 = vadd.f32 0.0, %v3256
  %v3258 = vpop.f32.mrf.mxu0
  %v3259 = vadd.f32 0.0, %v3258
  %3260 = vmatmul.bf16.gmra.mxu0 %v3225
  %v3261 = vpop.f32.mrf.mxu0
  %v3262 = vadd.f32 0.0, %v3261
  %v3263 = vpop.f32.mrf.mxu0
  %v3264 = vadd.f32 0.0, %v3263
  %3265 = vdwg.mxu0
  %v3266 = vpack.c.bf16 %v3237, %v3237
  %v3267 = vpack.c.bf16 %v3239, %v3239
  %v3268 = vpack.c.bf16 %v3242, %v3242
  %v3269 = vpack.c.bf16 %v3244, %v3244
  %v3270 = vpack.c.bf16 %v3247, %v3247
  %v3271 = vpack.c.bf16 %v3249, %v3249
  %v3272 = vpack.c.bf16 %v3252, %v3252
  %v3273 = vpack.c.bf16 %v3254, %v3254
  %v3274 = vpack.c.bf16 %v3257, %v3257
  %v3275 = vpack.c.bf16 %v3259, %v3259
  %v3276 = vpack.c.bf16 %v3262, %v3262
  %v3277 = vpack.c.bf16 %v3264, %v3264
  %3278 = vrot.lane.b32.xlu0 %v2636, 112
  %v3279 = vpop.permute.xlu0 %3278
  %3280 = vrot.lane.b32.xlu0 %v2637, 112
  %v3281 = vpop.permute.xlu0 %3280
  %3282 = vrot.lane.b32.xlu0 %v2638, 112
  %v3283 = vpop.permute.xlu0 %3282
  %3284 = vrot.lane.b32.xlu0 %v2639, 112
  %v3285 = vpop.permute.xlu0 %3284
  %3286 = vrot.lane.b32.xlu0 %v2640, 112
  %v3287 = vpop.permute.xlu0 %3286
  %3288 = vrot.lane.b32.xlu0 %v2641, 112
  %v3289 = vpop.permute.xlu0 %3288
  %3290 = vrot.lane.b32.xlu0 %v2636, 80
  %v3291 = vpop.permute.xlu0 %3290
  %3292 = vrot.lane.b32.xlu0 %v2637, 80
  %v3293 = vpop.permute.xlu0 %3292
  %3294 = vrot.lane.b32.xlu0 %v2638, 80
  %v3295 = vpop.permute.xlu0 %3294
  %3296 = vrot.lane.b32.xlu0 %v2639, 80
  %v3297 = vpop.permute.xlu0 %3296
  %3298 = vrot.lane.b32.xlu0 %v2640, 80
  %v3299 = vpop.permute.xlu0 %3298
  %3300 = vrot.lane.b32.xlu0 %v2641, 80
  %v3301 = vpop.permute.xlu0 %3300
  %v3303 = vsel %vm1138, %v3279, 0
  %v3306 = vsel %vm1138, %v3281, 0
  %v3309 = vsel %vm1138, %v3283, 0
  %v3312 = vsel %vm1138, %v3285, 0
  %v3315 = vsel %vm1138, %v3287, 0
  %v3318 = vsel %vm1138, %v3289, 0
  %v3321 = vsel %vm1138, %v3291, 0
  %v3324 = vsel %vm1138, %v3293, 0
  %v3327 = vsel %vm1138, %v3295, 0
  %v3330 = vsel %vm1138, %v3297, 0
  %v3333 = vsel %vm1138, %v3299, 0
  %v3336 = vsel %vm1138, %v3301, 0
  %3338 = vmatpush.bf16.xpose.msra.mxu0 0
  %3339 = vmatpush.bf16.xpose.msra.mxu0 0
  %3340 = vmatpush.bf16.xpose.msra.mxu0 %v3336
  %3341 = vmatpush.bf16.xpose.msra.mxu0 %v3333
  %3342 = vmatpush.bf16.xpose.msra.mxu0 %v3330
  %3343 = vmatpush.bf16.xpose.msra.mxu0 %v3327
  %3344 = vmatpush.bf16.xpose.msra.mxu0 %v3324
  %3345 = vmatpush.bf16.xpose.msra.mxu0 %v3321
  %3346 = vmatmul.bf16.gmra.mxu0 %v3303
  %v3347 = vpop.f32.mrf.mxu0
  %v3348 = vadd.f32 0.0, %v3347
  %v3349 = vpop.f32.mrf.mxu0
  %v3350 = vadd.f32 0.0, %v3349
  %3351 = vmatmul.bf16.gmra.mxu0 %v3306
  %v3352 = vpop.f32.mrf.mxu0
  %v3353 = vadd.f32 0.0, %v3352
  %v3354 = vpop.f32.mrf.mxu0
  %v3355 = vadd.f32 0.0, %v3354
  %3356 = vmatmul.bf16.gmra.mxu0 %v3309
  %v3357 = vpop.f32.mrf.mxu0
  %v3358 = vadd.f32 0.0, %v3357
  %v3359 = vpop.f32.mrf.mxu0
  %v3360 = vadd.f32 0.0, %v3359
  %3361 = vmatmul.bf16.gmra.mxu0 %v3312
  %v3362 = vpop.f32.mrf.mxu0
  %v3363 = vadd.f32 0.0, %v3362
  %v3364 = vpop.f32.mrf.mxu0
  %v3365 = vadd.f32 0.0, %v3364
  %3366 = vmatmul.bf16.gmra.mxu0 %v3315
  %v3367 = vpop.f32.mrf.mxu0
  %v3368 = vadd.f32 0.0, %v3367
  %v3369 = vpop.f32.mrf.mxu0
  %v3370 = vadd.f32 0.0, %v3369
  %3371 = vmatmul.bf16.gmra.mxu0 %v3318
  %v3372 = vpop.f32.mrf.mxu0
  %v3373 = vadd.f32 0.0, %v3372
  %v3374 = vpop.f32.mrf.mxu0
  %v3375 = vadd.f32 0.0, %v3374
  %3376 = vdwg.mxu0
  %v3377 = vsel %vm1214, %v3348, -inf
  %3378 = vmax.xlane.f32.xlu0 %v3377
  %v3379 = vpop.xlane.xlu0 %3378
  %v3380 = vsel %vm1214, %v3350, -inf
  %3381 = vmax.xlane.f32.xlu0 %v3380
  %v3382 = vpop.xlane.xlu0 %3381
  %v3383 = vsel %vm1214, %v3353, -inf
  %3384 = vmax.xlane.f32.xlu0 %v3383
  %v3385 = vpop.xlane.xlu0 %3384
  %v3386 = vsel %vm1214, %v3355, -inf
  %3387 = vmax.xlane.f32.xlu0 %v3386
  %v3388 = vpop.xlane.xlu0 %3387
  %v3389 = vsel %vm1214, %v3358, -inf
  %3390 = vmax.xlane.f32.xlu0 %v3389
  %v3391 = vpop.xlane.xlu0 %3390
  %v3392 = vsel %vm1214, %v3360, -inf
  %3393 = vmax.xlane.f32.xlu0 %v3392
  %v3394 = vpop.xlane.xlu0 %3393
  %v3395 = vsel %vm1214, %v3363, -inf
  %3396 = vmax.xlane.f32.xlu0 %v3395
  %v3397 = vpop.xlane.xlu0 %3396
  %v3398 = vsel %vm1214, %v3365, -inf
  %3399 = vmax.xlane.f32.xlu0 %v3398
  %v3400 = vpop.xlane.xlu0 %3399
  %v3401 = vsel %vm1214, %v3368, -inf
  %3402 = vmax.xlane.f32.xlu0 %v3401
  %v3403 = vpop.xlane.xlu0 %3402
  %v3404 = vsel %vm1214, %v3370, -inf
  %3405 = vmax.xlane.f32.xlu0 %v3404
  %v3406 = vpop.xlane.xlu0 %3405
  %v3407 = vsel %vm1214, %v3373, -inf
  %3408 = vmax.xlane.f32.xlu0 %v3407
  %v3409 = vpop.xlane.xlu0 %3408
  %v3410 = vsel %vm1214, %v3375, -inf
  %3411 = vmax.xlane.f32.xlu0 %v3410
  %v3412 = vpop.xlane.xlu0 %3411
  %v3413 = vsub.f32 %v3348, %v3379
  %v3414 = vsub.f32 %v3350, %v3382
  %v3415 = vsub.f32 %v3353, %v3385
  %v3416 = vsub.f32 %v3355, %v3388
  %v3417 = vsub.f32 %v3358, %v3391
  %v3418 = vsub.f32 %v3360, %v3394
  %v3419 = vsub.f32 %v3363, %v3397
  %v3420 = vsub.f32 %v3365, %v3400
  %v3421 = vsub.f32 %v3368, %v3403
  %v3422 = vsub.f32 %v3370, %v3406
  %v3423 = vsub.f32 %v3373, %v3409
  %v3424 = vsub.f32 %v3375, %v3412
  %v3425 = vmul.f32 %v3413, 1.442695
  %v3426 = vpow.pop %v3425
  %v3427 = vmul.f32 %v3414, 1.442695
  %v3428 = vpow.pop %v3427
  %v3429 = vmul.f32 %v3415, 1.442695
  %v3430 = vpow.pop %v3429
  %v3431 = vmul.f32 %v3416, 1.442695
  %v3432 = vpow.pop %v3431
  %v3433 = vmul.f32 %v3417, 1.442695
  %v3434 = vpow.pop %v3433
  %v3435 = vmul.f32 %v3418, 1.442695
  %v3436 = vpow.pop %v3435
  %v3437 = vmul.f32 %v3419, 1.442695
  %v3438 = vpow.pop %v3437
  %v3439 = vmul.f32 %v3420, 1.442695
  %v3440 = vpow.pop %v3439
  %v3441 = vmul.f32 %v3421, 1.442695
  %v3442 = vpow.pop %v3441
  %v3443 = vmul.f32 %v3422, 1.442695
  %v3444 = vpow.pop %v3443
  %v3445 = vmul.f32 %v3423, 1.442695
  %v3446 = vpow.pop %v3445
  %v3447 = vmul.f32 %v3424, 1.442695
  %v3448 = vpow.pop %v3447
  %v3449 = vsel %vm1214, %v3426, 0.0
  %3450 = vadd.xlane.f32.xlu0 %v3449
  %v3451 = vpop.xlane.xlu0 %3450
  %v3452 = vsel %vm1214, %v3428, 0.0
  %3453 = vadd.xlane.f32.xlu0 %v3452
  %v3454 = vpop.xlane.xlu0 %3453
  %v3455 = vsel %vm1214, %v3430, 0.0
  %3456 = vadd.xlane.f32.xlu0 %v3455
  %v3457 = vpop.xlane.xlu0 %3456
  %v3458 = vsel %vm1214, %v3432, 0.0
  %3459 = vadd.xlane.f32.xlu0 %v3458
  %v3460 = vpop.xlane.xlu0 %3459
  %v3461 = vsel %vm1214, %v3434, 0.0
  %3462 = vadd.xlane.f32.xlu0 %v3461
  %v3463 = vpop.xlane.xlu0 %3462
  %v3464 = vsel %vm1214, %v3436, 0.0
  %3465 = vadd.xlane.f32.xlu0 %v3464
  %v3466 = vpop.xlane.xlu0 %3465
  %v3467 = vsel %vm1214, %v3438, 0.0
  %3468 = vadd.xlane.f32.xlu0 %v3467
  %v3469 = vpop.xlane.xlu0 %3468
  %v3470 = vsel %vm1214, %v3440, 0.0
  %3471 = vadd.xlane.f32.xlu0 %v3470
  %v3472 = vpop.xlane.xlu0 %3471
  %v3473 = vsel %vm1214, %v3442, 0.0
  %3474 = vadd.xlane.f32.xlu0 %v3473
  %v3475 = vpop.xlane.xlu0 %3474
  %v3476 = vsel %vm1214, %v3444, 0.0
  %3477 = vadd.xlane.f32.xlu0 %v3476
  %v3478 = vpop.xlane.xlu0 %3477
  %v3479 = vsel %vm1214, %v3446, 0.0
  %3480 = vadd.xlane.f32.xlu0 %v3479
  %v3481 = vpop.xlane.xlu0 %3480
  %v3482 = vsel %vm1214, %v3448, 0.0
  %3483 = vadd.xlane.f32.xlu0 %v3482
  %v3484 = vpop.xlane.xlu0 %3483
  %v3485 = vrcp.pop %v3451
  %v3486 = vrcp.pop %v3454
  %v3487 = vrcp.pop %v3457
  %v3488 = vrcp.pop %v3460
  %v3489 = vrcp.pop %v3463
  %v3490 = vrcp.pop %v3466
  %v3491 = vrcp.pop %v3469
  %v3492 = vrcp.pop %v3472
  %v3493 = vrcp.pop %v3475
  %v3494 = vrcp.pop %v3478
  %v3495 = vrcp.pop %v3481
  %v3496 = vrcp.pop %v3484
  %v3497 = vmul.f32 %v3426, %v3485
  %v3498 = vmul.f32 %v3428, %v3486
  %v3499 = vmul.f32 %v3430, %v3487
  %v3500 = vmul.f32 %v3432, %v3488
  %v3501 = vmul.f32 %v3434, %v3489
  %v3502 = vmul.f32 %v3436, %v3490
  %v3503 = vmul.f32 %v3438, %v3491
  %v3504 = vmul.f32 %v3440, %v3492
  %v3505 = vmul.f32 %v3442, %v3493
  %v3506 = vmul.f32 %v3444, %v3494
  %v3507 = vmul.f32 %v3446, %v3495
  %v3508 = vmul.f32 %v3448, %v3496
  %v3509 = vpack.c.bf16 %v3498, %v3497
  %v3510 = vpack.c.bf16 %v3500, %v3499
  %v3511 = vpack.c.bf16 %v3502, %v3501
  %v3512 = vpack.c.bf16 %v3504, %v3503
  %v3513 = vpack.c.bf16 %v3506, %v3505
  %v3514 = vpack.c.bf16 %v3508, %v3507
  %3515 = vrot.lane.b32.xlu0 %v2636, 48
  %v3516 = vpop.permute.xlu0 %3515
  %3517 = vrot.lane.b32.xlu0 %v2637, 48
  %v3518 = vpop.permute.xlu0 %3517
  %3519 = vrot.lane.b32.xlu0 %v2638, 48
  %v3520 = vpop.permute.xlu0 %3519
  %3521 = vrot.lane.b32.xlu0 %v2639, 48
  %v3522 = vpop.permute.xlu0 %3521
  %3523 = vrot.lane.b32.xlu0 %v2640, 48
  %v3524 = vpop.permute.xlu0 %3523
  %3525 = vrot.lane.b32.xlu0 %v2641, 48
  %v3526 = vpop.permute.xlu0 %3525
  %v3534 = vsel %vm1214, %v3509, 0
  %v3537 = vsel %vm1214, %v3510, 0
  %v3540 = vsel %vm1214, %v3511, 0
  %v3543 = vsel %vm1214, %v3512, 0
  %v3546 = vsel %vm1214, %v3513, 0
  %v3549 = vsel %vm1214, %v3514, 0
  %3551 = vmatpush.bf16.msra.mxu0 0
  %3552 = vmatpush.bf16.msra.mxu0 0
  %3553 = vmatpush.bf16.msra.mxu0 %v3526
  %3554 = vmatpush.bf16.msra.mxu0 %v3524
  %3555 = vmatpush.bf16.msra.mxu0 %v3522
  %3556 = vmatpush.bf16.msra.mxu0 %v3520
  %3557 = vmatpush.bf16.msra.mxu0 %v3518
  %3558 = vmatpush.bf16.msra.mxu0 %v3516
  %3559 = vmatmul.bf16.gmra.mxu0 %v3534
  %v3560 = vpop.f32.mrf.mxu0
  %v3561 = vadd.f32 0.0, %v3560
  %v3562 = vpop.f32.mrf.mxu0
  %v3563 = vadd.f32 0.0, %v3562
  %3564 = vmatmul.bf16.gmra.mxu0 %v3537
  %v3565 = vpop.f32.mrf.mxu0
  %v3566 = vadd.f32 0.0, %v3565
  %v3567 = vpop.f32.mrf.mxu0
  %v3568 = vadd.f32 0.0, %v3567
  %3569 = vmatmul.bf16.gmra.mxu0 %v3540
  %v3570 = vpop.f32.mrf.mxu0
  %v3571 = vadd.f32 0.0, %v3570
  %v3572 = vpop.f32.mrf.mxu0
  %v3573 = vadd.f32 0.0, %v3572
  %3574 = vmatmul.bf16.gmra.mxu0 %v3543
  %v3575 = vpop.f32.mrf.mxu0
  %v3576 = vadd.f32 0.0, %v3575
  %v3577 = vpop.f32.mrf.mxu0
  %v3578 = vadd.f32 0.0, %v3577
  %3579 = vmatmul.bf16.gmra.mxu0 %v3546
  %v3580 = vpop.f32.mrf.mxu0
  %v3581 = vadd.f32 0.0, %v3580
  %v3582 = vpop.f32.mrf.mxu0
  %v3583 = vadd.f32 0.0, %v3582
  %3584 = vmatmul.bf16.gmra.mxu0 %v3549
  %v3585 = vpop.f32.mrf.mxu0
  %v3586 = vadd.f32 0.0, %v3585
  %v3587 = vpop.f32.mrf.mxu0
  %v3588 = vadd.f32 0.0, %v3587
  %3589 = vdwg.mxu0
  %v3590 = vpack.c.bf16 %v3561, %v3561
  %v3591 = vpack.c.bf16 %v3563, %v3563
  %v3592 = vpack.c.bf16 %v3566, %v3566
  %v3593 = vpack.c.bf16 %v3568, %v3568
  %v3594 = vpack.c.bf16 %v3571, %v3571
  %v3595 = vpack.c.bf16 %v3573, %v3573
  %v3596 = vpack.c.bf16 %v3576, %v3576
  %v3597 = vpack.c.bf16 %v3578, %v3578
  %v3598 = vpack.c.bf16 %v3581, %v3581
  %v3599 = vpack.c.bf16 %v3583, %v3583
  %v3600 = vpack.c.bf16 %v3586, %v3586
  %v3601 = vpack.c.bf16 %v3588, %v3588
  %3602 = vrot.lane.b32.xlu0 %v2636, 104
  %v3603 = vpop.permute.xlu0 %3602
  %3604 = vrot.lane.b32.xlu0 %v2637, 104
  %v3605 = vpop.permute.xlu0 %3604
  %3606 = vrot.lane.b32.xlu0 %v2638, 104
  %v3607 = vpop.permute.xlu0 %3606
  %3608 = vrot.lane.b32.xlu0 %v2639, 104
  %v3609 = vpop.permute.xlu0 %3608
  %3610 = vrot.lane.b32.xlu0 %v2640, 104
  %v3611 = vpop.permute.xlu0 %3610
  %3612 = vrot.lane.b32.xlu0 %v2641, 104
  %v3613 = vpop.permute.xlu0 %3612
  %3614 = vrot.lane.b32.xlu0 %v2636, 72
  %v3615 = vpop.permute.xlu0 %3614
  %3616 = vrot.lane.b32.xlu0 %v2637, 72
  %v3617 = vpop.permute.xlu0 %3616
  %3618 = vrot.lane.b32.xlu0 %v2638, 72
  %v3619 = vpop.permute.xlu0 %3618
  %3620 = vrot.lane.b32.xlu0 %v2639, 72
  %v3621 = vpop.permute.xlu0 %3620
  %3622 = vrot.lane.b32.xlu0 %v2640, 72
  %v3623 = vpop.permute.xlu0 %3622
  %3624 = vrot.lane.b32.xlu0 %v2641, 72
  %v3625 = vpop.permute.xlu0 %3624
  %v3627 = vsel %vm1138, %v3603, 0
  %v3630 = vsel %vm1138, %v3605, 0
  %v3633 = vsel %vm1138, %v3607, 0
  %v3636 = vsel %vm1138, %v3609, 0
  %v3639 = vsel %vm1138, %v3611, 0
  %v3642 = vsel %vm1138, %v3613, 0
  %v3645 = vsel %vm1138, %v3615, 0
  %v3648 = vsel %vm1138, %v3617, 0
  %v3651 = vsel %vm1138, %v3619, 0
  %v3654 = vsel %vm1138, %v3621, 0
  %v3657 = vsel %vm1138, %v3623, 0
  %v3660 = vsel %vm1138, %v3625, 0
  %3662 = vmatpush.bf16.xpose.msra.mxu0 0
  %3663 = vmatpush.bf16.xpose.msra.mxu0 0
  %3664 = vmatpush.bf16.xpose.msra.mxu0 %v3660
  %3665 = vmatpush.bf16.xpose.msra.mxu0 %v3657
  %3666 = vmatpush.bf16.xpose.msra.mxu0 %v3654
  %3667 = vmatpush.bf16.xpose.msra.mxu0 %v3651
  %3668 = vmatpush.bf16.xpose.msra.mxu0 %v3648
  %3669 = vmatpush.bf16.xpose.msra.mxu0 %v3645
  %3670 = vmatmul.bf16.gmra.mxu0 %v3627
  %v3671 = vpop.f32.mrf.mxu0
  %v3672 = vadd.f32 0.0, %v3671
  %v3673 = vpop.f32.mrf.mxu0
  %v3674 = vadd.f32 0.0, %v3673
  %3675 = vmatmul.bf16.gmra.mxu0 %v3630
  %v3676 = vpop.f32.mrf.mxu0
  %v3677 = vadd.f32 0.0, %v3676
  %v3678 = vpop.f32.mrf.mxu0
  %v3679 = vadd.f32 0.0, %v3678
  %3680 = vmatmul.bf16.gmra.mxu0 %v3633
  %v3681 = vpop.f32.mrf.mxu0
  %v3682 = vadd.f32 0.0, %v3681
  %v3683 = vpop.f32.mrf.mxu0
  %v3684 = vadd.f32 0.0, %v3683
  %3685 = vmatmul.bf16.gmra.mxu0 %v3636
  %v3686 = vpop.f32.mrf.mxu0
  %v3687 = vadd.f32 0.0, %v3686
  %v3688 = vpop.f32.mrf.mxu0
  %v3689 = vadd.f32 0.0, %v3688
  %3690 = vmatmul.bf16.gmra.mxu0 %v3639
  %v3691 = vpop.f32.mrf.mxu0
  %v3692 = vadd.f32 0.0, %v3691
  %v3693 = vpop.f32.mrf.mxu0
  %v3694 = vadd.f32 0.0, %v3693
  %3695 = vmatmul.bf16.gmra.mxu0 %v3642
  %v3696 = vpop.f32.mrf.mxu0
  %v3697 = vadd.f32 0.0, %v3696
  %v3698 = vpop.f32.mrf.mxu0
  %v3699 = vadd.f32 0.0, %v3698
  %3700 = vdwg.mxu0
  %v3701 = vsel %vm1214, %v3672, -inf
  %3702 = vmax.xlane.f32.xlu0 %v3701
  %v3703 = vpop.xlane.xlu0 %3702
  %v3704 = vsel %vm1214, %v3674, -inf
  %3705 = vmax.xlane.f32.xlu0 %v3704
  %v3706 = vpop.xlane.xlu0 %3705
  %v3707 = vsel %vm1214, %v3677, -inf
  %3708 = vmax.xlane.f32.xlu0 %v3707
  %v3709 = vpop.xlane.xlu0 %3708
  %v3710 = vsel %vm1214, %v3679, -inf
  %3711 = vmax.xlane.f32.xlu0 %v3710
  %v3712 = vpop.xlane.xlu0 %3711
  %v3713 = vsel %vm1214, %v3682, -inf
  %3714 = vmax.xlane.f32.xlu0 %v3713
  %v3715 = vpop.xlane.xlu0 %3714
  %v3716 = vsel %vm1214, %v3684, -inf
  %3717 = vmax.xlane.f32.xlu0 %v3716
  %v3718 = vpop.xlane.xlu0 %3717
  %v3719 = vsel %vm1214, %v3687, -inf
  %3720 = vmax.xlane.f32.xlu0 %v3719
  %v3721 = vpop.xlane.xlu0 %3720
  %v3722 = vsel %vm1214, %v3689, -inf
  %3723 = vmax.xlane.f32.xlu0 %v3722
  %v3724 = vpop.xlane.xlu0 %3723
  %v3725 = vsel %vm1214, %v3692, -inf
  %3726 = vmax.xlane.f32.xlu0 %v3725
  %v3727 = vpop.xlane.xlu0 %3726
  %v3728 = vsel %vm1214, %v3694, -inf
  %3729 = vmax.xlane.f32.xlu0 %v3728
  %v3730 = vpop.xlane.xlu0 %3729
  %v3731 = vsel %vm1214, %v3697, -inf
  %3732 = vmax.xlane.f32.xlu0 %v3731
  %v3733 = vpop.xlane.xlu0 %3732
  %v3734 = vsel %vm1214, %v3699, -inf
  %3735 = vmax.xlane.f32.xlu0 %v3734
  %v3736 = vpop.xlane.xlu0 %3735
  %v3737 = vsub.f32 %v3672, %v3703
  %v3738 = vsub.f32 %v3674, %v3706
  %v3739 = vsub.f32 %v3677, %v3709
  %v3740 = vsub.f32 %v3679, %v3712
  %v3741 = vsub.f32 %v3682, %v3715
  %v3742 = vsub.f32 %v3684, %v3718
  %v3743 = vsub.f32 %v3687, %v3721
  %v3744 = vsub.f32 %v3689, %v3724
  %v3745 = vsub.f32 %v3692, %v3727
  %v3746 = vsub.f32 %v3694, %v3730
  %v3747 = vsub.f32 %v3697, %v3733
  %v3748 = vsub.f32 %v3699, %v3736
  %v3749 = vmul.f32 %v3737, 1.442695
  %v3750 = vpow.pop %v3749
  %v3751 = vmul.f32 %v3738, 1.442695
  %v3752 = vpow.pop %v3751
  %v3753 = vmul.f32 %v3739, 1.442695
  %v3754 = vpow.pop %v3753
  %v3755 = vmul.f32 %v3740, 1.442695
  %v3756 = vpow.pop %v3755
  %v3757 = vmul.f32 %v3741, 1.442695
  %v3758 = vpow.pop %v3757
  %v3759 = vmul.f32 %v3742, 1.442695
  %v3760 = vpow.pop %v3759
  %v3761 = vmul.f32 %v3743, 1.442695
  %v3762 = vpow.pop %v3761
  %v3763 = vmul.f32 %v3744, 1.442695
  %v3764 = vpow.pop %v3763
  %v3765 = vmul.f32 %v3745, 1.442695
  %v3766 = vpow.pop %v3765
  %v3767 = vmul.f32 %v3746, 1.442695
  %v3768 = vpow.pop %v3767
  %v3769 = vmul.f32 %v3747, 1.442695
  %v3770 = vpow.pop %v3769
  %v3771 = vmul.f32 %v3748, 1.442695
  %v3772 = vpow.pop %v3771
  %v3773 = vsel %vm1214, %v3750, 0.0
  %3774 = vadd.xlane.f32.xlu0 %v3773
  %v3775 = vpop.xlane.xlu0 %3774
  %v3776 = vsel %vm1214, %v3752, 0.0
  %3777 = vadd.xlane.f32.xlu0 %v3776
  %v3778 = vpop.xlane.xlu0 %3777
  %v3779 = vsel %vm1214, %v3754, 0.0
  %3780 = vadd.xlane.f32.xlu0 %v3779
  %v3781 = vpop.xlane.xlu0 %3780
  %v3782 = vsel %vm1214, %v3756, 0.0
  %3783 = vadd.xlane.f32.xlu0 %v3782
  %v3784 = vpop.xlane.xlu0 %3783
  %v3785 = vsel %vm1214, %v3758, 0.0
  %3786 = vadd.xlane.f32.xlu0 %v3785
  %v3787 = vpop.xlane.xlu0 %3786
  %v3788 = vsel %vm1214, %v3760, 0.0
  %3789 = vadd.xlane.f32.xlu0 %v3788
  %v3790 = vpop.xlane.xlu0 %3789
  %v3791 = vsel %vm1214, %v3762, 0.0
  %3792 = vadd.xlane.f32.xlu0 %v3791
  %v3793 = vpop.xlane.xlu0 %3792
  %v3794 = vsel %vm1214, %v3764, 0.0
  %3795 = vadd.xlane.f32.xlu0 %v3794
  %v3796 = vpop.xlane.xlu0 %3795
  %v3797 = vsel %vm1214, %v3766, 0.0
  %3798 = vadd.xlane.f32.xlu0 %v3797
  %v3799 = vpop.xlane.xlu0 %3798
  %v3800 = vsel %vm1214, %v3768, 0.0
  %3801 = vadd.xlane.f32.xlu0 %v3800
  %v3802 = vpop.xlane.xlu0 %3801
  %v3803 = vsel %vm1214, %v3770, 0.0
  %3804 = vadd.xlane.f32.xlu0 %v3803
  %v3805 = vpop.xlane.xlu0 %3804
  %v3806 = vsel %vm1214, %v3772, 0.0
  %3807 = vadd.xlane.f32.xlu0 %v3806
  %v3808 = vpop.xlane.xlu0 %3807
  %v3809 = vrcp.pop %v3775
  %v3810 = vrcp.pop %v3778
  %v3811 = vrcp.pop %v3781
  %v3812 = vrcp.pop %v3784
  %v3813 = vrcp.pop %v3787
  %v3814 = vrcp.pop %v3790
  %v3815 = vrcp.pop %v3793
  %v3816 = vrcp.pop %v3796
  %v3817 = vrcp.pop %v3799
  %v3818 = vrcp.pop %v3802
  %v3819 = vrcp.pop %v3805
  %v3820 = vrcp.pop %v3808
  %v3821 = vmul.f32 %v3750, %v3809
  %v3822 = vmul.f32 %v3752, %v3810
  %v3823 = vmul.f32 %v3754, %v3811
  %v3824 = vmul.f32 %v3756, %v3812
  %v3825 = vmul.f32 %v3758, %v3813
  %v3826 = vmul.f32 %v3760, %v3814
  %v3827 = vmul.f32 %v3762, %v3815
  %v3828 = vmul.f32 %v3764, %v3816
  %v3829 = vmul.f32 %v3766, %v3817
  %v3830 = vmul.f32 %v3768, %v3818
  %v3831 = vmul.f32 %v3770, %v3819
  %v3832 = vmul.f32 %v3772, %v3820
  %v3833 = vpack.c.bf16 %v3822, %v3821
  %v3834 = vpack.c.bf16 %v3824, %v3823
  %v3835 = vpack.c.bf16 %v3826, %v3825
  %v3836 = vpack.c.bf16 %v3828, %v3827
  %v3837 = vpack.c.bf16 %v3830, %v3829
  %v3838 = vpack.c.bf16 %v3832, %v3831
  %3839 = vrot.lane.b32.xlu0 %v2636, 40
  %v3840 = vpop.permute.xlu0 %3839
  %3841 = vrot.lane.b32.xlu0 %v2637, 40
  %v3842 = vpop.permute.xlu0 %3841
  %3843 = vrot.lane.b32.xlu0 %v2638, 40
  %v3844 = vpop.permute.xlu0 %3843
  %3845 = vrot.lane.b32.xlu0 %v2639, 40
  %v3846 = vpop.permute.xlu0 %3845
  %3847 = vrot.lane.b32.xlu0 %v2640, 40
  %v3848 = vpop.permute.xlu0 %3847
  %3849 = vrot.lane.b32.xlu0 %v2641, 40
  %v3850 = vpop.permute.xlu0 %3849
  %v3858 = vsel %vm1214, %v3833, 0
  %v3861 = vsel %vm1214, %v3834, 0
  %v3864 = vsel %vm1214, %v3835, 0
  %v3867 = vsel %vm1214, %v3836, 0
  %v3870 = vsel %vm1214, %v3837, 0
  %v3873 = vsel %vm1214, %v3838, 0
  %3875 = vmatpush.bf16.msra.mxu0 0
  %3876 = vmatpush.bf16.msra.mxu0 0
  %3877 = vmatpush.bf16.msra.mxu0 %v3850
  %3878 = vmatpush.bf16.msra.mxu0 %v3848
  %3879 = vmatpush.bf16.msra.mxu0 %v3846
  %3880 = vmatpush.bf16.msra.mxu0 %v3844
  %3881 = vmatpush.bf16.msra.mxu0 %v3842
  %3882 = vmatpush.bf16.msra.mxu0 %v3840
  %3883 = vmatmul.bf16.gmra.mxu0 %v3858
  %v3884 = vpop.f32.mrf.mxu0
  %v3885 = vadd.f32 0.0, %v3884
  %v3886 = vpop.f32.mrf.mxu0
  %v3887 = vadd.f32 0.0, %v3886
  %3888 = vmatmul.bf16.gmra.mxu0 %v3861
  %v3889 = vpop.f32.mrf.mxu0
  %v3890 = vadd.f32 0.0, %v3889
  %v3891 = vpop.f32.mrf.mxu0
  %v3892 = vadd.f32 0.0, %v3891
  %3893 = vmatmul.bf16.gmra.mxu0 %v3864
  %v3894 = vpop.f32.mrf.mxu0
  %v3895 = vadd.f32 0.0, %v3894
  %v3896 = vpop.f32.mrf.mxu0
  %v3897 = vadd.f32 0.0, %v3896
  %3898 = vmatmul.bf16.gmra.mxu0 %v3867
  %v3899 = vpop.f32.mrf.mxu0
  %v3900 = vadd.f32 0.0, %v3899
  %v3901 = vpop.f32.mrf.mxu0
  %v3902 = vadd.f32 0.0, %v3901
  %3903 = vmatmul.bf16.gmra.mxu0 %v3870
  %v3904 = vpop.f32.mrf.mxu0
  %v3905 = vadd.f32 0.0, %v3904
  %v3906 = vpop.f32.mrf.mxu0
  %v3907 = vadd.f32 0.0, %v3906
  %3908 = vmatmul.bf16.gmra.mxu0 %v3873
  %v3909 = vpop.f32.mrf.mxu0
  %v3910 = vadd.f32 0.0, %v3909
  %v3911 = vpop.f32.mrf.mxu0
  %v3912 = vadd.f32 0.0, %v3911
  %3913 = vdwg.mxu0
  %v3914 = vpack.c.bf16 %v3885, %v3885
  %v3915 = vpack.c.bf16 %v3887, %v3887
  %v3916 = vpack.c.bf16 %v3890, %v3890
  %v3917 = vpack.c.bf16 %v3892, %v3892
  %v3918 = vpack.c.bf16 %v3895, %v3895
  %v3919 = vpack.c.bf16 %v3897, %v3897
  %v3920 = vpack.c.bf16 %v3900, %v3900
  %v3921 = vpack.c.bf16 %v3902, %v3902
  %v3922 = vpack.c.bf16 %v3905, %v3905
  %v3923 = vpack.c.bf16 %v3907, %v3907
  %v3924 = vpack.c.bf16 %v3910, %v3910
  %v3925 = vpack.c.bf16 %v3912, %v3912
  %v3938 = vunpack.c.l.b16 %v2942
  %v3939 = vunpack.c.l.b16 %v2943
  %v3940 = vunpack.c.l.b16 %v2944
  %v3941 = vunpack.c.l.b16 %v2945
  %v3942 = vunpack.c.l.b16 %v2946
  %v3943 = vunpack.c.l.b16 %v2947
  %v3944 = vunpack.c.l.b16 %v2948
  %v3945 = vunpack.c.l.b16 %v2949
  %v3946 = vunpack.c.l.b16 %v2950
  %v3947 = vunpack.c.l.b16 %v2951
  %v3948 = vunpack.c.l.b16 %v2952
  %v3949 = vunpack.c.l.b16 %v2953
  %v3950 = vpack.c.b16 %v3939, %v3938
  %v3951 = vpack.c.b16 %v3941, %v3940
  %v3952 = vpack.c.b16 %v3943, %v3942
  %v3953 = vpack.c.b16 %v3945, %v3944
  %v3954 = vpack.c.b16 %v3947, %v3946
  %v3955 = vpack.c.b16 %v3949, %v3948
  %v3968 = vunpack.c.l.b16 %v3266
  %v3969 = vunpack.c.l.b16 %v3267
  %v3970 = vunpack.c.l.b16 %v3268
  %v3971 = vunpack.c.l.b16 %v3269
  %v3972 = vunpack.c.l.b16 %v3270
  %v3973 = vunpack.c.l.b16 %v3271
  %v3974 = vunpack.c.l.b16 %v3272
  %v3975 = vunpack.c.l.b16 %v3273
  %v3976 = vunpack.c.l.b16 %v3274
  %v3977 = vunpack.c.l.b16 %v3275
  %v3978 = vunpack.c.l.b16 %v3276
  %v3979 = vunpack.c.l.b16 %v3277
  %v3980 = vpack.c.b16 %v3969, %v3968
  %v3981 = vpack.c.b16 %v3971, %v3970
  %v3982 = vpack.c.b16 %v3973, %v3972
  %v3983 = vpack.c.b16 %v3975, %v3974
  %v3984 = vpack.c.b16 %v3977, %v3976
  %v3985 = vpack.c.b16 %v3979, %v3978
  %3986 = vrot.lane.b32.xlu0 %v3980, 8
  %v3987 = vpop.permute.xlu0 %3986
  %3988 = vrot.lane.b32.xlu0 %v3981, 8
  %v3989 = vpop.permute.xlu0 %3988
  %3990 = vrot.lane.b32.xlu0 %v3982, 8
  %v3991 = vpop.permute.xlu0 %3990
  %3992 = vrot.lane.b32.xlu0 %v3983, 8
  %v3993 = vpop.permute.xlu0 %3992
  %3994 = vrot.lane.b32.xlu0 %v3984, 8
  %v3995 = vpop.permute.xlu0 %3994
  %3996 = vrot.lane.b32.xlu0 %v3985, 8
  %v3997 = vpop.permute.xlu0 %3996
  %v4010 = vunpack.c.l.b16 %v3590
  %v4011 = vunpack.c.l.b16 %v3591
  %v4012 = vunpack.c.l.b16 %v3592
  %v4013 = vunpack.c.l.b16 %v3593
  %v4014 = vunpack.c.l.b16 %v3594
  %v4015 = vunpack.c.l.b16 %v3595
  %v4016 = vunpack.c.l.b16 %v3596
  %v4017 = vunpack.c.l.b16 %v3597
  %v4018 = vunpack.c.l.b16 %v3598
  %v4019 = vunpack.c.l.b16 %v3599
  %v4020 = vunpack.c.l.b16 %v3600
  %v4021 = vunpack.c.l.b16 %v3601
  %v4022 = vpack.c.b16 %v4011, %v4010
  %v4023 = vpack.c.b16 %v4013, %v4012
  %v4024 = vpack.c.b16 %v4015, %v4014
  %v4025 = vpack.c.b16 %v4017, %v4016
  %v4026 = vpack.c.b16 %v4019, %v4018
  %v4027 = vpack.c.b16 %v4021, %v4020
  %4028 = vrot.lane.b32.xlu0 %v4022, 16
  %v4029 = vpop.permute.xlu0 %4028
  %4030 = vrot.lane.b32.xlu0 %v4023, 16
  %v4031 = vpop.permute.xlu0 %4030
  %4032 = vrot.lane.b32.xlu0 %v4024, 16
  %v4033 = vpop.permute.xlu0 %4032
  %4034 = vrot.lane.b32.xlu0 %v4025, 16
  %v4035 = vpop.permute.xlu0 %4034
  %4036 = vrot.lane.b32.xlu0 %v4026, 16
  %v4037 = vpop.permute.xlu0 %4036
  %4038 = vrot.lane.b32.xlu0 %v4027, 16
  %v4039 = vpop.permute.xlu0 %4038
  %v4052 = vunpack.c.l.b16 %v3914
  %v4053 = vunpack.c.l.b16 %v3915
  %v4054 = vunpack.c.l.b16 %v3916
  %v4055 = vunpack.c.l.b16 %v3917
  %v4056 = vunpack.c.l.b16 %v3918
  %v4057 = vunpack.c.l.b16 %v3919
  %v4058 = vunpack.c.l.b16 %v3920
  %v4059 = vunpack.c.l.b16 %v3921
  %v4060 = vunpack.c.l.b16 %v3922
  %v4061 = vunpack.c.l.b16 %v3923
  %v4062 = vunpack.c.l.b16 %v3924
  %v4063 = vunpack.c.l.b16 %v3925
  %v4064 = vpack.c.b16 %v4053, %v4052
  %v4065 = vpack.c.b16 %v4055, %v4054
  %v4066 = vpack.c.b16 %v4057, %v4056
  %v4067 = vpack.c.b16 %v4059, %v4058
  %v4068 = vpack.c.b16 %v4061, %v4060
  %v4069 = vpack.c.b16 %v4063, %v4062
  %4070 = vrot.lane.b32.xlu0 %v4064, 24
  %v4071 = vpop.permute.xlu0 %4070
  %4072 = vrot.lane.b32.xlu0 %v4065, 24
  %v4073 = vpop.permute.xlu0 %4072
  %4074 = vrot.lane.b32.xlu0 %v4066, 24
  %v4075 = vpop.permute.xlu0 %4074
  %4076 = vrot.lane.b32.xlu0 %v4067, 24
  %v4077 = vpop.permute.xlu0 %4076
  %4078 = vrot.lane.b32.xlu0 %v4068, 24
  %v4079 = vpop.permute.xlu0 %4078
  %4080 = vrot.lane.b32.xlu0 %v4069, 24
  %v4081 = vpop.permute.xlu0 %4080
  %v4084 = vsel %vm1138, %v3950, %v3987
  %v4087 = vsel %vm1138, %v3951, %v3989
  %v4090 = vsel %vm1138, %v3952, %v3991
  %v4093 = vsel %vm1138, %v3953, %v3993
  %v4096 = vsel %vm1138, %v3954, %v3995
  %v4099 = vsel %vm1138, %v3955, %v3997
  %v4101 = vsel %vm2586, %v4084, %v4029
  %v4103 = vsel %vm2586, %v4087, %v4031
  %v4105 = vsel %vm2586, %v4090, %v4033
  %v4107 = vsel %vm2586, %v4093, %v4035
  %v4109 = vsel %vm2586, %v4096, %v4037
  %v4111 = vsel %vm2586, %v4099, %v4039
  %v4113 = vsel %vm2599, %v4101, %v4071
  %v4115 = vsel %vm2599, %v4103, %v4073
  %v4117 = vsel %vm2599, %v4105, %v4075
  %v4119 = vsel %vm2599, %v4107, %v4077
  %v4121 = vsel %vm2599, %v4109, %v4079
  %v4123 = vsel %vm2599, %v4111, %v4081
  %v4124 = vld [vmem:[%s7] sm:$0xf]
  %v4125 = vld [vmem:[%s7 + $0x4] sm:$0xf]
  %v4126 = vld [vmem:[%s7 + $0x8] sm:$0xf]
  %v4127 = vld [vmem:[%s7 + $0xc] sm:$0xf]
  %v4132 = vunpack.c.l.b16 %v4124
  %v4133 = vunpack.c.l.b16 %v4125
  %v4134 = vunpack.c.l.b16 %v4126
  %v4135 = vunpack.c.l.b16 %v4127
  %v4136 = vpack.c.b16 %v4133, %v4132
  %v4137 = vpack.c.b16 %v4135, %v4134
  %v4140 = vsel %vm247, %v2601, 0
  %v4142 = vsel %vm247, %v2603, 0
  %v4144 = vsel %vm247, %v2605, 0
  %v4146 = vsel %vm247, %v2607, 0
  %v4148 = vsel %vm247, %v2609, 0
  %v4150 = vsel %vm247, %v2611, 0
  %v4152 = vsel %vm247, %v4113, 0
  %v4154 = vsel %vm247, %v4115, 0
  %v4156 = vsel %vm247, %v4117, 0
  %v4158 = vsel %vm247, %v4119, 0
  %v4160 = vsel %vm247, %v4121, 0
  %v4162 = vsel %vm247, %v4123, 0
  %4164 = vmatpush.bf16.msra.mxu0 0
  %4165 = vmatpush.bf16.msra.mxu0 0
  %4166 = vmatpush.bf16.msra.mxu0 0
  %4167 = vmatpush.bf16.msra.mxu0 0
  %4168 = vmatpush.bf16.msra.mxu0 0
  %4169 = vmatpush.bf16.msra.mxu0 0
  %4170 = vmatpush.bf16.msra.mxu0 %v4137
  %4171 = vmatpush.bf16.msra.mxu0 %v4136
  %4172 = vmatmul.bf16.gmra.mxu0 %v4140
  %v4173 = vpop.f32.mrf.mxu0
  %v4174 = vadd.f32 0.0, %v4173
  %v4175 = vpop.f32.mrf.mxu0
  %v4176 = vadd.f32 0.0, %v4175
  %4177 = vmatmul.bf16.gmra.mxu0 %v4142
  %v4178 = vpop.f32.mrf.mxu0
  %v4179 = vadd.f32 0.0, %v4178
  %v4180 = vpop.f32.mrf.mxu0
  %v4181 = vadd.f32 0.0, %v4180
  %4182 = vmatmul.bf16.gmra.mxu0 %v4144
  %v4183 = vpop.f32.mrf.mxu0
  %v4184 = vadd.f32 0.0, %v4183
  %v4185 = vpop.f32.mrf.mxu0
  %v4186 = vadd.f32 0.0, %v4185
  %4187 = vmatmul.bf16.gmra.mxu0 %v4146
  %v4188 = vpop.f32.mrf.mxu0
  %v4189 = vadd.f32 0.0, %v4188
  %v4190 = vpop.f32.mrf.mxu0
  %v4191 = vadd.f32 0.0, %v4190
  %4192 = vmatmul.bf16.gmra.mxu0 %v4148
  %v4193 = vpop.f32.mrf.mxu0
  %v4194 = vadd.f32 0.0, %v4193
  %v4195 = vpop.f32.mrf.mxu0
  %v4196 = vadd.f32 0.0, %v4195
  %4197 = vmatmul.bf16.gmra.mxu0 %v4150
  %v4198 = vpop.f32.mrf.mxu0
  %v4199 = vadd.f32 0.0, %v4198
  %v4200 = vpop.f32.mrf.mxu0
  %v4201 = vadd.f32 0.0, %v4200
  %4202 = vmatmul.bf16.gmra.mxu0 %v4152
  %v4203 = vpop.f32.mrf.mxu0
  %v4204 = vadd.f32 0.0, %v4203
  %v4205 = vpop.f32.mrf.mxu0
  %v4206 = vadd.f32 0.0, %v4205
  %4207 = vmatmul.bf16.gmra.mxu0 %v4154
  %v4208 = vpop.f32.mrf.mxu0
  %v4209 = vadd.f32 0.0, %v4208
  %v4210 = vpop.f32.mrf.mxu0
  %v4211 = vadd.f32 0.0, %v4210
  %4212 = vmatmul.bf16.gmra.mxu0 %v4156
  %v4213 = vpop.f32.mrf.mxu0
  %v4214 = vadd.f32 0.0, %v4213
  %v4215 = vpop.f32.mrf.mxu0
  %v4216 = vadd.f32 0.0, %v4215
  %4217 = vmatmul.bf16.gmra.mxu0 %v4158
  %v4218 = vpop.f32.mrf.mxu0
  %v4219 = vadd.f32 0.0, %v4218
  %v4220 = vpop.f32.mrf.mxu0
  %v4221 = vadd.f32 0.0, %v4220
  %4222 = vmatmul.bf16.gmra.mxu0 %v4160
  %v4223 = vpop.f32.mrf.mxu0
  %v4224 = vadd.f32 0.0, %v4223
  %v4225 = vpop.f32.mrf.mxu0
  %v4226 = vadd.f32 0.0, %v4225
  %4227 = vmatmul.bf16.gmra.mxu0 %v4162
  %v4228 = vpop.f32.mrf.mxu0
  %v4229 = vadd.f32 0.0, %v4228
  %v4230 = vpop.f32.mrf.mxu0
  %v4231 = vadd.f32 0.0, %v4230
  %4232 = vdwg.mxu0
  %v4233 = vadd.f32 %v272, %v4174
  %v4234 = vadd.f32 %v273, %v4176
  %v4235 = vadd.f32 %v274, %v4179
  %v4236 = vadd.f32 %v275, %v4181
  %v4237 = vadd.f32 %v276, %v4184
  %v4238 = vadd.f32 %v277, %v4186
  %v4239 = vadd.f32 %v278, %v4189
  %v4240 = vadd.f32 %v279, %v4191
  %v4241 = vadd.f32 %v280, %v4194
  %v4242 = vadd.f32 %v281, %v4196
  %v4243 = vadd.f32 %v282, %v4199
  %v4244 = vadd.f32 %v283, %v4201
  %v4245 = vadd.f32 %v284, %v4204
  %v4246 = vadd.f32 %v285, %v4206
  %v4247 = vadd.f32 %v286, %v4209
  %v4248 = vadd.f32 %v287, %v4211
  %v4249 = vadd.f32 %v288, %v4214
  %v4250 = vadd.f32 %v289, %v4216
  %v4251 = vadd.f32 %v290, %v4219
  %v4252 = vadd.f32 %v291, %v4221
  %v4253 = vadd.f32 %v292, %v4224
  %v4254 = vadd.f32 %v293, %v4226
  %v4255 = vadd.f32 %v294, %v4229
  %v4256 = vadd.f32 %v295, %v4231
  %v4257 = vld [vmem:[%s8] sm:$0x1]
  %v4259 = vperm.slane %v4257, 0
  %v4261 = vadd.f32 %v4233, %v4259
  %v4262 = vadd.f32 %v4234, %v4259
  %v4263 = vadd.f32 %v4235, %v4259
  %v4264 = vadd.f32 %v4236, %v4259
  %v4265 = vadd.f32 %v4237, %v4259
  %v4266 = vadd.f32 %v4238, %v4259
  %v4267 = vadd.f32 %v4239, %v4259
  %v4268 = vadd.f32 %v4240, %v4259
  %v4269 = vadd.f32 %v4241, %v4259
  %v4270 = vadd.f32 %v4242, %v4259
  %v4271 = vadd.f32 %v4243, %v4259
  %v4272 = vadd.f32 %v4244, %v4259
  %v4273 = vadd.f32 %v4245, %v4259
  %v4274 = vadd.f32 %v4246, %v4259
  %v4275 = vadd.f32 %v4247, %v4259
  %v4276 = vadd.f32 %v4248, %v4259
  %v4277 = vadd.f32 %v4249, %v4259
  %v4278 = vadd.f32 %v4250, %v4259
  %v4279 = vadd.f32 %v4251, %v4259
  %v4280 = vadd.f32 %v4252, %v4259
  %v4281 = vadd.f32 %v4253, %v4259
  %v4282 = vadd.f32 %v4254, %v4259
  %v4283 = vadd.f32 %v4255, %v4259
  %v4284 = vadd.f32 %v4256, %v4259
  %4285 = vst.msk [vmem:[%s17] sm:$0xff] %vm247, %v4261
  %4286 = vst.msk [vmem:[%s17 + $0x8] sm:$0xff] %vm247, %v4262
  %4287 = vst.msk [vmem:[%s17 + $0x10] sm:$0xff] %vm247, %v4263
  %4288 = vst.msk [vmem:[%s17 + $0x18] sm:$0xff] %vm247, %v4264
  %4289 = vst.msk [vmem:[%s17 + $0x20] sm:$0xff] %vm247, %v4265
  %4290 = vst.msk [vmem:[%s17 + $0x28] sm:$0xff] %vm247, %v4266
  %4291 = vst.msk [vmem:[%s17 + $0x30] sm:$0xff] %vm247, %v4267
  %4292 = vst.msk [vmem:[%s17 + $0x38] sm:$0xff] %vm247, %v4268
  %4293 = vst.msk [vmem:[%s17 + $0x40] sm:$0xff] %vm247, %v4269
  %4294 = vst.msk [vmem:[%s17 + $0x48] sm:$0xff] %vm247, %v4270
  %4295 = vst.msk [vmem:[%s17 + $0x50] sm:$0xff] %vm247, %v4271
  %4296 = vst.msk [vmem:[%s17 + $0x58] sm:$0xff] %vm247, %v4272
  %4297 = vst.msk [vmem:[%s17 + $0x60] sm:$0xff] %vm247, %v4273
  %4298 = vst.msk [vmem:[%s17 + $0x68] sm:$0xff] %vm247, %v4274
  %4299 = vst.msk [vmem:[%s17 + $0x70] sm:$0xff] %vm247, %v4275
  %4300 = vst.msk [vmem:[%s17 + $0x78] sm:$0xff] %vm247, %v4276
  %4301 = vst.msk [vmem:[%s17 + $0x80] sm:$0xff] %vm247, %v4277
  %4302 = vst.msk [vmem:[%s17 + $0x88] sm:$0xff] %vm247, %v4278
  %4303 = vst.msk [vmem:[%s17 + $0x90] sm:$0xff] %vm247, %v4279
  %4304 = vst.msk [vmem:[%s17 + $0x98] sm:$0xff] %vm247, %v4280
  %4305 = vst.msk [vmem:[%s17 + $0xa0] sm:$0xff] %vm247, %v4281
  %4306 = vst.msk [vmem:[%s17 + $0xa8] sm:$0xff] %vm247, %v4282
  %4307 = vst.msk [vmem:[%s17 + $0xb0] sm:$0xff] %vm247, %v4283
  %4308 = vst.msk [vmem:[%s17 + $0xb8] sm:$0xff] %vm247, %v4284
  %v4309 = vld [vmem:[%s17] sm:$0xff]
  %v4310 = vld [vmem:[%s17 + $0x8] sm:$0xff]
  %v4311 = vld [vmem:[%s17 + $0x10] sm:$0xff]
  %v4312 = vld [vmem:[%s17 + $0x18] sm:$0xff]
  %v4313 = vld [vmem:[%s17 + $0x20] sm:$0xff]
  %v4314 = vld [vmem:[%s17 + $0x28] sm:$0xff]
  %v4315 = vld [vmem:[%s17 + $0x30] sm:$0xff]
  %v4316 = vld [vmem:[%s17 + $0x38] sm:$0xff]
  %v4317 = vld [vmem:[%s17 + $0x40] sm:$0xff]
  %v4318 = vld [vmem:[%s17 + $0x48] sm:$0xff]
  %v4319 = vld [vmem:[%s17 + $0x50] sm:$0xff]
  %v4320 = vld [vmem:[%s17 + $0x58] sm:$0xff]
  %v4321 = vld [vmem:[%s17 + $0x60] sm:$0xff]
  %v4322 = vld [vmem:[%s17 + $0x68] sm:$0xff]
  %v4323 = vld [vmem:[%s17 + $0x70] sm:$0xff]
  %v4324 = vld [vmem:[%s17 + $0x78] sm:$0xff]
  %v4325 = vld [vmem:[%s17 + $0x80] sm:$0xff]
  %v4326 = vld [vmem:[%s17 + $0x88] sm:$0xff]
  %v4327 = vld [vmem:[%s17 + $0x90] sm:$0xff]
  %v4328 = vld [vmem:[%s17 + $0x98] sm:$0xff]
  %v4329 = vld [vmem:[%s17 + $0xa0] sm:$0xff]
  %v4330 = vld [vmem:[%s17 + $0xa8] sm:$0xff]
  %v4331 = vld [vmem:[%s17 + $0xb0] sm:$0xff]
  %v4332 = vld [vmem:[%s17 + $0xb8] sm:$0xff]
  %v4333 = vld [vmem:[%s9] sm:$0x1]
  %v4334 = vld [vmem:[%s10] sm:$0x1]
  %v4335 = vsel %vm247, %v4309, 0.0
  %4336 = vadd.xlane.f32.xlu0 %v4335
  %v4337 = vpop.xlane.xlu0 %4336
  %v4338 = vsel %vm247, %v4310, 0.0
  %4339 = vadd.xlane.f32.xlu0 %v4338
  %v4340 = vpop.xlane.xlu0 %4339
  %v4341 = vsel %vm247, %v4311, 0.0
  %4342 = vadd.xlane.f32.xlu0 %v4341
  %v4343 = vpop.xlane.xlu0 %4342
  %v4344 = vsel %vm247, %v4312, 0.0
  %4345 = vadd.xlane.f32.xlu0 %v4344
  %v4346 = vpop.xlane.xlu0 %4345
  %v4347 = vsel %vm247, %v4313, 0.0
  %4348 = vadd.xlane.f32.xlu0 %v4347
  %v4349 = vpop.xlane.xlu0 %4348
  %v4350 = vsel %vm247, %v4314, 0.0
  %4351 = vadd.xlane.f32.xlu0 %v4350
  %v4352 = vpop.xlane.xlu0 %4351
  %v4353 = vsel %vm247, %v4315, 0.0
  %4354 = vadd.xlane.f32.xlu0 %v4353
  %v4355 = vpop.xlane.xlu0 %4354
  %v4356 = vsel %vm247, %v4316, 0.0
  %4357 = vadd.xlane.f32.xlu0 %v4356
  %v4358 = vpop.xlane.xlu0 %4357
  %v4359 = vsel %vm247, %v4317, 0.0
  %4360 = vadd.xlane.f32.xlu0 %v4359
  %v4361 = vpop.xlane.xlu0 %4360
  %v4362 = vsel %vm247, %v4318, 0.0
  %4363 = vadd.xlane.f32.xlu0 %v4362
  %v4364 = vpop.xlane.xlu0 %4363
  %v4365 = vsel %vm247, %v4319, 0.0
  %4366 = vadd.xlane.f32.xlu0 %v4365
  %v4367 = vpop.xlane.xlu0 %4366
  %v4368 = vsel %vm247, %v4320, 0.0
  %4369 = vadd.xlane.f32.xlu0 %v4368
  %v4370 = vpop.xlane.xlu0 %4369
  %v4371 = vsel %vm247, %v4321, 0.0
  %4372 = vadd.xlane.f32.xlu0 %v4371
  %v4373 = vpop.xlane.xlu0 %4372
  %v4374 = vsel %vm247, %v4322, 0.0
  %4375 = vadd.xlane.f32.xlu0 %v4374
  %v4376 = vpop.xlane.xlu0 %4375
  %v4377 = vsel %vm247, %v4323, 0.0
  %4378 = vadd.xlane.f32.xlu0 %v4377
  %v4379 = vpop.xlane.xlu0 %4378
  %v4380 = vsel %vm247, %v4324, 0.0
  %4381 = vadd.xlane.f32.xlu0 %v4380
  %v4382 = vpop.xlane.xlu0 %4381
  %v4383 = vsel %vm247, %v4325, 0.0
  %4384 = vadd.xlane.f32.xlu0 %v4383
  %v4385 = vpop.xlane.xlu0 %4384
  %v4386 = vsel %vm247, %v4326, 0.0
  %4387 = vadd.xlane.f32.xlu0 %v4386
  %v4388 = vpop.xlane.xlu0 %4387
  %v4389 = vsel %vm247, %v4327, 0.0
  %4390 = vadd.xlane.f32.xlu0 %v4389
  %v4391 = vpop.xlane.xlu0 %4390
  %v4392 = vsel %vm247, %v4328, 0.0
  %4393 = vadd.xlane.f32.xlu0 %v4392
  %v4394 = vpop.xlane.xlu0 %4393
  %v4395 = vsel %vm247, %v4329, 0.0
  %4396 = vadd.xlane.f32.xlu0 %v4395
  %v4397 = vpop.xlane.xlu0 %4396
  %v4398 = vsel %vm247, %v4330, 0.0
  %4399 = vadd.xlane.f32.xlu0 %v4398
  %v4400 = vpop.xlane.xlu0 %4399
  %v4401 = vsel %vm247, %v4331, 0.0
  %4402 = vadd.xlane.f32.xlu0 %v4401
  %v4403 = vpop.xlane.xlu0 %4402
  %v4404 = vsel %vm247, %v4332, 0.0
  %4405 = vadd.xlane.f32.xlu0 %v4404
  %v4406 = vpop.xlane.xlu0 %4405
  %v4407 = vmul.f32 %v4337, %v376
  %v4408 = vmul.f32 %v4340, %v376
  %v4409 = vmul.f32 %v4343, %v376
  %v4410 = vmul.f32 %v4346, %v376
  %v4411 = vmul.f32 %v4349, %v376
  %v4412 = vmul.f32 %v4352, %v376
  %v4413 = vmul.f32 %v4355, %v376
  %v4414 = vmul.f32 %v4358, %v376
  %v4415 = vmul.f32 %v4361, %v376
  %v4416 = vmul.f32 %v4364, %v376
  %v4417 = vmul.f32 %v4367, %v376
  %v4418 = vmul.f32 %v4370, %v376
  %v4419 = vmul.f32 %v4373, %v376
  %v4420 = vmul.f32 %v4376, %v376
  %v4421 = vmul.f32 %v4379, %v376
  %v4422 = vmul.f32 %v4382, %v376
  %v4423 = vmul.f32 %v4385, %v376
  %v4424 = vmul.f32 %v4388, %v376
  %v4425 = vmul.f32 %v4391, %v376
  %v4426 = vmul.f32 %v4394, %v376
  %v4427 = vmul.f32 %v4397, %v376
  %v4428 = vmul.f32 %v4400, %v376
  %v4429 = vmul.f32 %v4403, %v376
  %v4430 = vmul.f32 %v4406, %v376
  %v4431 = vmul.f32 %v4309, %v4309
  %v4432 = vmul.f32 %v4310, %v4310
  %v4433 = vmul.f32 %v4311, %v4311
  %v4434 = vmul.f32 %v4312, %v4312
  %v4435 = vmul.f32 %v4313, %v4313
  %v4436 = vmul.f32 %v4314, %v4314
  %v4437 = vmul.f32 %v4315, %v4315
  %v4438 = vmul.f32 %v4316, %v4316
  %v4439 = vmul.f32 %v4317, %v4317
  %v4440 = vmul.f32 %v4318, %v4318
  %v4441 = vmul.f32 %v4319, %v4319
  %v4442 = vmul.f32 %v4320, %v4320
  %v4443 = vmul.f32 %v4321, %v4321
  %v4444 = vmul.f32 %v4322, %v4322
  %v4445 = vmul.f32 %v4323, %v4323
  %v4446 = vmul.f32 %v4324, %v4324
  %v4447 = vmul.f32 %v4325, %v4325
  %v4448 = vmul.f32 %v4326, %v4326
  %v4449 = vmul.f32 %v4327, %v4327
  %v4450 = vmul.f32 %v4328, %v4328
  %v4451 = vmul.f32 %v4329, %v4329
  %v4452 = vmul.f32 %v4330, %v4330
  %v4453 = vmul.f32 %v4331, %v4331
  %v4454 = vmul.f32 %v4332, %v4332
  %v4455 = vsel %vm247, %v4431, 0.0
  %4456 = vadd.xlane.f32.xlu0 %v4455
  %v4457 = vpop.xlane.xlu0 %4456
  %v4458 = vsel %vm247, %v4432, 0.0
  %4459 = vadd.xlane.f32.xlu0 %v4458
  %v4460 = vpop.xlane.xlu0 %4459
  %v4461 = vsel %vm247, %v4433, 0.0
  %4462 = vadd.xlane.f32.xlu0 %v4461
  %v4463 = vpop.xlane.xlu0 %4462
  %v4464 = vsel %vm247, %v4434, 0.0
  %4465 = vadd.xlane.f32.xlu0 %v4464
  %v4466 = vpop.xlane.xlu0 %4465
  %v4467 = vsel %vm247, %v4435, 0.0
  %4468 = vadd.xlane.f32.xlu0 %v4467
  %v4469 = vpop.xlane.xlu0 %4468
  %v4470 = vsel %vm247, %v4436, 0.0
  %4471 = vadd.xlane.f32.xlu0 %v4470
  %v4472 = vpop.xlane.xlu0 %4471
  %v4473 = vsel %vm247, %v4437, 0.0
  %4474 = vadd.xlane.f32.xlu0 %v4473
  %v4475 = vpop.xlane.xlu0 %4474
  %v4476 = vsel %vm247, %v4438, 0.0
  %4477 = vadd.xlane.f32.xlu0 %v4476
  %v4478 = vpop.xlane.xlu0 %4477
  %v4479 = vsel %vm247, %v4439, 0.0
  %4480 = vadd.xlane.f32.xlu0 %v4479
  %v4481 = vpop.xlane.xlu0 %4480
  %v4482 = vsel %vm247, %v4440, 0.0
  %4483 = vadd.xlane.f32.xlu0 %v4482
  %v4484 = vpop.xlane.xlu0 %4483
  %v4485 = vsel %vm247, %v4441, 0.0
  %4486 = vadd.xlane.f32.xlu0 %v4485
  %v4487 = vpop.xlane.xlu0 %4486
  %v4488 = vsel %vm247, %v4442, 0.0
  %4489 = vadd.xlane.f32.xlu0 %v4488
  %v4490 = vpop.xlane.xlu0 %4489
  %v4491 = vsel %vm247, %v4443, 0.0
  %4492 = vadd.xlane.f32.xlu0 %v4491
  %v4493 = vpop.xlane.xlu0 %4492
  %v4494 = vsel %vm247, %v4444, 0.0
  %4495 = vadd.xlane.f32.xlu0 %v4494
  %v4496 = vpop.xlane.xlu0 %4495
  %v4497 = vsel %vm247, %v4445, 0.0
  %4498 = vadd.xlane.f32.xlu0 %v4497
  %v4499 = vpop.xlane.xlu0 %4498
  %v4500 = vsel %vm247, %v4446, 0.0
  %4501 = vadd.xlane.f32.xlu0 %v4500
  %v4502 = vpop.xlane.xlu0 %4501
  %v4503 = vsel %vm247, %v4447, 0.0
  %4504 = vadd.xlane.f32.xlu0 %v4503
  %v4505 = vpop.xlane.xlu0 %4504
  %v4506 = vsel %vm247, %v4448, 0.0
  %4507 = vadd.xlane.f32.xlu0 %v4506
  %v4508 = vpop.xlane.xlu0 %4507
  %v4509 = vsel %vm247, %v4449, 0.0
  %4510 = vadd.xlane.f32.xlu0 %v4509
  %v4511 = vpop.xlane.xlu0 %4510
  %v4512 = vsel %vm247, %v4450, 0.0
  %4513 = vadd.xlane.f32.xlu0 %v4512
  %v4514 = vpop.xlane.xlu0 %4513
  %v4515 = vsel %vm247, %v4451, 0.0
  %4516 = vadd.xlane.f32.xlu0 %v4515
  %v4517 = vpop.xlane.xlu0 %4516
  %v4518 = vsel %vm247, %v4452, 0.0
  %4519 = vadd.xlane.f32.xlu0 %v4518
  %v4520 = vpop.xlane.xlu0 %4519
  %v4521 = vsel %vm247, %v4453, 0.0
  %4522 = vadd.xlane.f32.xlu0 %v4521
  %v4523 = vpop.xlane.xlu0 %4522
  %v4524 = vsel %vm247, %v4454, 0.0
  %4525 = vadd.xlane.f32.xlu0 %v4524
  %v4526 = vpop.xlane.xlu0 %4525
  %v4527 = vmul.f32 %v4457, %v376
  %v4528 = vmul.f32 %v4460, %v376
  %v4529 = vmul.f32 %v4463, %v376
  %v4530 = vmul.f32 %v4466, %v376
  %v4531 = vmul.f32 %v4469, %v376
  %v4532 = vmul.f32 %v4472, %v376
  %v4533 = vmul.f32 %v4475, %v376
  %v4534 = vmul.f32 %v4478, %v376
  %v4535 = vmul.f32 %v4481, %v376
  %v4536 = vmul.f32 %v4484, %v376
  %v4537 = vmul.f32 %v4487, %v376
  %v4538 = vmul.f32 %v4490, %v376
  %v4539 = vmul.f32 %v4493, %v376
  %v4540 = vmul.f32 %v4496, %v376
  %v4541 = vmul.f32 %v4499, %v376
  %v4542 = vmul.f32 %v4502, %v376
  %v4543 = vmul.f32 %v4505, %v376
  %v4544 = vmul.f32 %v4508, %v376
  %v4545 = vmul.f32 %v4511, %v376
  %v4546 = vmul.f32 %v4514, %v376
  %v4547 = vmul.f32 %v4517, %v376
  %v4548 = vmul.f32 %v4520, %v376
  %v4549 = vmul.f32 %v4523, %v376
  %v4550 = vmul.f32 %v4526, %v376
  %v4551 = vmul.f32 %v4407, %v4407
  %v4552 = vmul.f32 %v4408, %v4408
  %v4553 = vmul.f32 %v4409, %v4409
  %v4554 = vmul.f32 %v4410, %v4410
  %v4555 = vmul.f32 %v4411, %v4411
  %v4556 = vmul.f32 %v4412, %v4412
  %v4557 = vmul.f32 %v4413, %v4413
  %v4558 = vmul.f32 %v4414, %v4414
  %v4559 = vmul.f32 %v4415, %v4415
  %v4560 = vmul.f32 %v4416, %v4416
  %v4561 = vmul.f32 %v4417, %v4417
  %v4562 = vmul.f32 %v4418, %v4418
  %v4563 = vmul.f32 %v4419, %v4419
  %v4564 = vmul.f32 %v4420, %v4420
  %v4565 = vmul.f32 %v4421, %v4421
  %v4566 = vmul.f32 %v4422, %v4422
  %v4567 = vmul.f32 %v4423, %v4423
  %v4568 = vmul.f32 %v4424, %v4424
  %v4569 = vmul.f32 %v4425, %v4425
  %v4570 = vmul.f32 %v4426, %v4426
  %v4571 = vmul.f32 %v4427, %v4427
  %v4572 = vmul.f32 %v4428, %v4428
  %v4573 = vmul.f32 %v4429, %v4429
  %v4574 = vmul.f32 %v4430, %v4430
  %v4575 = vsub.f32 %v4527, %v4551
  %v4576 = vsub.f32 %v4528, %v4552
  %v4577 = vsub.f32 %v4529, %v4553
  %v4578 = vsub.f32 %v4530, %v4554
  %v4579 = vsub.f32 %v4531, %v4555
  %v4580 = vsub.f32 %v4532, %v4556
  %v4581 = vsub.f32 %v4533, %v4557
  %v4582 = vsub.f32 %v4534, %v4558
  %v4583 = vsub.f32 %v4535, %v4559
  %v4584 = vsub.f32 %v4536, %v4560
  %v4585 = vsub.f32 %v4537, %v4561
  %v4586 = vsub.f32 %v4538, %v4562
  %v4587 = vsub.f32 %v4539, %v4563
  %v4588 = vsub.f32 %v4540, %v4564
  %v4589 = vsub.f32 %v4541, %v4565
  %v4590 = vsub.f32 %v4542, %v4566
  %v4591 = vsub.f32 %v4543, %v4567
  %v4592 = vsub.f32 %v4544, %v4568
  %v4593 = vsub.f32 %v4545, %v4569
  %v4594 = vsub.f32 %v4546, %v4570
  %v4595 = vsub.f32 %v4547, %v4571
  %v4596 = vsub.f32 %v4548, %v4572
  %v4597 = vsub.f32 %v4549, %v4573
  %v4598 = vsub.f32 %v4550, %v4574
  %v4599 = vsub.f32 %v4309, %v4407
  %v4600 = vsub.f32 %v4310, %v4408
  %v4601 = vsub.f32 %v4311, %v4409
  %v4602 = vsub.f32 %v4312, %v4410
  %v4603 = vsub.f32 %v4313, %v4411
  %v4604 = vsub.f32 %v4314, %v4412
  %v4605 = vsub.f32 %v4315, %v4413
  %v4606 = vsub.f32 %v4316, %v4414
  %v4607 = vsub.f32 %v4317, %v4415
  %v4608 = vsub.f32 %v4318, %v4416
  %v4609 = vsub.f32 %v4319, %v4417
  %v4610 = vsub.f32 %v4320, %v4418
  %v4611 = vsub.f32 %v4321, %v4419
  %v4612 = vsub.f32 %v4322, %v4420
  %v4613 = vsub.f32 %v4323, %v4421
  %v4614 = vsub.f32 %v4324, %v4422
  %v4615 = vsub.f32 %v4325, %v4423
  %v4616 = vsub.f32 %v4326, %v4424
  %v4617 = vsub.f32 %v4327, %v4425
  %v4618 = vsub.f32 %v4328, %v4426
  %v4619 = vsub.f32 %v4329, %v4427
  %v4620 = vsub.f32 %v4330, %v4428
  %v4621 = vsub.f32 %v4331, %v4429
  %v4622 = vsub.f32 %v4332, %v4430
  %v4623 = vadd.f32 %v4575, 1e-05
  %v4624 = vadd.f32 %v4576, 1e-05
  %v4625 = vadd.f32 %v4577, 1e-05
  %v4626 = vadd.f32 %v4578, 1e-05
  %v4627 = vadd.f32 %v4579, 1e-05
  %v4628 = vadd.f32 %v4580, 1e-05
  %v4629 = vadd.f32 %v4581, 1e-05
  %v4630 = vadd.f32 %v4582, 1e-05
  %v4631 = vadd.f32 %v4583, 1e-05
  %v4632 = vadd.f32 %v4584, 1e-05
  %v4633 = vadd.f32 %v4585, 1e-05
  %v4634 = vadd.f32 %v4586, 1e-05
  %v4635 = vadd.f32 %v4587, 1e-05
  %v4636 = vadd.f32 %v4588, 1e-05
  %v4637 = vadd.f32 %v4589, 1e-05
  %v4638 = vadd.f32 %v4590, 1e-05
  %v4639 = vadd.f32 %v4591, 1e-05
  %v4640 = vadd.f32 %v4592, 1e-05
  %v4641 = vadd.f32 %v4593, 1e-05
  %v4642 = vadd.f32 %v4594, 1e-05
  %v4643 = vadd.f32 %v4595, 1e-05
  %v4644 = vadd.f32 %v4596, 1e-05
  %v4645 = vadd.f32 %v4597, 1e-05
  %v4646 = vadd.f32 %v4598, 1e-05
  %v4647 = vrsqrt.pop %v4623
  %v4648 = vmul.f32 %v4647, %v4623
  %v4649 = vmul.f32 %v4648, %v4647
  %v4650 = vmul.f32 0.5, %v4649
  %v4651 = vsub.f32 1.5, %v4650
  %v4652 = vmul.f32 %v4647, %v4651
  %vm4653 = vweird.f32 %v4623
  %vm4654 = vweird.f32 %v4647
  %vm4655 = vmor %vm4653, %vm4654
  %v4656 = vsel %vm4655, %v4647, %v4652
  %v4657 = vrsqrt.pop %v4624
  %v4658 = vmul.f32 %v4657, %v4624
  %v4659 = vmul.f32 %v4658, %v4657
  %v4660 = vmul.f32 0.5, %v4659
  %v4661 = vsub.f32 1.5, %v4660
  %v4662 = vmul.f32 %v4657, %v4661
  %vm4663 = vweird.f32 %v4624
  %vm4664 = vweird.f32 %v4657
  %vm4665 = vmor %vm4663, %vm4664
  %v4666 = vsel %vm4665, %v4657, %v4662
  %v4667 = vrsqrt.pop %v4625
  %v4668 = vmul.f32 %v4667, %v4625
  %v4669 = vmul.f32 %v4668, %v4667
  %v4670 = vmul.f32 0.5, %v4669
  %v4671 = vsub.f32 1.5, %v4670
  %v4672 = vmul.f32 %v4667, %v4671
  %vm4673 = vweird.f32 %v4625
  %vm4674 = vweird.f32 %v4667
  %vm4675 = vmor %vm4673, %vm4674
  %v4676 = vsel %vm4675, %v4667, %v4672
  %v4677 = vrsqrt.pop %v4626
  %v4678 = vmul.f32 %v4677, %v4626
  %v4679 = vmul.f32 %v4678, %v4677
  %v4680 = vmul.f32 0.5, %v4679
  %v4681 = vsub.f32 1.5, %v4680
  %v4682 = vmul.f32 %v4677, %v4681
  %vm4683 = vweird.f32 %v4626
  %vm4684 = vweird.f32 %v4677
  %vm4685 = vmor %vm4683, %vm4684
  %v4686 = vsel %vm4685, %v4677, %v4682
  %v4687 = vrsqrt.pop %v4627
  %v4688 = vmul.f32 %v4687, %v4627
  %v4689 = vmul.f32 %v4688, %v4687
  %v4690 = vmul.f32 0.5, %v4689
  %v4691 = vsub.f32 1.5, %v4690
  %v4692 = vmul.f32 %v4687, %v4691
  %vm4693 = vweird.f32 %v4627
  %vm4694 = vweird.f32 %v4687
  %vm4695 = vmor %vm4693, %vm4694
  %v4696 = vsel %vm4695, %v4687, %v4692
  %v4697 = vrsqrt.pop %v4628
  %v4698 = vmul.f32 %v4697, %v4628
  %v4699 = vmul.f32 %v4698, %v4697
  %v4700 = vmul.f32 0.5, %v4699
  %v4701 = vsub.f32 1.5, %v4700
  %v4702 = vmul.f32 %v4697, %v4701
  %vm4703 = vweird.f32 %v4628
  %vm4704 = vweird.f32 %v4697
  %vm4705 = vmor %vm4703, %vm4704
  %v4706 = vsel %vm4705, %v4697, %v4702
  %v4707 = vrsqrt.pop %v4629
  %v4708 = vmul.f32 %v4707, %v4629
  %v4709 = vmul.f32 %v4708, %v4707
  %v4710 = vmul.f32 0.5, %v4709
  %v4711 = vsub.f32 1.5, %v4710
  %v4712 = vmul.f32 %v4707, %v4711
  %vm4713 = vweird.f32 %v4629
  %vm4714 = vweird.f32 %v4707
  %vm4715 = vmor %vm4713, %vm4714
  %v4716 = vsel %vm4715, %v4707, %v4712
  %v4717 = vrsqrt.pop %v4630
  %v4718 = vmul.f32 %v4717, %v4630
  %v4719 = vmul.f32 %v4718, %v4717
  %v4720 = vmul.f32 0.5, %v4719
  %v4721 = vsub.f32 1.5, %v4720
  %v4722 = vmul.f32 %v4717, %v4721
  %vm4723 = vweird.f32 %v4630
  %vm4724 = vweird.f32 %v4717
  %vm4725 = vmor %vm4723, %vm4724
  %v4726 = vsel %vm4725, %v4717, %v4722
  %v4727 = vrsqrt.pop %v4631
  %v4728 = vmul.f32 %v4727, %v4631
  %v4729 = vmul.f32 %v4728, %v4727
  %v4730 = vmul.f32 0.5, %v4729
  %v4731 = vsub.f32 1.5, %v4730
  %v4732 = vmul.f32 %v4727, %v4731
  %vm4733 = vweird.f32 %v4631
  %vm4734 = vweird.f32 %v4727
  %vm4735 = vmor %vm4733, %vm4734
  %v4736 = vsel %vm4735, %v4727, %v4732
  %v4737 = vrsqrt.pop %v4632
  %v4738 = vmul.f32 %v4737, %v4632
  %v4739 = vmul.f32 %v4738, %v4737
  %v4740 = vmul.f32 0.5, %v4739
  %v4741 = vsub.f32 1.5, %v4740
  %v4742 = vmul.f32 %v4737, %v4741
  %vm4743 = vweird.f32 %v4632
  %vm4744 = vweird.f32 %v4737
  %vm4745 = vmor %vm4743, %vm4744
  %v4746 = vsel %vm4745, %v4737, %v4742
  %v4747 = vrsqrt.pop %v4633
  %v4748 = vmul.f32 %v4747, %v4633
  %v4749 = vmul.f32 %v4748, %v4747
  %v4750 = vmul.f32 0.5, %v4749
  %v4751 = vsub.f32 1.5, %v4750
  %v4752 = vmul.f32 %v4747, %v4751
  %vm4753 = vweird.f32 %v4633
  %vm4754 = vweird.f32 %v4747
  %vm4755 = vmor %vm4753, %vm4754
  %v4756 = vsel %vm4755, %v4747, %v4752
  %v4757 = vrsqrt.pop %v4634
  %v4758 = vmul.f32 %v4757, %v4634
  %v4759 = vmul.f32 %v4758, %v4757
  %v4760 = vmul.f32 0.5, %v4759
  %v4761 = vsub.f32 1.5, %v4760
  %v4762 = vmul.f32 %v4757, %v4761
  %vm4763 = vweird.f32 %v4634
  %vm4764 = vweird.f32 %v4757
  %vm4765 = vmor %vm4763, %vm4764
  %v4766 = vsel %vm4765, %v4757, %v4762
  %v4767 = vrsqrt.pop %v4635
  %v4768 = vmul.f32 %v4767, %v4635
  %v4769 = vmul.f32 %v4768, %v4767
  %v4770 = vmul.f32 0.5, %v4769
  %v4771 = vsub.f32 1.5, %v4770
  %v4772 = vmul.f32 %v4767, %v4771
  %vm4773 = vweird.f32 %v4635
  %vm4774 = vweird.f32 %v4767
  %vm4775 = vmor %vm4773, %vm4774
  %v4776 = vsel %vm4775, %v4767, %v4772
  %v4777 = vrsqrt.pop %v4636
  %v4778 = vmul.f32 %v4777, %v4636
  %v4779 = vmul.f32 %v4778, %v4777
  %v4780 = vmul.f32 0.5, %v4779
  %v4781 = vsub.f32 1.5, %v4780
  %v4782 = vmul.f32 %v4777, %v4781
  %vm4783 = vweird.f32 %v4636
  %vm4784 = vweird.f32 %v4777
  %vm4785 = vmor %vm4783, %vm4784
  %v4786 = vsel %vm4785, %v4777, %v4782
  %v4787 = vrsqrt.pop %v4637
  %v4788 = vmul.f32 %v4787, %v4637
  %v4789 = vmul.f32 %v4788, %v4787
  %v4790 = vmul.f32 0.5, %v4789
  %v4791 = vsub.f32 1.5, %v4790
  %v4792 = vmul.f32 %v4787, %v4791
  %vm4793 = vweird.f32 %v4637
  %vm4794 = vweird.f32 %v4787
  %vm4795 = vmor %vm4793, %vm4794
  %v4796 = vsel %vm4795, %v4787, %v4792
  %v4797 = vrsqrt.pop %v4638
  %v4798 = vmul.f32 %v4797, %v4638
  %v4799 = vmul.f32 %v4798, %v4797
  %v4800 = vmul.f32 0.5, %v4799
  %v4801 = vsub.f32 1.5, %v4800
  %v4802 = vmul.f32 %v4797, %v4801
  %vm4803 = vweird.f32 %v4638
  %vm4804 = vweird.f32 %v4797
  %vm4805 = vmor %vm4803, %vm4804
  %v4806 = vsel %vm4805, %v4797, %v4802
  %v4807 = vrsqrt.pop %v4639
  %v4808 = vmul.f32 %v4807, %v4639
  %v4809 = vmul.f32 %v4808, %v4807
  %v4810 = vmul.f32 0.5, %v4809
  %v4811 = vsub.f32 1.5, %v4810
  %v4812 = vmul.f32 %v4807, %v4811
  %vm4813 = vweird.f32 %v4639
  %vm4814 = vweird.f32 %v4807
  %vm4815 = vmor %vm4813, %vm4814
  %v4816 = vsel %vm4815, %v4807, %v4812
  %v4817 = vrsqrt.pop %v4640
  %v4818 = vmul.f32 %v4817, %v4640
  %v4819 = vmul.f32 %v4818, %v4817
  %v4820 = vmul.f32 0.5, %v4819
  %v4821 = vsub.f32 1.5, %v4820
  %v4822 = vmul.f32 %v4817, %v4821
  %vm4823 = vweird.f32 %v4640
  %vm4824 = vweird.f32 %v4817
  %vm4825 = vmor %vm4823, %vm4824
  %v4826 = vsel %vm4825, %v4817, %v4822
  %v4827 = vrsqrt.pop %v4641
  %v4828 = vmul.f32 %v4827, %v4641
  %v4829 = vmul.f32 %v4828, %v4827
  %v4830 = vmul.f32 0.5, %v4829
  %v4831 = vsub.f32 1.5, %v4830
  %v4832 = vmul.f32 %v4827, %v4831
  %vm4833 = vweird.f32 %v4641
  %vm4834 = vweird.f32 %v4827
  %vm4835 = vmor %vm4833, %vm4834
  %v4836 = vsel %vm4835, %v4827, %v4832
  %v4837 = vrsqrt.pop %v4642
  %v4838 = vmul.f32 %v4837, %v4642
  %v4839 = vmul.f32 %v4838, %v4837
  %v4840 = vmul.f32 0.5, %v4839
  %v4841 = vsub.f32 1.5, %v4840
  %v4842 = vmul.f32 %v4837, %v4841
  %vm4843 = vweird.f32 %v4642
  %vm4844 = vweird.f32 %v4837
  %vm4845 = vmor %vm4843, %vm4844
  %v4846 = vsel %vm4845, %v4837, %v4842
  %v4847 = vrsqrt.pop %v4643
  %v4848 = vmul.f32 %v4847, %v4643
  %v4849 = vmul.f32 %v4848, %v4847
  %v4850 = vmul.f32 0.5, %v4849
  %v4851 = vsub.f32 1.5, %v4850
  %v4852 = vmul.f32 %v4847, %v4851
  %vm4853 = vweird.f32 %v4643
  %vm4854 = vweird.f32 %v4847
  %vm4855 = vmor %vm4853, %vm4854
  %v4856 = vsel %vm4855, %v4847, %v4852
  %v4857 = vrsqrt.pop %v4644
  %v4858 = vmul.f32 %v4857, %v4644
  %v4859 = vmul.f32 %v4858, %v4857
  %v4860 = vmul.f32 0.5, %v4859
  %v4861 = vsub.f32 1.5, %v4860
  %v4862 = vmul.f32 %v4857, %v4861
  %vm4863 = vweird.f32 %v4644
  %vm4864 = vweird.f32 %v4857
  %vm4865 = vmor %vm4863, %vm4864
  %v4866 = vsel %vm4865, %v4857, %v4862
  %v4867 = vrsqrt.pop %v4645
  %v4868 = vmul.f32 %v4867, %v4645
  %v4869 = vmul.f32 %v4868, %v4867
  %v4870 = vmul.f32 0.5, %v4869
  %v4871 = vsub.f32 1.5, %v4870
  %v4872 = vmul.f32 %v4867, %v4871
  %vm4873 = vweird.f32 %v4645
  %vm4874 = vweird.f32 %v4867
  %vm4875 = vmor %vm4873, %vm4874
  %v4876 = vsel %vm4875, %v4867, %v4872
  %v4877 = vrsqrt.pop %v4646
  %v4878 = vmul.f32 %v4877, %v4646
  %v4879 = vmul.f32 %v4878, %v4877
  %v4880 = vmul.f32 0.5, %v4879
  %v4881 = vsub.f32 1.5, %v4880
  %v4882 = vmul.f32 %v4877, %v4881
  %vm4883 = vweird.f32 %v4646
  %vm4884 = vweird.f32 %v4877
  %vm4885 = vmor %vm4883, %vm4884
  %v4886 = vsel %vm4885, %v4877, %v4882
  %v4887 = vmul.f32 %v4599, %v4656
  %v4888 = vmul.f32 %v4600, %v4666
  %v4889 = vmul.f32 %v4601, %v4676
  %v4890 = vmul.f32 %v4602, %v4686
  %v4891 = vmul.f32 %v4603, %v4696
  %v4892 = vmul.f32 %v4604, %v4706
  %v4893 = vmul.f32 %v4605, %v4716
  %v4894 = vmul.f32 %v4606, %v4726
  %v4895 = vmul.f32 %v4607, %v4736
  %v4896 = vmul.f32 %v4608, %v4746
  %v4897 = vmul.f32 %v4609, %v4756
  %v4898 = vmul.f32 %v4610, %v4766
  %v4899 = vmul.f32 %v4611, %v4776
  %v4900 = vmul.f32 %v4612, %v4786
  %v4901 = vmul.f32 %v4613, %v4796
  %v4902 = vmul.f32 %v4614, %v4806
  %v4903 = vmul.f32 %v4615, %v4816
  %v4904 = vmul.f32 %v4616, %v4826
  %v4905 = vmul.f32 %v4617, %v4836
  %v4906 = vmul.f32 %v4618, %v4846
  %v4907 = vmul.f32 %v4619, %v4856
  %v4908 = vmul.f32 %v4620, %v4866
  %v4909 = vmul.f32 %v4621, %v4876
  %v4910 = vmul.f32 %v4622, %v4886
  %v4912 = vperm.slane %v4333, 0
  %v4914 = vmul.f32 %v4887, %v4912
  %v4915 = vmul.f32 %v4888, %v4912
  %v4916 = vmul.f32 %v4889, %v4912
  %v4917 = vmul.f32 %v4890, %v4912
  %v4918 = vmul.f32 %v4891, %v4912
  %v4919 = vmul.f32 %v4892, %v4912
  %v4920 = vmul.f32 %v4893, %v4912
  %v4921 = vmul.f32 %v4894, %v4912
  %v4922 = vmul.f32 %v4895, %v4912
  %v4923 = vmul.f32 %v4896, %v4912
  %v4924 = vmul.f32 %v4897, %v4912
  %v4925 = vmul.f32 %v4898, %v4912
  %v4926 = vmul.f32 %v4899, %v4912
  %v4927 = vmul.f32 %v4900, %v4912
  %v4928 = vmul.f32 %v4901, %v4912
  %v4929 = vmul.f32 %v4902, %v4912
  %v4930 = vmul.f32 %v4903, %v4912
  %v4931 = vmul.f32 %v4904, %v4912
  %v4932 = vmul.f32 %v4905, %v4912
  %v4933 = vmul.f32 %v4906, %v4912
  %v4934 = vmul.f32 %v4907, %v4912
  %v4935 = vmul.f32 %v4908, %v4912
  %v4936 = vmul.f32 %v4909, %v4912
  %v4937 = vmul.f32 %v4910, %v4912
  %v4939 = vperm.slane %v4334, 0
  %v4941 = vadd.f32 %v4914, %v4939
  %v4942 = vadd.f32 %v4915, %v4939
  %v4943 = vadd.f32 %v4916, %v4939
  %v4944 = vadd.f32 %v4917, %v4939
  %v4945 = vadd.f32 %v4918, %v4939
  %v4946 = vadd.f32 %v4919, %v4939
  %v4947 = vadd.f32 %v4920, %v4939
  %v4948 = vadd.f32 %v4921, %v4939
  %v4949 = vadd.f32 %v4922, %v4939
  %v4950 = vadd.f32 %v4923, %v4939
  %v4951 = vadd.f32 %v4924, %v4939
  %v4952 = vadd.f32 %v4925, %v4939
  %v4953 = vadd.f32 %v4926, %v4939
  %v4954 = vadd.f32 %v4927, %v4939
  %v4955 = vadd.f32 %v4928, %v4939
  %v4956 = vadd.f32 %v4929, %v4939
  %v4957 = vadd.f32 %v4930, %v4939
  %v4958 = vadd.f32 %v4931, %v4939
  %v4959 = vadd.f32 %v4932, %v4939
  %v4960 = vadd.f32 %v4933, %v4939
  %v4961 = vadd.f32 %v4934, %v4939
  %v4962 = vadd.f32 %v4935, %v4939
  %v4963 = vadd.f32 %v4936, %v4939
  %v4964 = vadd.f32 %v4937, %v4939
  %v4965 = vpack.c.bf16 %v4942, %v4941
  %v4966 = vpack.c.bf16 %v4944, %v4943
  %v4967 = vpack.c.bf16 %v4946, %v4945
  %v4968 = vpack.c.bf16 %v4948, %v4947
  %v4969 = vpack.c.bf16 %v4950, %v4949
  %v4970 = vpack.c.bf16 %v4952, %v4951
  %v4971 = vpack.c.bf16 %v4954, %v4953
  %v4972 = vpack.c.bf16 %v4956, %v4955
  %v4973 = vpack.c.bf16 %v4958, %v4957
  %v4974 = vpack.c.bf16 %v4960, %v4959
  %v4975 = vpack.c.bf16 %v4962, %v4961
  %v4976 = vpack.c.bf16 %v4964, %v4963
  %v4977 = vld [vmem:[%s11] sm:$0xf]
  %v4978 = vld [vmem:[%s11 + $0x4] sm:$0xf]
  %v4979 = vld [vmem:[%s11 + $0x8] sm:$0xf]
  %v4980 = vld [vmem:[%s11 + $0xc] sm:$0xf]
  %v4981 = vld [vmem:[%s12] sm:$0x1]
  %v4983 = vperm.slane %v4981, 0
  %v4989 = vunpack.c.l.b16 %v4977
  %v4990 = vunpack.c.l.b16 %v4978
  %v4991 = vunpack.c.l.b16 %v4979
  %v4992 = vunpack.c.l.b16 %v4980
  %v4993 = vpack.c.b16 %v4990, %v4989
  %v4994 = vpack.c.b16 %v4992, %v4991
  %v4998 = vsel %vm247, %v4965, 0
  %v5001 = vsel %vm247, %v4966, 0
  %v5004 = vsel %vm247, %v4967, 0
  %v5007 = vsel %vm247, %v4968, 0
  %v5010 = vsel %vm247, %v4969, 0
  %v5013 = vsel %vm247, %v4970, 0
  %v5016 = vsel %vm247, %v4971, 0
  %v5019 = vsel %vm247, %v4972, 0
  %v5022 = vsel %vm247, %v4973, 0
  %v5025 = vsel %vm247, %v4974, 0
  %v5028 = vsel %vm247, %v4975, 0
  %v5031 = vsel %vm247, %v4976, 0
  %5033 = vmatpush.bf16.msra.mxu0 0
  %5034 = vmatpush.bf16.msra.mxu0 0
  %5035 = vmatpush.bf16.msra.mxu0 0
  %5036 = vmatpush.bf16.msra.mxu0 0
  %5037 = vmatpush.bf16.msra.mxu0 0
  %5038 = vmatpush.bf16.msra.mxu0 0
  %5039 = vmatpush.bf16.msra.mxu0 %v4994
  %5040 = vmatpush.bf16.msra.mxu0 %v4993
  %5041 = vmatmul.bf16.gmra.mxu0 %v4998
  %v5042 = vpop.f32.mrf.mxu0
  %v5043 = vadd.f32 %v4983, %v5042
  %v5044 = vpop.f32.mrf.mxu0
  %v5045 = vadd.f32 %v4983, %v5044
  %5046 = vmatmul.bf16.gmra.mxu0 %v5001
  %v5047 = vpop.f32.mrf.mxu0
  %v5048 = vadd.f32 %v4983, %v5047
  %v5049 = vpop.f32.mrf.mxu0
  %v5050 = vadd.f32 %v4983, %v5049
  %5051 = vmatmul.bf16.gmra.mxu0 %v5004
  %v5052 = vpop.f32.mrf.mxu0
  %v5053 = vadd.f32 %v4983, %v5052
  %v5054 = vpop.f32.mrf.mxu0
  %v5055 = vadd.f32 %v4983, %v5054
  %5056 = vmatmul.bf16.gmra.mxu0 %v5007
  %v5057 = vpop.f32.mrf.mxu0
  %v5058 = vadd.f32 %v4983, %v5057
  %v5059 = vpop.f32.mrf.mxu0
  %v5060 = vadd.f32 %v4983, %v5059
  %5061 = vmatmul.bf16.gmra.mxu0 %v5010
  %v5062 = vpop.f32.mrf.mxu0
  %v5063 = vadd.f32 %v4983, %v5062
  %v5064 = vpop.f32.mrf.mxu0
  %v5065 = vadd.f32 %v4983, %v5064
  %5066 = vmatmul.bf16.gmra.mxu0 %v5013
  %v5067 = vpop.f32.mrf.mxu0
  %v5068 = vadd.f32 %v4983, %v5067
  %v5069 = vpop.f32.mrf.mxu0
  %v5070 = vadd.f32 %v4983, %v5069
  %5071 = vmatmul.bf16.gmra.mxu0 %v5016
  %v5072 = vpop.f32.mrf.mxu0
  %v5073 = vadd.f32 %v4983, %v5072
  %v5074 = vpop.f32.mrf.mxu0
  %v5075 = vadd.f32 %v4983, %v5074
  %5076 = vmatmul.bf16.gmra.mxu0 %v5019
  %v5077 = vpop.f32.mrf.mxu0
  %v5078 = vadd.f32 %v4983, %v5077
  %v5079 = vpop.f32.mrf.mxu0
  %v5080 = vadd.f32 %v4983, %v5079
  %5081 = vmatmul.bf16.gmra.mxu0 %v5022
  %v5082 = vpop.f32.mrf.mxu0
  %v5083 = vadd.f32 %v4983, %v5082
  %v5084 = vpop.f32.mrf.mxu0
  %v5085 = vadd.f32 %v4983, %v5084
  %5086 = vmatmul.bf16.gmra.mxu0 %v5025
  %v5087 = vpop.f32.mrf.mxu0
  %v5088 = vadd.f32 %v4983, %v5087
  %v5089 = vpop.f32.mrf.mxu0
  %v5090 = vadd.f32 %v4983, %v5089
  %5091 = vmatmul.bf16.gmra.mxu0 %v5028
  %v5092 = vpop.f32.mrf.mxu0
  %v5093 = vadd.f32 %v4983, %v5092
  %v5094 = vpop.f32.mrf.mxu0
  %v5095 = vadd.f32 %v4983, %v5094
  %5096 = vmatmul.bf16.gmra.mxu0 %v5031
  %v5097 = vpop.f32.mrf.mxu0
  %v5098 = vadd.f32 %v4983, %v5097
  %v5099 = vpop.f32.mrf.mxu0
  %v5100 = vadd.f32 %v4983, %v5099
  %5101 = vdwg.mxu0
  %v5102 = vmul.f32 %v5043, 0.5
  %v5103 = vmul.f32 %v5045, 0.5
  %v5104 = vmul.f32 %v5048, 0.5
  %v5105 = vmul.f32 %v5050, 0.5
  %v5106 = vmul.f32 %v5053, 0.5
  %v5107 = vmul.f32 %v5055, 0.5
  %v5108 = vmul.f32 %v5058, 0.5
  %v5109 = vmul.f32 %v5060, 0.5
  %v5110 = vmul.f32 %v5063, 0.5
  %v5111 = vmul.f32 %v5065, 0.5
  %v5112 = vmul.f32 %v5068, 0.5
  %v5113 = vmul.f32 %v5070, 0.5
  %v5114 = vmul.f32 %v5073, 0.5
  %v5115 = vmul.f32 %v5075, 0.5
  %v5116 = vmul.f32 %v5078, 0.5
  %v5117 = vmul.f32 %v5080, 0.5
  %v5118 = vmul.f32 %v5083, 0.5
  %v5119 = vmul.f32 %v5085, 0.5
  %v5120 = vmul.f32 %v5088, 0.5
  %v5121 = vmul.f32 %v5090, 0.5
  %v5122 = vmul.f32 %v5093, 0.5
  %v5123 = vmul.f32 %v5095, 0.5
  %v5124 = vmul.f32 %v5098, 0.5
  %v5125 = vmul.f32 %v5100, 0.5
  %v5126 = vmul.f32 %v5043, 0.044715
  %v5127 = vmul.f32 %v5045, 0.044715
  %v5128 = vmul.f32 %v5048, 0.044715
  %v5129 = vmul.f32 %v5050, 0.044715
  %v5130 = vmul.f32 %v5053, 0.044715
  %v5131 = vmul.f32 %v5055, 0.044715
  %v5132 = vmul.f32 %v5058, 0.044715
  %v5133 = vmul.f32 %v5060, 0.044715
  %v5134 = vmul.f32 %v5063, 0.044715
  %v5135 = vmul.f32 %v5065, 0.044715
  %v5136 = vmul.f32 %v5068, 0.044715
  %v5137 = vmul.f32 %v5070, 0.044715
  %v5138 = vmul.f32 %v5073, 0.044715
  %v5139 = vmul.f32 %v5075, 0.044715
  %v5140 = vmul.f32 %v5078, 0.044715
  %v5141 = vmul.f32 %v5080, 0.044715
  %v5142 = vmul.f32 %v5083, 0.044715
  %v5143 = vmul.f32 %v5085, 0.044715
  %v5144 = vmul.f32 %v5088, 0.044715
  %v5145 = vmul.f32 %v5090, 0.044715
  %v5146 = vmul.f32 %v5093, 0.044715
  %v5147 = vmul.f32 %v5095, 0.044715
  %v5148 = vmul.f32 %v5098, 0.044715
  %v5149 = vmul.f32 %v5100, 0.044715
  %v5150 = vmul.f32 %v5126, %v5043
  %v5151 = vmul.f32 %v5127, %v5045
  %v5152 = vmul.f32 %v5128, %v5048
  %v5153 = vmul.f32 %v5129, %v5050
  %v5154 = vmul.f32 %v5130, %v5053
  %v5155 = vmul.f32 %v5131, %v5055
  %v5156 = vmul.f32 %v5132, %v5058
  %v5157 = vmul.f32 %v5133, %v5060
  %v5158 = vmul.f32 %v5134, %v5063
  %v5159 = vmul.f32 %v5135, %v5065
  %v5160 = vmul.f32 %v5136, %v5068
  %v5161 = vmul.f32 %v5137, %v5070
  %v5162 = vmul.f32 %v5138, %v5073
  %v5163 = vmul.f32 %v5139, %v5075
  %v5164 = vmul.f32 %v5140, %v5078
  %v5165 = vmul.f32 %v5141, %v5080
  %v5166 = vmul.f32 %v5142, %v5083
  %v5167 = vmul.f32 %v5143, %v5085
  %v5168 = vmul.f32 %v5144, %v5088
  %v5169 = vmul.f32 %v5145, %v5090
  %v5170 = vmul.f32 %v5146, %v5093
  %v5171 = vmul.f32 %v5147, %v5095
  %v5172 = vmul.f32 %v5148, %v5098
  %v5173 = vmul.f32 %v5149, %v5100
  %v5174 = vmul.f32 %v5150, %v5043
  %v5175 = vmul.f32 %v5151, %v5045
  %v5176 = vmul.f32 %v5152, %v5048
  %v5177 = vmul.f32 %v5153, %v5050
  %v5178 = vmul.f32 %v5154, %v5053
  %v5179 = vmul.f32 %v5155, %v5055
  %v5180 = vmul.f32 %v5156, %v5058
  %v5181 = vmul.f32 %v5157, %v5060
  %v5182 = vmul.f32 %v5158, %v5063
  %v5183 = vmul.f32 %v5159, %v5065
  %v5184 = vmul.f32 %v5160, %v5068
  %v5185 = vmul.f32 %v5161, %v5070
  %v5186 = vmul.f32 %v5162, %v5073
  %v5187 = vmul.f32 %v5163, %v5075
  %v5188 = vmul.f32 %v5164, %v5078
  %v5189 = vmul.f32 %v5165, %v5080
  %v5190 = vmul.f32 %v5166, %v5083
  %v5191 = vmul.f32 %v5167, %v5085
  %v5192 = vmul.f32 %v5168, %v5088
  %v5193 = vmul.f32 %v5169, %v5090
  %v5194 = vmul.f32 %v5170, %v5093
  %v5195 = vmul.f32 %v5171, %v5095
  %v5196 = vmul.f32 %v5172, %v5098
  %v5197 = vmul.f32 %v5173, %v5100
  %v5198 = vadd.f32 %v5043, %v5174
  %v5199 = vadd.f32 %v5045, %v5175
  %v5200 = vadd.f32 %v5048, %v5176
  %v5201 = vadd.f32 %v5050, %v5177
  %v5202 = vadd.f32 %v5053, %v5178
  %v5203 = vadd.f32 %v5055, %v5179
  %v5204 = vadd.f32 %v5058, %v5180
  %v5205 = vadd.f32 %v5060, %v5181
  %v5206 = vadd.f32 %v5063, %v5182
  %v5207 = vadd.f32 %v5065, %v5183
  %v5208 = vadd.f32 %v5068, %v5184
  %v5209 = vadd.f32 %v5070, %v5185
  %v5210 = vadd.f32 %v5073, %v5186
  %v5211 = vadd.f32 %v5075, %v5187
  %v5212 = vadd.f32 %v5078, %v5188
  %v5213 = vadd.f32 %v5080, %v5189
  %v5214 = vadd.f32 %v5083, %v5190
  %v5215 = vadd.f32 %v5085, %v5191
  %v5216 = vadd.f32 %v5088, %v5192
  %v5217 = vadd.f32 %v5090, %v5193
  %v5218 = vadd.f32 %v5093, %v5194
  %v5219 = vadd.f32 %v5095, %v5195
  %v5220 = vadd.f32 %v5098, %v5196
  %v5221 = vadd.f32 %v5100, %v5197
  %v5222 = vmul.f32 %v5198, 0.7978846
  %v5223 = vmul.f32 %v5199, 0.7978846
  %v5224 = vmul.f32 %v5200, 0.7978846
  %v5225 = vmul.f32 %v5201, 0.7978846
  %v5226 = vmul.f32 %v5202, 0.7978846
  %v5227 = vmul.f32 %v5203, 0.7978846
  %v5228 = vmul.f32 %v5204, 0.7978846
  %v5229 = vmul.f32 %v5205, 0.7978846
  %v5230 = vmul.f32 %v5206, 0.7978846
  %v5231 = vmul.f32 %v5207, 0.7978846
  %v5232 = vmul.f32 %v5208, 0.7978846
  %v5233 = vmul.f32 %v5209, 0.7978846
  %v5234 = vmul.f32 %v5210, 0.7978846
  %v5235 = vmul.f32 %v5211, 0.7978846
  %v5236 = vmul.f32 %v5212, 0.7978846
  %v5237 = vmul.f32 %v5213, 0.7978846
  %v5238 = vmul.f32 %v5214, 0.7978846
  %v5239 = vmul.f32 %v5215, 0.7978846
  %v5240 = vmul.f32 %v5216, 0.7978846
  %v5241 = vmul.f32 %v5217, 0.7978846
  %v5242 = vmul.f32 %v5218, 0.7978846
  %v5243 = vmul.f32 %v5219, 0.7978846
  %v5244 = vmul.f32 %v5220, 0.7978846
  %v5245 = vmul.f32 %v5221, 0.7978846
  %v5246 = vtanh.pop %v5222
  %v5247 = vtanh.pop %v5223
  %v5248 = vtanh.pop %v5224
  %v5249 = vtanh.pop %v5225
  %v5250 = vtanh.pop %v5226
  %v5251 = vtanh.pop %v5227
  %v5252 = vtanh.pop %v5228
  %v5253 = vtanh.pop %v5229
  %v5254 = vtanh.pop %v5230
  %v5255 = vtanh.pop %v5231
  %v5256 = vtanh.pop %v5232
  %v5257 = vtanh.pop %v5233
  %v5258 = vtanh.pop %v5234
  %v5259 = vtanh.pop %v5235
  %v5260 = vtanh.pop %v5236
  %v5261 = vtanh.pop %v5237
  %v5262 = vtanh.pop %v5238
  %v5263 = vtanh.pop %v5239
  %v5264 = vtanh.pop %v5240
  %v5265 = vtanh.pop %v5241
  %v5266 = vtanh.pop %v5242
  %v5267 = vtanh.pop %v5243
  %v5268 = vtanh.pop %v5244
  %v5269 = vtanh.pop %v5245
  %v5270 = vadd.f32 %v5246, 1.0
  %v5271 = vadd.f32 %v5247, 1.0
  %v5272 = vadd.f32 %v5248, 1.0
  %v5273 = vadd.f32 %v5249, 1.0
  %v5274 = vadd.f32 %v5250, 1.0
  %v5275 = vadd.f32 %v5251, 1.0
  %v5276 = vadd.f32 %v5252, 1.0
  %v5277 = vadd.f32 %v5253, 1.0
  %v5278 = vadd.f32 %v5254, 1.0
  %v5279 = vadd.f32 %v5255, 1.0
  %v5280 = vadd.f32 %v5256, 1.0
  %v5281 = vadd.f32 %v5257, 1.0
  %v5282 = vadd.f32 %v5258, 1.0
  %v5283 = vadd.f32 %v5259, 1.0
  %v5284 = vadd.f32 %v5260, 1.0
  %v5285 = vadd.f32 %v5261, 1.0
  %v5286 = vadd.f32 %v5262, 1.0
  %v5287 = vadd.f32 %v5263, 1.0
  %v5288 = vadd.f32 %v5264, 1.0
  %v5289 = vadd.f32 %v5265, 1.0
  %v5290 = vadd.f32 %v5266, 1.0
  %v5291 = vadd.f32 %v5267, 1.0
  %v5292 = vadd.f32 %v5268, 1.0
  %v5293 = vadd.f32 %v5269, 1.0
  %v5294 = vmul.f32 %v5102, %v5270
  %v5295 = vmul.f32 %v5103, %v5271
  %v5296 = vmul.f32 %v5104, %v5272
  %v5297 = vmul.f32 %v5105, %v5273
  %v5298 = vmul.f32 %v5106, %v5274
  %v5299 = vmul.f32 %v5107, %v5275
  %v5300 = vmul.f32 %v5108, %v5276
  %v5301 = vmul.f32 %v5109, %v5277
  %v5302 = vmul.f32 %v5110, %v5278
  %v5303 = vmul.f32 %v5111, %v5279
  %v5304 = vmul.f32 %v5112, %v5280
  %v5305 = vmul.f32 %v5113, %v5281
  %v5306 = vmul.f32 %v5114, %v5282
  %v5307 = vmul.f32 %v5115, %v5283
  %v5308 = vmul.f32 %v5116, %v5284
  %v5309 = vmul.f32 %v5117, %v5285
  %v5310 = vmul.f32 %v5118, %v5286
  %v5311 = vmul.f32 %v5119, %v5287
  %v5312 = vmul.f32 %v5120, %v5288
  %v5313 = vmul.f32 %v5121, %v5289
  %v5314 = vmul.f32 %v5122, %v5290
  %v5315 = vmul.f32 %v5123, %v5291
  %v5316 = vmul.f32 %v5124, %v5292
  %v5317 = vmul.f32 %v5125, %v5293
  %v5318 = vpack.c.bf16 %v5295, %v5294
  %v5319 = vpack.c.bf16 %v5297, %v5296
  %v5320 = vpack.c.bf16 %v5299, %v5298
  %v5321 = vpack.c.bf16 %v5301, %v5300
  %v5322 = vpack.c.bf16 %v5303, %v5302
  %v5323 = vpack.c.bf16 %v5305, %v5304
  %v5324 = vpack.c.bf16 %v5307, %v5306
  %v5325 = vpack.c.bf16 %v5309, %v5308
  %v5326 = vpack.c.bf16 %v5311, %v5310
  %v5327 = vpack.c.bf16 %v5313, %v5312
  %v5328 = vpack.c.bf16 %v5315, %v5314
  %v5329 = vpack.c.bf16 %v5317, %v5316
  %v5330 = vld [vmem:[%s13] sm:$0xf]
  %v5331 = vld [vmem:[%s13 + $0x4] sm:$0xf]
  %v5332 = vld [vmem:[%s13 + $0x8] sm:$0xf]
  %v5333 = vld [vmem:[%s13 + $0xc] sm:$0xf]
  %v5334 = vld [vmem:[%s13 + $0x10] sm:$0xf]
  %v5335 = vld [vmem:[%s13 + $0x14] sm:$0xf]
  %v5336 = vld [vmem:[%s13 + $0x18] sm:$0xf]
  %v5337 = vld [vmem:[%s13 + $0x1c] sm:$0xf]
  %v5338 = vld [vmem:[%s13 + $0x20] sm:$0xf]
  %v5339 = vld [vmem:[%s13 + $0x24] sm:$0xf]
  %v5340 = vld [vmem:[%s13 + $0x28] sm:$0xf]
  %v5341 = vld [vmem:[%s13 + $0x2c] sm:$0xf]
  %v5342 = vld [vmem:[%s13 + $0x30] sm:$0xf]
  %v5343 = vld [vmem:[%s13 + $0x34] sm:$0xf]
  %v5344 = vld [vmem:[%s13 + $0x38] sm:$0xf]
  %v5345 = vld [vmem:[%s13 + $0x3c] sm:$0xf]
  %v5362 = vunpack.c.l.b16 %v5330
  %v5363 = vunpack.c.l.b16 %v5331
  %v5364 = vunpack.c.l.b16 %v5332
  %v5365 = vunpack.c.l.b16 %v5333
  %v5366 = vunpack.c.l.b16 %v5334
  %v5367 = vunpack.c.l.b16 %v5335
  %v5368 = vunpack.c.l.b16 %v5336
  %v5369 = vunpack.c.l.b16 %v5337
  %v5370 = vunpack.c.l.b16 %v5338
  %v5371 = vunpack.c.l.b16 %v5339
  %v5372 = vunpack.c.l.b16 %v5340
  %v5373 = vunpack.c.l.b16 %v5341
  %v5374 = vunpack.c.l.b16 %v5342
  %v5375 = vunpack.c.l.b16 %v5343
  %v5376 = vunpack.c.l.b16 %v5344
  %v5377 = vunpack.c.l.b16 %v5345
  %v5378 = vpack.c.b16 %v5363, %v5362
  %v5379 = vpack.c.b16 %v5365, %v5364
  %v5380 = vpack.c.b16 %v5367, %v5366
  %v5381 = vpack.c.b16 %v5369, %v5368
  %v5382 = vpack.c.b16 %v5371, %v5370
  %v5383 = vpack.c.b16 %v5373, %v5372
  %v5384 = vpack.c.b16 %v5375, %v5374
  %v5385 = vpack.c.b16 %v5377, %v5376
  %5394 = vmatpush.bf16.msra.mxu0 %v5385
  %5395 = vmatpush.bf16.msra.mxu0 %v5384
  %5396 = vmatpush.bf16.msra.mxu0 %v5383
  %5397 = vmatpush.bf16.msra.mxu0 %v5382
  %5398 = vmatpush.bf16.msra.mxu0 %v5381
  %5399 = vmatpush.bf16.msra.mxu0 %v5380
  %5400 = vmatpush.bf16.msra.mxu0 %v5379
  %5401 = vmatpush.bf16.msra.mxu0 %v5378
  %5402 = vmatmul.bf16.gmra.mxu0 %v5318
  %v5403 = vpop.f32.mrf.mxu0
  %v5404 = vadd.f32 0.0, %v5403
  %v5405 = vpop.f32.mrf.mxu0
  %v5406 = vadd.f32 0.0, %v5405
  %5407 = vmatmul.bf16.gmra.mxu0 %v5319
  %v5408 = vpop.f32.mrf.mxu0
  %v5409 = vadd.f32 0.0, %v5408
  %v5410 = vpop.f32.mrf.mxu0
  %v5411 = vadd.f32 0.0, %v5410
  %5412 = vmatmul.bf16.gmra.mxu0 %v5320
  %v5413 = vpop.f32.mrf.mxu0
  %v5414 = vadd.f32 0.0, %v5413
  %v5415 = vpop.f32.mrf.mxu0
  %v5416 = vadd.f32 0.0, %v5415
  %5417 = vmatmul.bf16.gmra.mxu0 %v5321
  %v5418 = vpop.f32.mrf.mxu0
  %v5419 = vadd.f32 0.0, %v5418
  %v5420 = vpop.f32.mrf.mxu0
  %v5421 = vadd.f32 0.0, %v5420
  %5422 = vmatmul.bf16.gmra.mxu0 %v5322
  %v5423 = vpop.f32.mrf.mxu0
  %v5424 = vadd.f32 0.0, %v5423
  %v5425 = vpop.f32.mrf.mxu0
  %v5426 = vadd.f32 0.0, %v5425
  %5427 = vmatmul.bf16.gmra.mxu0 %v5323
  %v5428 = vpop.f32.mrf.mxu0
  %v5429 = vadd.f32 0.0, %v5428
  %v5430 = vpop.f32.mrf.mxu0
  %v5431 = vadd.f32 0.0, %v5430
  %5432 = vmatmul.bf16.gmra.mxu0 %v5324
  %v5433 = vpop.f32.mrf.mxu0
  %v5434 = vadd.f32 0.0, %v5433
  %v5435 = vpop.f32.mrf.mxu0
  %v5436 = vadd.f32 0.0, %v5435
  %5437 = vmatmul.bf16.gmra.mxu0 %v5325
  %v5438 = vpop.f32.mrf.mxu0
  %v5439 = vadd.f32 0.0, %v5438
  %v5440 = vpop.f32.mrf.mxu0
  %v5441 = vadd.f32 0.0, %v5440
  %5442 = vmatmul.bf16.gmra.mxu0 %v5326
  %v5443 = vpop.f32.mrf.mxu0
  %v5444 = vadd.f32 0.0, %v5443
  %v5445 = vpop.f32.mrf.mxu0
  %v5446 = vadd.f32 0.0, %v5445
  %5447 = vmatmul.bf16.gmra.mxu0 %v5327
  %v5448 = vpop.f32.mrf.mxu0
  %v5449 = vadd.f32 0.0, %v5448
  %v5450 = vpop.f32.mrf.mxu0
  %v5451 = vadd.f32 0.0, %v5450
  %5452 = vmatmul.bf16.gmra.mxu0 %v5328
  %v5453 = vpop.f32.mrf.mxu0
  %v5454 = vadd.f32 0.0, %v5453
  %v5455 = vpop.f32.mrf.mxu0
  %v5456 = vadd.f32 0.0, %v5455
  %5457 = vmatmul.bf16.gmra.mxu0 %v5329
  %v5458 = vpop.f32.mrf.mxu0
  %v5459 = vadd.f32 0.0, %v5458
  %v5460 = vpop.f32.mrf.mxu0
  %v5461 = vadd.f32 0.0, %v5460
  %5462 = vdwg.mxu0
  %v5463 = vadd.f32 %v4309, %v5404
  %v5464 = vadd.f32 %v4310, %v5406
  %v5465 = vadd.f32 %v4311, %v5409
  %v5466 = vadd.f32 %v4312, %v5411
  %v5467 = vadd.f32 %v4313, %v5414
  %v5468 = vadd.f32 %v4314, %v5416
  %v5469 = vadd.f32 %v4315, %v5419
  %v5470 = vadd.f32 %v4316, %v5421
  %v5471 = vadd.f32 %v4317, %v5424
  %v5472 = vadd.f32 %v4318, %v5426
  %v5473 = vadd.f32 %v4319, %v5429
  %v5474 = vadd.f32 %v4320, %v5431
  %v5475 = vadd.f32 %v4321, %v5434
  %v5476 = vadd.f32 %v4322, %v5436
  %v5477 = vadd.f32 %v4323, %v5439
  %v5478 = vadd.f32 %v4324, %v5441
  %v5479 = vadd.f32 %v4325, %v5444
  %v5480 = vadd.f32 %v4326, %v5446
  %v5481 = vadd.f32 %v4327, %v5449
  %v5482 = vadd.f32 %v4328, %v5451
  %v5483 = vadd.f32 %v4329, %v5454
  %v5484 = vadd.f32 %v4330, %v5456
  %v5485 = vadd.f32 %v4331, %v5459
  %v5486 = vadd.f32 %v4332, %v5461
  %v5487 = vld [vmem:[%s14] sm:$0x1]
  %v5489 = vperm.slane %v5487, 0
  %v5491 = vadd.f32 %v5463, %v5489
  %v5492 = vadd.f32 %v5464, %v5489
  %v5493 = vadd.f32 %v5465, %v5489
  %v5494 = vadd.f32 %v5466, %v5489
  %v5495 = vadd.f32 %v5467, %v5489
  %v5496 = vadd.f32 %v5468, %v5489
  %v5497 = vadd.f32 %v5469, %v5489
  %v5498 = vadd.f32 %v5470, %v5489
  %v5499 = vadd.f32 %v5471, %v5489
  %v5500 = vadd.f32 %v5472, %v5489
  %v5501 = vadd.f32 %v5473, %v5489
  %v5502 = vadd.f32 %v5474, %v5489
  %v5503 = vadd.f32 %v5475, %v5489
  %v5504 = vadd.f32 %v5476, %v5489
  %v5505 = vadd.f32 %v5477, %v5489
  %v5506 = vadd.f32 %v5478, %v5489
  %v5507 = vadd.f32 %v5479, %v5489
  %v5508 = vadd.f32 %v5480, %v5489
  %v5509 = vadd.f32 %v5481, %v5489
  %v5510 = vadd.f32 %v5482, %v5489
  %v5511 = vadd.f32 %v5483, %v5489
  %v5512 = vadd.f32 %v5484, %v5489
  %v5513 = vadd.f32 %v5485, %v5489
  %v5514 = vadd.f32 %v5486, %v5489
  %5515 = vst.msk [vmem:[%s17] sm:$0xff] %vm247, %v5491
  %5516 = vst.msk [vmem:[%s17 + $0x8] sm:$0xff] %vm247, %v5492
  %5517 = vst.msk [vmem:[%s17 + $0x10] sm:$0xff] %vm247, %v5493
  %5518 = vst.msk [vmem:[%s17 + $0x18] sm:$0xff] %vm247, %v5494
  %5519 = vst.msk [vmem:[%s17 + $0x20] sm:$0xff] %vm247, %v5495
  %5520 = vst.msk [vmem:[%s17 + $0x28] sm:$0xff] %vm247, %v5496
  %5521 = vst.msk [vmem:[%s17 + $0x30] sm:$0xff] %vm247, %v5497
  %5522 = vst.msk [vmem:[%s17 + $0x38] sm:$0xff] %vm247, %v5498
  %5523 = vst.msk [vmem:[%s17 + $0x40] sm:$0xff] %vm247, %v5499
  %5524 = vst.msk [vmem:[%s17 + $0x48] sm:$0xff] %vm247, %v5500
  %5525 = vst.msk [vmem:[%s17 + $0x50] sm:$0xff] %vm247, %v5501
  %5526 = vst.msk [vmem:[%s17 + $0x58] sm:$0xff] %vm247, %v5502
  %5527 = vst.msk [vmem:[%s17 + $0x60] sm:$0xff] %vm247, %v5503
  %5528 = vst.msk [vmem:[%s17 + $0x68] sm:$0xff] %vm247, %v5504
  %5529 = vst.msk [vmem:[%s17 + $0x70] sm:$0xff] %vm247, %v5505
  %5530 = vst.msk [vmem:[%s17 + $0x78] sm:$0xff] %vm247, %v5506
  %5531 = vst.msk [vmem:[%s17 + $0x80] sm:$0xff] %vm247, %v5507
  %5532 = vst.msk [vmem:[%s17 + $0x88] sm:$0xff] %vm247, %v5508
  %5533 = vst.msk [vmem:[%s17 + $0x90] sm:$0xff] %vm247, %v5509
  %5534 = vst.msk [vmem:[%s17 + $0x98] sm:$0xff] %vm247, %v5510
  %5535 = vst.msk [vmem:[%s17 + $0xa0] sm:$0xff] %vm247, %v5511
  %5536 = vst.msk [vmem:[%s17 + $0xa8] sm:$0xff] %vm247, %v5512
  %5537 = vst.msk [vmem:[%s17 + $0xb0] sm:$0xff] %vm247, %v5513
  %5538 = vst.msk [vmem:[%s17 + $0xb8] sm:$0xff] %vm247, %v5514
  %v5539 = vld [vmem:[%s17] sm:$0xff]
  %v5540 = vld [vmem:[%s17 + $0x8] sm:$0xff]
  %v5541 = vld [vmem:[%s17 + $0x10] sm:$0xff]
  %v5542 = vld [vmem:[%s17 + $0x18] sm:$0xff]
  %v5543 = vld [vmem:[%s17 + $0x20] sm:$0xff]
  %v5544 = vld [vmem:[%s17 + $0x28] sm:$0xff]
  %v5545 = vld [vmem:[%s17 + $0x30] sm:$0xff]
  %v5546 = vld [vmem:[%s17 + $0x38] sm:$0xff]
  %v5547 = vld [vmem:[%s17 + $0x40] sm:$0xff]
  %v5548 = vld [vmem:[%s17 + $0x48] sm:$0xff]
  %v5549 = vld [vmem:[%s17 + $0x50] sm:$0xff]
  %v5550 = vld [vmem:[%s17 + $0x58] sm:$0xff]
  %v5551 = vld [vmem:[%s17 + $0x60] sm:$0xff]
  %v5552 = vld [vmem:[%s17 + $0x68] sm:$0xff]
  %v5553 = vld [vmem:[%s17 + $0x70] sm:$0xff]
  %v5554 = vld [vmem:[%s17 + $0x78] sm:$0xff]
  %v5555 = vld [vmem:[%s17 + $0x80] sm:$0xff]
  %v5556 = vld [vmem:[%s17 + $0x88] sm:$0xff]
  %v5557 = vld [vmem:[%s17 + $0x90] sm:$0xff]
  %v5558 = vld [vmem:[%s17 + $0x98] sm:$0xff]
  %v5559 = vld [vmem:[%s17 + $0xa0] sm:$0xff]
  %v5560 = vld [vmem:[%s17 + $0xa8] sm:$0xff]
  %v5561 = vld [vmem:[%s17 + $0xb0] sm:$0xff]
  %v5562 = vld [vmem:[%s17 + $0xb8] sm:$0xff]
  %s5563 = scalar_lea.vmem %s3, 1
  %v5564 = vld [vmem:[%s5563] sm:$0x1]
  %s5565 = scalar_lea.vmem %s4, 1
  %v5566 = vld [vmem:[%s5565] sm:$0x1]
  %v5567 = vsel %vm247, %v5539, 0.0
  %5568 = vadd.xlane.f32.xlu0 %v5567
  %v5569 = vpop.xlane.xlu0 %5568
  %v5570 = vsel %vm247, %v5540, 0.0
  %5571 = vadd.xlane.f32.xlu0 %v5570
  %v5572 = vpop.xlane.xlu0 %5571
  %v5573 = vsel %vm247, %v5541, 0.0
  %5574 = vadd.xlane.f32.xlu0 %v5573
  %v5575 = vpop.xlane.xlu0 %5574
  %v5576 = vsel %vm247, %v5542, 0.0
  %5577 = vadd.xlane.f32.xlu0 %v5576
  %v5578 = vpop.xlane.xlu0 %5577
  %v5579 = vsel %vm247, %v5543, 0.0
  %5580 = vadd.xlane.f32.xlu0 %v5579
  %v5581 = vpop.xlane.xlu0 %5580
  %v5582 = vsel %vm247, %v5544, 0.0
  %5583 = vadd.xlane.f32.xlu0 %v5582
  %v5584 = vpop.xlane.xlu0 %5583
  %v5585 = vsel %vm247, %v5545, 0.0
  %5586 = vadd.xlane.f32.xlu0 %v5585
  %v5587 = vpop.xlane.xlu0 %5586
  %v5588 = vsel %vm247, %v5546, 0.0
  %5589 = vadd.xlane.f32.xlu0 %v5588
  %v5590 = vpop.xlane.xlu0 %5589
  %v5591 = vsel %vm247, %v5547, 0.0
  %5592 = vadd.xlane.f32.xlu0 %v5591
  %v5593 = vpop.xlane.xlu0 %5592
  %v5594 = vsel %vm247, %v5548, 0.0
  %5595 = vadd.xlane.f32.xlu0 %v5594
  %v5596 = vpop.xlane.xlu0 %5595
  %v5597 = vsel %vm247, %v5549, 0.0
  %5598 = vadd.xlane.f32.xlu0 %v5597
  %v5599 = vpop.xlane.xlu0 %5598
  %v5600 = vsel %vm247, %v5550, 0.0
  %5601 = vadd.xlane.f32.xlu0 %v5600
  %v5602 = vpop.xlane.xlu0 %5601
  %v5603 = vsel %vm247, %v5551, 0.0
  %5604 = vadd.xlane.f32.xlu0 %v5603
  %v5605 = vpop.xlane.xlu0 %5604
  %v5606 = vsel %vm247, %v5552, 0.0
  %5607 = vadd.xlane.f32.xlu0 %v5606
  %v5608 = vpop.xlane.xlu0 %5607
  %v5609 = vsel %vm247, %v5553, 0.0
  %5610 = vadd.xlane.f32.xlu0 %v5609
  %v5611 = vpop.xlane.xlu0 %5610
  %v5612 = vsel %vm247, %v5554, 0.0
  %5613 = vadd.xlane.f32.xlu0 %v5612
  %v5614 = vpop.xlane.xlu0 %5613
  %v5615 = vsel %vm247, %v5555, 0.0
  %5616 = vadd.xlane.f32.xlu0 %v5615
  %v5617 = vpop.xlane.xlu0 %5616
  %v5618 = vsel %vm247, %v5556, 0.0
  %5619 = vadd.xlane.f32.xlu0 %v5618
  %v5620 = vpop.xlane.xlu0 %5619
  %v5621 = vsel %vm247, %v5557, 0.0
  %5622 = vadd.xlane.f32.xlu0 %v5621
  %v5623 = vpop.xlane.xlu0 %5622
  %v5624 = vsel %vm247, %v5558, 0.0
  %5625 = vadd.xlane.f32.xlu0 %v5624
  %v5626 = vpop.xlane.xlu0 %5625
  %v5627 = vsel %vm247, %v5559, 0.0
  %5628 = vadd.xlane.f32.xlu0 %v5627
  %v5629 = vpop.xlane.xlu0 %5628
  %v5630 = vsel %vm247, %v5560, 0.0
  %5631 = vadd.xlane.f32.xlu0 %v5630
  %v5632 = vpop.xlane.xlu0 %5631
  %v5633 = vsel %vm247, %v5561, 0.0
  %5634 = vadd.xlane.f32.xlu0 %v5633
  %v5635 = vpop.xlane.xlu0 %5634
  %v5636 = vsel %vm247, %v5562, 0.0
  %5637 = vadd.xlane.f32.xlu0 %v5636
  %v5638 = vpop.xlane.xlu0 %5637
  %v5639 = vmul.f32 %v5569, %v376
  %v5640 = vmul.f32 %v5572, %v376
  %v5641 = vmul.f32 %v5575, %v376
  %v5642 = vmul.f32 %v5578, %v376
  %v5643 = vmul.f32 %v5581, %v376
  %v5644 = vmul.f32 %v5584, %v376
  %v5645 = vmul.f32 %v5587, %v376
  %v5646 = vmul.f32 %v5590, %v376
  %v5647 = vmul.f32 %v5593, %v376
  %v5648 = vmul.f32 %v5596, %v376
  %v5649 = vmul.f32 %v5599, %v376
  %v5650 = vmul.f32 %v5602, %v376
  %v5651 = vmul.f32 %v5605, %v376
  %v5652 = vmul.f32 %v5608, %v376
  %v5653 = vmul.f32 %v5611, %v376
  %v5654 = vmul.f32 %v5614, %v376
  %v5655 = vmul.f32 %v5617, %v376
  %v5656 = vmul.f32 %v5620, %v376
  %v5657 = vmul.f32 %v5623, %v376
  %v5658 = vmul.f32 %v5626, %v376
  %v5659 = vmul.f32 %v5629, %v376
  %v5660 = vmul.f32 %v5632, %v376
  %v5661 = vmul.f32 %v5635, %v376
  %v5662 = vmul.f32 %v5638, %v376
  %v5663 = vmul.f32 %v5539, %v5539
  %v5664 = vmul.f32 %v5540, %v5540
  %v5665 = vmul.f32 %v5541, %v5541
  %v5666 = vmul.f32 %v5542, %v5542
  %v5667 = vmul.f32 %v5543, %v5543
  %v5668 = vmul.f32 %v5544, %v5544
  %v5669 = vmul.f32 %v5545, %v5545
  %v5670 = vmul.f32 %v5546, %v5546
  %v5671 = vmul.f32 %v5547, %v5547
  %v5672 = vmul.f32 %v5548, %v5548
  %v5673 = vmul.f32 %v5549, %v5549
  %v5674 = vmul.f32 %v5550, %v5550
  %v5675 = vmul.f32 %v5551, %v5551
  %v5676 = vmul.f32 %v5552, %v5552
  %v5677 = vmul.f32 %v5553, %v5553
  %v5678 = vmul.f32 %v5554, %v5554
  %v5679 = vmul.f32 %v5555, %v5555
  %v5680 = vmul.f32 %v5556, %v5556
  %v5681 = vmul.f32 %v5557, %v5557
  %v5682 = vmul.f32 %v5558, %v5558
  %v5683 = vmul.f32 %v5559, %v5559
  %v5684 = vmul.f32 %v5560, %v5560
  %v5685 = vmul.f32 %v5561, %v5561
  %v5686 = vmul.f32 %v5562, %v5562
  %v5687 = vsel %vm247, %v5663, 0.0
  %5688 = vadd.xlane.f32.xlu0 %v5687
  %v5689 = vpop.xlane.xlu0 %5688
  %v5690 = vsel %vm247, %v5664, 0.0
  %5691 = vadd.xlane.f32.xlu0 %v5690
  %v5692 = vpop.xlane.xlu0 %5691
  %v5693 = vsel %vm247, %v5665, 0.0
  %5694 = vadd.xlane.f32.xlu0 %v5693
  %v5695 = vpop.xlane.xlu0 %5694
  %v5696 = vsel %vm247, %v5666, 0.0
  %5697 = vadd.xlane.f32.xlu0 %v5696
  %v5698 = vpop.xlane.xlu0 %5697
  %v5699 = vsel %vm247, %v5667, 0.0
  %5700 = vadd.xlane.f32.xlu0 %v5699
  %v5701 = vpop.xlane.xlu0 %5700
  %v5702 = vsel %vm247, %v5668, 0.0
  %5703 = vadd.xlane.f32.xlu0 %v5702
  %v5704 = vpop.xlane.xlu0 %5703
  %v5705 = vsel %vm247, %v5669, 0.0
  %5706 = vadd.xlane.f32.xlu0 %v5705
  %v5707 = vpop.xlane.xlu0 %5706
  %v5708 = vsel %vm247, %v5670, 0.0
  %5709 = vadd.xlane.f32.xlu0 %v5708
  %v5710 = vpop.xlane.xlu0 %5709
  %v5711 = vsel %vm247, %v5671, 0.0
  %5712 = vadd.xlane.f32.xlu0 %v5711
  %v5713 = vpop.xlane.xlu0 %5712
  %v5714 = vsel %vm247, %v5672, 0.0
  %5715 = vadd.xlane.f32.xlu0 %v5714
  %v5716 = vpop.xlane.xlu0 %5715
  %v5717 = vsel %vm247, %v5673, 0.0
  %5718 = vadd.xlane.f32.xlu0 %v5717
  %v5719 = vpop.xlane.xlu0 %5718
  %v5720 = vsel %vm247, %v5674, 0.0
  %5721 = vadd.xlane.f32.xlu0 %v5720
  %v5722 = vpop.xlane.xlu0 %5721
  %v5723 = vsel %vm247, %v5675, 0.0
  %5724 = vadd.xlane.f32.xlu0 %v5723
  %v5725 = vpop.xlane.xlu0 %5724
  %v5726 = vsel %vm247, %v5676, 0.0
  %5727 = vadd.xlane.f32.xlu0 %v5726
  %v5728 = vpop.xlane.xlu0 %5727
  %v5729 = vsel %vm247, %v5677, 0.0
  %5730 = vadd.xlane.f32.xlu0 %v5729
  %v5731 = vpop.xlane.xlu0 %5730
  %v5732 = vsel %vm247, %v5678, 0.0
  %5733 = vadd.xlane.f32.xlu0 %v5732
  %v5734 = vpop.xlane.xlu0 %5733
  %v5735 = vsel %vm247, %v5679, 0.0
  %5736 = vadd.xlane.f32.xlu0 %v5735
  %v5737 = vpop.xlane.xlu0 %5736
  %v5738 = vsel %vm247, %v5680, 0.0
  %5739 = vadd.xlane.f32.xlu0 %v5738
  %v5740 = vpop.xlane.xlu0 %5739
  %v5741 = vsel %vm247, %v5681, 0.0
  %5742 = vadd.xlane.f32.xlu0 %v5741
  %v5743 = vpop.xlane.xlu0 %5742
  %v5744 = vsel %vm247, %v5682, 0.0
  %5745 = vadd.xlane.f32.xlu0 %v5744
  %v5746 = vpop.xlane.xlu0 %5745
  %v5747 = vsel %vm247, %v5683, 0.0
  %5748 = vadd.xlane.f32.xlu0 %v5747
  %v5749 = vpop.xlane.xlu0 %5748
  %v5750 = vsel %vm247, %v5684, 0.0
  %5751 = vadd.xlane.f32.xlu0 %v5750
  %v5752 = vpop.xlane.xlu0 %5751
  %v5753 = vsel %vm247, %v5685, 0.0
  %5754 = vadd.xlane.f32.xlu0 %v5753
  %v5755 = vpop.xlane.xlu0 %5754
  %v5756 = vsel %vm247, %v5686, 0.0
  %5757 = vadd.xlane.f32.xlu0 %v5756
  %v5758 = vpop.xlane.xlu0 %5757
  %v5759 = vmul.f32 %v5689, %v376
  %v5760 = vmul.f32 %v5692, %v376
  %v5761 = vmul.f32 %v5695, %v376
  %v5762 = vmul.f32 %v5698, %v376
  %v5763 = vmul.f32 %v5701, %v376
  %v5764 = vmul.f32 %v5704, %v376
  %v5765 = vmul.f32 %v5707, %v376
  %v5766 = vmul.f32 %v5710, %v376
  %v5767 = vmul.f32 %v5713, %v376
  %v5768 = vmul.f32 %v5716, %v376
  %v5769 = vmul.f32 %v5719, %v376
  %v5770 = vmul.f32 %v5722, %v376
  %v5771 = vmul.f32 %v5725, %v376
  %v5772 = vmul.f32 %v5728, %v376
  %v5773 = vmul.f32 %v5731, %v376
  %v5774 = vmul.f32 %v5734, %v376
  %v5775 = vmul.f32 %v5737, %v376
  %v5776 = vmul.f32 %v5740, %v376
  %v5777 = vmul.f32 %v5743, %v376
  %v5778 = vmul.f32 %v5746, %v376
  %v5779 = vmul.f32 %v5749, %v376
  %v5780 = vmul.f32 %v5752, %v376
  %v5781 = vmul.f32 %v5755, %v376
  %v5782 = vmul.f32 %v5758, %v376
  %v5783 = vmul.f32 %v5639, %v5639
  %v5784 = vmul.f32 %v5640, %v5640
  %v5785 = vmul.f32 %v5641, %v5641
  %v5786 = vmul.f32 %v5642, %v5642
  %v5787 = vmul.f32 %v5643, %v5643
  %v5788 = vmul.f32 %v5644, %v5644
  %v5789 = vmul.f32 %v5645, %v5645
  %v5790 = vmul.f32 %v5646, %v5646
  %v5791 = vmul.f32 %v5647, %v5647
  %v5792 = vmul.f32 %v5648, %v5648
  %v5793 = vmul.f32 %v5649, %v5649
  %v5794 = vmul.f32 %v5650, %v5650
  %v5795 = vmul.f32 %v5651, %v5651
  %v5796 = vmul.f32 %v5652, %v5652
  %v5797 = vmul.f32 %v5653, %v5653
  %v5798 = vmul.f32 %v5654, %v5654
  %v5799 = vmul.f32 %v5655, %v5655
  %v5800 = vmul.f32 %v5656, %v5656
  %v5801 = vmul.f32 %v5657, %v5657
  %v5802 = vmul.f32 %v5658, %v5658
  %v5803 = vmul.f32 %v5659, %v5659
  %v5804 = vmul.f32 %v5660, %v5660
  %v5805 = vmul.f32 %v5661, %v5661
  %v5806 = vmul.f32 %v5662, %v5662
  %v5807 = vsub.f32 %v5759, %v5783
  %v5808 = vsub.f32 %v5760, %v5784
  %v5809 = vsub.f32 %v5761, %v5785
  %v5810 = vsub.f32 %v5762, %v5786
  %v5811 = vsub.f32 %v5763, %v5787
  %v5812 = vsub.f32 %v5764, %v5788
  %v5813 = vsub.f32 %v5765, %v5789
  %v5814 = vsub.f32 %v5766, %v5790
  %v5815 = vsub.f32 %v5767, %v5791
  %v5816 = vsub.f32 %v5768, %v5792
  %v5817 = vsub.f32 %v5769, %v5793
  %v5818 = vsub.f32 %v5770, %v5794
  %v5819 = vsub.f32 %v5771, %v5795
  %v5820 = vsub.f32 %v5772, %v5796
  %v5821 = vsub.f32 %v5773, %v5797
  %v5822 = vsub.f32 %v5774, %v5798
  %v5823 = vsub.f32 %v5775, %v5799
  %v5824 = vsub.f32 %v5776, %v5800
  %v5825 = vsub.f32 %v5777, %v5801
  %v5826 = vsub.f32 %v5778, %v5802
  %v5827 = vsub.f32 %v5779, %v5803
  %v5828 = vsub.f32 %v5780, %v5804
  %v5829 = vsub.f32 %v5781, %v5805
  %v5830 = vsub.f32 %v5782, %v5806
  %v5831 = vsub.f32 %v5539, %v5639
  %v5832 = vsub.f32 %v5540, %v5640
  %v5833 = vsub.f32 %v5541, %v5641
  %v5834 = vsub.f32 %v5542, %v5642
  %v5835 = vsub.f32 %v5543, %v5643
  %v5836 = vsub.f32 %v5544, %v5644
  %v5837 = vsub.f32 %v5545, %v5645
  %v5838 = vsub.f32 %v5546, %v5646
  %v5839 = vsub.f32 %v5547, %v5647
  %v5840 = vsub.f32 %v5548, %v5648
  %v5841 = vsub.f32 %v5549, %v5649
  %v5842 = vsub.f32 %v5550, %v5650
  %v5843 = vsub.f32 %v5551, %v5651
  %v5844 = vsub.f32 %v5552, %v5652
  %v5845 = vsub.f32 %v5553, %v5653
  %v5846 = vsub.f32 %v5554, %v5654
  %v5847 = vsub.f32 %v5555, %v5655
  %v5848 = vsub.f32 %v5556, %v5656
  %v5849 = vsub.f32 %v5557, %v5657
  %v5850 = vsub.f32 %v5558, %v5658
  %v5851 = vsub.f32 %v5559, %v5659
  %v5852 = vsub.f32 %v5560, %v5660
  %v5853 = vsub.f32 %v5561, %v5661
  %v5854 = vsub.f32 %v5562, %v5662
  %v5855 = vadd.f32 %v5807, 1e-05
  %v5856 = vadd.f32 %v5808, 1e-05
  %v5857 = vadd.f32 %v5809, 1e-05
  %v5858 = vadd.f32 %v5810, 1e-05
  %v5859 = vadd.f32 %v5811, 1e-05
  %v5860 = vadd.f32 %v5812, 1e-05
  %v5861 = vadd.f32 %v5813, 1e-05
  %v5862 = vadd.f32 %v5814, 1e-05
  %v5863 = vadd.f32 %v5815, 1e-05
  %v5864 = vadd.f32 %v5816, 1e-05
  %v5865 = vadd.f32 %v5817, 1e-05
  %v5866 = vadd.f32 %v5818, 1e-05
  %v5867 = vadd.f32 %v5819, 1e-05
  %v5868 = vadd.f32 %v5820, 1e-05
  %v5869 = vadd.f32 %v5821, 1e-05
  %v5870 = vadd.f32 %v5822, 1e-05
  %v5871 = vadd.f32 %v5823, 1e-05
  %v5872 = vadd.f32 %v5824, 1e-05
  %v5873 = vadd.f32 %v5825, 1e-05
  %v5874 = vadd.f32 %v5826, 1e-05
  %v5875 = vadd.f32 %v5827, 1e-05
  %v5876 = vadd.f32 %v5828, 1e-05
  %v5877 = vadd.f32 %v5829, 1e-05
  %v5878 = vadd.f32 %v5830, 1e-05
  %v5879 = vrsqrt.pop %v5855
  %v5880 = vmul.f32 %v5879, %v5855
  %v5881 = vmul.f32 %v5880, %v5879
  %v5882 = vmul.f32 0.5, %v5881
  %v5883 = vsub.f32 1.5, %v5882
  %v5884 = vmul.f32 %v5879, %v5883
  %vm5885 = vweird.f32 %v5855
  %vm5886 = vweird.f32 %v5879
  %vm5887 = vmor %vm5885, %vm5886
  %v5888 = vsel %vm5887, %v5879, %v5884
  %v5889 = vrsqrt.pop %v5856
  %v5890 = vmul.f32 %v5889, %v5856
  %v5891 = vmul.f32 %v5890, %v5889
  %v5892 = vmul.f32 0.5, %v5891
  %v5893 = vsub.f32 1.5, %v5892
  %v5894 = vmul.f32 %v5889, %v5893
  %vm5895 = vweird.f32 %v5856
  %vm5896 = vweird.f32 %v5889
  %vm5897 = vmor %vm5895, %vm5896
  %v5898 = vsel %vm5897, %v5889, %v5894
  %v5899 = vrsqrt.pop %v5857
  %v5900 = vmul.f32 %v5899, %v5857
  %v5901 = vmul.f32 %v5900, %v5899
  %v5902 = vmul.f32 0.5, %v5901
  %v5903 = vsub.f32 1.5, %v5902
  %v5904 = vmul.f32 %v5899, %v5903
  %vm5905 = vweird.f32 %v5857
  %vm5906 = vweird.f32 %v5899
  %vm5907 = vmor %vm5905, %vm5906
  %v5908 = vsel %vm5907, %v5899, %v5904
  %v5909 = vrsqrt.pop %v5858
  %v5910 = vmul.f32 %v5909, %v5858
  %v5911 = vmul.f32 %v5910, %v5909
  %v5912 = vmul.f32 0.5, %v5911
  %v5913 = vsub.f32 1.5, %v5912
  %v5914 = vmul.f32 %v5909, %v5913
  %vm5915 = vweird.f32 %v5858
  %vm5916 = vweird.f32 %v5909
  %vm5917 = vmor %vm5915, %vm5916
  %v5918 = vsel %vm5917, %v5909, %v5914
  %v5919 = vrsqrt.pop %v5859
  %v5920 = vmul.f32 %v5919, %v5859
  %v5921 = vmul.f32 %v5920, %v5919
  %v5922 = vmul.f32 0.5, %v5921
  %v5923 = vsub.f32 1.5, %v5922
  %v5924 = vmul.f32 %v5919, %v5923
  %vm5925 = vweird.f32 %v5859
  %vm5926 = vweird.f32 %v5919
  %vm5927 = vmor %vm5925, %vm5926
  %v5928 = vsel %vm5927, %v5919, %v5924
  %v5929 = vrsqrt.pop %v5860
  %v5930 = vmul.f32 %v5929, %v5860
  %v5931 = vmul.f32 %v5930, %v5929
  %v5932 = vmul.f32 0.5, %v5931
  %v5933 = vsub.f32 1.5, %v5932
  %v5934 = vmul.f32 %v5929, %v5933
  %vm5935 = vweird.f32 %v5860
  %vm5936 = vweird.f32 %v5929
  %vm5937 = vmor %vm5935, %vm5936
  %v5938 = vsel %vm5937, %v5929, %v5934
  %v5939 = vrsqrt.pop %v5861
  %v5940 = vmul.f32 %v5939, %v5861
  %v5941 = vmul.f32 %v5940, %v5939
  %v5942 = vmul.f32 0.5, %v5941
  %v5943 = vsub.f32 1.5, %v5942
  %v5944 = vmul.f32 %v5939, %v5943
  %vm5945 = vweird.f32 %v5861
  %vm5946 = vweird.f32 %v5939
  %vm5947 = vmor %vm5945, %vm5946
  %v5948 = vsel %vm5947, %v5939, %v5944
  %v5949 = vrsqrt.pop %v5862
  %v5950 = vmul.f32 %v5949, %v5862
  %v5951 = vmul.f32 %v5950, %v5949
  %v5952 = vmul.f32 0.5, %v5951
  %v5953 = vsub.f32 1.5, %v5952
  %v5954 = vmul.f32 %v5949, %v5953
  %vm5955 = vweird.f32 %v5862
  %vm5956 = vweird.f32 %v5949
  %vm5957 = vmor %vm5955, %vm5956
  %v5958 = vsel %vm5957, %v5949, %v5954
  %v5959 = vrsqrt.pop %v5863
  %v5960 = vmul.f32 %v5959, %v5863
  %v5961 = vmul.f32 %v5960, %v5959
  %v5962 = vmul.f32 0.5, %v5961
  %v5963 = vsub.f32 1.5, %v5962
  %v5964 = vmul.f32 %v5959, %v5963
  %vm5965 = vweird.f32 %v5863
  %vm5966 = vweird.f32 %v5959
  %vm5967 = vmor %vm5965, %vm5966
  %v5968 = vsel %vm5967, %v5959, %v5964
  %v5969 = vrsqrt.pop %v5864
  %v5970 = vmul.f32 %v5969, %v5864
  %v5971 = vmul.f32 %v5970, %v5969
  %v5972 = vmul.f32 0.5, %v5971
  %v5973 = vsub.f32 1.5, %v5972
  %v5974 = vmul.f32 %v5969, %v5973
  %vm5975 = vweird.f32 %v5864
  %vm5976 = vweird.f32 %v5969
  %vm5977 = vmor %vm5975, %vm5976
  %v5978 = vsel %vm5977, %v5969, %v5974
  %v5979 = vrsqrt.pop %v5865
  %v5980 = vmul.f32 %v5979, %v5865
  %v5981 = vmul.f32 %v5980, %v5979
  %v5982 = vmul.f32 0.5, %v5981
  %v5983 = vsub.f32 1.5, %v5982
  %v5984 = vmul.f32 %v5979, %v5983
  %vm5985 = vweird.f32 %v5865
  %vm5986 = vweird.f32 %v5979
  %vm5987 = vmor %vm5985, %vm5986
  %v5988 = vsel %vm5987, %v5979, %v5984
  %v5989 = vrsqrt.pop %v5866
  %v5990 = vmul.f32 %v5989, %v5866
  %v5991 = vmul.f32 %v5990, %v5989
  %v5992 = vmul.f32 0.5, %v5991
  %v5993 = vsub.f32 1.5, %v5992
  %v5994 = vmul.f32 %v5989, %v5993
  %vm5995 = vweird.f32 %v5866
  %vm5996 = vweird.f32 %v5989
  %vm5997 = vmor %vm5995, %vm5996
  %v5998 = vsel %vm5997, %v5989, %v5994
  %v5999 = vrsqrt.pop %v5867
  %v6000 = vmul.f32 %v5999, %v5867
  %v6001 = vmul.f32 %v6000, %v5999
  %v6002 = vmul.f32 0.5, %v6001
  %v6003 = vsub.f32 1.5, %v6002
  %v6004 = vmul.f32 %v5999, %v6003
  %vm6005 = vweird.f32 %v5867
  %vm6006 = vweird.f32 %v5999
  %vm6007 = vmor %vm6005, %vm6006
  %v6008 = vsel %vm6007, %v5999, %v6004
  %v6009 = vrsqrt.pop %v5868
  %v6010 = vmul.f32 %v6009, %v5868
  %v6011 = vmul.f32 %v6010, %v6009
  %v6012 = vmul.f32 0.5, %v6011
  %v6013 = vsub.f32 1.5, %v6012
  %v6014 = vmul.f32 %v6009, %v6013
  %vm6015 = vweird.f32 %v5868
  %vm6016 = vweird.f32 %v6009
  %vm6017 = vmor %vm6015, %vm6016
  %v6018 = vsel %vm6017, %v6009, %v6014
  %v6019 = vrsqrt.pop %v5869
  %v6020 = vmul.f32 %v6019, %v5869
  %v6021 = vmul.f32 %v6020, %v6019
  %v6022 = vmul.f32 0.5, %v6021
  %v6023 = vsub.f32 1.5, %v6022
  %v6024 = vmul.f32 %v6019, %v6023
  %vm6025 = vweird.f32 %v5869
  %vm6026 = vweird.f32 %v6019
  %vm6027 = vmor %vm6025, %vm6026
  %v6028 = vsel %vm6027, %v6019, %v6024
  %v6029 = vrsqrt.pop %v5870
  %v6030 = vmul.f32 %v6029, %v5870
  %v6031 = vmul.f32 %v6030, %v6029
  %v6032 = vmul.f32 0.5, %v6031
  %v6033 = vsub.f32 1.5, %v6032
  %v6034 = vmul.f32 %v6029, %v6033
  %vm6035 = vweird.f32 %v5870
  %vm6036 = vweird.f32 %v6029
  %vm6037 = vmor %vm6035, %vm6036
  %v6038 = vsel %vm6037, %v6029, %v6034
  %v6039 = vrsqrt.pop %v5871
  %v6040 = vmul.f32 %v6039, %v5871
  %v6041 = vmul.f32 %v6040, %v6039
  %v6042 = vmul.f32 0.5, %v6041
  %v6043 = vsub.f32 1.5, %v6042
  %v6044 = vmul.f32 %v6039, %v6043
  %vm6045 = vweird.f32 %v5871
  %vm6046 = vweird.f32 %v6039
  %vm6047 = vmor %vm6045, %vm6046
  %v6048 = vsel %vm6047, %v6039, %v6044
  %v6049 = vrsqrt.pop %v5872
  %v6050 = vmul.f32 %v6049, %v5872
  %v6051 = vmul.f32 %v6050, %v6049
  %v6052 = vmul.f32 0.5, %v6051
  %v6053 = vsub.f32 1.5, %v6052
  %v6054 = vmul.f32 %v6049, %v6053
  %vm6055 = vweird.f32 %v5872
  %vm6056 = vweird.f32 %v6049
  %vm6057 = vmor %vm6055, %vm6056
  %v6058 = vsel %vm6057, %v6049, %v6054
  %v6059 = vrsqrt.pop %v5873
  %v6060 = vmul.f32 %v6059, %v5873
  %v6061 = vmul.f32 %v6060, %v6059
  %v6062 = vmul.f32 0.5, %v6061
  %v6063 = vsub.f32 1.5, %v6062
  %v6064 = vmul.f32 %v6059, %v6063
  %vm6065 = vweird.f32 %v5873
  %vm6066 = vweird.f32 %v6059
  %vm6067 = vmor %vm6065, %vm6066
  %v6068 = vsel %vm6067, %v6059, %v6064
  %v6069 = vrsqrt.pop %v5874
  %v6070 = vmul.f32 %v6069, %v5874
  %v6071 = vmul.f32 %v6070, %v6069
  %v6072 = vmul.f32 0.5, %v6071
  %v6073 = vsub.f32 1.5, %v6072
  %v6074 = vmul.f32 %v6069, %v6073
  %vm6075 = vweird.f32 %v5874
  %vm6076 = vweird.f32 %v6069
  %vm6077 = vmor %vm6075, %vm6076
  %v6078 = vsel %vm6077, %v6069, %v6074
  %v6079 = vrsqrt.pop %v5875
  %v6080 = vmul.f32 %v6079, %v5875
  %v6081 = vmul.f32 %v6080, %v6079
  %v6082 = vmul.f32 0.5, %v6081
  %v6083 = vsub.f32 1.5, %v6082
  %v6084 = vmul.f32 %v6079, %v6083
  %vm6085 = vweird.f32 %v5875
  %vm6086 = vweird.f32 %v6079
  %vm6087 = vmor %vm6085, %vm6086
  %v6088 = vsel %vm6087, %v6079, %v6084
  %v6089 = vrsqrt.pop %v5876
  %v6090 = vmul.f32 %v6089, %v5876
  %v6091 = vmul.f32 %v6090, %v6089
  %v6092 = vmul.f32 0.5, %v6091
  %v6093 = vsub.f32 1.5, %v6092
  %v6094 = vmul.f32 %v6089, %v6093
  %vm6095 = vweird.f32 %v5876
  %vm6096 = vweird.f32 %v6089
  %vm6097 = vmor %vm6095, %vm6096
  %v6098 = vsel %vm6097, %v6089, %v6094
  %v6099 = vrsqrt.pop %v5877
  %v6100 = vmul.f32 %v6099, %v5877
  %v6101 = vmul.f32 %v6100, %v6099
  %v6102 = vmul.f32 0.5, %v6101
  %v6103 = vsub.f32 1.5, %v6102
  %v6104 = vmul.f32 %v6099, %v6103
  %vm6105 = vweird.f32 %v5877
  %vm6106 = vweird.f32 %v6099
  %vm6107 = vmor %vm6105, %vm6106
  %v6108 = vsel %vm6107, %v6099, %v6104
  %v6109 = vrsqrt.pop %v5878
  %v6110 = vmul.f32 %v6109, %v5878
  %v6111 = vmul.f32 %v6110, %v6109
  %v6112 = vmul.f32 0.5, %v6111
  %v6113 = vsub.f32 1.5, %v6112
  %v6114 = vmul.f32 %v6109, %v6113
  %vm6115 = vweird.f32 %v5878
  %vm6116 = vweird.f32 %v6109
  %vm6117 = vmor %vm6115, %vm6116
  %v6118 = vsel %vm6117, %v6109, %v6114
  %v6119 = vmul.f32 %v5831, %v5888
  %v6120 = vmul.f32 %v5832, %v5898
  %v6121 = vmul.f32 %v5833, %v5908
  %v6122 = vmul.f32 %v5834, %v5918
  %v6123 = vmul.f32 %v5835, %v5928
  %v6124 = vmul.f32 %v5836, %v5938
  %v6125 = vmul.f32 %v5837, %v5948
  %v6126 = vmul.f32 %v5838, %v5958
  %v6127 = vmul.f32 %v5839, %v5968
  %v6128 = vmul.f32 %v5840, %v5978
  %v6129 = vmul.f32 %v5841, %v5988
  %v6130 = vmul.f32 %v5842, %v5998
  %v6131 = vmul.f32 %v5843, %v6008
  %v6132 = vmul.f32 %v5844, %v6018
  %v6133 = vmul.f32 %v5845, %v6028
  %v6134 = vmul.f32 %v5846, %v6038
  %v6135 = vmul.f32 %v5847, %v6048
  %v6136 = vmul.f32 %v5848, %v6058
  %v6137 = vmul.f32 %v5849, %v6068
  %v6138 = vmul.f32 %v5850, %v6078
  %v6139 = vmul.f32 %v5851, %v6088
  %v6140 = vmul.f32 %v5852, %v6098
  %v6141 = vmul.f32 %v5853, %v6108
  %v6142 = vmul.f32 %v5854, %v6118
  %v6144 = vperm.slane %v5564, 0
  %v6146 = vmul.f32 %v6119, %v6144
  %v6147 = vmul.f32 %v6120, %v6144
  %v6148 = vmul.f32 %v6121, %v6144
  %v6149 = vmul.f32 %v6122, %v6144
  %v6150 = vmul.f32 %v6123, %v6144
  %v6151 = vmul.f32 %v6124, %v6144
  %v6152 = vmul.f32 %v6125, %v6144
  %v6153 = vmul.f32 %v6126, %v6144
  %v6154 = vmul.f32 %v6127, %v6144
  %v6155 = vmul.f32 %v6128, %v6144
  %v6156 = vmul.f32 %v6129, %v6144
  %v6157 = vmul.f32 %v6130, %v6144
  %v6158 = vmul.f32 %v6131, %v6144
  %v6159 = vmul.f32 %v6132, %v6144
  %v6160 = vmul.f32 %v6133, %v6144
  %v6161 = vmul.f32 %v6134, %v6144
  %v6162 = vmul.f32 %v6135, %v6144
  %v6163 = vmul.f32 %v6136, %v6144
  %v6164 = vmul.f32 %v6137, %v6144
  %v6165 = vmul.f32 %v6138, %v6144
  %v6166 = vmul.f32 %v6139, %v6144
  %v6167 = vmul.f32 %v6140, %v6144
  %v6168 = vmul.f32 %v6141, %v6144
  %v6169 = vmul.f32 %v6142, %v6144
  %v6171 = vperm.slane %v5566, 0
  %v6173 = vadd.f32 %v6146, %v6171
  %v6174 = vadd.f32 %v6147, %v6171
  %v6175 = vadd.f32 %v6148, %v6171
  %v6176 = vadd.f32 %v6149, %v6171
  %v6177 = vadd.f32 %v6150, %v6171
  %v6178 = vadd.f32 %v6151, %v6171
  %v6179 = vadd.f32 %v6152, %v6171
  %v6180 = vadd.f32 %v6153, %v6171
  %v6181 = vadd.f32 %v6154, %v6171
  %v6182 = vadd.f32 %v6155, %v6171
  %v6183 = vadd.f32 %v6156, %v6171
  %v6184 = vadd.f32 %v6157, %v6171
  %v6185 = vadd.f32 %v6158, %v6171
  %v6186 = vadd.f32 %v6159, %v6171
  %v6187 = vadd.f32 %v6160, %v6171
  %v6188 = vadd.f32 %v6161, %v6171
  %v6189 = vadd.f32 %v6162, %v6171
  %v6190 = vadd.f32 %v6163, %v6171
  %v6191 = vadd.f32 %v6164, %v6171
  %v6192 = vadd.f32 %v6165, %v6171
  %v6193 = vadd.f32 %v6166, %v6171
  %v6194 = vadd.f32 %v6167, %v6171
  %v6195 = vadd.f32 %v6168, %v6171
  %v6196 = vadd.f32 %v6169, %v6171
  %v6197 = vpack.c.bf16 %v6174, %v6173
  %v6198 = vpack.c.bf16 %v6176, %v6175
  %v6199 = vpack.c.bf16 %v6178, %v6177
  %v6200 = vpack.c.bf16 %v6180, %v6179
  %v6201 = vpack.c.bf16 %v6182, %v6181
  %v6202 = vpack.c.bf16 %v6184, %v6183
  %v6203 = vpack.c.bf16 %v6186, %v6185
  %v6204 = vpack.c.bf16 %v6188, %v6187
  %v6205 = vpack.c.bf16 %v6190, %v6189
  %v6206 = vpack.c.bf16 %v6192, %v6191
  %v6207 = vpack.c.bf16 %v6194, %v6193
  %v6208 = vpack.c.bf16 %v6196, %v6195
  %s6209 = scalar_lea.vmem %s5, 16
  %v6210 = vld [vmem:[%s6209] sm:$0xf]
  %v6211 = vld [vmem:[%s6209 + $0x4] sm:$0xf]
  %v6212 = vld [vmem:[%s6209 + $0x8] sm:$0xf]
  %v6213 = vld [vmem:[%s6209 + $0xc] sm:$0xf]
  %s6214 = scalar_lea.vmem %s6, 1
  %v6215 = vld [vmem:[%s6214] sm:$0x1]
  %v6217 = vperm.slane %v6215, 0
  %v6223 = vunpack.c.l.b16 %v6210
  %v6224 = vunpack.c.l.b16 %v6211
  %v6225 = vunpack.c.l.b16 %v6212
  %v6226 = vunpack.c.l.b16 %v6213
  %v6227 = vpack.c.b16 %v6224, %v6223
  %v6228 = vpack.c.b16 %v6226, %v6225
  %v6232 = vsel %vm247, %v6197, 0
  %v6235 = vsel %vm247, %v6198, 0
  %v6238 = vsel %vm247, %v6199, 0
  %v6241 = vsel %vm247, %v6200, 0
  %v6244 = vsel %vm247, %v6201, 0
  %v6247 = vsel %vm247, %v6202, 0
  %v6250 = vsel %vm247, %v6203, 0
  %v6253 = vsel %vm247, %v6204, 0
  %v6256 = vsel %vm247, %v6205, 0
  %v6259 = vsel %vm247, %v6206, 0
  %v6262 = vsel %vm247, %v6207, 0
  %v6265 = vsel %vm247, %v6208, 0
  %6267 = vmatpush.bf16.msra.mxu0 0
  %6268 = vmatpush.bf16.msra.mxu0 0
  %6269 = vmatpush.bf16.msra.mxu0 0
  %6270 = vmatpush.bf16.msra.mxu0 0
  %6271 = vmatpush.bf16.msra.mxu0 0
  %6272 = vmatpush.bf16.msra.mxu0 0
  %6273 = vmatpush.bf16.msra.mxu0 %v6228
  %6274 = vmatpush.bf16.msra.mxu0 %v6227
  %6275 = vmatmul.bf16.gmra.mxu0 %v6232
  %v6276 = vpop.f32.mrf.mxu0
  %v6277 = vadd.f32 %v6217, %v6276
  %v6278 = vpop.f32.mrf.mxu0
  %v6279 = vadd.f32 %v6217, %v6278
  %6280 = vmatmul.bf16.gmra.mxu0 %v6235
  %v6281 = vpop.f32.mrf.mxu0
  %v6282 = vadd.f32 %v6217, %v6281
  %v6283 = vpop.f32.mrf.mxu0
  %v6284 = vadd.f32 %v6217, %v6283
  %6285 = vmatmul.bf16.gmra.mxu0 %v6238
  %v6286 = vpop.f32.mrf.mxu0
  %v6287 = vadd.f32 %v6217, %v6286
  %v6288 = vpop.f32.mrf.mxu0
  %v6289 = vadd.f32 %v6217, %v6288
  %6290 = vmatmul.bf16.gmra.mxu0 %v6241
  %v6291 = vpop.f32.mrf.mxu0
  %v6292 = vadd.f32 %v6217, %v6291
  %v6293 = vpop.f32.mrf.mxu0
  %v6294 = vadd.f32 %v6217, %v6293
  %6295 = vmatmul.bf16.gmra.mxu0 %v6244
  %v6296 = vpop.f32.mrf.mxu0
  %v6297 = vadd.f32 %v6217, %v6296
  %v6298 = vpop.f32.mrf.mxu0
  %v6299 = vadd.f32 %v6217, %v6298
  %6300 = vmatmul.bf16.gmra.mxu0 %v6247
  %v6301 = vpop.f32.mrf.mxu0
  %v6302 = vadd.f32 %v6217, %v6301
  %v6303 = vpop.f32.mrf.mxu0
  %v6304 = vadd.f32 %v6217, %v6303
  %6305 = vmatmul.bf16.gmra.mxu0 %v6250
  %v6306 = vpop.f32.mrf.mxu0
  %v6307 = vadd.f32 %v6217, %v6306
  %v6308 = vpop.f32.mrf.mxu0
  %v6309 = vadd.f32 %v6217, %v6308
  %6310 = vmatmul.bf16.gmra.mxu0 %v6253
  %v6311 = vpop.f32.mrf.mxu0
  %v6312 = vadd.f32 %v6217, %v6311
  %v6313 = vpop.f32.mrf.mxu0
  %v6314 = vadd.f32 %v6217, %v6313
  %6315 = vmatmul.bf16.gmra.mxu0 %v6256
  %v6316 = vpop.f32.mrf.mxu0
  %v6317 = vadd.f32 %v6217, %v6316
  %v6318 = vpop.f32.mrf.mxu0
  %v6319 = vadd.f32 %v6217, %v6318
  %6320 = vmatmul.bf16.gmra.mxu0 %v6259
  %v6321 = vpop.f32.mrf.mxu0
  %v6322 = vadd.f32 %v6217, %v6321
  %v6323 = vpop.f32.mrf.mxu0
  %v6324 = vadd.f32 %v6217, %v6323
  %6325 = vmatmul.bf16.gmra.mxu0 %v6262
  %v6326 = vpop.f32.mrf.mxu0
  %v6327 = vadd.f32 %v6217, %v6326
  %v6328 = vpop.f32.mrf.mxu0
  %v6329 = vadd.f32 %v6217, %v6328
  %6330 = vmatmul.bf16.gmra.mxu0 %v6265
  %v6331 = vpop.f32.mrf.mxu0
  %v6332 = vadd.f32 %v6217, %v6331
  %v6333 = vpop.f32.mrf.mxu0
  %v6334 = vadd.f32 %v6217, %v6333
  %6335 = vdwg.mxu0
  %v6336 = vpack.c.bf16 %v6277, %v6277
  %v6337 = vpack.c.bf16 %v6279, %v6279
  %v6338 = vpack.c.bf16 %v6282, %v6282
  %v6339 = vpack.c.bf16 %v6284, %v6284
  %v6340 = vpack.c.bf16 %v6287, %v6287
  %v6341 = vpack.c.bf16 %v6289, %v6289
  %v6342 = vpack.c.bf16 %v6292, %v6292
  %v6343 = vpack.c.bf16 %v6294, %v6294
  %v6344 = vpack.c.bf16 %v6297, %v6297
  %v6345 = vpack.c.bf16 %v6299, %v6299
  %v6346 = vpack.c.bf16 %v6302, %v6302
  %v6347 = vpack.c.bf16 %v6304, %v6304
  %v6348 = vpack.c.bf16 %v6307, %v6307
  %v6349 = vpack.c.bf16 %v6309, %v6309
  %v6350 = vpack.c.bf16 %v6312, %v6312
  %v6351 = vpack.c.bf16 %v6314, %v6314
  %v6352 = vpack.c.bf16 %v6317, %v6317
  %v6353 = vpack.c.bf16 %v6319, %v6319
  %v6354 = vpack.c.bf16 %v6322, %v6322
  %v6355 = vpack.c.bf16 %v6324, %v6324
  %v6356 = vpack.c.bf16 %v6327, %v6327
  %v6357 = vpack.c.bf16 %v6329, %v6329
  %v6358 = vpack.c.bf16 %v6332, %v6332
  %v6359 = vpack.c.bf16 %v6334, %v6334
  %v6372 = vunpack.c.l.b16 %v6336
  %v6373 = vunpack.c.l.b16 %v6337
  %v6374 = vunpack.c.l.b16 %v6338
  %v6375 = vunpack.c.l.b16 %v6339
  %v6376 = vunpack.c.l.b16 %v6340
  %v6377 = vunpack.c.l.b16 %v6341
  %v6378 = vunpack.c.l.b16 %v6342
  %v6379 = vunpack.c.l.b16 %v6343
  %v6380 = vunpack.c.l.b16 %v6344
  %v6381 = vunpack.c.l.b16 %v6345
  %v6382 = vunpack.c.l.b16 %v6346
  %v6383 = vunpack.c.l.b16 %v6347
  %v6384 = vpack.c.b16 %v6373, %v6372
  %v6385 = vpack.c.b16 %v6375, %v6374
  %v6386 = vpack.c.b16 %v6377, %v6376
  %v6387 = vpack.c.b16 %v6379, %v6378
  %v6388 = vpack.c.b16 %v6381, %v6380
  %v6389 = vpack.c.b16 %v6383, %v6382
  %6390 = vrot.lane.b32.xlu0 %v6384, 96
  %v6391 = vpop.permute.xlu0 %6390
  %6392 = vrot.lane.b32.xlu0 %v6385, 96
  %v6393 = vpop.permute.xlu0 %6392
  %6394 = vrot.lane.b32.xlu0 %v6386, 96
  %v6395 = vpop.permute.xlu0 %6394
  %6396 = vrot.lane.b32.xlu0 %v6387, 96
  %v6397 = vpop.permute.xlu0 %6396
  %6398 = vrot.lane.b32.xlu0 %v6388, 96
  %v6399 = vpop.permute.xlu0 %6398
  %6400 = vrot.lane.b32.xlu0 %v6389, 96
  %v6401 = vpop.permute.xlu0 %6400
  %v6403 = vsel %vm1138, %v6384, 0
  %v6406 = vsel %vm1138, %v6385, 0
  %v6409 = vsel %vm1138, %v6386, 0
  %v6412 = vsel %vm1138, %v6387, 0
  %v6415 = vsel %vm1138, %v6388, 0
  %v6418 = vsel %vm1138, %v6389, 0
  %v6421 = vsel %vm1138, %v6391, 0
  %v6424 = vsel %vm1138, %v6393, 0
  %v6427 = vsel %vm1138, %v6395, 0
  %v6430 = vsel %vm1138, %v6397, 0
  %v6433 = vsel %vm1138, %v6399, 0
  %v6436 = vsel %vm1138, %v6401, 0
  %6438 = vmatpush.bf16.xpose.msra.mxu0 0
  %6439 = vmatpush.bf16.xpose.msra.mxu0 0
  %6440 = vmatpush.bf16.xpose.msra.mxu0 %v6436
  %6441 = vmatpush.bf16.xpose.msra.mxu0 %v6433
  %6442 = vmatpush.bf16.xpose.msra.mxu0 %v6430
  %6443 = vmatpush.bf16.xpose.msra.mxu0 %v6427
  %6444 = vmatpush.bf16.xpose.msra.mxu0 %v6424
  %6445 = vmatpush.bf16.xpose.msra.mxu0 %v6421
  %6446 = vmatmul.bf16.gmra.mxu0 %v6403
  %v6447 = vpop.f32.mrf.mxu0
  %v6448 = vadd.f32 0.0, %v6447
  %v6449 = vpop.f32.mrf.mxu0
  %v6450 = vadd.f32 0.0, %v6449
  %6451 = vmatmul.bf16.gmra.mxu0 %v6406
  %v6452 = vpop.f32.mrf.mxu0
  %v6453 = vadd.f32 0.0, %v6452
  %v6454 = vpop.f32.mrf.mxu0
  %v6455 = vadd.f32 0.0, %v6454
  %6456 = vmatmul.bf16.gmra.mxu0 %v6409
  %v6457 = vpop.f32.mrf.mxu0
  %v6458 = vadd.f32 0.0, %v6457
  %v6459 = vpop.f32.mrf.mxu0
  %v6460 = vadd.f32 0.0, %v6459
  %6461 = vmatmul.bf16.gmra.mxu0 %v6412
  %v6462 = vpop.f32.mrf.mxu0
  %v6463 = vadd.f32 0.0, %v6462
  %v6464 = vpop.f32.mrf.mxu0
  %v6465 = vadd.f32 0.0, %v6464
  %6466 = vmatmul.bf16.gmra.mxu0 %v6415
  %v6467 = vpop.f32.mrf.mxu0
  %v6468 = vadd.f32 0.0, %v6467
  %v6469 = vpop.f32.mrf.mxu0
  %v6470 = vadd.f32 0.0, %v6469
  %6471 = vmatmul.bf16.gmra.mxu0 %v6418
  %v6472 = vpop.f32.mrf.mxu0
  %v6473 = vadd.f32 0.0, %v6472
  %v6474 = vpop.f32.mrf.mxu0
  %v6475 = vadd.f32 0.0, %v6474
  %6476 = vdwg.mxu0
  %v6477 = vsel %vm1214, %v6448, -inf
  %6478 = vmax.xlane.f32.xlu0 %v6477
  %v6479 = vpop.xlane.xlu0 %6478
  %v6480 = vsel %vm1214, %v6450, -inf
  %6481 = vmax.xlane.f32.xlu0 %v6480
  %v6482 = vpop.xlane.xlu0 %6481
  %v6483 = vsel %vm1214, %v6453, -inf
  %6484 = vmax.xlane.f32.xlu0 %v6483
  %v6485 = vpop.xlane.xlu0 %6484
  %v6486 = vsel %vm1214, %v6455, -inf
  %6487 = vmax.xlane.f32.xlu0 %v6486
  %v6488 = vpop.xlane.xlu0 %6487
  %v6489 = vsel %vm1214, %v6458, -inf
  %6490 = vmax.xlane.f32.xlu0 %v6489
  %v6491 = vpop.xlane.xlu0 %6490
  %v6492 = vsel %vm1214, %v6460, -inf
  %6493 = vmax.xlane.f32.xlu0 %v6492
  %v6494 = vpop.xlane.xlu0 %6493
  %v6495 = vsel %vm1214, %v6463, -inf
  %6496 = vmax.xlane.f32.xlu0 %v6495
  %v6497 = vpop.xlane.xlu0 %6496
  %v6498 = vsel %vm1214, %v6465, -inf
  %6499 = vmax.xlane.f32.xlu0 %v6498
  %v6500 = vpop.xlane.xlu0 %6499
  %v6501 = vsel %vm1214, %v6468, -inf
  %6502 = vmax.xlane.f32.xlu0 %v6501
  %v6503 = vpop.xlane.xlu0 %6502
  %v6504 = vsel %vm1214, %v6470, -inf
  %6505 = vmax.xlane.f32.xlu0 %v6504
  %v6506 = vpop.xlane.xlu0 %6505
  %v6507 = vsel %vm1214, %v6473, -inf
  %6508 = vmax.xlane.f32.xlu0 %v6507
  %v6509 = vpop.xlane.xlu0 %6508
  %v6510 = vsel %vm1214, %v6475, -inf
  %6511 = vmax.xlane.f32.xlu0 %v6510
  %v6512 = vpop.xlane.xlu0 %6511
  %v6513 = vsub.f32 %v6448, %v6479
  %v6514 = vsub.f32 %v6450, %v6482
  %v6515 = vsub.f32 %v6453, %v6485
  %v6516 = vsub.f32 %v6455, %v6488
  %v6517 = vsub.f32 %v6458, %v6491
  %v6518 = vsub.f32 %v6460, %v6494
  %v6519 = vsub.f32 %v6463, %v6497
  %v6520 = vsub.f32 %v6465, %v6500
  %v6521 = vsub.f32 %v6468, %v6503
  %v6522 = vsub.f32 %v6470, %v6506
  %v6523 = vsub.f32 %v6473, %v6509
  %v6524 = vsub.f32 %v6475, %v6512
  %v6525 = vmul.f32 %v6513, 1.442695
  %v6526 = vpow.pop %v6525
  %v6527 = vmul.f32 %v6514, 1.442695
  %v6528 = vpow.pop %v6527
  %v6529 = vmul.f32 %v6515, 1.442695
  %v6530 = vpow.pop %v6529
  %v6531 = vmul.f32 %v6516, 1.442695
  %v6532 = vpow.pop %v6531
  %v6533 = vmul.f32 %v6517, 1.442695
  %v6534 = vpow.pop %v6533
  %v6535 = vmul.f32 %v6518, 1.442695
  %v6536 = vpow.pop %v6535
  %v6537 = vmul.f32 %v6519, 1.442695
  %v6538 = vpow.pop %v6537
  %v6539 = vmul.f32 %v6520, 1.442695
  %v6540 = vpow.pop %v6539
  %v6541 = vmul.f32 %v6521, 1.442695
  %v6542 = vpow.pop %v6541
  %v6543 = vmul.f32 %v6522, 1.442695
  %v6544 = vpow.pop %v6543
  %v6545 = vmul.f32 %v6523, 1.442695
  %v6546 = vpow.pop %v6545
  %v6547 = vmul.f32 %v6524, 1.442695
  %v6548 = vpow.pop %v6547
  %v6549 = vsel %vm1214, %v6526, 0.0
  %6550 = vadd.xlane.f32.xlu0 %v6549
  %v6551 = vpop.xlane.xlu0 %6550
  %v6552 = vsel %vm1214, %v6528, 0.0
  %6553 = vadd.xlane.f32.xlu0 %v6552
  %v6554 = vpop.xlane.xlu0 %6553
  %v6555 = vsel %vm1214, %v6530, 0.0
  %6556 = vadd.xlane.f32.xlu0 %v6555
  %v6557 = vpop.xlane.xlu0 %6556
  %v6558 = vsel %vm1214, %v6532, 0.0
  %6559 = vadd.xlane.f32.xlu0 %v6558
  %v6560 = vpop.xlane.xlu0 %6559
  %v6561 = vsel %vm1214, %v6534, 0.0
  %6562 = vadd.xlane.f32.xlu0 %v6561
  %v6563 = vpop.xlane.xlu0 %6562
  %v6564 = vsel %vm1214, %v6536, 0.0
  %6565 = vadd.xlane.f32.xlu0 %v6564
  %v6566 = vpop.xlane.xlu0 %6565
  %v6567 = vsel %vm1214, %v6538, 0.0
  %6568 = vadd.xlane.f32.xlu0 %v6567
  %v6569 = vpop.xlane.xlu0 %6568
  %v6570 = vsel %vm1214, %v6540, 0.0
  %6571 = vadd.xlane.f32.xlu0 %v6570
  %v6572 = vpop.xlane.xlu0 %6571
  %v6573 = vsel %vm1214, %v6542, 0.0
  %6574 = vadd.xlane.f32.xlu0 %v6573
  %v6575 = vpop.xlane.xlu0 %6574
  %v6576 = vsel %vm1214, %v6544, 0.0
  %6577 = vadd.xlane.f32.xlu0 %v6576
  %v6578 = vpop.xlane.xlu0 %6577
  %v6579 = vsel %vm1214, %v6546, 0.0
  %6580 = vadd.xlane.f32.xlu0 %v6579
  %v6581 = vpop.xlane.xlu0 %6580
  %v6582 = vsel %vm1214, %v6548, 0.0
  %6583 = vadd.xlane.f32.xlu0 %v6582
  %v6584 = vpop.xlane.xlu0 %6583
  %v6585 = vrcp.pop %v6551
  %v6586 = vrcp.pop %v6554
  %v6587 = vrcp.pop %v6557
  %v6588 = vrcp.pop %v6560
  %v6589 = vrcp.pop %v6563
  %v6590 = vrcp.pop %v6566
  %v6591 = vrcp.pop %v6569
  %v6592 = vrcp.pop %v6572
  %v6593 = vrcp.pop %v6575
  %v6594 = vrcp.pop %v6578
  %v6595 = vrcp.pop %v6581
  %v6596 = vrcp.pop %v6584
  %v6597 = vmul.f32 %v6526, %v6585
  %v6598 = vmul.f32 %v6528, %v6586
  %v6599 = vmul.f32 %v6530, %v6587
  %v6600 = vmul.f32 %v6532, %v6588
  %v6601 = vmul.f32 %v6534, %v6589
  %v6602 = vmul.f32 %v6536, %v6590
  %v6603 = vmul.f32 %v6538, %v6591
  %v6604 = vmul.f32 %v6540, %v6592
  %v6605 = vmul.f32 %v6542, %v6593
  %v6606 = vmul.f32 %v6544, %v6594
  %v6607 = vmul.f32 %v6546, %v6595
  %v6608 = vmul.f32 %v6548, %v6596
  %v6609 = vpack.c.bf16 %v6598, %v6597
  %v6610 = vpack.c.bf16 %v6600, %v6599
  %v6611 = vpack.c.bf16 %v6602, %v6601
  %v6612 = vpack.c.bf16 %v6604, %v6603
  %v6613 = vpack.c.bf16 %v6606, %v6605
  %v6614 = vpack.c.bf16 %v6608, %v6607
  %6615 = vrot.lane.b32.xlu0 %v6384, 64
  %v6616 = vpop.permute.xlu0 %6615
  %6617 = vrot.lane.b32.xlu0 %v6385, 64
  %v6618 = vpop.permute.xlu0 %6617
  %6619 = vrot.lane.b32.xlu0 %v6386, 64
  %v6620 = vpop.permute.xlu0 %6619
  %6621 = vrot.lane.b32.xlu0 %v6387, 64
  %v6622 = vpop.permute.xlu0 %6621
  %6623 = vrot.lane.b32.xlu0 %v6388, 64
  %v6624 = vpop.permute.xlu0 %6623
  %6625 = vrot.lane.b32.xlu0 %v6389, 64
  %v6626 = vpop.permute.xlu0 %6625
  %v6634 = vsel %vm1214, %v6609, 0
  %v6637 = vsel %vm1214, %v6610, 0
  %v6640 = vsel %vm1214, %v6611, 0
  %v6643 = vsel %vm1214, %v6612, 0
  %v6646 = vsel %vm1214, %v6613, 0
  %v6649 = vsel %vm1214, %v6614, 0
  %6651 = vmatpush.bf16.msra.mxu0 0
  %6652 = vmatpush.bf16.msra.mxu0 0
  %6653 = vmatpush.bf16.msra.mxu0 %v6626
  %6654 = vmatpush.bf16.msra.mxu0 %v6624
  %6655 = vmatpush.bf16.msra.mxu0 %v6622
  %6656 = vmatpush.bf16.msra.mxu0 %v6620
  %6657 = vmatpush.bf16.msra.mxu0 %v6618
  %6658 = vmatpush.bf16.msra.mxu0 %v6616
  %6659 = vmatmul.bf16.gmra.mxu0 %v6634
  %v6660 = vpop.f32.mrf.mxu0
  %v6661 = vadd.f32 0.0, %v6660
  %v6662 = vpop.f32.mrf.mxu0
  %v6663 = vadd.f32 0.0, %v6662
  %6664 = vmatmul.bf16.gmra.mxu0 %v6637
  %v6665 = vpop.f32.mrf.mxu0
  %v6666 = vadd.f32 0.0, %v6665
  %v6667 = vpop.f32.mrf.mxu0
  %v6668 = vadd.f32 0.0, %v6667
  %6669 = vmatmul.bf16.gmra.mxu0 %v6640
  %v6670 = vpop.f32.mrf.mxu0
  %v6671 = vadd.f32 0.0, %v6670
  %v6672 = vpop.f32.mrf.mxu0
  %v6673 = vadd.f32 0.0, %v6672
  %6674 = vmatmul.bf16.gmra.mxu0 %v6643
  %v6675 = vpop.f32.mrf.mxu0
  %v6676 = vadd.f32 0.0, %v6675
  %v6677 = vpop.f32.mrf.mxu0
  %v6678 = vadd.f32 0.0, %v6677
  %6679 = vmatmul.bf16.gmra.mxu0 %v6646
  %v6680 = vpop.f32.mrf.mxu0
  %v6681 = vadd.f32 0.0, %v6680
  %v6682 = vpop.f32.mrf.mxu0
  %v6683 = vadd.f32 0.0, %v6682
  %6684 = vmatmul.bf16.gmra.mxu0 %v6649
  %v6685 = vpop.f32.mrf.mxu0
  %v6686 = vadd.f32 0.0, %v6685
  %v6687 = vpop.f32.mrf.mxu0
  %v6688 = vadd.f32 0.0, %v6687
  %6689 = vdwg.mxu0
  %v6690 = vpack.c.bf16 %v6661, %v6661
  %v6691 = vpack.c.bf16 %v6663, %v6663
  %v6692 = vpack.c.bf16 %v6666, %v6666
  %v6693 = vpack.c.bf16 %v6668, %v6668
  %v6694 = vpack.c.bf16 %v6671, %v6671
  %v6695 = vpack.c.bf16 %v6673, %v6673
  %v6696 = vpack.c.bf16 %v6676, %v6676
  %v6697 = vpack.c.bf16 %v6678, %v6678
  %v6698 = vpack.c.bf16 %v6681, %v6681
  %v6699 = vpack.c.bf16 %v6683, %v6683
  %v6700 = vpack.c.bf16 %v6686, %v6686
  %v6701 = vpack.c.bf16 %v6688, %v6688
  %6702 = vrot.lane.b32.xlu0 %v6384, 120
  %v6703 = vpop.permute.xlu0 %6702
  %6704 = vrot.lane.b32.xlu0 %v6385, 120
  %v6705 = vpop.permute.xlu0 %6704
  %6706 = vrot.lane.b32.xlu0 %v6386, 120
  %v6707 = vpop.permute.xlu0 %6706
  %6708 = vrot.lane.b32.xlu0 %v6387, 120
  %v6709 = vpop.permute.xlu0 %6708
  %6710 = vrot.lane.b32.xlu0 %v6388, 120
  %v6711 = vpop.permute.xlu0 %6710
  %6712 = vrot.lane.b32.xlu0 %v6389, 120
  %v6713 = vpop.permute.xlu0 %6712
  %6714 = vrot.lane.b32.xlu0 %v6384, 88
  %v6715 = vpop.permute.xlu0 %6714
  %6716 = vrot.lane.b32.xlu0 %v6385, 88
  %v6717 = vpop.permute.xlu0 %6716
  %6718 = vrot.lane.b32.xlu0 %v6386, 88
  %v6719 = vpop.permute.xlu0 %6718
  %6720 = vrot.lane.b32.xlu0 %v6387, 88
  %v6721 = vpop.permute.xlu0 %6720
  %6722 = vrot.lane.b32.xlu0 %v6388, 88
  %v6723 = vpop.permute.xlu0 %6722
  %6724 = vrot.lane.b32.xlu0 %v6389, 88
  %v6725 = vpop.permute.xlu0 %6724
  %v6727 = vsel %vm1138, %v6703, 0
  %v6730 = vsel %vm1138, %v6705, 0
  %v6733 = vsel %vm1138, %v6707, 0
  %v6736 = vsel %vm1138, %v6709, 0
  %v6739 = vsel %vm1138, %v6711, 0
  %v6742 = vsel %vm1138, %v6713, 0
  %v6745 = vsel %vm1138, %v6715, 0
  %v6748 = vsel %vm1138, %v6717, 0
  %v6751 = vsel %vm1138, %v6719, 0
  %v6754 = vsel %vm1138, %v6721, 0
  %v6757 = vsel %vm1138, %v6723, 0
  %v6760 = vsel %vm1138, %v6725, 0
  %6762 = vmatpush.bf16.xpose.msra.mxu0 0
  %6763 = vmatpush.bf16.xpose.msra.mxu0 0
  %6764 = vmatpush.bf16.xpose.msra.mxu0 %v6760
  %6765 = vmatpush.bf16.xpose.msra.mxu0 %v6757
  %6766 = vmatpush.bf16.xpose.msra.mxu0 %v6754
  %6767 = vmatpush.bf16.xpose.msra.mxu0 %v6751
  %6768 = vmatpush.bf16.xpose.msra.mxu0 %v6748
  %6769 = vmatpush.bf16.xpose.msra.mxu0 %v6745
  %6770 = vmatmul.bf16.gmra.mxu0 %v6727
  %v6771 = vpop.f32.mrf.mxu0
  %v6772 = vadd.f32 0.0, %v6771
  %v6773 = vpop.f32.mrf.mxu0
  %v6774 = vadd.f32 0.0, %v6773
  %6775 = vmatmul.bf16.gmra.mxu0 %v6730
  %v6776 = vpop.f32.mrf.mxu0
  %v6777 = vadd.f32 0.0, %v6776
  %v6778 = vpop.f32.mrf.mxu0
  %v6779 = vadd.f32 0.0, %v6778
  %6780 = vmatmul.bf16.gmra.mxu0 %v6733
  %v6781 = vpop.f32.mrf.mxu0
  %v6782 = vadd.f32 0.0, %v6781
  %v6783 = vpop.f32.mrf.mxu0
  %v6784 = vadd.f32 0.0, %v6783
  %6785 = vmatmul.bf16.gmra.mxu0 %v6736
  %v6786 = vpop.f32.mrf.mxu0
  %v6787 = vadd.f32 0.0, %v6786
  %v6788 = vpop.f32.mrf.mxu0
  %v6789 = vadd.f32 0.0, %v6788
  %6790 = vmatmul.bf16.gmra.mxu0 %v6739
  %v6791 = vpop.f32.mrf.mxu0
  %v6792 = vadd.f32 0.0, %v6791
  %v6793 = vpop.f32.mrf.mxu0
  %v6794 = vadd.f32 0.0, %v6793
  %6795 = vmatmul.bf16.gmra.mxu0 %v6742
  %v6796 = vpop.f32.mrf.mxu0
  %v6797 = vadd.f32 0.0, %v6796
  %v6798 = vpop.f32.mrf.mxu0
  %v6799 = vadd.f32 0.0, %v6798
  %6800 = vdwg.mxu0
  %v6801 = vsel %vm1214, %v6772, -inf
  %6802 = vmax.xlane.f32.xlu0 %v6801
  %v6803 = vpop.xlane.xlu0 %6802
  %v6804 = vsel %vm1214, %v6774, -inf
  %6805 = vmax.xlane.f32.xlu0 %v6804
  %v6806 = vpop.xlane.xlu0 %6805
  %v6807 = vsel %vm1214, %v6777, -inf
  %6808 = vmax.xlane.f32.xlu0 %v6807
  %v6809 = vpop.xlane.xlu0 %6808
  %v6810 = vsel %vm1214, %v6779, -inf
  %6811 = vmax.xlane.f32.xlu0 %v6810
  %v6812 = vpop.xlane.xlu0 %6811
  %v6813 = vsel %vm1214, %v6782, -inf
  %6814 = vmax.xlane.f32.xlu0 %v6813
  %v6815 = vpop.xlane.xlu0 %6814
  %v6816 = vsel %vm1214, %v6784, -inf
  %6817 = vmax.xlane.f32.xlu0 %v6816
  %v6818 = vpop.xlane.xlu0 %6817
  %v6819 = vsel %vm1214, %v6787, -inf
  %6820 = vmax.xlane.f32.xlu0 %v6819
  %v6821 = vpop.xlane.xlu0 %6820
  %v6822 = vsel %vm1214, %v6789, -inf
  %6823 = vmax.xlane.f32.xlu0 %v6822
  %v6824 = vpop.xlane.xlu0 %6823
  %v6825 = vsel %vm1214, %v6792, -inf
  %6826 = vmax.xlane.f32.xlu0 %v6825
  %v6827 = vpop.xlane.xlu0 %6826
  %v6828 = vsel %vm1214, %v6794, -inf
  %6829 = vmax.xlane.f32.xlu0 %v6828
  %v6830 = vpop.xlane.xlu0 %6829
  %v6831 = vsel %vm1214, %v6797, -inf
  %6832 = vmax.xlane.f32.xlu0 %v6831
  %v6833 = vpop.xlane.xlu0 %6832
  %v6834 = vsel %vm1214, %v6799, -inf
  %6835 = vmax.xlane.f32.xlu0 %v6834
  %v6836 = vpop.xlane.xlu0 %6835
  %v6837 = vsub.f32 %v6772, %v6803
  %v6838 = vsub.f32 %v6774, %v6806
  %v6839 = vsub.f32 %v6777, %v6809
  %v6840 = vsub.f32 %v6779, %v6812
  %v6841 = vsub.f32 %v6782, %v6815
  %v6842 = vsub.f32 %v6784, %v6818
  %v6843 = vsub.f32 %v6787, %v6821
  %v6844 = vsub.f32 %v6789, %v6824
  %v6845 = vsub.f32 %v6792, %v6827
  %v6846 = vsub.f32 %v6794, %v6830
  %v6847 = vsub.f32 %v6797, %v6833
  %v6848 = vsub.f32 %v6799, %v6836
  %v6849 = vmul.f32 %v6837, 1.442695
  %v6850 = vpow.pop %v6849
  %v6851 = vmul.f32 %v6838, 1.442695
  %v6852 = vpow.pop %v6851
  %v6853 = vmul.f32 %v6839, 1.442695
  %v6854 = vpow.pop %v6853
  %v6855 = vmul.f32 %v6840, 1.442695
  %v6856 = vpow.pop %v6855
  %v6857 = vmul.f32 %v6841, 1.442695
  %v6858 = vpow.pop %v6857
  %v6859 = vmul.f32 %v6842, 1.442695
  %v6860 = vpow.pop %v6859
  %v6861 = vmul.f32 %v6843, 1.442695
  %v6862 = vpow.pop %v6861
  %v6863 = vmul.f32 %v6844, 1.442695
  %v6864 = vpow.pop %v6863
  %v6865 = vmul.f32 %v6845, 1.442695
  %v6866 = vpow.pop %v6865
  %v6867 = vmul.f32 %v6846, 1.442695
  %v6868 = vpow.pop %v6867
  %v6869 = vmul.f32 %v6847, 1.442695
  %v6870 = vpow.pop %v6869
  %v6871 = vmul.f32 %v6848, 1.442695
  %v6872 = vpow.pop %v6871
  %v6873 = vsel %vm1214, %v6850, 0.0
  %6874 = vadd.xlane.f32.xlu0 %v6873
  %v6875 = vpop.xlane.xlu0 %6874
  %v6876 = vsel %vm1214, %v6852, 0.0
  %6877 = vadd.xlane.f32.xlu0 %v6876
  %v6878 = vpop.xlane.xlu0 %6877
  %v6879 = vsel %vm1214, %v6854, 0.0
  %6880 = vadd.xlane.f32.xlu0 %v6879
  %v6881 = vpop.xlane.xlu0 %6880
  %v6882 = vsel %vm1214, %v6856, 0.0
  %6883 = vadd.xlane.f32.xlu0 %v6882
  %v6884 = vpop.xlane.xlu0 %6883
  %v6885 = vsel %vm1214, %v6858, 0.0
  %6886 = vadd.xlane.f32.xlu0 %v6885
  %v6887 = vpop.xlane.xlu0 %6886
  %v6888 = vsel %vm1214, %v6860, 0.0
  %6889 = vadd.xlane.f32.xlu0 %v6888
  %v6890 = vpop.xlane.xlu0 %6889
  %v6891 = vsel %vm1214, %v6862, 0.0
  %6892 = vadd.xlane.f32.xlu0 %v6891
  %v6893 = vpop.xlane.xlu0 %6892
  %v6894 = vsel %vm1214, %v6864, 0.0
  %6895 = vadd.xlane.f32.xlu0 %v6894
  %v6896 = vpop.xlane.xlu0 %6895
  %v6897 = vsel %vm1214, %v6866, 0.0
  %6898 = vadd.xlane.f32.xlu0 %v6897
  %v6899 = vpop.xlane.xlu0 %6898
  %v6900 = vsel %vm1214, %v6868, 0.0
  %6901 = vadd.xlane.f32.xlu0 %v6900
  %v6902 = vpop.xlane.xlu0 %6901
  %v6903 = vsel %vm1214, %v6870, 0.0
  %6904 = vadd.xlane.f32.xlu0 %v6903
  %v6905 = vpop.xlane.xlu0 %6904
  %v6906 = vsel %vm1214, %v6872, 0.0
  %6907 = vadd.xlane.f32.xlu0 %v6906
  %v6908 = vpop.xlane.xlu0 %6907
  %v6909 = vrcp.pop %v6875
  %v6910 = vrcp.pop %v6878
  %v6911 = vrcp.pop %v6881
  %v6912 = vrcp.pop %v6884
  %v6913 = vrcp.pop %v6887
  %v6914 = vrcp.pop %v6890
  %v6915 = vrcp.pop %v6893
  %v6916 = vrcp.pop %v6896
  %v6917 = vrcp.pop %v6899
  %v6918 = vrcp.pop %v6902
  %v6919 = vrcp.pop %v6905
  %v6920 = vrcp.pop %v6908
  %v6921 = vmul.f32 %v6850, %v6909
  %v6922 = vmul.f32 %v6852, %v6910
  %v6923 = vmul.f32 %v6854, %v6911
  %v6924 = vmul.f32 %v6856, %v6912
  %v6925 = vmul.f32 %v6858, %v6913
  %v6926 = vmul.f32 %v6860, %v6914
  %v6927 = vmul.f32 %v6862, %v6915
  %v6928 = vmul.f32 %v6864, %v6916
  %v6929 = vmul.f32 %v6866, %v6917
  %v6930 = vmul.f32 %v6868, %v6918
  %v6931 = vmul.f32 %v6870, %v6919
  %v6932 = vmul.f32 %v6872, %v6920
  %v6933 = vpack.c.bf16 %v6922, %v6921
  %v6934 = vpack.c.bf16 %v6924, %v6923
  %v6935 = vpack.c.bf16 %v6926, %v6925
  %v6936 = vpack.c.bf16 %v6928, %v6927
  %v6937 = vpack.c.bf16 %v6930, %v6929
  %v6938 = vpack.c.bf16 %v6932, %v6931
  %6939 = vrot.lane.b32.xlu0 %v6384, 56
  %v6940 = vpop.permute.xlu0 %6939
  %6941 = vrot.lane.b32.xlu0 %v6385, 56
  %v6942 = vpop.permute.xlu0 %6941
  %6943 = vrot.lane.b32.xlu0 %v6386, 56
  %v6944 = vpop.permute.xlu0 %6943
  %6945 = vrot.lane.b32.xlu0 %v6387, 56
  %v6946 = vpop.permute.xlu0 %6945
  %6947 = vrot.lane.b32.xlu0 %v6388, 56
  %v6948 = vpop.permute.xlu0 %6947
  %6949 = vrot.lane.b32.xlu0 %v6389, 56
  %v6950 = vpop.permute.xlu0 %6949
  %v6958 = vsel %vm1214, %v6933, 0
  %v6961 = vsel %vm1214, %v6934, 0
  %v6964 = vsel %vm1214, %v6935, 0
  %v6967 = vsel %vm1214, %v6936, 0
  %v6970 = vsel %vm1214, %v6937, 0
  %v6973 = vsel %vm1214, %v6938, 0
  %6975 = vmatpush.bf16.msra.mxu0 0
  %6976 = vmatpush.bf16.msra.mxu0 0
  %6977 = vmatpush.bf16.msra.mxu0 %v6950
  %6978 = vmatpush.bf16.msra.mxu0 %v6948
  %6979 = vmatpush.bf16.msra.mxu0 %v6946
  %6980 = vmatpush.bf16.msra.mxu0 %v6944
  %6981 = vmatpush.bf16.msra.mxu0 %v6942
  %6982 = vmatpush.bf16.msra.mxu0 %v6940
  %6983 = vmatmul.bf16.gmra.mxu0 %v6958
  %v6984 = vpop.f32.mrf.mxu0
  %v6985 = vadd.f32 0.0, %v6984
  %v6986 = vpop.f32.mrf.mxu0
  %v6987 = vadd.f32 0.0, %v6986
  %6988 = vmatmul.bf16.gmra.mxu0 %v6961
  %v6989 = vpop.f32.mrf.mxu0
  %v6990 = vadd.f32 0.0, %v6989
  %v6991 = vpop.f32.mrf.mxu0
  %v6992 = vadd.f32 0.0, %v6991
  %6993 = vmatmul.bf16.gmra.mxu0 %v6964
  %v6994 = vpop.f32.mrf.mxu0
  %v6995 = vadd.f32 0.0, %v6994
  %v6996 = vpop.f32.mrf.mxu0
  %v6997 = vadd.f32 0.0, %v6996
  %6998 = vmatmul.bf16.gmra.mxu0 %v6967
  %v6999 = vpop.f32.mrf.mxu0
  %v7000 = vadd.f32 0.0, %v6999
  %v7001 = vpop.f32.mrf.mxu0
  %v7002 = vadd.f32 0.0, %v7001
  %7003 = vmatmul.bf16.gmra.mxu0 %v6970
  %v7004 = vpop.f32.mrf.mxu0
  %v7005 = vadd.f32 0.0, %v7004
  %v7006 = vpop.f32.mrf.mxu0
  %v7007 = vadd.f32 0.0, %v7006
  %7008 = vmatmul.bf16.gmra.mxu0 %v6973
  %v7009 = vpop.f32.mrf.mxu0
  %v7010 = vadd.f32 0.0, %v7009
  %v7011 = vpop.f32.mrf.mxu0
  %v7012 = vadd.f32 0.0, %v7011
  %7013 = vdwg.mxu0
  %v7014 = vpack.c.bf16 %v6985, %v6985
  %v7015 = vpack.c.bf16 %v6987, %v6987
  %v7016 = vpack.c.bf16 %v6990, %v6990
  %v7017 = vpack.c.bf16 %v6992, %v6992
  %v7018 = vpack.c.bf16 %v6995, %v6995
  %v7019 = vpack.c.bf16 %v6997, %v6997
  %v7020 = vpack.c.bf16 %v7000, %v7000
  %v7021 = vpack.c.bf16 %v7002, %v7002
  %v7022 = vpack.c.bf16 %v7005, %v7005
  %v7023 = vpack.c.bf16 %v7007, %v7007
  %v7024 = vpack.c.bf16 %v7010, %v7010
  %v7025 = vpack.c.bf16 %v7012, %v7012
  %7026 = vrot.lane.b32.xlu0 %v6384, 112
  %v7027 = vpop.permute.xlu0 %7026
  %7028 = vrot.lane.b32.xlu0 %v6385, 112
  %v7029 = vpop.permute.xlu0 %7028
  %7030 = vrot.lane.b32.xlu0 %v6386, 112
  %v7031 = vpop.permute.xlu0 %7030
  %7032 = vrot.lane.b32.xlu0 %v6387, 112
  %v7033 = vpop.permute.xlu0 %7032
  %7034 = vrot.lane.b32.xlu0 %v6388, 112
  %v7035 = vpop.permute.xlu0 %7034
  %7036 = vrot.lane.b32.xlu0 %v6389, 112
  %v7037 = vpop.permute.xlu0 %7036
  %7038 = vrot.lane.b32.xlu0 %v6384, 80
  %v7039 = vpop.permute.xlu0 %7038
  %7040 = vrot.lane.b32.xlu0 %v6385, 80
  %v7041 = vpop.permute.xlu0 %7040
  %7042 = vrot.lane.b32.xlu0 %v6386, 80
  %v7043 = vpop.permute.xlu0 %7042
  %7044 = vrot.lane.b32.xlu0 %v6387, 80
  %v7045 = vpop.permute.xlu0 %7044
  %7046 = vrot.lane.b32.xlu0 %v6388, 80
  %v7047 = vpop.permute.xlu0 %7046
  %7048 = vrot.lane.b32.xlu0 %v6389, 80
  %v7049 = vpop.permute.xlu0 %7048
  %v7051 = vsel %vm1138, %v7027, 0
  %v7054 = vsel %vm1138, %v7029, 0
  %v7057 = vsel %vm1138, %v7031, 0
  %v7060 = vsel %vm1138, %v7033, 0
  %v7063 = vsel %vm1138, %v7035, 0
  %v7066 = vsel %vm1138, %v7037, 0
  %v7069 = vsel %vm1138, %v7039, 0
  %v7072 = vsel %vm1138, %v7041, 0
  %v7075 = vsel %vm1138, %v7043, 0
  %v7078 = vsel %vm1138, %v7045, 0
  %v7081 = vsel %vm1138, %v7047, 0
  %v7084 = vsel %vm1138, %v7049, 0
  %7086 = vmatpush.bf16.xpose.msra.mxu0 0
  %7087 = vmatpush.bf16.xpose.msra.mxu0 0
  %7088 = vmatpush.bf16.xpose.msra.mxu0 %v7084
  %7089 = vmatpush.bf16.xpose.msra.mxu0 %v7081
  %7090 = vmatpush.bf16.xpose.msra.mxu0 %v7078
  %7091 = vmatpush.bf16.xpose.msra.mxu0 %v7075
  %7092 = vmatpush.bf16.xpose.msra.mxu0 %v7072
  %7093 = vmatpush.bf16.xpose.msra.mxu0 %v7069
  %7094 = vmatmul.bf16.gmra.mxu0 %v7051
  %v7095 = vpop.f32.mrf.mxu0
  %v7096 = vadd.f32 0.0, %v7095
  %v7097 = vpop.f32.mrf.mxu0
  %v7098 = vadd.f32 0.0, %v7097
  %7099 = vmatmul.bf16.gmra.mxu0 %v7054
  %v7100 = vpop.f32.mrf.mxu0
  %v7101 = vadd.f32 0.0, %v7100
  %v7102 = vpop.f32.mrf.mxu0
  %v7103 = vadd.f32 0.0, %v7102
  %7104 = vmatmul.bf16.gmra.mxu0 %v7057
  %v7105 = vpop.f32.mrf.mxu0
  %v7106 = vadd.f32 0.0, %v7105
  %v7107 = vpop.f32.mrf.mxu0
  %v7108 = vadd.f32 0.0, %v7107
  %7109 = vmatmul.bf16.gmra.mxu0 %v7060
  %v7110 = vpop.f32.mrf.mxu0
  %v7111 = vadd.f32 0.0, %v7110
  %v7112 = vpop.f32.mrf.mxu0
  %v7113 = vadd.f32 0.0, %v7112
  %7114 = vmatmul.bf16.gmra.mxu0 %v7063
  %v7115 = vpop.f32.mrf.mxu0
  %v7116 = vadd.f32 0.0, %v7115
  %v7117 = vpop.f32.mrf.mxu0
  %v7118 = vadd.f32 0.0, %v7117
  %7119 = vmatmul.bf16.gmra.mxu0 %v7066
  %v7120 = vpop.f32.mrf.mxu0
  %v7121 = vadd.f32 0.0, %v7120
  %v7122 = vpop.f32.mrf.mxu0
  %v7123 = vadd.f32 0.0, %v7122
  %7124 = vdwg.mxu0
  %v7125 = vsel %vm1214, %v7096, -inf
  %7126 = vmax.xlane.f32.xlu0 %v7125
  %v7127 = vpop.xlane.xlu0 %7126
  %v7128 = vsel %vm1214, %v7098, -inf
  %7129 = vmax.xlane.f32.xlu0 %v7128
  %v7130 = vpop.xlane.xlu0 %7129
  %v7131 = vsel %vm1214, %v7101, -inf
  %7132 = vmax.xlane.f32.xlu0 %v7131
  %v7133 = vpop.xlane.xlu0 %7132
  %v7134 = vsel %vm1214, %v7103, -inf
  %7135 = vmax.xlane.f32.xlu0 %v7134
  %v7136 = vpop.xlane.xlu0 %7135
  %v7137 = vsel %vm1214, %v7106, -inf
  %7138 = vmax.xlane.f32.xlu0 %v7137
  %v7139 = vpop.xlane.xlu0 %7138
  %v7140 = vsel %vm1214, %v7108, -inf
  %7141 = vmax.xlane.f32.xlu0 %v7140
  %v7142 = vpop.xlane.xlu0 %7141
  %v7143 = vsel %vm1214, %v7111, -inf
  %7144 = vmax.xlane.f32.xlu0 %v7143
  %v7145 = vpop.xlane.xlu0 %7144
  %v7146 = vsel %vm1214, %v7113, -inf
  %7147 = vmax.xlane.f32.xlu0 %v7146
  %v7148 = vpop.xlane.xlu0 %7147
  %v7149 = vsel %vm1214, %v7116, -inf
  %7150 = vmax.xlane.f32.xlu0 %v7149
  %v7151 = vpop.xlane.xlu0 %7150
  %v7152 = vsel %vm1214, %v7118, -inf
  %7153 = vmax.xlane.f32.xlu0 %v7152
  %v7154 = vpop.xlane.xlu0 %7153
  %v7155 = vsel %vm1214, %v7121, -inf
  %7156 = vmax.xlane.f32.xlu0 %v7155
  %v7157 = vpop.xlane.xlu0 %7156
  %v7158 = vsel %vm1214, %v7123, -inf
  %7159 = vmax.xlane.f32.xlu0 %v7158
  %v7160 = vpop.xlane.xlu0 %7159
  %v7161 = vsub.f32 %v7096, %v7127
  %v7162 = vsub.f32 %v7098, %v7130
  %v7163 = vsub.f32 %v7101, %v7133
  %v7164 = vsub.f32 %v7103, %v7136
  %v7165 = vsub.f32 %v7106, %v7139
  %v7166 = vsub.f32 %v7108, %v7142
  %v7167 = vsub.f32 %v7111, %v7145
  %v7168 = vsub.f32 %v7113, %v7148
  %v7169 = vsub.f32 %v7116, %v7151
  %v7170 = vsub.f32 %v7118, %v7154
  %v7171 = vsub.f32 %v7121, %v7157
  %v7172 = vsub.f32 %v7123, %v7160
  %v7173 = vmul.f32 %v7161, 1.442695
  %v7174 = vpow.pop %v7173
  %v7175 = vmul.f32 %v7162, 1.442695
  %v7176 = vpow.pop %v7175
  %v7177 = vmul.f32 %v7163, 1.442695
  %v7178 = vpow.pop %v7177
  %v7179 = vmul.f32 %v7164, 1.442695
  %v7180 = vpow.pop %v7179
  %v7181 = vmul.f32 %v7165, 1.442695
  %v7182 = vpow.pop %v7181
  %v7183 = vmul.f32 %v7166, 1.442695
  %v7184 = vpow.pop %v7183
  %v7185 = vmul.f32 %v7167, 1.442695
  %v7186 = vpow.pop %v7185
  %v7187 = vmul.f32 %v7168, 1.442695
  %v7188 = vpow.pop %v7187
  %v7189 = vmul.f32 %v7169, 1.442695
  %v7190 = vpow.pop %v7189
  %v7191 = vmul.f32 %v7170, 1.442695
  %v7192 = vpow.pop %v7191
  %v7193 = vmul.f32 %v7171, 1.442695
  %v7194 = vpow.pop %v7193
  %v7195 = vmul.f32 %v7172, 1.442695
  %v7196 = vpow.pop %v7195
  %v7197 = vsel %vm1214, %v7174, 0.0
  %7198 = vadd.xlane.f32.xlu0 %v7197
  %v7199 = vpop.xlane.xlu0 %7198
  %v7200 = vsel %vm1214, %v7176, 0.0
  %7201 = vadd.xlane.f32.xlu0 %v7200
  %v7202 = vpop.xlane.xlu0 %7201
  %v7203 = vsel %vm1214, %v7178, 0.0
  %7204 = vadd.xlane.f32.xlu0 %v7203
  %v7205 = vpop.xlane.xlu0 %7204
  %v7206 = vsel %vm1214, %v7180, 0.0
  %7207 = vadd.xlane.f32.xlu0 %v7206
  %v7208 = vpop.xlane.xlu0 %7207
  %v7209 = vsel %vm1214, %v7182, 0.0
  %7210 = vadd.xlane.f32.xlu0 %v7209
  %v7211 = vpop.xlane.xlu0 %7210
  %v7212 = vsel %vm1214, %v7184, 0.0
  %7213 = vadd.xlane.f32.xlu0 %v7212
  %v7214 = vpop.xlane.xlu0 %7213
  %v7215 = vsel %vm1214, %v7186, 0.0
  %7216 = vadd.xlane.f32.xlu0 %v7215
  %v7217 = vpop.xlane.xlu0 %7216
  %v7218 = vsel %vm1214, %v7188, 0.0
  %7219 = vadd.xlane.f32.xlu0 %v7218
  %v7220 = vpop.xlane.xlu0 %7219
  %v7221 = vsel %vm1214, %v7190, 0.0
  %7222 = vadd.xlane.f32.xlu0 %v7221
  %v7223 = vpop.xlane.xlu0 %7222
  %v7224 = vsel %vm1214, %v7192, 0.0
  %7225 = vadd.xlane.f32.xlu0 %v7224
  %v7226 = vpop.xlane.xlu0 %7225
  %v7227 = vsel %vm1214, %v7194, 0.0
  %7228 = vadd.xlane.f32.xlu0 %v7227
  %v7229 = vpop.xlane.xlu0 %7228
  %v7230 = vsel %vm1214, %v7196, 0.0
  %7231 = vadd.xlane.f32.xlu0 %v7230
  %v7232 = vpop.xlane.xlu0 %7231
  %v7233 = vrcp.pop %v7199
  %v7234 = vrcp.pop %v7202
  %v7235 = vrcp.pop %v7205
  %v7236 = vrcp.pop %v7208
  %v7237 = vrcp.pop %v7211
  %v7238 = vrcp.pop %v7214
  %v7239 = vrcp.pop %v7217
  %v7240 = vrcp.pop %v7220
  %v7241 = vrcp.pop %v7223
  %v7242 = vrcp.pop %v7226
  %v7243 = vrcp.pop %v7229
  %v7244 = vrcp.pop %v7232
  %v7245 = vmul.f32 %v7174, %v7233
  %v7246 = vmul.f32 %v7176, %v7234
  %v7247 = vmul.f32 %v7178, %v7235
  %v7248 = vmul.f32 %v7180, %v7236
  %v7249 = vmul.f32 %v7182, %v7237
  %v7250 = vmul.f32 %v7184, %v7238
  %v7251 = vmul.f32 %v7186, %v7239
  %v7252 = vmul.f32 %v7188, %v7240
  %v7253 = vmul.f32 %v7190, %v7241
  %v7254 = vmul.f32 %v7192, %v7242
  %v7255 = vmul.f32 %v7194, %v7243
  %v7256 = vmul.f32 %v7196, %v7244
  %v7257 = vpack.c.bf16 %v7246, %v7245
  %v7258 = vpack.c.bf16 %v7248, %v7247
  %v7259 = vpack.c.bf16 %v7250, %v7249
  %v7260 = vpack.c.bf16 %v7252, %v7251
  %v7261 = vpack.c.bf16 %v7254, %v7253
  %v7262 = vpack.c.bf16 %v7256, %v7255
  %7263 = vrot.lane.b32.xlu0 %v6384, 48
  %v7264 = vpop.permute.xlu0 %7263
  %7265 = vrot.lane.b32.xlu0 %v6385, 48
  %v7266 = vpop.permute.xlu0 %7265
  %7267 = vrot.lane.b32.xlu0 %v6386, 48
  %v7268 = vpop.permute.xlu0 %7267
  %7269 = vrot.lane.b32.xlu0 %v6387, 48
  %v7270 = vpop.permute.xlu0 %7269
  %7271 = vrot.lane.b32.xlu0 %v6388, 48
  %v7272 = vpop.permute.xlu0 %7271
  %7273 = vrot.lane.b32.xlu0 %v6389, 48
  %v7274 = vpop.permute.xlu0 %7273
  %v7282 = vsel %vm1214, %v7257, 0
  %v7285 = vsel %vm1214, %v7258, 0
  %v7288 = vsel %vm1214, %v7259, 0
  %v7291 = vsel %vm1214, %v7260, 0
  %v7294 = vsel %vm1214, %v7261, 0
  %v7297 = vsel %vm1214, %v7262, 0
  %7299 = vmatpush.bf16.msra.mxu0 0
  %7300 = vmatpush.bf16.msra.mxu0 0
  %7301 = vmatpush.bf16.msra.mxu0 %v7274
  %7302 = vmatpush.bf16.msra.mxu0 %v7272
  %7303 = vmatpush.bf16.msra.mxu0 %v7270
  %7304 = vmatpush.bf16.msra.mxu0 %v7268
  %7305 = vmatpush.bf16.msra.mxu0 %v7266
  %7306 = vmatpush.bf16.msra.mxu0 %v7264
  %7307 = vmatmul.bf16.gmra.mxu0 %v7282
  %v7308 = vpop.f32.mrf.mxu0
  %v7309 = vadd.f32 0.0, %v7308
  %v7310 = vpop.f32.mrf.mxu0
  %v7311 = vadd.f32 0.0, %v7310
  %7312 = vmatmul.bf16.gmra.mxu0 %v7285
  %v7313 = vpop.f32.mrf.mxu0
  %v7314 = vadd.f32 0.0, %v7313
  %v7315 = vpop.f32.mrf.mxu0
  %v7316 = vadd.f32 0.0, %v7315
  %7317 = vmatmul.bf16.gmra.mxu0 %v7288
  %v7318 = vpop.f32.mrf.mxu0
  %v7319 = vadd.f32 0.0, %v7318
  %v7320 = vpop.f32.mrf.mxu0
  %v7321 = vadd.f32 0.0, %v7320
  %7322 = vmatmul.bf16.gmra.mxu0 %v7291
  %v7323 = vpop.f32.mrf.mxu0
  %v7324 = vadd.f32 0.0, %v7323
  %v7325 = vpop.f32.mrf.mxu0
  %v7326 = vadd.f32 0.0, %v7325
  %7327 = vmatmul.bf16.gmra.mxu0 %v7294
  %v7328 = vpop.f32.mrf.mxu0
  %v7329 = vadd.f32 0.0, %v7328
  %v7330 = vpop.f32.mrf.mxu0
  %v7331 = vadd.f32 0.0, %v7330
  %7332 = vmatmul.bf16.gmra.mxu0 %v7297
  %v7333 = vpop.f32.mrf.mxu0
  %v7334 = vadd.f32 0.0, %v7333
  %v7335 = vpop.f32.mrf.mxu0
  %v7336 = vadd.f32 0.0, %v7335
  %7337 = vdwg.mxu0
  %v7338 = vpack.c.bf16 %v7309, %v7309
  %v7339 = vpack.c.bf16 %v7311, %v7311
  %v7340 = vpack.c.bf16 %v7314, %v7314
  %v7341 = vpack.c.bf16 %v7316, %v7316
  %v7342 = vpack.c.bf16 %v7319, %v7319
  %v7343 = vpack.c.bf16 %v7321, %v7321
  %v7344 = vpack.c.bf16 %v7324, %v7324
  %v7345 = vpack.c.bf16 %v7326, %v7326
  %v7346 = vpack.c.bf16 %v7329, %v7329
  %v7347 = vpack.c.bf16 %v7331, %v7331
  %v7348 = vpack.c.bf16 %v7334, %v7334
  %v7349 = vpack.c.bf16 %v7336, %v7336
  %7350 = vrot.lane.b32.xlu0 %v6384, 104
  %v7351 = vpop.permute.xlu0 %7350
  %7352 = vrot.lane.b32.xlu0 %v6385, 104
  %v7353 = vpop.permute.xlu0 %7352
  %7354 = vrot.lane.b32.xlu0 %v6386, 104
  %v7355 = vpop.permute.xlu0 %7354
  %7356 = vrot.lane.b32.xlu0 %v6387, 104
  %v7357 = vpop.permute.xlu0 %7356
  %7358 = vrot.lane.b32.xlu0 %v6388, 104
  %v7359 = vpop.permute.xlu0 %7358
  %7360 = vrot.lane.b32.xlu0 %v6389, 104
  %v7361 = vpop.permute.xlu0 %7360
  %7362 = vrot.lane.b32.xlu0 %v6384, 72
  %v7363 = vpop.permute.xlu0 %7362
  %7364 = vrot.lane.b32.xlu0 %v6385, 72
  %v7365 = vpop.permute.xlu0 %7364
  %7366 = vrot.lane.b32.xlu0 %v6386, 72
  %v7367 = vpop.permute.xlu0 %7366
  %7368 = vrot.lane.b32.xlu0 %v6387, 72
  %v7369 = vpop.permute.xlu0 %7368
  %7370 = vrot.lane.b32.xlu0 %v6388, 72
  %v7371 = vpop.permute.xlu0 %7370
  %7372 = vrot.lane.b32.xlu0 %v6389, 72
  %v7373 = vpop.permute.xlu0 %7372
  %v7375 = vsel %vm1138, %v7351, 0
  %v7378 = vsel %vm1138, %v7353, 0
  %v7381 = vsel %vm1138, %v7355, 0
  %v7384 = vsel %vm1138, %v7357, 0
  %v7387 = vsel %vm1138, %v7359, 0
  %v7390 = vsel %vm1138, %v7361, 0
  %v7393 = vsel %vm1138, %v7363, 0
  %v7396 = vsel %vm1138, %v7365, 0
  %v7399 = vsel %vm1138, %v7367, 0
  %v7402 = vsel %vm1138, %v7369, 0
  %v7405 = vsel %vm1138, %v7371, 0
  %v7408 = vsel %vm1138, %v7373, 0
  %7410 = vmatpush.bf16.xpose.msra.mxu0 0
  %7411 = vmatpush.bf16.xpose.msra.mxu0 0
  %7412 = vmatpush.bf16.xpose.msra.mxu0 %v7408
  %7413 = vmatpush.bf16.xpose.msra.mxu0 %v7405
  %7414 = vmatpush.bf16.xpose.msra.mxu0 %v7402
  %7415 = vmatpush.bf16.xpose.msra.mxu0 %v7399
  %7416 = vmatpush.bf16.xpose.msra.mxu0 %v7396
  %7417 = vmatpush.bf16.xpose.msra.mxu0 %v7393
  %7418 = vmatmul.bf16.gmra.mxu0 %v7375
  %v7419 = vpop.f32.mrf.mxu0
  %v7420 = vadd.f32 0.0, %v7419
  %v7421 = vpop.f32.mrf.mxu0
  %v7422 = vadd.f32 0.0, %v7421
  %7423 = vmatmul.bf16.gmra.mxu0 %v7378
  %v7424 = vpop.f32.mrf.mxu0
  %v7425 = vadd.f32 0.0, %v7424
  %v7426 = vpop.f32.mrf.mxu0
  %v7427 = vadd.f32 0.0, %v7426
  %7428 = vmatmul.bf16.gmra.mxu0 %v7381
  %v7429 = vpop.f32.mrf.mxu0
  %v7430 = vadd.f32 0.0, %v7429
  %v7431 = vpop.f32.mrf.mxu0
  %v7432 = vadd.f32 0.0, %v7431
  %7433 = vmatmul.bf16.gmra.mxu0 %v7384
  %v7434 = vpop.f32.mrf.mxu0
  %v7435 = vadd.f32 0.0, %v7434
  %v7436 = vpop.f32.mrf.mxu0
  %v7437 = vadd.f32 0.0, %v7436
  %7438 = vmatmul.bf16.gmra.mxu0 %v7387
  %v7439 = vpop.f32.mrf.mxu0
  %v7440 = vadd.f32 0.0, %v7439
  %v7441 = vpop.f32.mrf.mxu0
  %v7442 = vadd.f32 0.0, %v7441
  %7443 = vmatmul.bf16.gmra.mxu0 %v7390
  %v7444 = vpop.f32.mrf.mxu0
  %v7445 = vadd.f32 0.0, %v7444
  %v7446 = vpop.f32.mrf.mxu0
  %v7447 = vadd.f32 0.0, %v7446
  %7448 = vdwg.mxu0
  %v7449 = vsel %vm1214, %v7420, -inf
  %7450 = vmax.xlane.f32.xlu0 %v7449
  %v7451 = vpop.xlane.xlu0 %7450
  %v7452 = vsel %vm1214, %v7422, -inf
  %7453 = vmax.xlane.f32.xlu0 %v7452
  %v7454 = vpop.xlane.xlu0 %7453
  %v7455 = vsel %vm1214, %v7425, -inf
  %7456 = vmax.xlane.f32.xlu0 %v7455
  %v7457 = vpop.xlane.xlu0 %7456
  %v7458 = vsel %vm1214, %v7427, -inf
  %7459 = vmax.xlane.f32.xlu0 %v7458
  %v7460 = vpop.xlane.xlu0 %7459
  %v7461 = vsel %vm1214, %v7430, -inf
  %7462 = vmax.xlane.f32.xlu0 %v7461
  %v7463 = vpop.xlane.xlu0 %7462
  %v7464 = vsel %vm1214, %v7432, -inf
  %7465 = vmax.xlane.f32.xlu0 %v7464
  %v7466 = vpop.xlane.xlu0 %7465
  %v7467 = vsel %vm1214, %v7435, -inf
  %7468 = vmax.xlane.f32.xlu0 %v7467
  %v7469 = vpop.xlane.xlu0 %7468
  %v7470 = vsel %vm1214, %v7437, -inf
  %7471 = vmax.xlane.f32.xlu0 %v7470
  %v7472 = vpop.xlane.xlu0 %7471
  %v7473 = vsel %vm1214, %v7440, -inf
  %7474 = vmax.xlane.f32.xlu0 %v7473
  %v7475 = vpop.xlane.xlu0 %7474
  %v7476 = vsel %vm1214, %v7442, -inf
  %7477 = vmax.xlane.f32.xlu0 %v7476
  %v7478 = vpop.xlane.xlu0 %7477
  %v7479 = vsel %vm1214, %v7445, -inf
  %7480 = vmax.xlane.f32.xlu0 %v7479
  %v7481 = vpop.xlane.xlu0 %7480
  %v7482 = vsel %vm1214, %v7447, -inf
  %7483 = vmax.xlane.f32.xlu0 %v7482
  %v7484 = vpop.xlane.xlu0 %7483
  %v7485 = vsub.f32 %v7420, %v7451
  %v7486 = vsub.f32 %v7422, %v7454
  %v7487 = vsub.f32 %v7425, %v7457
  %v7488 = vsub.f32 %v7427, %v7460
  %v7489 = vsub.f32 %v7430, %v7463
  %v7490 = vsub.f32 %v7432, %v7466
  %v7491 = vsub.f32 %v7435, %v7469
  %v7492 = vsub.f32 %v7437, %v7472
  %v7493 = vsub.f32 %v7440, %v7475
  %v7494 = vsub.f32 %v7442, %v7478
  %v7495 = vsub.f32 %v7445, %v7481
  %v7496 = vsub.f32 %v7447, %v7484
  %v7497 = vmul.f32 %v7485, 1.442695
  %v7498 = vpow.pop %v7497
  %v7499 = vmul.f32 %v7486, 1.442695
  %v7500 = vpow.pop %v7499
  %v7501 = vmul.f32 %v7487, 1.442695
  %v7502 = vpow.pop %v7501
  %v7503 = vmul.f32 %v7488, 1.442695
  %v7504 = vpow.pop %v7503
  %v7505 = vmul.f32 %v7489, 1.442695
  %v7506 = vpow.pop %v7505
  %v7507 = vmul.f32 %v7490, 1.442695
  %v7508 = vpow.pop %v7507
  %v7509 = vmul.f32 %v7491, 1.442695
  %v7510 = vpow.pop %v7509
  %v7511 = vmul.f32 %v7492, 1.442695
  %v7512 = vpow.pop %v7511
  %v7513 = vmul.f32 %v7493, 1.442695
  %v7514 = vpow.pop %v7513
  %v7515 = vmul.f32 %v7494, 1.442695
  %v7516 = vpow.pop %v7515
  %v7517 = vmul.f32 %v7495, 1.442695
  %v7518 = vpow.pop %v7517
  %v7519 = vmul.f32 %v7496, 1.442695
  %v7520 = vpow.pop %v7519
  %v7521 = vsel %vm1214, %v7498, 0.0
  %7522 = vadd.xlane.f32.xlu0 %v7521
  %v7523 = vpop.xlane.xlu0 %7522
  %v7524 = vsel %vm1214, %v7500, 0.0
  %7525 = vadd.xlane.f32.xlu0 %v7524
  %v7526 = vpop.xlane.xlu0 %7525
  %v7527 = vsel %vm1214, %v7502, 0.0
  %7528 = vadd.xlane.f32.xlu0 %v7527
  %v7529 = vpop.xlane.xlu0 %7528
  %v7530 = vsel %vm1214, %v7504, 0.0
  %7531 = vadd.xlane.f32.xlu0 %v7530
  %v7532 = vpop.xlane.xlu0 %7531
  %v7533 = vsel %vm1214, %v7506, 0.0
  %7534 = vadd.xlane.f32.xlu0 %v7533
  %v7535 = vpop.xlane.xlu0 %7534
  %v7536 = vsel %vm1214, %v7508, 0.0
  %7537 = vadd.xlane.f32.xlu0 %v7536
  %v7538 = vpop.xlane.xlu0 %7537
  %v7539 = vsel %vm1214, %v7510, 0.0
  %7540 = vadd.xlane.f32.xlu0 %v7539
  %v7541 = vpop.xlane.xlu0 %7540
  %v7542 = vsel %vm1214, %v7512, 0.0
  %7543 = vadd.xlane.f32.xlu0 %v7542
  %v7544 = vpop.xlane.xlu0 %7543
  %v7545 = vsel %vm1214, %v7514, 0.0
  %7546 = vadd.xlane.f32.xlu0 %v7545
  %v7547 = vpop.xlane.xlu0 %7546
  %v7548 = vsel %vm1214, %v7516, 0.0
  %7549 = vadd.xlane.f32.xlu0 %v7548
  %v7550 = vpop.xlane.xlu0 %7549
  %v7551 = vsel %vm1214, %v7518, 0.0
  %7552 = vadd.xlane.f32.xlu0 %v7551
  %v7553 = vpop.xlane.xlu0 %7552
  %v7554 = vsel %vm1214, %v7520, 0.0
  %7555 = vadd.xlane.f32.xlu0 %v7554
  %v7556 = vpop.xlane.xlu0 %7555
  %v7557 = vrcp.pop %v7523
  %v7558 = vrcp.pop %v7526
  %v7559 = vrcp.pop %v7529
  %v7560 = vrcp.pop %v7532
  %v7561 = vrcp.pop %v7535
  %v7562 = vrcp.pop %v7538
  %v7563 = vrcp.pop %v7541
  %v7564 = vrcp.pop %v7544
  %v7565 = vrcp.pop %v7547
  %v7566 = vrcp.pop %v7550
  %v7567 = vrcp.pop %v7553
  %v7568 = vrcp.pop %v7556
  %v7569 = vmul.f32 %v7498, %v7557
  %v7570 = vmul.f32 %v7500, %v7558
  %v7571 = vmul.f32 %v7502, %v7559
  %v7572 = vmul.f32 %v7504, %v7560
  %v7573 = vmul.f32 %v7506, %v7561
  %v7574 = vmul.f32 %v7508, %v7562
  %v7575 = vmul.f32 %v7510, %v7563
  %v7576 = vmul.f32 %v7512, %v7564
  %v7577 = vmul.f32 %v7514, %v7565
  %v7578 = vmul.f32 %v7516, %v7566
  %v7579 = vmul.f32 %v7518, %v7567
  %v7580 = vmul.f32 %v7520, %v7568
  %v7581 = vpack.c.bf16 %v7570, %v7569
  %v7582 = vpack.c.bf16 %v7572, %v7571
  %v7583 = vpack.c.bf16 %v7574, %v7573
  %v7584 = vpack.c.bf16 %v7576, %v7575
  %v7585 = vpack.c.bf16 %v7578, %v7577
  %v7586 = vpack.c.bf16 %v7580, %v7579
  %7587 = vrot.lane.b32.xlu0 %v6384, 40
  %v7588 = vpop.permute.xlu0 %7587
  %7589 = vrot.lane.b32.xlu0 %v6385, 40
  %v7590 = vpop.permute.xlu0 %7589
  %7591 = vrot.lane.b32.xlu0 %v6386, 40
  %v7592 = vpop.permute.xlu0 %7591
  %7593 = vrot.lane.b32.xlu0 %v6387, 40
  %v7594 = vpop.permute.xlu0 %7593
  %7595 = vrot.lane.b32.xlu0 %v6388, 40
  %v7596 = vpop.permute.xlu0 %7595
  %7597 = vrot.lane.b32.xlu0 %v6389, 40
  %v7598 = vpop.permute.xlu0 %7597
  %v7606 = vsel %vm1214, %v7581, 0
  %v7609 = vsel %vm1214, %v7582, 0
  %v7612 = vsel %vm1214, %v7583, 0
  %v7615 = vsel %vm1214, %v7584, 0
  %v7618 = vsel %vm1214, %v7585, 0
  %v7621 = vsel %vm1214, %v7586, 0
  %7623 = vmatpush.bf16.msra.mxu0 0
  %7624 = vmatpush.bf16.msra.mxu0 0
  %7625 = vmatpush.bf16.msra.mxu0 %v7598
  %7626 = vmatpush.bf16.msra.mxu0 %v7596
  %7627 = vmatpush.bf16.msra.mxu0 %v7594
  %7628 = vmatpush.bf16.msra.mxu0 %v7592
  %7629 = vmatpush.bf16.msra.mxu0 %v7590
  %7630 = vmatpush.bf16.msra.mxu0 %v7588
  %7631 = vmatmul.bf16.gmra.mxu0 %v7606
  %v7632 = vpop.f32.mrf.mxu0
  %v7633 = vadd.f32 0.0, %v7632
  %v7634 = vpop.f32.mrf.mxu0
  %v7635 = vadd.f32 0.0, %v7634
  %7636 = vmatmul.bf16.gmra.mxu0 %v7609
  %v7637 = vpop.f32.mrf.mxu0
  %v7638 = vadd.f32 0.0, %v7637
  %v7639 = vpop.f32.mrf.mxu0
  %v7640 = vadd.f32 0.0, %v7639
  %7641 = vmatmul.bf16.gmra.mxu0 %v7612
  %v7642 = vpop.f32.mrf.mxu0
  %v7643 = vadd.f32 0.0, %v7642
  %v7644 = vpop.f32.mrf.mxu0
  %v7645 = vadd.f32 0.0, %v7644
  %7646 = vmatmul.bf16.gmra.mxu0 %v7615
  %v7647 = vpop.f32.mrf.mxu0
  %v7648 = vadd.f32 0.0, %v7647
  %v7649 = vpop.f32.mrf.mxu0
  %v7650 = vadd.f32 0.0, %v7649
  %7651 = vmatmul.bf16.gmra.mxu0 %v7618
  %v7652 = vpop.f32.mrf.mxu0
  %v7653 = vadd.f32 0.0, %v7652
  %v7654 = vpop.f32.mrf.mxu0
  %v7655 = vadd.f32 0.0, %v7654
  %7656 = vmatmul.bf16.gmra.mxu0 %v7621
  %v7657 = vpop.f32.mrf.mxu0
  %v7658 = vadd.f32 0.0, %v7657
  %v7659 = vpop.f32.mrf.mxu0
  %v7660 = vadd.f32 0.0, %v7659
  %7661 = vdwg.mxu0
  %v7662 = vpack.c.bf16 %v7633, %v7633
  %v7663 = vpack.c.bf16 %v7635, %v7635
  %v7664 = vpack.c.bf16 %v7638, %v7638
  %v7665 = vpack.c.bf16 %v7640, %v7640
  %v7666 = vpack.c.bf16 %v7643, %v7643
  %v7667 = vpack.c.bf16 %v7645, %v7645
  %v7668 = vpack.c.bf16 %v7648, %v7648
  %v7669 = vpack.c.bf16 %v7650, %v7650
  %v7670 = vpack.c.bf16 %v7653, %v7653
  %v7671 = vpack.c.bf16 %v7655, %v7655
  %v7672 = vpack.c.bf16 %v7658, %v7658
  %v7673 = vpack.c.bf16 %v7660, %v7660
  %v7686 = vunpack.c.l.b16 %v6690
  %v7687 = vunpack.c.l.b16 %v6691
  %v7688 = vunpack.c.l.b16 %v6692
  %v7689 = vunpack.c.l.b16 %v6693
  %v7690 = vunpack.c.l.b16 %v6694
  %v7691 = vunpack.c.l.b16 %v6695
  %v7692 = vunpack.c.l.b16 %v6696
  %v7693 = vunpack.c.l.b16 %v6697
  %v7694 = vunpack.c.l.b16 %v6698
  %v7695 = vunpack.c.l.b16 %v6699
  %v7696 = vunpack.c.l.b16 %v6700
  %v7697 = vunpack.c.l.b16 %v6701
  %v7698 = vpack.c.b16 %v7687, %v7686
  %v7699 = vpack.c.b16 %v7689, %v7688
  %v7700 = vpack.c.b16 %v7691, %v7690
  %v7701 = vpack.c.b16 %v7693, %v7692
  %v7702 = vpack.c.b16 %v7695, %v7694
  %v7703 = vpack.c.b16 %v7697, %v7696
  %v7716 = vunpack.c.l.b16 %v7014
  %v7717 = vunpack.c.l.b16 %v7015
  %v7718 = vunpack.c.l.b16 %v7016
  %v7719 = vunpack.c.l.b16 %v7017
  %v7720 = vunpack.c.l.b16 %v7018
  %v7721 = vunpack.c.l.b16 %v7019
  %v7722 = vunpack.c.l.b16 %v7020
  %v7723 = vunpack.c.l.b16 %v7021
  %v7724 = vunpack.c.l.b16 %v7022
  %v7725 = vunpack.c.l.b16 %v7023
  %v7726 = vunpack.c.l.b16 %v7024
  %v7727 = vunpack.c.l.b16 %v7025
  %v7728 = vpack.c.b16 %v7717, %v7716
  %v7729 = vpack.c.b16 %v7719, %v7718
  %v7730 = vpack.c.b16 %v7721, %v7720
  %v7731 = vpack.c.b16 %v7723, %v7722
  %v7732 = vpack.c.b16 %v7725, %v7724
  %v7733 = vpack.c.b16 %v7727, %v7726
  %7734 = vrot.lane.b32.xlu0 %v7728, 8
  %v7735 = vpop.permute.xlu0 %7734
  %7736 = vrot.lane.b32.xlu0 %v7729, 8
  %v7737 = vpop.permute.xlu0 %7736
  %7738 = vrot.lane.b32.xlu0 %v7730, 8
  %v7739 = vpop.permute.xlu0 %7738
  %7740 = vrot.lane.b32.xlu0 %v7731, 8
  %v7741 = vpop.permute.xlu0 %7740
  %7742 = vrot.lane.b32.xlu0 %v7732, 8
  %v7743 = vpop.permute.xlu0 %7742
  %7744 = vrot.lane.b32.xlu0 %v7733, 8
  %v7745 = vpop.permute.xlu0 %7744
  %v7758 = vunpack.c.l.b16 %v7338
  %v7759 = vunpack.c.l.b16 %v7339
  %v7760 = vunpack.c.l.b16 %v7340
  %v7761 = vunpack.c.l.b16 %v7341
  %v7762 = vunpack.c.l.b16 %v7342
  %v7763 = vunpack.c.l.b16 %v7343
  %v7764 = vunpack.c.l.b16 %v7344
  %v7765 = vunpack.c.l.b16 %v7345
  %v7766 = vunpack.c.l.b16 %v7346
  %v7767 = vunpack.c.l.b16 %v7347
  %v7768 = vunpack.c.l.b16 %v7348
  %v7769 = vunpack.c.l.b16 %v7349
  %v7770 = vpack.c.b16 %v7759, %v7758
  %v7771 = vpack.c.b16 %v7761, %v7760
  %v7772 = vpack.c.b16 %v7763, %v7762
  %v7773 = vpack.c.b16 %v7765, %v7764
  %v7774 = vpack.c.b16 %v7767, %v7766
  %v7775 = vpack.c.b16 %v7769, %v7768
  %7776 = vrot.lane.b32.xlu0 %v7770, 16
  %v7777 = vpop.permute.xlu0 %7776
  %7778 = vrot.lane.b32.xlu0 %v7771, 16
  %v7779 = vpop.permute.xlu0 %7778
  %7780 = vrot.lane.b32.xlu0 %v7772, 16
  %v7781 = vpop.permute.xlu0 %7780
  %7782 = vrot.lane.b32.xlu0 %v7773, 16
  %v7783 = vpop.permute.xlu0 %7782
  %7784 = vrot.lane.b32.xlu0 %v7774, 16
  %v7785 = vpop.permute.xlu0 %7784
  %7786 = vrot.lane.b32.xlu0 %v7775, 16
  %v7787 = vpop.permute.xlu0 %7786
  %v7800 = vunpack.c.l.b16 %v7662
  %v7801 = vunpack.c.l.b16 %v7663
  %v7802 = vunpack.c.l.b16 %v7664
  %v7803 = vunpack.c.l.b16 %v7665
  %v7804 = vunpack.c.l.b16 %v7666
  %v7805 = vunpack.c.l.b16 %v7667
  %v7806 = vunpack.c.l.b16 %v7668
  %v7807 = vunpack.c.l.b16 %v7669
  %v7808 = vunpack.c.l.b16 %v7670
  %v7809 = vunpack.c.l.b16 %v7671
  %v7810 = vunpack.c.l.b16 %v7672
  %v7811 = vunpack.c.l.b16 %v7673
  %v7812 = vpack.c.b16 %v7801, %v7800
  %v7813 = vpack.c.b16 %v7803, %v7802
  %v7814 = vpack.c.b16 %v7805, %v7804
  %v7815 = vpack.c.b16 %v7807, %v7806
  %v7816 = vpack.c.b16 %v7809, %v7808
  %v7817 = vpack.c.b16 %v7811, %v7810
  %7818 = vrot.lane.b32.xlu0 %v7812, 24
  %v7819 = vpop.permute.xlu0 %7818
  %7820 = vrot.lane.b32.xlu0 %v7813, 24
  %v7821 = vpop.permute.xlu0 %7820
  %7822 = vrot.lane.b32.xlu0 %v7814, 24
  %v7823 = vpop.permute.xlu0 %7822
  %7824 = vrot.lane.b32.xlu0 %v7815, 24
  %v7825 = vpop.permute.xlu0 %7824
  %7826 = vrot.lane.b32.xlu0 %v7816, 24
  %v7827 = vpop.permute.xlu0 %7826
  %7828 = vrot.lane.b32.xlu0 %v7817, 24
  %v7829 = vpop.permute.xlu0 %7828
  %v7832 = vsel %vm1138, %v7698, %v7735
  %v7835 = vsel %vm1138, %v7699, %v7737
  %v7838 = vsel %vm1138, %v7700, %v7739
  %v7841 = vsel %vm1138, %v7701, %v7741
  %v7844 = vsel %vm1138, %v7702, %v7743
  %v7847 = vsel %vm1138, %v7703, %v7745
  %v7849 = vsel %vm2586, %v7832, %v7777
  %v7851 = vsel %vm2586, %v7835, %v7779
  %v7853 = vsel %vm2586, %v7838, %v7781
  %v7855 = vsel %vm2586, %v7841, %v7783
  %v7857 = vsel %vm2586, %v7844, %v7785
  %v7859 = vsel %vm2586, %v7847, %v7787
  %v7861 = vsel %vm2599, %v7849, %v7819
  %v7863 = vsel %vm2599, %v7851, %v7821
  %v7865 = vsel %vm2599, %v7853, %v7823
  %v7867 = vsel %vm2599, %v7855, %v7825
  %v7869 = vsel %vm2599, %v7857, %v7827
  %v7871 = vsel %vm2599, %v7859, %v7829
  %v7884 = vunpack.c.l.b16 %v6348
  %v7885 = vunpack.c.l.b16 %v6349
  %v7886 = vunpack.c.l.b16 %v6350
  %v7887 = vunpack.c.l.b16 %v6351
  %v7888 = vunpack.c.l.b16 %v6352
  %v7889 = vunpack.c.l.b16 %v6353
  %v7890 = vunpack.c.l.b16 %v6354
  %v7891 = vunpack.c.l.b16 %v6355
  %v7892 = vunpack.c.l.b16 %v6356
  %v7893 = vunpack.c.l.b16 %v6357
  %v7894 = vunpack.c.l.b16 %v6358
  %v7895 = vunpack.c.l.b16 %v6359
  %v7896 = vpack.c.b16 %v7885, %v7884
  %v7897 = vpack.c.b16 %v7887, %v7886
  %v7898 = vpack.c.b16 %v7889, %v7888
  %v7899 = vpack.c.b16 %v7891, %v7890
  %v7900 = vpack.c.b16 %v7893, %v7892
  %v7901 = vpack.c.b16 %v7895, %v7894
  %7902 = vrot.lane.b32.xlu0 %v7896, 96
  %v7903 = vpop.permute.xlu0 %7902
  %7904 = vrot.lane.b32.xlu0 %v7897, 96
  %v7905 = vpop.permute.xlu0 %7904
  %7906 = vrot.lane.b32.xlu0 %v7898, 96
  %v7907 = vpop.permute.xlu0 %7906
  %7908 = vrot.lane.b32.xlu0 %v7899, 96
  %v7909 = vpop.permute.xlu0 %7908
  %7910 = vrot.lane.b32.xlu0 %v7900, 96
  %v7911 = vpop.permute.xlu0 %7910
  %7912 = vrot.lane.b32.xlu0 %v7901, 96
  %v7913 = vpop.permute.xlu0 %7912
  %v7915 = vsel %vm1138, %v7896, 0
  %v7918 = vsel %vm1138, %v7897, 0
  %v7921 = vsel %vm1138, %v7898, 0
  %v7924 = vsel %vm1138, %v7899, 0
  %v7927 = vsel %vm1138, %v7900, 0
  %v7930 = vsel %vm1138, %v7901, 0
  %v7933 = vsel %vm1138, %v7903, 0
  %v7936 = vsel %vm1138, %v7905, 0
  %v7939 = vsel %vm1138, %v7907, 0
  %v7942 = vsel %vm1138, %v7909, 0
  %v7945 = vsel %vm1138, %v7911, 0
  %v7948 = vsel %vm1138, %v7913, 0
  %7950 = vmatpush.bf16.xpose.msra.mxu0 0
  %7951 = vmatpush.bf16.xpose.msra.mxu0 0
  %7952 = vmatpush.bf16.xpose.msra.mxu0 %v7948
  %7953 = vmatpush.bf16.xpose.msra.mxu0 %v7945
  %7954 = vmatpush.bf16.xpose.msra.mxu0 %v7942
  %7955 = vmatpush.bf16.xpose.msra.mxu0 %v7939
  %7956 = vmatpush.bf16.xpose.msra.mxu0 %v7936
  %7957 = vmatpush.bf16.xpose.msra.mxu0 %v7933
  %7958 = vmatmul.bf16.gmra.mxu0 %v7915
  %v7959 = vpop.f32.mrf.mxu0
  %v7960 = vadd.f32 0.0, %v7959
  %v7961 = vpop.f32.mrf.mxu0
  %v7962 = vadd.f32 0.0, %v7961
  %7963 = vmatmul.bf16.gmra.mxu0 %v7918
  %v7964 = vpop.f32.mrf.mxu0
  %v7965 = vadd.f32 0.0, %v7964
  %v7966 = vpop.f32.mrf.mxu0
  %v7967 = vadd.f32 0.0, %v7966
  %7968 = vmatmul.bf16.gmra.mxu0 %v7921
  %v7969 = vpop.f32.mrf.mxu0
  %v7970 = vadd.f32 0.0, %v7969
  %v7971 = vpop.f32.mrf.mxu0
  %v7972 = vadd.f32 0.0, %v7971
  %7973 = vmatmul.bf16.gmra.mxu0 %v7924
  %v7974 = vpop.f32.mrf.mxu0
  %v7975 = vadd.f32 0.0, %v7974
  %v7976 = vpop.f32.mrf.mxu0
  %v7977 = vadd.f32 0.0, %v7976
  %7978 = vmatmul.bf16.gmra.mxu0 %v7927
  %v7979 = vpop.f32.mrf.mxu0
  %v7980 = vadd.f32 0.0, %v7979
  %v7981 = vpop.f32.mrf.mxu0
  %v7982 = vadd.f32 0.0, %v7981
  %7983 = vmatmul.bf16.gmra.mxu0 %v7930
  %v7984 = vpop.f32.mrf.mxu0
  %v7985 = vadd.f32 0.0, %v7984
  %v7986 = vpop.f32.mrf.mxu0
  %v7987 = vadd.f32 0.0, %v7986
  %7988 = vdwg.mxu0
  %v7989 = vsel %vm1214, %v7960, -inf
  %7990 = vmax.xlane.f32.xlu0 %v7989
  %v7991 = vpop.xlane.xlu0 %7990
  %v7992 = vsel %vm1214, %v7962, -inf
  %7993 = vmax.xlane.f32.xlu0 %v7992
  %v7994 = vpop.xlane.xlu0 %7993
  %v7995 = vsel %vm1214, %v7965, -inf
  %7996 = vmax.xlane.f32.xlu0 %v7995
  %v7997 = vpop.xlane.xlu0 %7996
  %v7998 = vsel %vm1214, %v7967, -inf
  %7999 = vmax.xlane.f32.xlu0 %v7998
  %v8000 = vpop.xlane.xlu0 %7999
  %v8001 = vsel %vm1214, %v7970, -inf
  %8002 = vmax.xlane.f32.xlu0 %v8001
  %v8003 = vpop.xlane.xlu0 %8002
  %v8004 = vsel %vm1214, %v7972, -inf
  %8005 = vmax.xlane.f32.xlu0 %v8004
  %v8006 = vpop.xlane.xlu0 %8005
  %v8007 = vsel %vm1214, %v7975, -inf
  %8008 = vmax.xlane.f32.xlu0 %v8007
  %v8009 = vpop.xlane.xlu0 %8008
  %v8010 = vsel %vm1214, %v7977, -inf
  %8011 = vmax.xlane.f32.xlu0 %v8010
  %v8012 = vpop.xlane.xlu0 %8011
  %v8013 = vsel %vm1214, %v7980, -inf
  %8014 = vmax.xlane.f32.xlu0 %v8013
  %v8015 = vpop.xlane.xlu0 %8014
  %v8016 = vsel %vm1214, %v7982, -inf
  %8017 = vmax.xlane.f32.xlu0 %v8016
  %v8018 = vpop.xlane.xlu0 %8017
  %v8019 = vsel %vm1214, %v7985, -inf
  %8020 = vmax.xlane.f32.xlu0 %v8019
  %v8021 = vpop.xlane.xlu0 %8020
  %v8022 = vsel %vm1214, %v7987, -inf
  %8023 = vmax.xlane.f32.xlu0 %v8022
  %v8024 = vpop.xlane.xlu0 %8023
  %v8025 = vsub.f32 %v7960, %v7991
  %v8026 = vsub.f32 %v7962, %v7994
  %v8027 = vsub.f32 %v7965, %v7997
  %v8028 = vsub.f32 %v7967, %v8000
  %v8029 = vsub.f32 %v7970, %v8003
  %v8030 = vsub.f32 %v7972, %v8006
  %v8031 = vsub.f32 %v7975, %v8009
  %v8032 = vsub.f32 %v7977, %v8012
  %v8033 = vsub.f32 %v7980, %v8015
  %v8034 = vsub.f32 %v7982, %v8018
  %v8035 = vsub.f32 %v7985, %v8021
  %v8036 = vsub.f32 %v7987, %v8024
  %v8037 = vmul.f32 %v8025, 1.442695
  %v8038 = vpow.pop %v8037
  %v8039 = vmul.f32 %v8026, 1.442695
  %v8040 = vpow.pop %v8039
  %v8041 = vmul.f32 %v8027, 1.442695
  %v8042 = vpow.pop %v8041
  %v8043 = vmul.f32 %v8028, 1.442695
  %v8044 = vpow.pop %v8043
  %v8045 = vmul.f32 %v8029, 1.442695
  %v8046 = vpow.pop %v8045
  %v8047 = vmul.f32 %v8030, 1.442695
  %v8048 = vpow.pop %v8047
  %v8049 = vmul.f32 %v8031, 1.442695
  %v8050 = vpow.pop %v8049
  %v8051 = vmul.f32 %v8032, 1.442695
  %v8052 = vpow.pop %v8051
  %v8053 = vmul.f32 %v8033, 1.442695
  %v8054 = vpow.pop %v8053
  %v8055 = vmul.f32 %v8034, 1.442695
  %v8056 = vpow.pop %v8055
  %v8057 = vmul.f32 %v8035, 1.442695
  %v8058 = vpow.pop %v8057
  %v8059 = vmul.f32 %v8036, 1.442695
  %v8060 = vpow.pop %v8059
  %v8061 = vsel %vm1214, %v8038, 0.0
  %8062 = vadd.xlane.f32.xlu0 %v8061
  %v8063 = vpop.xlane.xlu0 %8062
  %v8064 = vsel %vm1214, %v8040, 0.0
  %8065 = vadd.xlane.f32.xlu0 %v8064
  %v8066 = vpop.xlane.xlu0 %8065
  %v8067 = vsel %vm1214, %v8042, 0.0
  %8068 = vadd.xlane.f32.xlu0 %v8067
  %v8069 = vpop.xlane.xlu0 %8068
  %v8070 = vsel %vm1214, %v8044, 0.0
  %8071 = vadd.xlane.f32.xlu0 %v8070
  %v8072 = vpop.xlane.xlu0 %8071
  %v8073 = vsel %vm1214, %v8046, 0.0
  %8074 = vadd.xlane.f32.xlu0 %v8073
  %v8075 = vpop.xlane.xlu0 %8074
  %v8076 = vsel %vm1214, %v8048, 0.0
  %8077 = vadd.xlane.f32.xlu0 %v8076
  %v8078 = vpop.xlane.xlu0 %8077
  %v8079 = vsel %vm1214, %v8050, 0.0
  %8080 = vadd.xlane.f32.xlu0 %v8079
  %v8081 = vpop.xlane.xlu0 %8080
  %v8082 = vsel %vm1214, %v8052, 0.0
  %8083 = vadd.xlane.f32.xlu0 %v8082
  %v8084 = vpop.xlane.xlu0 %8083
  %v8085 = vsel %vm1214, %v8054, 0.0
  %8086 = vadd.xlane.f32.xlu0 %v8085
  %v8087 = vpop.xlane.xlu0 %8086
  %v8088 = vsel %vm1214, %v8056, 0.0
  %8089 = vadd.xlane.f32.xlu0 %v8088
  %v8090 = vpop.xlane.xlu0 %8089
  %v8091 = vsel %vm1214, %v8058, 0.0
  %8092 = vadd.xlane.f32.xlu0 %v8091
  %v8093 = vpop.xlane.xlu0 %8092
  %v8094 = vsel %vm1214, %v8060, 0.0
  %8095 = vadd.xlane.f32.xlu0 %v8094
  %v8096 = vpop.xlane.xlu0 %8095
  %v8097 = vrcp.pop %v8063
  %v8098 = vrcp.pop %v8066
  %v8099 = vrcp.pop %v8069
  %v8100 = vrcp.pop %v8072
  %v8101 = vrcp.pop %v8075
  %v8102 = vrcp.pop %v8078
  %v8103 = vrcp.pop %v8081
  %v8104 = vrcp.pop %v8084
  %v8105 = vrcp.pop %v8087
  %v8106 = vrcp.pop %v8090
  %v8107 = vrcp.pop %v8093
  %v8108 = vrcp.pop %v8096
  %v8109 = vmul.f32 %v8038, %v8097
  %v8110 = vmul.f32 %v8040, %v8098
  %v8111 = vmul.f32 %v8042, %v8099
  %v8112 = vmul.f32 %v8044, %v8100
  %v8113 = vmul.f32 %v8046, %v8101
  %v8114 = vmul.f32 %v8048, %v8102
  %v8115 = vmul.f32 %v8050, %v8103
  %v8116 = vmul.f32 %v8052, %v8104
  %v8117 = vmul.f32 %v8054, %v8105
  %v8118 = vmul.f32 %v8056, %v8106
  %v8119 = vmul.f32 %v8058, %v8107
  %v8120 = vmul.f32 %v8060, %v8108
  %v8121 = vpack.c.bf16 %v8110, %v8109
  %v8122 = vpack.c.bf16 %v8112, %v8111
  %v8123 = vpack.c.bf16 %v8114, %v8113
  %v8124 = vpack.c.bf16 %v8116, %v8115
  %v8125 = vpack.c.bf16 %v8118, %v8117
  %v8126 = vpack.c.bf16 %v8120, %v8119
  %8127 = vrot.lane.b32.xlu0 %v7896, 64
  %v8128 = vpop.permute.xlu0 %8127
  %8129 = vrot.lane.b32.xlu0 %v7897, 64
  %v8130 = vpop.permute.xlu0 %8129
  %8131 = vrot.lane.b32.xlu0 %v7898, 64
  %v8132 = vpop.permute.xlu0 %8131
  %8133 = vrot.lane.b32.xlu0 %v7899, 64
  %v8134 = vpop.permute.xlu0 %8133
  %8135 = vrot.lane.b32.xlu0 %v7900, 64
  %v8136 = vpop.permute.xlu0 %8135
  %8137 = vrot.lane.b32.xlu0 %v7901, 64
  %v8138 = vpop.permute.xlu0 %8137
  %v8146 = vsel %vm1214, %v8121, 0
  %v8149 = vsel %vm1214, %v8122, 0
  %v8152 = vsel %vm1214, %v8123, 0
  %v8155 = vsel %vm1214, %v8124, 0
  %v8158 = vsel %vm1214, %v8125, 0
  %v8161 = vsel %vm1214, %v8126, 0
  %8163 = vmatpush.bf16.msra.mxu0 0
  %8164 = vmatpush.bf16.msra.mxu0 0
  %8165 = vmatpush.bf16.msra.mxu0 %v8138
  %8166 = vmatpush.bf16.msra.mxu0 %v8136
  %8167 = vmatpush.bf16.msra.mxu0 %v8134
  %8168 = vmatpush.bf16.msra.mxu0 %v8132
  %8169 = vmatpush.bf16.msra.mxu0 %v8130
  %8170 = vmatpush.bf16.msra.mxu0 %v8128
  %8171 = vmatmul.bf16.gmra.mxu0 %v8146
  %v8172 = vpop.f32.mrf.mxu0
  %v8173 = vadd.f32 0.0, %v8172
  %v8174 = vpop.f32.mrf.mxu0
  %v8175 = vadd.f32 0.0, %v8174
  %8176 = vmatmul.bf16.gmra.mxu0 %v8149
  %v8177 = vpop.f32.mrf.mxu0
  %v8178 = vadd.f32 0.0, %v8177
  %v8179 = vpop.f32.mrf.mxu0
  %v8180 = vadd.f32 0.0, %v8179
  %8181 = vmatmul.bf16.gmra.mxu0 %v8152
  %v8182 = vpop.f32.mrf.mxu0
  %v8183 = vadd.f32 0.0, %v8182
  %v8184 = vpop.f32.mrf.mxu0
  %v8185 = vadd.f32 0.0, %v8184
  %8186 = vmatmul.bf16.gmra.mxu0 %v8155
  %v8187 = vpop.f32.mrf.mxu0
  %v8188 = vadd.f32 0.0, %v8187
  %v8189 = vpop.f32.mrf.mxu0
  %v8190 = vadd.f32 0.0, %v8189
  %8191 = vmatmul.bf16.gmra.mxu0 %v8158
  %v8192 = vpop.f32.mrf.mxu0
  %v8193 = vadd.f32 0.0, %v8192
  %v8194 = vpop.f32.mrf.mxu0
  %v8195 = vadd.f32 0.0, %v8194
  %8196 = vmatmul.bf16.gmra.mxu0 %v8161
  %v8197 = vpop.f32.mrf.mxu0
  %v8198 = vadd.f32 0.0, %v8197
  %v8199 = vpop.f32.mrf.mxu0
  %v8200 = vadd.f32 0.0, %v8199
  %8201 = vdwg.mxu0
  %v8202 = vpack.c.bf16 %v8173, %v8173
  %v8203 = vpack.c.bf16 %v8175, %v8175
  %v8204 = vpack.c.bf16 %v8178, %v8178
  %v8205 = vpack.c.bf16 %v8180, %v8180
  %v8206 = vpack.c.bf16 %v8183, %v8183
  %v8207 = vpack.c.bf16 %v8185, %v8185
  %v8208 = vpack.c.bf16 %v8188, %v8188
  %v8209 = vpack.c.bf16 %v8190, %v8190
  %v8210 = vpack.c.bf16 %v8193, %v8193
  %v8211 = vpack.c.bf16 %v8195, %v8195
  %v8212 = vpack.c.bf16 %v8198, %v8198
  %v8213 = vpack.c.bf16 %v8200, %v8200
  %8214 = vrot.lane.b32.xlu0 %v7896, 120
  %v8215 = vpop.permute.xlu0 %8214
  %8216 = vrot.lane.b32.xlu0 %v7897, 120
  %v8217 = vpop.permute.xlu0 %8216
  %8218 = vrot.lane.b32.xlu0 %v7898, 120
  %v8219 = vpop.permute.xlu0 %8218
  %8220 = vrot.lane.b32.xlu0 %v7899, 120
  %v8221 = vpop.permute.xlu0 %8220
  %8222 = vrot.lane.b32.xlu0 %v7900, 120
  %v8223 = vpop.permute.xlu0 %8222
  %8224 = vrot.lane.b32.xlu0 %v7901, 120
  %v8225 = vpop.permute.xlu0 %8224
  %8226 = vrot.lane.b32.xlu0 %v7896, 88
  %v8227 = vpop.permute.xlu0 %8226
  %8228 = vrot.lane.b32.xlu0 %v7897, 88
  %v8229 = vpop.permute.xlu0 %8228
  %8230 = vrot.lane.b32.xlu0 %v7898, 88
  %v8231 = vpop.permute.xlu0 %8230
  %8232 = vrot.lane.b32.xlu0 %v7899, 88
  %v8233 = vpop.permute.xlu0 %8232
  %8234 = vrot.lane.b32.xlu0 %v7900, 88
  %v8235 = vpop.permute.xlu0 %8234
  %8236 = vrot.lane.b32.xlu0 %v7901, 88
  %v8237 = vpop.permute.xlu0 %8236
  %v8239 = vsel %vm1138, %v8215, 0
  %v8242 = vsel %vm1138, %v8217, 0
  %v8245 = vsel %vm1138, %v8219, 0
  %v8248 = vsel %vm1138, %v8221, 0
  %v8251 = vsel %vm1138, %v8223, 0
  %v8254 = vsel %vm1138, %v8225, 0
  %v8257 = vsel %vm1138, %v8227, 0
  %v8260 = vsel %vm1138, %v8229, 0
  %v8263 = vsel %vm1138, %v8231, 0
  %v8266 = vsel %vm1138, %v8233, 0
  %v8269 = vsel %vm1138, %v8235, 0
  %v8272 = vsel %vm1138, %v8237, 0
  %8274 = vmatpush.bf16.xpose.msra.mxu0 0
  %8275 = vmatpush.bf16.xpose.msra.mxu0 0
  %8276 = vmatpush.bf16.xpose.msra.mxu0 %v8272
  %8277 = vmatpush.bf16.xpose.msra.mxu0 %v8269
  %8278 = vmatpush.bf16.xpose.msra.mxu0 %v8266
  %8279 = vmatpush.bf16.xpose.msra.mxu0 %v8263
  %8280 = vmatpush.bf16.xpose.msra.mxu0 %v8260
  %8281 = vmatpush.bf16.xpose.msra.mxu0 %v8257
  %8282 = vmatmul.bf16.gmra.mxu0 %v8239
  %v8283 = vpop.f32.mrf.mxu0
  %v8284 = vadd.f32 0.0, %v8283
  %v8285 = vpop.f32.mrf.mxu0
  %v8286 = vadd.f32 0.0, %v8285
  %8287 = vmatmul.bf16.gmra.mxu0 %v8242
  %v8288 = vpop.f32.mrf.mxu0
  %v8289 = vadd.f32 0.0, %v8288
  %v8290 = vpop.f32.mrf.mxu0
  %v8291 = vadd.f32 0.0, %v8290
  %8292 = vmatmul.bf16.gmra.mxu0 %v8245
  %v8293 = vpop.f32.mrf.mxu0
  %v8294 = vadd.f32 0.0, %v8293
  %v8295 = vpop.f32.mrf.mxu0
  %v8296 = vadd.f32 0.0, %v8295
  %8297 = vmatmul.bf16.gmra.mxu0 %v8248
  %v8298 = vpop.f32.mrf.mxu0
  %v8299 = vadd.f32 0.0, %v8298
  %v8300 = vpop.f32.mrf.mxu0
  %v8301 = vadd.f32 0.0, %v8300
  %8302 = vmatmul.bf16.gmra.mxu0 %v8251
  %v8303 = vpop.f32.mrf.mxu0
  %v8304 = vadd.f32 0.0, %v8303
  %v8305 = vpop.f32.mrf.mxu0
  %v8306 = vadd.f32 0.0, %v8305
  %8307 = vmatmul.bf16.gmra.mxu0 %v8254
  %v8308 = vpop.f32.mrf.mxu0
  %v8309 = vadd.f32 0.0, %v8308
  %v8310 = vpop.f32.mrf.mxu0
  %v8311 = vadd.f32 0.0, %v8310
  %8312 = vdwg.mxu0
  %v8313 = vsel %vm1214, %v8284, -inf
  %8314 = vmax.xlane.f32.xlu0 %v8313
  %v8315 = vpop.xlane.xlu0 %8314
  %v8316 = vsel %vm1214, %v8286, -inf
  %8317 = vmax.xlane.f32.xlu0 %v8316
  %v8318 = vpop.xlane.xlu0 %8317
  %v8319 = vsel %vm1214, %v8289, -inf
  %8320 = vmax.xlane.f32.xlu0 %v8319
  %v8321 = vpop.xlane.xlu0 %8320
  %v8322 = vsel %vm1214, %v8291, -inf
  %8323 = vmax.xlane.f32.xlu0 %v8322
  %v8324 = vpop.xlane.xlu0 %8323
  %v8325 = vsel %vm1214, %v8294, -inf
  %8326 = vmax.xlane.f32.xlu0 %v8325
  %v8327 = vpop.xlane.xlu0 %8326
  %v8328 = vsel %vm1214, %v8296, -inf
  %8329 = vmax.xlane.f32.xlu0 %v8328
  %v8330 = vpop.xlane.xlu0 %8329
  %v8331 = vsel %vm1214, %v8299, -inf
  %8332 = vmax.xlane.f32.xlu0 %v8331
  %v8333 = vpop.xlane.xlu0 %8332
  %v8334 = vsel %vm1214, %v8301, -inf
  %8335 = vmax.xlane.f32.xlu0 %v8334
  %v8336 = vpop.xlane.xlu0 %8335
  %v8337 = vsel %vm1214, %v8304, -inf
  %8338 = vmax.xlane.f32.xlu0 %v8337
  %v8339 = vpop.xlane.xlu0 %8338
  %v8340 = vsel %vm1214, %v8306, -inf
  %8341 = vmax.xlane.f32.xlu0 %v8340
  %v8342 = vpop.xlane.xlu0 %8341
  %v8343 = vsel %vm1214, %v8309, -inf
  %8344 = vmax.xlane.f32.xlu0 %v8343
  %v8345 = vpop.xlane.xlu0 %8344
  %v8346 = vsel %vm1214, %v8311, -inf
  %8347 = vmax.xlane.f32.xlu0 %v8346
  %v8348 = vpop.xlane.xlu0 %8347
  %v8349 = vsub.f32 %v8284, %v8315
  %v8350 = vsub.f32 %v8286, %v8318
  %v8351 = vsub.f32 %v8289, %v8321
  %v8352 = vsub.f32 %v8291, %v8324
  %v8353 = vsub.f32 %v8294, %v8327
  %v8354 = vsub.f32 %v8296, %v8330
  %v8355 = vsub.f32 %v8299, %v8333
  %v8356 = vsub.f32 %v8301, %v8336
  %v8357 = vsub.f32 %v8304, %v8339
  %v8358 = vsub.f32 %v8306, %v8342
  %v8359 = vsub.f32 %v8309, %v8345
  %v8360 = vsub.f32 %v8311, %v8348
  %v8361 = vmul.f32 %v8349, 1.442695
  %v8362 = vpow.pop %v8361
  %v8363 = vmul.f32 %v8350, 1.442695
  %v8364 = vpow.pop %v8363
  %v8365 = vmul.f32 %v8351, 1.442695
  %v8366 = vpow.pop %v8365
  %v8367 = vmul.f32 %v8352, 1.442695
  %v8368 = vpow.pop %v8367
  %v8369 = vmul.f32 %v8353, 1.442695
  %v8370 = vpow.pop %v8369
  %v8371 = vmul.f32 %v8354, 1.442695
  %v8372 = vpow.pop %v8371
  %v8373 = vmul.f32 %v8355, 1.442695
  %v8374 = vpow.pop %v8373
  %v8375 = vmul.f32 %v8356, 1.442695
  %v8376 = vpow.pop %v8375
  %v8377 = vmul.f32 %v8357, 1.442695
  %v8378 = vpow.pop %v8377
  %v8379 = vmul.f32 %v8358, 1.442695
  %v8380 = vpow.pop %v8379
  %v8381 = vmul.f32 %v8359, 1.442695
  %v8382 = vpow.pop %v8381
  %v8383 = vmul.f32 %v8360, 1.442695
  %v8384 = vpow.pop %v8383
  %v8385 = vsel %vm1214, %v8362, 0.0
  %8386 = vadd.xlane.f32.xlu0 %v8385
  %v8387 = vpop.xlane.xlu0 %8386
  %v8388 = vsel %vm1214, %v8364, 0.0
  %8389 = vadd.xlane.f32.xlu0 %v8388
  %v8390 = vpop.xlane.xlu0 %8389
  %v8391 = vsel %vm1214, %v8366, 0.0
  %8392 = vadd.xlane.f32.xlu0 %v8391
  %v8393 = vpop.xlane.xlu0 %8392
  %v8394 = vsel %vm1214, %v8368, 0.0
  %8395 = vadd.xlane.f32.xlu0 %v8394
  %v8396 = vpop.xlane.xlu0 %8395
  %v8397 = vsel %vm1214, %v8370, 0.0
  %8398 = vadd.xlane.f32.xlu0 %v8397
  %v8399 = vpop.xlane.xlu0 %8398
  %v8400 = vsel %vm1214, %v8372, 0.0
  %8401 = vadd.xlane.f32.xlu0 %v8400
  %v8402 = vpop.xlane.xlu0 %8401
  %v8403 = vsel %vm1214, %v8374, 0.0
  %8404 = vadd.xlane.f32.xlu0 %v8403
  %v8405 = vpop.xlane.xlu0 %8404
  %v8406 = vsel %vm1214, %v8376, 0.0
  %8407 = vadd.xlane.f32.xlu0 %v8406
  %v8408 = vpop.xlane.xlu0 %8407
  %v8409 = vsel %vm1214, %v8378, 0.0
  %8410 = vadd.xlane.f32.xlu0 %v8409
  %v8411 = vpop.xlane.xlu0 %8410
  %v8412 = vsel %vm1214, %v8380, 0.0
  %8413 = vadd.xlane.f32.xlu0 %v8412
  %v8414 = vpop.xlane.xlu0 %8413
  %v8415 = vsel %vm1214, %v8382, 0.0
  %8416 = vadd.xlane.f32.xlu0 %v8415
  %v8417 = vpop.xlane.xlu0 %8416
  %v8418 = vsel %vm1214, %v8384, 0.0
  %8419 = vadd.xlane.f32.xlu0 %v8418
  %v8420 = vpop.xlane.xlu0 %8419
  %v8421 = vrcp.pop %v8387
  %v8422 = vrcp.pop %v8390
  %v8423 = vrcp.pop %v8393
  %v8424 = vrcp.pop %v8396
  %v8425 = vrcp.pop %v8399
  %v8426 = vrcp.pop %v8402
  %v8427 = vrcp.pop %v8405
  %v8428 = vrcp.pop %v8408
  %v8429 = vrcp.pop %v8411
  %v8430 = vrcp.pop %v8414
  %v8431 = vrcp.pop %v8417
  %v8432 = vrcp.pop %v8420
  %v8433 = vmul.f32 %v8362, %v8421
  %v8434 = vmul.f32 %v8364, %v8422
  %v8435 = vmul.f32 %v8366, %v8423
  %v8436 = vmul.f32 %v8368, %v8424
  %v8437 = vmul.f32 %v8370, %v8425
  %v8438 = vmul.f32 %v8372, %v8426
  %v8439 = vmul.f32 %v8374, %v8427
  %v8440 = vmul.f32 %v8376, %v8428
  %v8441 = vmul.f32 %v8378, %v8429
  %v8442 = vmul.f32 %v8380, %v8430
  %v8443 = vmul.f32 %v8382, %v8431
  %v8444 = vmul.f32 %v8384, %v8432
  %v8445 = vpack.c.bf16 %v8434, %v8433
  %v8446 = vpack.c.bf16 %v8436, %v8435
  %v8447 = vpack.c.bf16 %v8438, %v8437
  %v8448 = vpack.c.bf16 %v8440, %v8439
  %v8449 = vpack.c.bf16 %v8442, %v8441
  %v8450 = vpack.c.bf16 %v8444, %v8443
  %8451 = vrot.lane.b32.xlu0 %v7896, 56
  %v8452 = vpop.permute.xlu0 %8451
  %8453 = vrot.lane.b32.xlu0 %v7897, 56
  %v8454 = vpop.permute.xlu0 %8453
  %8455 = vrot.lane.b32.xlu0 %v7898, 56
  %v8456 = vpop.permute.xlu0 %8455
  %8457 = vrot.lane.b32.xlu0 %v7899, 56
  %v8458 = vpop.permute.xlu0 %8457
  %8459 = vrot.lane.b32.xlu0 %v7900, 56
  %v8460 = vpop.permute.xlu0 %8459
  %8461 = vrot.lane.b32.xlu0 %v7901, 56
  %v8462 = vpop.permute.xlu0 %8461
  %v8470 = vsel %vm1214, %v8445, 0
  %v8473 = vsel %vm1214, %v8446, 0
  %v8476 = vsel %vm1214, %v8447, 0
  %v8479 = vsel %vm1214, %v8448, 0
  %v8482 = vsel %vm1214, %v8449, 0
  %v8485 = vsel %vm1214, %v8450, 0
  %8487 = vmatpush.bf16.msra.mxu0 0
  %8488 = vmatpush.bf16.msra.mxu0 0
  %8489 = vmatpush.bf16.msra.mxu0 %v8462
  %8490 = vmatpush.bf16.msra.mxu0 %v8460
  %8491 = vmatpush.bf16.msra.mxu0 %v8458
  %8492 = vmatpush.bf16.msra.mxu0 %v8456
  %8493 = vmatpush.bf16.msra.mxu0 %v8454
  %8494 = vmatpush.bf16.msra.mxu0 %v8452
  %8495 = vmatmul.bf16.gmra.mxu0 %v8470
  %v8496 = vpop.f32.mrf.mxu0
  %v8497 = vadd.f32 0.0, %v8496
  %v8498 = vpop.f32.mrf.mxu0
  %v8499 = vadd.f32 0.0, %v8498
  %8500 = vmatmul.bf16.gmra.mxu0 %v8473
  %v8501 = vpop.f32.mrf.mxu0
  %v8502 = vadd.f32 0.0, %v8501
  %v8503 = vpop.f32.mrf.mxu0
  %v8504 = vadd.f32 0.0, %v8503
  %8505 = vmatmul.bf16.gmra.mxu0 %v8476
  %v8506 = vpop.f32.mrf.mxu0
  %v8507 = vadd.f32 0.0, %v8506
  %v8508 = vpop.f32.mrf.mxu0
  %v8509 = vadd.f32 0.0, %v8508
  %8510 = vmatmul.bf16.gmra.mxu0 %v8479
  %v8511 = vpop.f32.mrf.mxu0
  %v8512 = vadd.f32 0.0, %v8511
  %v8513 = vpop.f32.mrf.mxu0
  %v8514 = vadd.f32 0.0, %v8513
  %8515 = vmatmul.bf16.gmra.mxu0 %v8482
  %v8516 = vpop.f32.mrf.mxu0
  %v8517 = vadd.f32 0.0, %v8516
  %v8518 = vpop.f32.mrf.mxu0
  %v8519 = vadd.f32 0.0, %v8518
  %8520 = vmatmul.bf16.gmra.mxu0 %v8485
  %v8521 = vpop.f32.mrf.mxu0
  %v8522 = vadd.f32 0.0, %v8521
  %v8523 = vpop.f32.mrf.mxu0
  %v8524 = vadd.f32 0.0, %v8523
  %8525 = vdwg.mxu0
  %v8526 = vpack.c.bf16 %v8497, %v8497
  %v8527 = vpack.c.bf16 %v8499, %v8499
  %v8528 = vpack.c.bf16 %v8502, %v8502
  %v8529 = vpack.c.bf16 %v8504, %v8504
  %v8530 = vpack.c.bf16 %v8507, %v8507
  %v8531 = vpack.c.bf16 %v8509, %v8509
  %v8532 = vpack.c.bf16 %v8512, %v8512
  %v8533 = vpack.c.bf16 %v8514, %v8514
  %v8534 = vpack.c.bf16 %v8517, %v8517
  %v8535 = vpack.c.bf16 %v8519, %v8519
  %v8536 = vpack.c.bf16 %v8522, %v8522
  %v8537 = vpack.c.bf16 %v8524, %v8524
  %8538 = vrot.lane.b32.xlu0 %v7896, 112
  %v8539 = vpop.permute.xlu0 %8538
  %8540 = vrot.lane.b32.xlu0 %v7897, 112
  %v8541 = vpop.permute.xlu0 %8540
  %8542 = vrot.lane.b32.xlu0 %v7898, 112
  %v8543 = vpop.permute.xlu0 %8542
  %8544 = vrot.lane.b32.xlu0 %v7899, 112
  %v8545 = vpop.permute.xlu0 %8544
  %8546 = vrot.lane.b32.xlu0 %v7900, 112
  %v8547 = vpop.permute.xlu0 %8546
  %8548 = vrot.lane.b32.xlu0 %v7901, 112
  %v8549 = vpop.permute.xlu0 %8548
  %8550 = vrot.lane.b32.xlu0 %v7896, 80
  %v8551 = vpop.permute.xlu0 %8550
  %8552 = vrot.lane.b32.xlu0 %v7897, 80
  %v8553 = vpop.permute.xlu0 %8552
  %8554 = vrot.lane.b32.xlu0 %v7898, 80
  %v8555 = vpop.permute.xlu0 %8554
  %8556 = vrot.lane.b32.xlu0 %v7899, 80
  %v8557 = vpop.permute.xlu0 %8556
  %8558 = vrot.lane.b32.xlu0 %v7900, 80
  %v8559 = vpop.permute.xlu0 %8558
  %8560 = vrot.lane.b32.xlu0 %v7901, 80
  %v8561 = vpop.permute.xlu0 %8560
  %v8563 = vsel %vm1138, %v8539, 0
  %v8566 = vsel %vm1138, %v8541, 0
  %v8569 = vsel %vm1138, %v8543, 0
  %v8572 = vsel %vm1138, %v8545, 0
  %v8575 = vsel %vm1138, %v8547, 0
  %v8578 = vsel %vm1138, %v8549, 0
  %v8581 = vsel %vm1138, %v8551, 0
  %v8584 = vsel %vm1138, %v8553, 0
  %v8587 = vsel %vm1138, %v8555, 0
  %v8590 = vsel %vm1138, %v8557, 0
  %v8593 = vsel %vm1138, %v8559, 0
  %v8596 = vsel %vm1138, %v8561, 0
  %8598 = vmatpush.bf16.xpose.msra.mxu0 0
  %8599 = vmatpush.bf16.xpose.msra.mxu0 0
  %8600 = vmatpush.bf16.xpose.msra.mxu0 %v8596
  %8601 = vmatpush.bf16.xpose.msra.mxu0 %v8593
  %8602 = vmatpush.bf16.xpose.msra.mxu0 %v8590
  %8603 = vmatpush.bf16.xpose.msra.mxu0 %v8587
  %8604 = vmatpush.bf16.xpose.msra.mxu0 %v8584
  %8605 = vmatpush.bf16.xpose.msra.mxu0 %v8581
  %8606 = vmatmul.bf16.gmra.mxu0 %v8563
  %v8607 = vpop.f32.mrf.mxu0
  %v8608 = vadd.f32 0.0, %v8607
  %v8609 = vpop.f32.mrf.mxu0
  %v8610 = vadd.f32 0.0, %v8609
  %8611 = vmatmul.bf16.gmra.mxu0 %v8566
  %v8612 = vpop.f32.mrf.mxu0
  %v8613 = vadd.f32 0.0, %v8612
  %v8614 = vpop.f32.mrf.mxu0
  %v8615 = vadd.f32 0.0, %v8614
  %8616 = vmatmul.bf16.gmra.mxu0 %v8569
  %v8617 = vpop.f32.mrf.mxu0
  %v8618 = vadd.f32 0.0, %v8617
  %v8619 = vpop.f32.mrf.mxu0
  %v8620 = vadd.f32 0.0, %v8619
  %8621 = vmatmul.bf16.gmra.mxu0 %v8572
  %v8622 = vpop.f32.mrf.mxu0
  %v8623 = vadd.f32 0.0, %v8622
  %v8624 = vpop.f32.mrf.mxu0
  %v8625 = vadd.f32 0.0, %v8624
  %8626 = vmatmul.bf16.gmra.mxu0 %v8575
  %v8627 = vpop.f32.mrf.mxu0
  %v8628 = vadd.f32 0.0, %v8627
  %v8629 = vpop.f32.mrf.mxu0
  %v8630 = vadd.f32 0.0, %v8629
  %8631 = vmatmul.bf16.gmra.mxu0 %v8578
  %v8632 = vpop.f32.mrf.mxu0
  %v8633 = vadd.f32 0.0, %v8632
  %v8634 = vpop.f32.mrf.mxu0
  %v8635 = vadd.f32 0.0, %v8634
  %8636 = vdwg.mxu0
  %v8637 = vsel %vm1214, %v8608, -inf
  %8638 = vmax.xlane.f32.xlu0 %v8637
  %v8639 = vpop.xlane.xlu0 %8638
  %v8640 = vsel %vm1214, %v8610, -inf
  %8641 = vmax.xlane.f32.xlu0 %v8640
  %v8642 = vpop.xlane.xlu0 %8641
  %v8643 = vsel %vm1214, %v8613, -inf
  %8644 = vmax.xlane.f32.xlu0 %v8643
  %v8645 = vpop.xlane.xlu0 %8644
  %v8646 = vsel %vm1214, %v8615, -inf
  %8647 = vmax.xlane.f32.xlu0 %v8646
  %v8648 = vpop.xlane.xlu0 %8647
  %v8649 = vsel %vm1214, %v8618, -inf
  %8650 = vmax.xlane.f32.xlu0 %v8649
  %v8651 = vpop.xlane.xlu0 %8650
  %v8652 = vsel %vm1214, %v8620, -inf
  %8653 = vmax.xlane.f32.xlu0 %v8652
  %v8654 = vpop.xlane.xlu0 %8653
  %v8655 = vsel %vm1214, %v8623, -inf
  %8656 = vmax.xlane.f32.xlu0 %v8655
  %v8657 = vpop.xlane.xlu0 %8656
  %v8658 = vsel %vm1214, %v8625, -inf
  %8659 = vmax.xlane.f32.xlu0 %v8658
  %v8660 = vpop.xlane.xlu0 %8659
  %v8661 = vsel %vm1214, %v8628, -inf
  %8662 = vmax.xlane.f32.xlu0 %v8661
  %v8663 = vpop.xlane.xlu0 %8662
  %v8664 = vsel %vm1214, %v8630, -inf
  %8665 = vmax.xlane.f32.xlu0 %v8664
  %v8666 = vpop.xlane.xlu0 %8665
  %v8667 = vsel %vm1214, %v8633, -inf
  %8668 = vmax.xlane.f32.xlu0 %v8667
  %v8669 = vpop.xlane.xlu0 %8668
  %v8670 = vsel %vm1214, %v8635, -inf
  %8671 = vmax.xlane.f32.xlu0 %v8670
  %v8672 = vpop.xlane.xlu0 %8671
  %v8673 = vsub.f32 %v8608, %v8639
  %v8674 = vsub.f32 %v8610, %v8642
  %v8675 = vsub.f32 %v8613, %v8645
  %v8676 = vsub.f32 %v8615, %v8648
  %v8677 = vsub.f32 %v8618, %v8651
  %v8678 = vsub.f32 %v8620, %v8654
  %v8679 = vsub.f32 %v8623, %v8657
  %v8680 = vsub.f32 %v8625, %v8660
  %v8681 = vsub.f32 %v8628, %v8663
  %v8682 = vsub.f32 %v8630, %v8666
  %v8683 = vsub.f32 %v8633, %v8669
  %v8684 = vsub.f32 %v8635, %v8672
  %v8685 = vmul.f32 %v8673, 1.442695
  %v8686 = vpow.pop %v8685
  %v8687 = vmul.f32 %v8674, 1.442695
  %v8688 = vpow.pop %v8687
  %v8689 = vmul.f32 %v8675, 1.442695
  %v8690 = vpow.pop %v8689
  %v8691 = vmul.f32 %v8676, 1.442695
  %v8692 = vpow.pop %v8691
  %v8693 = vmul.f32 %v8677, 1.442695
  %v8694 = vpow.pop %v8693
  %v8695 = vmul.f32 %v8678, 1.442695
  %v8696 = vpow.pop %v8695
  %v8697 = vmul.f32 %v8679, 1.442695
  %v8698 = vpow.pop %v8697
  %v8699 = vmul.f32 %v8680, 1.442695
  %v8700 = vpow.pop %v8699
  %v8701 = vmul.f32 %v8681, 1.442695
  %v8702 = vpow.pop %v8701
  %v8703 = vmul.f32 %v8682, 1.442695
  %v8704 = vpow.pop %v8703
  %v8705 = vmul.f32 %v8683, 1.442695
  %v8706 = vpow.pop %v8705
  %v8707 = vmul.f32 %v8684, 1.442695
  %v8708 = vpow.pop %v8707
  %v8709 = vsel %vm1214, %v8686, 0.0
  %8710 = vadd.xlane.f32.xlu0 %v8709
  %v8711 = vpop.xlane.xlu0 %8710
  %v8712 = vsel %vm1214, %v8688, 0.0
  %8713 = vadd.xlane.f32.xlu0 %v8712
  %v8714 = vpop.xlane.xlu0 %8713
  %v8715 = vsel %vm1214, %v8690, 0.0
  %8716 = vadd.xlane.f32.xlu0 %v8715
  %v8717 = vpop.xlane.xlu0 %8716
  %v8718 = vsel %vm1214, %v8692, 0.0
  %8719 = vadd.xlane.f32.xlu0 %v8718
  %v8720 = vpop.xlane.xlu0 %8719
  %v8721 = vsel %vm1214, %v8694, 0.0
  %8722 = vadd.xlane.f32.xlu0 %v8721
  %v8723 = vpop.xlane.xlu0 %8722
  %v8724 = vsel %vm1214, %v8696, 0.0
  %8725 = vadd.xlane.f32.xlu0 %v8724
  %v8726 = vpop.xlane.xlu0 %8725
  %v8727 = vsel %vm1214, %v8698, 0.0
  %8728 = vadd.xlane.f32.xlu0 %v8727
  %v8729 = vpop.xlane.xlu0 %8728
  %v8730 = vsel %vm1214, %v8700, 0.0
  %8731 = vadd.xlane.f32.xlu0 %v8730
  %v8732 = vpop.xlane.xlu0 %8731
  %v8733 = vsel %vm1214, %v8702, 0.0
  %8734 = vadd.xlane.f32.xlu0 %v8733
  %v8735 = vpop.xlane.xlu0 %8734
  %v8736 = vsel %vm1214, %v8704, 0.0
  %8737 = vadd.xlane.f32.xlu0 %v8736
  %v8738 = vpop.xlane.xlu0 %8737
  %v8739 = vsel %vm1214, %v8706, 0.0
  %8740 = vadd.xlane.f32.xlu0 %v8739
  %v8741 = vpop.xlane.xlu0 %8740
  %v8742 = vsel %vm1214, %v8708, 0.0
  %8743 = vadd.xlane.f32.xlu0 %v8742
  %v8744 = vpop.xlane.xlu0 %8743
  %v8745 = vrcp.pop %v8711
  %v8746 = vrcp.pop %v8714
  %v8747 = vrcp.pop %v8717
  %v8748 = vrcp.pop %v8720
  %v8749 = vrcp.pop %v8723
  %v8750 = vrcp.pop %v8726
  %v8751 = vrcp.pop %v8729
  %v8752 = vrcp.pop %v8732
  %v8753 = vrcp.pop %v8735
  %v8754 = vrcp.pop %v8738
  %v8755 = vrcp.pop %v8741
  %v8756 = vrcp.pop %v8744
  %v8757 = vmul.f32 %v8686, %v8745
  %v8758 = vmul.f32 %v8688, %v8746
  %v8759 = vmul.f32 %v8690, %v8747
  %v8760 = vmul.f32 %v8692, %v8748
  %v8761 = vmul.f32 %v8694, %v8749
  %v8762 = vmul.f32 %v8696, %v8750
  %v8763 = vmul.f32 %v8698, %v8751
  %v8764 = vmul.f32 %v8700, %v8752
  %v8765 = vmul.f32 %v8702, %v8753
  %v8766 = vmul.f32 %v8704, %v8754
  %v8767 = vmul.f32 %v8706, %v8755
  %v8768 = vmul.f32 %v8708, %v8756
  %v8769 = vpack.c.bf16 %v8758, %v8757
  %v8770 = vpack.c.bf16 %v8760, %v8759
  %v8771 = vpack.c.bf16 %v8762, %v8761
  %v8772 = vpack.c.bf16 %v8764, %v8763
  %v8773 = vpack.c.bf16 %v8766, %v8765
  %v8774 = vpack.c.bf16 %v8768, %v8767
  %8775 = vrot.lane.b32.xlu0 %v7896, 48
  %v8776 = vpop.permute.xlu0 %8775
  %8777 = vrot.lane.b32.xlu0 %v7897, 48
  %v8778 = vpop.permute.xlu0 %8777
  %8779 = vrot.lane.b32.xlu0 %v7898, 48
  %v8780 = vpop.permute.xlu0 %8779
  %8781 = vrot.lane.b32.xlu0 %v7899, 48
  %v8782 = vpop.permute.xlu0 %8781
  %8783 = vrot.lane.b32.xlu0 %v7900, 48
  %v8784 = vpop.permute.xlu0 %8783
  %8785 = vrot.lane.b32.xlu0 %v7901, 48
  %v8786 = vpop.permute.xlu0 %8785
  %v8794 = vsel %vm1214, %v8769, 0
  %v8797 = vsel %vm1214, %v8770, 0
  %v8800 = vsel %vm1214, %v8771, 0
  %v8803 = vsel %vm1214, %v8772, 0
  %v8806 = vsel %vm1214, %v8773, 0
  %v8809 = vsel %vm1214, %v8774, 0
  %8811 = vmatpush.bf16.msra.mxu0 0
  %8812 = vmatpush.bf16.msra.mxu0 0
  %8813 = vmatpush.bf16.msra.mxu0 %v8786
  %8814 = vmatpush.bf16.msra.mxu0 %v8784
  %8815 = vmatpush.bf16.msra.mxu0 %v8782
  %8816 = vmatpush.bf16.msra.mxu0 %v8780
  %8817 = vmatpush.bf16.msra.mxu0 %v8778
  %8818 = vmatpush.bf16.msra.mxu0 %v8776
  %8819 = vmatmul.bf16.gmra.mxu0 %v8794
  %v8820 = vpop.f32.mrf.mxu0
  %v8821 = vadd.f32 0.0, %v8820
  %v8822 = vpop.f32.mrf.mxu0
  %v8823 = vadd.f32 0.0, %v8822
  %8824 = vmatmul.bf16.gmra.mxu0 %v8797
  %v8825 = vpop.f32.mrf.mxu0
  %v8826 = vadd.f32 0.0, %v8825
  %v8827 = vpop.f32.mrf.mxu0
  %v8828 = vadd.f32 0.0, %v8827
  %8829 = vmatmul.bf16.gmra.mxu0 %v8800
  %v8830 = vpop.f32.mrf.mxu0
  %v8831 = vadd.f32 0.0, %v8830
  %v8832 = vpop.f32.mrf.mxu0
  %v8833 = vadd.f32 0.0, %v8832
  %8834 = vmatmul.bf16.gmra.mxu0 %v8803
  %v8835 = vpop.f32.mrf.mxu0
  %v8836 = vadd.f32 0.0, %v8835
  %v8837 = vpop.f32.mrf.mxu0
  %v8838 = vadd.f32 0.0, %v8837
  %8839 = vmatmul.bf16.gmra.mxu0 %v8806
  %v8840 = vpop.f32.mrf.mxu0
  %v8841 = vadd.f32 0.0, %v8840
  %v8842 = vpop.f32.mrf.mxu0
  %v8843 = vadd.f32 0.0, %v8842
  %8844 = vmatmul.bf16.gmra.mxu0 %v8809
  %v8845 = vpop.f32.mrf.mxu0
  %v8846 = vadd.f32 0.0, %v8845
  %v8847 = vpop.f32.mrf.mxu0
  %v8848 = vadd.f32 0.0, %v8847
  %8849 = vdwg.mxu0
  %v8850 = vpack.c.bf16 %v8821, %v8821
  %v8851 = vpack.c.bf16 %v8823, %v8823
  %v8852 = vpack.c.bf16 %v8826, %v8826
  %v8853 = vpack.c.bf16 %v8828, %v8828
  %v8854 = vpack.c.bf16 %v8831, %v8831
  %v8855 = vpack.c.bf16 %v8833, %v8833
  %v8856 = vpack.c.bf16 %v8836, %v8836
  %v8857 = vpack.c.bf16 %v8838, %v8838
  %v8858 = vpack.c.bf16 %v8841, %v8841
  %v8859 = vpack.c.bf16 %v8843, %v8843
  %v8860 = vpack.c.bf16 %v8846, %v8846
  %v8861 = vpack.c.bf16 %v8848, %v8848
  %8862 = vrot.lane.b32.xlu0 %v7896, 104
  %v8863 = vpop.permute.xlu0 %8862
  %8864 = vrot.lane.b32.xlu0 %v7897, 104
  %v8865 = vpop.permute.xlu0 %8864
  %8866 = vrot.lane.b32.xlu0 %v7898, 104
  %v8867 = vpop.permute.xlu0 %8866
  %8868 = vrot.lane.b32.xlu0 %v7899, 104
  %v8869 = vpop.permute.xlu0 %8868
  %8870 = vrot.lane.b32.xlu0 %v7900, 104
  %v8871 = vpop.permute.xlu0 %8870
  %8872 = vrot.lane.b32.xlu0 %v7901, 104
  %v8873 = vpop.permute.xlu0 %8872
  %8874 = vrot.lane.b32.xlu0 %v7896, 72
  %v8875 = vpop.permute.xlu0 %8874
  %8876 = vrot.lane.b32.xlu0 %v7897, 72
  %v8877 = vpop.permute.xlu0 %8876
  %8878 = vrot.lane.b32.xlu0 %v7898, 72
  %v8879 = vpop.permute.xlu0 %8878
  %8880 = vrot.lane.b32.xlu0 %v7899, 72
  %v8881 = vpop.permute.xlu0 %8880
  %8882 = vrot.lane.b32.xlu0 %v7900, 72
  %v8883 = vpop.permute.xlu0 %8882
  %8884 = vrot.lane.b32.xlu0 %v7901, 72
  %v8885 = vpop.permute.xlu0 %8884
  %v8887 = vsel %vm1138, %v8863, 0
  %v8890 = vsel %vm1138, %v8865, 0
  %v8893 = vsel %vm1138, %v8867, 0
  %v8896 = vsel %vm1138, %v8869, 0
  %v8899 = vsel %vm1138, %v8871, 0
  %v8902 = vsel %vm1138, %v8873, 0
  %v8905 = vsel %vm1138, %v8875, 0
  %v8908 = vsel %vm1138, %v8877, 0
  %v8911 = vsel %vm1138, %v8879, 0
  %v8914 = vsel %vm1138, %v8881, 0
  %v8917 = vsel %vm1138, %v8883, 0
  %v8920 = vsel %vm1138, %v8885, 0
  %8922 = vmatpush.bf16.xpose.msra.mxu0 0
  %8923 = vmatpush.bf16.xpose.msra.mxu0 0
  %8924 = vmatpush.bf16.xpose.msra.mxu0 %v8920
  %8925 = vmatpush.bf16.xpose.msra.mxu0 %v8917
  %8926 = vmatpush.bf16.xpose.msra.mxu0 %v8914
  %8927 = vmatpush.bf16.xpose.msra.mxu0 %v8911
  %8928 = vmatpush.bf16.xpose.msra.mxu0 %v8908
  %8929 = vmatpush.bf16.xpose.msra.mxu0 %v8905
  %8930 = vmatmul.bf16.gmra.mxu0 %v8887
  %v8931 = vpop.f32.mrf.mxu0
  %v8932 = vadd.f32 0.0, %v8931
  %v8933 = vpop.f32.mrf.mxu0
  %v8934 = vadd.f32 0.0, %v8933
  %8935 = vmatmul.bf16.gmra.mxu0 %v8890
  %v8936 = vpop.f32.mrf.mxu0
  %v8937 = vadd.f32 0.0, %v8936
  %v8938 = vpop.f32.mrf.mxu0
  %v8939 = vadd.f32 0.0, %v8938
  %8940 = vmatmul.bf16.gmra.mxu0 %v8893
  %v8941 = vpop.f32.mrf.mxu0
  %v8942 = vadd.f32 0.0, %v8941
  %v8943 = vpop.f32.mrf.mxu0
  %v8944 = vadd.f32 0.0, %v8943
  %8945 = vmatmul.bf16.gmra.mxu0 %v8896
  %v8946 = vpop.f32.mrf.mxu0
  %v8947 = vadd.f32 0.0, %v8946
  %v8948 = vpop.f32.mrf.mxu0
  %v8949 = vadd.f32 0.0, %v8948
  %8950 = vmatmul.bf16.gmra.mxu0 %v8899
  %v8951 = vpop.f32.mrf.mxu0
  %v8952 = vadd.f32 0.0, %v8951
  %v8953 = vpop.f32.mrf.mxu0
  %v8954 = vadd.f32 0.0, %v8953
  %8955 = vmatmul.bf16.gmra.mxu0 %v8902
  %v8956 = vpop.f32.mrf.mxu0
  %v8957 = vadd.f32 0.0, %v8956
  %v8958 = vpop.f32.mrf.mxu0
  %v8959 = vadd.f32 0.0, %v8958
  %8960 = vdwg.mxu0
  %v8961 = vsel %vm1214, %v8932, -inf
  %8962 = vmax.xlane.f32.xlu0 %v8961
  %v8963 = vpop.xlane.xlu0 %8962
  %v8964 = vsel %vm1214, %v8934, -inf
  %8965 = vmax.xlane.f32.xlu0 %v8964
  %v8966 = vpop.xlane.xlu0 %8965
  %v8967 = vsel %vm1214, %v8937, -inf
  %8968 = vmax.xlane.f32.xlu0 %v8967
  %v8969 = vpop.xlane.xlu0 %8968
  %v8970 = vsel %vm1214, %v8939, -inf
  %8971 = vmax.xlane.f32.xlu0 %v8970
  %v8972 = vpop.xlane.xlu0 %8971
  %v8973 = vsel %vm1214, %v8942, -inf
  %8974 = vmax.xlane.f32.xlu0 %v8973
  %v8975 = vpop.xlane.xlu0 %8974
  %v8976 = vsel %vm1214, %v8944, -inf
  %8977 = vmax.xlane.f32.xlu0 %v8976
  %v8978 = vpop.xlane.xlu0 %8977
  %v8979 = vsel %vm1214, %v8947, -inf
  %8980 = vmax.xlane.f32.xlu0 %v8979
  %v8981 = vpop.xlane.xlu0 %8980
  %v8982 = vsel %vm1214, %v8949, -inf
  %8983 = vmax.xlane.f32.xlu0 %v8982
  %v8984 = vpop.xlane.xlu0 %8983
  %v8985 = vsel %vm1214, %v8952, -inf
  %8986 = vmax.xlane.f32.xlu0 %v8985
  %v8987 = vpop.xlane.xlu0 %8986
  %v8988 = vsel %vm1214, %v8954, -inf
  %8989 = vmax.xlane.f32.xlu0 %v8988
  %v8990 = vpop.xlane.xlu0 %8989
  %v8991 = vsel %vm1214, %v8957, -inf
  %8992 = vmax.xlane.f32.xlu0 %v8991
  %v8993 = vpop.xlane.xlu0 %8992
  %v8994 = vsel %vm1214, %v8959, -inf
  %8995 = vmax.xlane.f32.xlu0 %v8994
  %v8996 = vpop.xlane.xlu0 %8995
  %v8997 = vsub.f32 %v8932, %v8963
  %v8998 = vsub.f32 %v8934, %v8966
  %v8999 = vsub.f32 %v8937, %v8969
  %v9000 = vsub.f32 %v8939, %v8972
  %v9001 = vsub.f32 %v8942, %v8975
  %v9002 = vsub.f32 %v8944, %v8978
  %v9003 = vsub.f32 %v8947, %v8981
  %v9004 = vsub.f32 %v8949, %v8984
  %v9005 = vsub.f32 %v8952, %v8987
  %v9006 = vsub.f32 %v8954, %v8990
  %v9007 = vsub.f32 %v8957, %v8993
  %v9008 = vsub.f32 %v8959, %v8996
  %v9009 = vmul.f32 %v8997, 1.442695
  %v9010 = vpow.pop %v9009
  %v9011 = vmul.f32 %v8998, 1.442695
  %v9012 = vpow.pop %v9011
  %v9013 = vmul.f32 %v8999, 1.442695
  %v9014 = vpow.pop %v9013
  %v9015 = vmul.f32 %v9000, 1.442695
  %v9016 = vpow.pop %v9015
  %v9017 = vmul.f32 %v9001, 1.442695
  %v9018 = vpow.pop %v9017
  %v9019 = vmul.f32 %v9002, 1.442695
  %v9020 = vpow.pop %v9019
  %v9021 = vmul.f32 %v9003, 1.442695
  %v9022 = vpow.pop %v9021
  %v9023 = vmul.f32 %v9004, 1.442695
  %v9024 = vpow.pop %v9023
  %v9025 = vmul.f32 %v9005, 1.442695
  %v9026 = vpow.pop %v9025
  %v9027 = vmul.f32 %v9006, 1.442695
  %v9028 = vpow.pop %v9027
  %v9029 = vmul.f32 %v9007, 1.442695
  %v9030 = vpow.pop %v9029
  %v9031 = vmul.f32 %v9008, 1.442695
  %v9032 = vpow.pop %v9031
  %v9033 = vsel %vm1214, %v9010, 0.0
  %9034 = vadd.xlane.f32.xlu0 %v9033
  %v9035 = vpop.xlane.xlu0 %9034
  %v9036 = vsel %vm1214, %v9012, 0.0
  %9037 = vadd.xlane.f32.xlu0 %v9036
  %v9038 = vpop.xlane.xlu0 %9037
  %v9039 = vsel %vm1214, %v9014, 0.0
  %9040 = vadd.xlane.f32.xlu0 %v9039
  %v9041 = vpop.xlane.xlu0 %9040
  %v9042 = vsel %vm1214, %v9016, 0.0
  %9043 = vadd.xlane.f32.xlu0 %v9042
  %v9044 = vpop.xlane.xlu0 %9043
  %v9045 = vsel %vm1214, %v9018, 0.0
  %9046 = vadd.xlane.f32.xlu0 %v9045
  %v9047 = vpop.xlane.xlu0 %9046
  %v9048 = vsel %vm1214, %v9020, 0.0
  %9049 = vadd.xlane.f32.xlu0 %v9048
  %v9050 = vpop.xlane.xlu0 %9049
  %v9051 = vsel %vm1214, %v9022, 0.0
  %9052 = vadd.xlane.f32.xlu0 %v9051
  %v9053 = vpop.xlane.xlu0 %9052
  %v9054 = vsel %vm1214, %v9024, 0.0
  %9055 = vadd.xlane.f32.xlu0 %v9054
  %v9056 = vpop.xlane.xlu0 %9055
  %v9057 = vsel %vm1214, %v9026, 0.0
  %9058 = vadd.xlane.f32.xlu0 %v9057
  %v9059 = vpop.xlane.xlu0 %9058
  %v9060 = vsel %vm1214, %v9028, 0.0
  %9061 = vadd.xlane.f32.xlu0 %v9060
  %v9062 = vpop.xlane.xlu0 %9061
  %v9063 = vsel %vm1214, %v9030, 0.0
  %9064 = vadd.xlane.f32.xlu0 %v9063
  %v9065 = vpop.xlane.xlu0 %9064
  %v9066 = vsel %vm1214, %v9032, 0.0
  %9067 = vadd.xlane.f32.xlu0 %v9066
  %v9068 = vpop.xlane.xlu0 %9067
  %v9069 = vrcp.pop %v9035
  %v9070 = vrcp.pop %v9038
  %v9071 = vrcp.pop %v9041
  %v9072 = vrcp.pop %v9044
  %v9073 = vrcp.pop %v9047
  %v9074 = vrcp.pop %v9050
  %v9075 = vrcp.pop %v9053
  %v9076 = vrcp.pop %v9056
  %v9077 = vrcp.pop %v9059
  %v9078 = vrcp.pop %v9062
  %v9079 = vrcp.pop %v9065
  %v9080 = vrcp.pop %v9068
  %v9081 = vmul.f32 %v9010, %v9069
  %v9082 = vmul.f32 %v9012, %v9070
  %v9083 = vmul.f32 %v9014, %v9071
  %v9084 = vmul.f32 %v9016, %v9072
  %v9085 = vmul.f32 %v9018, %v9073
  %v9086 = vmul.f32 %v9020, %v9074
  %v9087 = vmul.f32 %v9022, %v9075
  %v9088 = vmul.f32 %v9024, %v9076
  %v9089 = vmul.f32 %v9026, %v9077
  %v9090 = vmul.f32 %v9028, %v9078
  %v9091 = vmul.f32 %v9030, %v9079
  %v9092 = vmul.f32 %v9032, %v9080
  %v9093 = vpack.c.bf16 %v9082, %v9081
  %v9094 = vpack.c.bf16 %v9084, %v9083
  %v9095 = vpack.c.bf16 %v9086, %v9085
  %v9096 = vpack.c.bf16 %v9088, %v9087
  %v9097 = vpack.c.bf16 %v9090, %v9089
  %v9098 = vpack.c.bf16 %v9092, %v9091
  %9099 = vrot.lane.b32.xlu0 %v7896, 40
  %v9100 = vpop.permute.xlu0 %9099
  %9101 = vrot.lane.b32.xlu0 %v7897, 40
  %v9102 = vpop.permute.xlu0 %9101
  %9103 = vrot.lane.b32.xlu0 %v7898, 40
  %v9104 = vpop.permute.xlu0 %9103
  %9105 = vrot.lane.b32.xlu0 %v7899, 40
  %v9106 = vpop.permute.xlu0 %9105
  %9107 = vrot.lane.b32.xlu0 %v7900, 40
  %v9108 = vpop.permute.xlu0 %9107
  %9109 = vrot.lane.b32.xlu0 %v7901, 40
  %v9110 = vpop.permute.xlu0 %9109
  %v9118 = vsel %vm1214, %v9093, 0
  %v9121 = vsel %vm1214, %v9094, 0
  %v9124 = vsel %vm1214, %v9095, 0
  %v9127 = vsel %vm1214, %v9096, 0
  %v9130 = vsel %vm1214, %v9097, 0
  %v9133 = vsel %vm1214, %v9098, 0
  %9135 = vmatpush.bf16.msra.mxu0 0
  %9136 = vmatpush.bf16.msra.mxu0 0
  %9137 = vmatpush.bf16.msra.mxu0 %v9110
  %9138 = vmatpush.bf16.msra.mxu0 %v9108
  %9139 = vmatpush.bf16.msra.mxu0 %v9106
  %9140 = vmatpush.bf16.msra.mxu0 %v9104
  %9141 = vmatpush.bf16.msra.mxu0 %v9102
  %9142 = vmatpush.bf16.msra.mxu0 %v9100
  %9143 = vmatmul.bf16.gmra.mxu0 %v9118
  %v9144 = vpop.f32.mrf.mxu0
  %v9145 = vadd.f32 0.0, %v9144
  %v9146 = vpop.f32.mrf.mxu0
  %v9147 = vadd.f32 0.0, %v9146
  %9148 = vmatmul.bf16.gmra.mxu0 %v9121
  %v9149 = vpop.f32.mrf.mxu0
  %v9150 = vadd.f32 0.0, %v9149
  %v9151 = vpop.f32.mrf.mxu0
  %v9152 = vadd.f32 0.0, %v9151
  %9153 = vmatmul.bf16.gmra.mxu0 %v9124
  %v9154 = vpop.f32.mrf.mxu0
  %v9155 = vadd.f32 0.0, %v9154
  %v9156 = vpop.f32.mrf.mxu0
  %v9157 = vadd.f32 0.0, %v9156
  %9158 = vmatmul.bf16.gmra.mxu0 %v9127
  %v9159 = vpop.f32.mrf.mxu0
  %v9160 = vadd.f32 0.0, %v9159
  %v9161 = vpop.f32.mrf.mxu0
  %v9162 = vadd.f32 0.0, %v9161
  %9163 = vmatmul.bf16.gmra.mxu0 %v9130
  %v9164 = vpop.f32.mrf.mxu0
  %v9165 = vadd.f32 0.0, %v9164
  %v9166 = vpop.f32.mrf.mxu0
  %v9167 = vadd.f32 0.0, %v9166
  %9168 = vmatmul.bf16.gmra.mxu0 %v9133
  %v9169 = vpop.f32.mrf.mxu0
  %v9170 = vadd.f32 0.0, %v9169
  %v9171 = vpop.f32.mrf.mxu0
  %v9172 = vadd.f32 0.0, %v9171
  %9173 = vdwg.mxu0
  %v9174 = vpack.c.bf16 %v9145, %v9145
  %v9175 = vpack.c.bf16 %v9147, %v9147
  %v9176 = vpack.c.bf16 %v9150, %v9150
  %v9177 = vpack.c.bf16 %v9152, %v9152
  %v9178 = vpack.c.bf16 %v9155, %v9155
  %v9179 = vpack.c.bf16 %v9157, %v9157
  %v9180 = vpack.c.bf16 %v9160, %v9160
  %v9181 = vpack.c.bf16 %v9162, %v9162
  %v9182 = vpack.c.bf16 %v9165, %v9165
  %v9183 = vpack.c.bf16 %v9167, %v9167
  %v9184 = vpack.c.bf16 %v9170, %v9170
  %v9185 = vpack.c.bf16 %v9172, %v9172
  %v9198 = vunpack.c.l.b16 %v8202
  %v9199 = vunpack.c.l.b16 %v8203
  %v9200 = vunpack.c.l.b16 %v8204
  %v9201 = vunpack.c.l.b16 %v8205
  %v9202 = vunpack.c.l.b16 %v8206
  %v9203 = vunpack.c.l.b16 %v8207
  %v9204 = vunpack.c.l.b16 %v8208
  %v9205 = vunpack.c.l.b16 %v8209
  %v9206 = vunpack.c.l.b16 %v8210
  %v9207 = vunpack.c.l.b16 %v8211
  %v9208 = vunpack.c.l.b16 %v8212
  %v9209 = vunpack.c.l.b16 %v8213
  %v9210 = vpack.c.b16 %v9199, %v9198
  %v9211 = vpack.c.b16 %v9201, %v9200
  %v9212 = vpack.c.b16 %v9203, %v9202
  %v9213 = vpack.c.b16 %v9205, %v9204
  %v9214 = vpack.c.b16 %v9207, %v9206
  %v9215 = vpack.c.b16 %v9209, %v9208
  %v9228 = vunpack.c.l.b16 %v8526
  %v9229 = vunpack.c.l.b16 %v8527
  %v9230 = vunpack.c.l.b16 %v8528
  %v9231 = vunpack.c.l.b16 %v8529
  %v9232 = vunpack.c.l.b16 %v8530
  %v9233 = vunpack.c.l.b16 %v8531
  %v9234 = vunpack.c.l.b16 %v8532
  %v9235 = vunpack.c.l.b16 %v8533
  %v9236 = vunpack.c.l.b16 %v8534
  %v9237 = vunpack.c.l.b16 %v8535
  %v9238 = vunpack.c.l.b16 %v8536
  %v9239 = vunpack.c.l.b16 %v8537
  %v9240 = vpack.c.b16 %v9229, %v9228
  %v9241 = vpack.c.b16 %v9231, %v9230
  %v9242 = vpack.c.b16 %v9233, %v9232
  %v9243 = vpack.c.b16 %v9235, %v9234
  %v9244 = vpack.c.b16 %v9237, %v9236
  %v9245 = vpack.c.b16 %v9239, %v9238
  %9246 = vrot.lane.b32.xlu0 %v9240, 8
  %v9247 = vpop.permute.xlu0 %9246
  %9248 = vrot.lane.b32.xlu0 %v9241, 8
  %v9249 = vpop.permute.xlu0 %9248
  %9250 = vrot.lane.b32.xlu0 %v9242, 8
  %v9251 = vpop.permute.xlu0 %9250
  %9252 = vrot.lane.b32.xlu0 %v9243, 8
  %v9253 = vpop.permute.xlu0 %9252
  %9254 = vrot.lane.b32.xlu0 %v9244, 8
  %v9255 = vpop.permute.xlu0 %9254
  %9256 = vrot.lane.b32.xlu0 %v9245, 8
  %v9257 = vpop.permute.xlu0 %9256
  %v9270 = vunpack.c.l.b16 %v8850
  %v9271 = vunpack.c.l.b16 %v8851
  %v9272 = vunpack.c.l.b16 %v8852
  %v9273 = vunpack.c.l.b16 %v8853
  %v9274 = vunpack.c.l.b16 %v8854
  %v9275 = vunpack.c.l.b16 %v8855
  %v9276 = vunpack.c.l.b16 %v8856
  %v9277 = vunpack.c.l.b16 %v8857
  %v9278 = vunpack.c.l.b16 %v8858
  %v9279 = vunpack.c.l.b16 %v8859
  %v9280 = vunpack.c.l.b16 %v8860
  %v9281 = vunpack.c.l.b16 %v8861
  %v9282 = vpack.c.b16 %v9271, %v9270
  %v9283 = vpack.c.b16 %v9273, %v9272
  %v9284 = vpack.c.b16 %v9275, %v9274
  %v9285 = vpack.c.b16 %v9277, %v9276
  %v9286 = vpack.c.b16 %v9279, %v9278
  %v9287 = vpack.c.b16 %v9281, %v9280
  %9288 = vrot.lane.b32.xlu0 %v9282, 16
  %v9289 = vpop.permute.xlu0 %9288
  %9290 = vrot.lane.b32.xlu0 %v9283, 16
  %v9291 = vpop.permute.xlu0 %9290
  %9292 = vrot.lane.b32.xlu0 %v9284, 16
  %v9293 = vpop.permute.xlu0 %9292
  %9294 = vrot.lane.b32.xlu0 %v9285, 16
  %v9295 = vpop.permute.xlu0 %9294
  %9296 = vrot.lane.b32.xlu0 %v9286, 16
  %v9297 = vpop.permute.xlu0 %9296
  %9298 = vrot.lane.b32.xlu0 %v9287, 16
  %v9299 = vpop.permute.xlu0 %9298
  %v9312 = vunpack.c.l.b16 %v9174
  %v9313 = vunpack.c.l.b16 %v9175
  %v9314 = vunpack.c.l.b16 %v9176
  %v9315 = vunpack.c.l.b16 %v9177
  %v9316 = vunpack.c.l.b16 %v9178
  %v9317 = vunpack.c.l.b16 %v9179
  %v9318 = vunpack.c.l.b16 %v9180
  %v9319 = vunpack.c.l.b16 %v9181
  %v9320 = vunpack.c.l.b16 %v9182
  %v9321 = vunpack.c.l.b16 %v9183
  %v9322 = vunpack.c.l.b16 %v9184
  %v9323 = vunpack.c.l.b16 %v9185
  %v9324 = vpack.c.b16 %v9313, %v9312
  %v9325 = vpack.c.b16 %v9315, %v9314
  %v9326 = vpack.c.b16 %v9317, %v9316
  %v9327 = vpack.c.b16 %v9319, %v9318
  %v9328 = vpack.c.b16 %v9321, %v9320
  %v9329 = vpack.c.b16 %v9323, %v9322
  %9330 = vrot.lane.b32.xlu0 %v9324, 24
  %v9331 = vpop.permute.xlu0 %9330
  %9332 = vrot.lane.b32.xlu0 %v9325, 24
  %v9333 = vpop.permute.xlu0 %9332
  %9334 = vrot.lane.b32.xlu0 %v9326, 24
  %v9335 = vpop.permute.xlu0 %9334
  %9336 = vrot.lane.b32.xlu0 %v9327, 24
  %v9337 = vpop.permute.xlu0 %9336
  %9338 = vrot.lane.b32.xlu0 %v9328, 24
  %v9339 = vpop.permute.xlu0 %9338
  %9340 = vrot.lane.b32.xlu0 %v9329, 24
  %v9341 = vpop.permute.xlu0 %9340
  %v9344 = vsel %vm1138, %v9210, %v9247
  %v9347 = vsel %vm1138, %v9211, %v9249
  %v9350 = vsel %vm1138, %v9212, %v9251
  %v9353 = vsel %vm1138, %v9213, %v9253
  %v9356 = vsel %vm1138, %v9214, %v9255
  %v9359 = vsel %vm1138, %v9215, %v9257
  %v9361 = vsel %vm2586, %v9344, %v9289
  %v9363 = vsel %vm2586, %v9347, %v9291
  %v9365 = vsel %vm2586, %v9350, %v9293
  %v9367 = vsel %vm2586, %v9353, %v9295
  %v9369 = vsel %vm2586, %v9356, %v9297
  %v9371 = vsel %vm2586, %v9359, %v9299
  %v9373 = vsel %vm2599, %v9361, %v9331
  %v9375 = vsel %vm2599, %v9363, %v9333
  %v9377 = vsel %vm2599, %v9365, %v9335
  %v9379 = vsel %vm2599, %v9367, %v9337
  %v9381 = vsel %vm2599, %v9369, %v9339
  %v9383 = vsel %vm2599, %v9371, %v9341
  %s9384 = scalar_lea.vmem %s7, 16
  %v9385 = vld [vmem:[%s9384] sm:$0xf]
  %v9386 = vld [vmem:[%s9384 + $0x4] sm:$0xf]
  %v9387 = vld [vmem:[%s9384 + $0x8] sm:$0xf]
  %v9388 = vld [vmem:[%s9384 + $0xc] sm:$0xf]
  %v9393 = vunpack.c.l.b16 %v9385
  %v9394 = vunpack.c.l.b16 %v9386
  %v9395 = vunpack.c.l.b16 %v9387
  %v9396 = vunpack.c.l.b16 %v9388
  %v9397 = vpack.c.b16 %v9394, %v9393
  %v9398 = vpack.c.b16 %v9396, %v9395
  %v9401 = vsel %vm247, %v7861, 0
  %v9403 = vsel %vm247, %v7863, 0
  %v9405 = vsel %vm247, %v7865, 0
  %v9407 = vsel %vm247, %v7867, 0
  %v9409 = vsel %vm247, %v7869, 0
  %v9411 = vsel %vm247, %v7871, 0
  %v9413 = vsel %vm247, %v9373, 0
  %v9415 = vsel %vm247, %v9375, 0
  %v9417 = vsel %vm247, %v9377, 0
  %v9419 = vsel %vm247, %v9379, 0
  %v9421 = vsel %vm247, %v9381, 0
  %v9423 = vsel %vm247, %v9383, 0
  %9425 = vmatpush.bf16.msra.mxu0 0
  %9426 = vmatpush.bf16.msra.mxu0 0
  %9427 = vmatpush.bf16.msra.mxu0 0
  %9428 = vmatpush.bf16.msra.mxu0 0
  %9429 = vmatpush.bf16.msra.mxu0 0
  %9430 = vmatpush.bf16.msra.mxu0 0
  %9431 = vmatpush.bf16.msra.mxu0 %v9398
  %9432 = vmatpush.bf16.msra.mxu0 %v9397
  %9433 = vmatmul.bf16.gmra.mxu0 %v9401
  %v9434 = vpop.f32.mrf.mxu0
  %v9435 = vadd.f32 0.0, %v9434
  %v9436 = vpop.f32.mrf.mxu0
  %v9437 = vadd.f32 0.0, %v9436
  %9438 = vmatmul.bf16.gmra.mxu0 %v9403
  %v9439 = vpop.f32.mrf.mxu0
  %v9440 = vadd.f32 0.0, %v9439
  %v9441 = vpop.f32.mrf.mxu0
  %v9442 = vadd.f32 0.0, %v9441
  %9443 = vmatmul.bf16.gmra.mxu0 %v9405
  %v9444 = vpop.f32.mrf.mxu0
  %v9445 = vadd.f32 0.0, %v9444
  %v9446 = vpop.f32.mrf.mxu0
  %v9447 = vadd.f32 0.0, %v9446
  %9448 = vmatmul.bf16.gmra.mxu0 %v9407
  %v9449 = vpop.f32.mrf.mxu0
  %v9450 = vadd.f32 0.0, %v9449
  %v9451 = vpop.f32.mrf.mxu0
  %v9452 = vadd.f32 0.0, %v9451
  %9453 = vmatmul.bf16.gmra.mxu0 %v9409
  %v9454 = vpop.f32.mrf.mxu0
  %v9455 = vadd.f32 0.0, %v9454
  %v9456 = vpop.f32.mrf.mxu0
  %v9457 = vadd.f32 0.0, %v9456
  %9458 = vmatmul.bf16.gmra.mxu0 %v9411
  %v9459 = vpop.f32.mrf.mxu0
  %v9460 = vadd.f32 0.0, %v9459
  %v9461 = vpop.f32.mrf.mxu0
  %v9462 = vadd.f32 0.0, %v9461
  %9463 = vmatmul.bf16.gmra.mxu0 %v9413
  %v9464 = vpop.f32.mrf.mxu0
  %v9465 = vadd.f32 0.0, %v9464
  %v9466 = vpop.f32.mrf.mxu0
  %v9467 = vadd.f32 0.0, %v9466
  %9468 = vmatmul.bf16.gmra.mxu0 %v9415
  %v9469 = vpop.f32.mrf.mxu0
  %v9470 = vadd.f32 0.0, %v9469
  %v9471 = vpop.f32.mrf.mxu0
  %v9472 = vadd.f32 0.0, %v9471
  %9473 = vmatmul.bf16.gmra.mxu0 %v9417
  %v9474 = vpop.f32.mrf.mxu0
  %v9475 = vadd.f32 0.0, %v9474
  %v9476 = vpop.f32.mrf.mxu0
  %v9477 = vadd.f32 0.0, %v9476
  %9478 = vmatmul.bf16.gmra.mxu0 %v9419
  %v9479 = vpop.f32.mrf.mxu0
  %v9480 = vadd.f32 0.0, %v9479
  %v9481 = vpop.f32.mrf.mxu0
  %v9482 = vadd.f32 0.0, %v9481
  %9483 = vmatmul.bf16.gmra.mxu0 %v9421
  %v9484 = vpop.f32.mrf.mxu0
  %v9485 = vadd.f32 0.0, %v9484
  %v9486 = vpop.f32.mrf.mxu0
  %v9487 = vadd.f32 0.0, %v9486
  %9488 = vmatmul.bf16.gmra.mxu0 %v9423
  %v9489 = vpop.f32.mrf.mxu0
  %v9490 = vadd.f32 0.0, %v9489
  %v9491 = vpop.f32.mrf.mxu0
  %v9492 = vadd.f32 0.0, %v9491
  %9493 = vdwg.mxu0
  %v9494 = vadd.f32 %v5539, %v9435
  %v9495 = vadd.f32 %v5540, %v9437
  %v9496 = vadd.f32 %v5541, %v9440
  %v9497 = vadd.f32 %v5542, %v9442
  %v9498 = vadd.f32 %v5543, %v9445
  %v9499 = vadd.f32 %v5544, %v9447
  %v9500 = vadd.f32 %v5545, %v9450
  %v9501 = vadd.f32 %v5546, %v9452
  %v9502 = vadd.f32 %v5547, %v9455
  %v9503 = vadd.f32 %v5548, %v9457
  %v9504 = vadd.f32 %v5549, %v9460
  %v9505 = vadd.f32 %v5550, %v9462
  %v9506 = vadd.f32 %v5551, %v9465
  %v9507 = vadd.f32 %v5552, %v9467
  %v9508 = vadd.f32 %v5553, %v9470
  %v9509 = vadd.f32 %v5554, %v9472
  %v9510 = vadd.f32 %v5555, %v9475
  %v9511 = vadd.f32 %v5556, %v9477
  %v9512 = vadd.f32 %v5557, %v9480
  %v9513 = vadd.f32 %v5558, %v9482
  %v9514 = vadd.f32 %v5559, %v9485
  %v9515 = vadd.f32 %v5560, %v9487
  %v9516 = vadd.f32 %v5561, %v9490
  %v9517 = vadd.f32 %v5562, %v9492
  %s9518 = scalar_lea.vmem %s8, 1
  %v9519 = vld [vmem:[%s9518] sm:$0x1]
  %v9521 = vperm.slane %v9519, 0
  %v9523 = vadd.f32 %v9494, %v9521
  %v9524 = vadd.f32 %v9495, %v9521
  %v9525 = vadd.f32 %v9496, %v9521
  %v9526 = vadd.f32 %v9497, %v9521
  %v9527 = vadd.f32 %v9498, %v9521
  %v9528 = vadd.f32 %v9499, %v9521
  %v9529 = vadd.f32 %v9500, %v9521
  %v9530 = vadd.f32 %v9501, %v9521
  %v9531 = vadd.f32 %v9502, %v9521
  %v9532 = vadd.f32 %v9503, %v9521
  %v9533 = vadd.f32 %v9504, %v9521
  %v9534 = vadd.f32 %v9505, %v9521
  %v9535 = vadd.f32 %v9506, %v9521
  %v9536 = vadd.f32 %v9507, %v9521
  %v9537 = vadd.f32 %v9508, %v9521
  %v9538 = vadd.f32 %v9509, %v9521
  %v9539 = vadd.f32 %v9510, %v9521
  %v9540 = vadd.f32 %v9511, %v9521
  %v9541 = vadd.f32 %v9512, %v9521
  %v9542 = vadd.f32 %v9513, %v9521
  %v9543 = vadd.f32 %v9514, %v9521
  %v9544 = vadd.f32 %v9515, %v9521
  %v9545 = vadd.f32 %v9516, %v9521
  %v9546 = vadd.f32 %v9517, %v9521
  %9547 = vst.msk [vmem:[%s17] sm:$0xff] %vm247, %v9523
  %9548 = vst.msk [vmem:[%s17 + $0x8] sm:$0xff] %vm247, %v9524
  %9549 = vst.msk [vmem:[%s17 + $0x10] sm:$0xff] %vm247, %v9525
  %9550 = vst.msk [vmem:[%s17 + $0x18] sm:$0xff] %vm247, %v9526
  %9551 = vst.msk [vmem:[%s17 + $0x20] sm:$0xff] %vm247, %v9527
  %9552 = vst.msk [vmem:[%s17 + $0x28] sm:$0xff] %vm247, %v9528
  %9553 = vst.msk [vmem:[%s17 + $0x30] sm:$0xff] %vm247, %v9529
  %9554 = vst.msk [vmem:[%s17 + $0x38] sm:$0xff] %vm247, %v9530
  %9555 = vst.msk [vmem:[%s17 + $0x40] sm:$0xff] %vm247, %v9531
  %9556 = vst.msk [vmem:[%s17 + $0x48] sm:$0xff] %vm247, %v9532
  %9557 = vst.msk [vmem:[%s17 + $0x50] sm:$0xff] %vm247, %v9533
  %9558 = vst.msk [vmem:[%s17 + $0x58] sm:$0xff] %vm247, %v9534
  %9559 = vst.msk [vmem:[%s17 + $0x60] sm:$0xff] %vm247, %v9535
  %9560 = vst.msk [vmem:[%s17 + $0x68] sm:$0xff] %vm247, %v9536
  %9561 = vst.msk [vmem:[%s17 + $0x70] sm:$0xff] %vm247, %v9537
  %9562 = vst.msk [vmem:[%s17 + $0x78] sm:$0xff] %vm247, %v9538
  %9563 = vst.msk [vmem:[%s17 + $0x80] sm:$0xff] %vm247, %v9539
  %9564 = vst.msk [vmem:[%s17 + $0x88] sm:$0xff] %vm247, %v9540
  %9565 = vst.msk [vmem:[%s17 + $0x90] sm:$0xff] %vm247, %v9541
  %9566 = vst.msk [vmem:[%s17 + $0x98] sm:$0xff] %vm247, %v9542
  %9567 = vst.msk [vmem:[%s17 + $0xa0] sm:$0xff] %vm247, %v9543
  %9568 = vst.msk [vmem:[%s17 + $0xa8] sm:$0xff] %vm247, %v9544
  %9569 = vst.msk [vmem:[%s17 + $0xb0] sm:$0xff] %vm247, %v9545
  %9570 = vst.msk [vmem:[%s17 + $0xb8] sm:$0xff] %vm247, %v9546
  %v9571 = vld [vmem:[%s17] sm:$0xff]
  %v9572 = vld [vmem:[%s17 + $0x8] sm:$0xff]
  %v9573 = vld [vmem:[%s17 + $0x10] sm:$0xff]
  %v9574 = vld [vmem:[%s17 + $0x18] sm:$0xff]
  %v9575 = vld [vmem:[%s17 + $0x20] sm:$0xff]
  %v9576 = vld [vmem:[%s17 + $0x28] sm:$0xff]
  %v9577 = vld [vmem:[%s17 + $0x30] sm:$0xff]
  %v9578 = vld [vmem:[%s17 + $0x38] sm:$0xff]
  %v9579 = vld [vmem:[%s17 + $0x40] sm:$0xff]
  %v9580 = vld [vmem:[%s17 + $0x48] sm:$0xff]
  %v9581 = vld [vmem:[%s17 + $0x50] sm:$0xff]
  %v9582 = vld [vmem:[%s17 + $0x58] sm:$0xff]
  %v9583 = vld [vmem:[%s17 + $0x60] sm:$0xff]
  %v9584 = vld [vmem:[%s17 + $0x68] sm:$0xff]
  %v9585 = vld [vmem:[%s17 + $0x70] sm:$0xff]
  %v9586 = vld [vmem:[%s17 + $0x78] sm:$0xff]
  %v9587 = vld [vmem:[%s17 + $0x80] sm:$0xff]
  %v9588 = vld [vmem:[%s17 + $0x88] sm:$0xff]
  %v9589 = vld [vmem:[%s17 + $0x90] sm:$0xff]
  %v9590 = vld [vmem:[%s17 + $0x98] sm:$0xff]
  %v9591 = vld [vmem:[%s17 + $0xa0] sm:$0xff]
  %v9592 = vld [vmem:[%s17 + $0xa8] sm:$0xff]
  %v9593 = vld [vmem:[%s17 + $0xb0] sm:$0xff]
  %v9594 = vld [vmem:[%s17 + $0xb8] sm:$0xff]
  %s9595 = scalar_lea.vmem %s9, 1
  %v9596 = vld [vmem:[%s9595] sm:$0x1]
  %s9597 = scalar_lea.vmem %s10, 1
  %v9598 = vld [vmem:[%s9597] sm:$0x1]
  %v9599 = vsel %vm247, %v9571, 0.0
  %9600 = vadd.xlane.f32.xlu0 %v9599
  %v9601 = vpop.xlane.xlu0 %9600
  %v9602 = vsel %vm247, %v9572, 0.0
  %9603 = vadd.xlane.f32.xlu0 %v9602
  %v9604 = vpop.xlane.xlu0 %9603
  %v9605 = vsel %vm247, %v9573, 0.0
  %9606 = vadd.xlane.f32.xlu0 %v9605
  %v9607 = vpop.xlane.xlu0 %9606
  %v9608 = vsel %vm247, %v9574, 0.0
  %9609 = vadd.xlane.f32.xlu0 %v9608
  %v9610 = vpop.xlane.xlu0 %9609
  %v9611 = vsel %vm247, %v9575, 0.0
  %9612 = vadd.xlane.f32.xlu0 %v9611
  %v9613 = vpop.xlane.xlu0 %9612
  %v9614 = vsel %vm247, %v9576, 0.0
  %9615 = vadd.xlane.f32.xlu0 %v9614
  %v9616 = vpop.xlane.xlu0 %9615
  %v9617 = vsel %vm247, %v9577, 0.0
  %9618 = vadd.xlane.f32.xlu0 %v9617
  %v9619 = vpop.xlane.xlu0 %9618
  %v9620 = vsel %vm247, %v9578, 0.0
  %9621 = vadd.xlane.f32.xlu0 %v9620
  %v9622 = vpop.xlane.xlu0 %9621
  %v9623 = vsel %vm247, %v9579, 0.0
  %9624 = vadd.xlane.f32.xlu0 %v9623
  %v9625 = vpop.xlane.xlu0 %9624
  %v9626 = vsel %vm247, %v9580, 0.0
  %9627 = vadd.xlane.f32.xlu0 %v9626
  %v9628 = vpop.xlane.xlu0 %9627
  %v9629 = vsel %vm247, %v9581, 0.0
  %9630 = vadd.xlane.f32.xlu0 %v9629
  %v9631 = vpop.xlane.xlu0 %9630
  %v9632 = vsel %vm247, %v9582, 0.0
  %9633 = vadd.xlane.f32.xlu0 %v9632
  %v9634 = vpop.xlane.xlu0 %9633
  %v9635 = vsel %vm247, %v9583, 0.0
  %9636 = vadd.xlane.f32.xlu0 %v9635
  %v9637 = vpop.xlane.xlu0 %9636
  %v9638 = vsel %vm247, %v9584, 0.0
  %9639 = vadd.xlane.f32.xlu0 %v9638
  %v9640 = vpop.xlane.xlu0 %9639
  %v9641 = vsel %vm247, %v9585, 0.0
  %9642 = vadd.xlane.f32.xlu0 %v9641
  %v9643 = vpop.xlane.xlu0 %9642
  %v9644 = vsel %vm247, %v9586, 0.0
  %9645 = vadd.xlane.f32.xlu0 %v9644
  %v9646 = vpop.xlane.xlu0 %9645
  %v9647 = vsel %vm247, %v9587, 0.0
  %9648 = vadd.xlane.f32.xlu0 %v9647
  %v9649 = vpop.xlane.xlu0 %9648
  %v9650 = vsel %vm247, %v9588, 0.0
  %9651 = vadd.xlane.f32.xlu0 %v9650
  %v9652 = vpop.xlane.xlu0 %9651
  %v9653 = vsel %vm247, %v9589, 0.0
  %9654 = vadd.xlane.f32.xlu0 %v9653
  %v9655 = vpop.xlane.xlu0 %9654
  %v9656 = vsel %vm247, %v9590, 0.0
  %9657 = vadd.xlane.f32.xlu0 %v9656
  %v9658 = vpop.xlane.xlu0 %9657
  %v9659 = vsel %vm247, %v9591, 0.0
  %9660 = vadd.xlane.f32.xlu0 %v9659
  %v9661 = vpop.xlane.xlu0 %9660
  %v9662 = vsel %vm247, %v9592, 0.0
  %9663 = vadd.xlane.f32.xlu0 %v9662
  %v9664 = vpop.xlane.xlu0 %9663
  %v9665 = vsel %vm247, %v9593, 0.0
  %9666 = vadd.xlane.f32.xlu0 %v9665
  %v9667 = vpop.xlane.xlu0 %9666
  %v9668 = vsel %vm247, %v9594, 0.0
  %9669 = vadd.xlane.f32.xlu0 %v9668
  %v9670 = vpop.xlane.xlu0 %9669
  %v9671 = vmul.f32 %v9601, %v376
  %v9672 = vmul.f32 %v9604, %v376
  %v9673 = vmul.f32 %v9607, %v376
  %v9674 = vmul.f32 %v9610, %v376
  %v9675 = vmul.f32 %v9613, %v376
  %v9676 = vmul.f32 %v9616, %v376
  %v9677 = vmul.f32 %v9619, %v376
  %v9678 = vmul.f32 %v9622, %v376
  %v9679 = vmul.f32 %v9625, %v376
  %v9680 = vmul.f32 %v9628, %v376
  %v9681 = vmul.f32 %v9631, %v376
  %v9682 = vmul.f32 %v9634, %v376
  %v9683 = vmul.f32 %v9637, %v376
  %v9684 = vmul.f32 %v9640, %v376
  %v9685 = vmul.f32 %v9643, %v376
  %v9686 = vmul.f32 %v9646, %v376
  %v9687 = vmul.f32 %v9649, %v376
  %v9688 = vmul.f32 %v9652, %v376
  %v9689 = vmul.f32 %v9655, %v376
  %v9690 = vmul.f32 %v9658, %v376
  %v9691 = vmul.f32 %v9661, %v376
  %v9692 = vmul.f32 %v9664, %v376
  %v9693 = vmul.f32 %v9667, %v376
  %v9694 = vmul.f32 %v9670, %v376
  %v9695 = vmul.f32 %v9571, %v9571
  %v9696 = vmul.f32 %v9572, %v9572
  %v9697 = vmul.f32 %v9573, %v9573
  %v9698 = vmul.f32 %v9574, %v9574
  %v9699 = vmul.f32 %v9575, %v9575
  %v9700 = vmul.f32 %v9576, %v9576
  %v9701 = vmul.f32 %v9577, %v9577
  %v9702 = vmul.f32 %v9578, %v9578
  %v9703 = vmul.f32 %v9579, %v9579
  %v9704 = vmul.f32 %v9580, %v9580
  %v9705 = vmul.f32 %v9581, %v9581
  %v9706 = vmul.f32 %v9582, %v9582
  %v9707 = vmul.f32 %v9583, %v9583
  %v9708 = vmul.f32 %v9584, %v9584
  %v9709 = vmul.f32 %v9585, %v9585
  %v9710 = vmul.f32 %v9586, %v9586
  %v9711 = vmul.f32 %v9587, %v9587
  %v9712 = vmul.f32 %v9588, %v9588
  %v9713 = vmul.f32 %v9589, %v9589
  %v9714 = vmul.f32 %v9590, %v9590
  %v9715 = vmul.f32 %v9591, %v9591
  %v9716 = vmul.f32 %v9592, %v9592
  %v9717 = vmul.f32 %v9593, %v9593
  %v9718 = vmul.f32 %v9594, %v9594
  %v9719 = vsel %vm247, %v9695, 0.0
  %9720 = vadd.xlane.f32.xlu0 %v9719
  %v9721 = vpop.xlane.xlu0 %9720
  %v9722 = vsel %vm247, %v9696, 0.0
  %9723 = vadd.xlane.f32.xlu0 %v9722
  %v9724 = vpop.xlane.xlu0 %9723
  %v9725 = vsel %vm247, %v9697, 0.0
  %9726 = vadd.xlane.f32.xlu0 %v9725
  %v9727 = vpop.xlane.xlu0 %9726
  %v9728 = vsel %vm247, %v9698, 0.0
  %9729 = vadd.xlane.f32.xlu0 %v9728
  %v9730 = vpop.xlane.xlu0 %9729
  %v9731 = vsel %vm247, %v9699, 0.0
  %9732 = vadd.xlane.f32.xlu0 %v9731
  %v9733 = vpop.xlane.xlu0 %9732
  %v9734 = vsel %vm247, %v9700, 0.0
  %9735 = vadd.xlane.f32.xlu0 %v9734
  %v9736 = vpop.xlane.xlu0 %9735
  %v9737 = vsel %vm247, %v9701, 0.0
  %9738 = vadd.xlane.f32.xlu0 %v9737
  %v9739 = vpop.xlane.xlu0 %9738
  %v9740 = vsel %vm247, %v9702, 0.0
  %9741 = vadd.xlane.f32.xlu0 %v9740
  %v9742 = vpop.xlane.xlu0 %9741
  %v9743 = vsel %vm247, %v9703, 0.0
  %9744 = vadd.xlane.f32.xlu0 %v9743
  %v9745 = vpop.xlane.xlu0 %9744
  %v9746 = vsel %vm247, %v9704, 0.0
  %9747 = vadd.xlane.f32.xlu0 %v9746
  %v9748 = vpop.xlane.xlu0 %9747
  %v9749 = vsel %vm247, %v9705, 0.0
  %9750 = vadd.xlane.f32.xlu0 %v9749
  %v9751 = vpop.xlane.xlu0 %9750
  %v9752 = vsel %vm247, %v9706, 0.0
  %9753 = vadd.xlane.f32.xlu0 %v9752
  %v9754 = vpop.xlane.xlu0 %9753
  %v9755 = vsel %vm247, %v9707, 0.0
  %9756 = vadd.xlane.f32.xlu0 %v9755
  %v9757 = vpop.xlane.xlu0 %9756
  %v9758 = vsel %vm247, %v9708, 0.0
  %9759 = vadd.xlane.f32.xlu0 %v9758
  %v9760 = vpop.xlane.xlu0 %9759
  %v9761 = vsel %vm247, %v9709, 0.0
  %9762 = vadd.xlane.f32.xlu0 %v9761
  %v9763 = vpop.xlane.xlu0 %9762
  %v9764 = vsel %vm247, %v9710, 0.0
  %9765 = vadd.xlane.f32.xlu0 %v9764
  %v9766 = vpop.xlane.xlu0 %9765
  %v9767 = vsel %vm247, %v9711, 0.0
  %9768 = vadd.xlane.f32.xlu0 %v9767
  %v9769 = vpop.xlane.xlu0 %9768
  %v9770 = vsel %vm247, %v9712, 0.0
  %9771 = vadd.xlane.f32.xlu0 %v9770
  %v9772 = vpop.xlane.xlu0 %9771
  %v9773 = vsel %vm247, %v9713, 0.0
  %9774 = vadd.xlane.f32.xlu0 %v9773
  %v9775 = vpop.xlane.xlu0 %9774
  %v9776 = vsel %vm247, %v9714, 0.0
  %9777 = vadd.xlane.f32.xlu0 %v9776
  %v9778 = vpop.xlane.xlu0 %9777
  %v9779 = vsel %vm247, %v9715, 0.0
  %9780 = vadd.xlane.f32.xlu0 %v9779
  %v9781 = vpop.xlane.xlu0 %9780
  %v9782 = vsel %vm247, %v9716, 0.0
  %9783 = vadd.xlane.f32.xlu0 %v9782
  %v9784 = vpop.xlane.xlu0 %9783
  %v9785 = vsel %vm247, %v9717, 0.0
  %9786 = vadd.xlane.f32.xlu0 %v9785
  %v9787 = vpop.xlane.xlu0 %9786
  %v9788 = vsel %vm247, %v9718, 0.0
  %9789 = vadd.xlane.f32.xlu0 %v9788
  %v9790 = vpop.xlane.xlu0 %9789
  %v9791 = vmul.f32 %v9721, %v376
  %v9792 = vmul.f32 %v9724, %v376
  %v9793 = vmul.f32 %v9727, %v376
  %v9794 = vmul.f32 %v9730, %v376
  %v9795 = vmul.f32 %v9733, %v376
  %v9796 = vmul.f32 %v9736, %v376
  %v9797 = vmul.f32 %v9739, %v376
  %v9798 = vmul.f32 %v9742, %v376
  %v9799 = vmul.f32 %v9745, %v376
  %v9800 = vmul.f32 %v9748, %v376
  %v9801 = vmul.f32 %v9751, %v376
  %v9802 = vmul.f32 %v9754, %v376
  %v9803 = vmul.f32 %v9757, %v376
  %v9804 = vmul.f32 %v9760, %v376
  %v9805 = vmul.f32 %v9763, %v376
  %v9806 = vmul.f32 %v9766, %v376
  %v9807 = vmul.f32 %v9769, %v376
  %v9808 = vmul.f32 %v9772, %v376
  %v9809 = vmul.f32 %v9775, %v376
  %v9810 = vmul.f32 %v9778, %v376
  %v9811 = vmul.f32 %v9781, %v376
  %v9812 = vmul.f32 %v9784, %v376
  %v9813 = vmul.f32 %v9787, %v376
  %v9814 = vmul.f32 %v9790, %v376
  %v9815 = vmul.f32 %v9671, %v9671
  %v9816 = vmul.f32 %v9672, %v9672
  %v9817 = vmul.f32 %v9673, %v9673
  %v9818 = vmul.f32 %v9674, %v9674
  %v9819 = vmul.f32 %v9675, %v9675
  %v9820 = vmul.f32 %v9676, %v9676
  %v9821 = vmul.f32 %v9677, %v9677
  %v9822 = vmul.f32 %v9678, %v9678
  %v9823 = vmul.f32 %v9679, %v9679
  %v9824 = vmul.f32 %v9680, %v9680
  %v9825 = vmul.f32 %v9681, %v9681
  %v9826 = vmul.f32 %v9682, %v9682
  %v9827 = vmul.f32 %v9683, %v9683
  %v9828 = vmul.f32 %v9684, %v9684
  %v9829 = vmul.f32 %v9685, %v9685
  %v9830 = vmul.f32 %v9686, %v9686
  %v9831 = vmul.f32 %v9687, %v9687
  %v9832 = vmul.f32 %v9688, %v9688
  %v9833 = vmul.f32 %v9689, %v9689
  %v9834 = vmul.f32 %v9690, %v9690
  %v9835 = vmul.f32 %v9691, %v9691
  %v9836 = vmul.f32 %v9692, %v9692
  %v9837 = vmul.f32 %v9693, %v9693
  %v9838 = vmul.f32 %v9694, %v9694
  %v9839 = vsub.f32 %v9791, %v9815
  %v9840 = vsub.f32 %v9792, %v9816
  %v9841 = vsub.f32 %v9793, %v9817
  %v9842 = vsub.f32 %v9794, %v9818
  %v9843 = vsub.f32 %v9795, %v9819
  %v9844 = vsub.f32 %v9796, %v9820
  %v9845 = vsub.f32 %v9797, %v9821
  %v9846 = vsub.f32 %v9798, %v9822
  %v9847 = vsub.f32 %v9799, %v9823
  %v9848 = vsub.f32 %v9800, %v9824
  %v9849 = vsub.f32 %v9801, %v9825
  %v9850 = vsub.f32 %v9802, %v9826
  %v9851 = vsub.f32 %v9803, %v9827
  %v9852 = vsub.f32 %v9804, %v9828
  %v9853 = vsub.f32 %v9805, %v9829
  %v9854 = vsub.f32 %v9806, %v9830
  %v9855 = vsub.f32 %v9807, %v9831
  %v9856 = vsub.f32 %v9808, %v9832
  %v9857 = vsub.f32 %v9809, %v9833
  %v9858 = vsub.f32 %v9810, %v9834
  %v9859 = vsub.f32 %v9811, %v9835
  %v9860 = vsub.f32 %v9812, %v9836
  %v9861 = vsub.f32 %v9813, %v9837
  %v9862 = vsub.f32 %v9814, %v9838
  %v9863 = vsub.f32 %v9571, %v9671
  %v9864 = vsub.f32 %v9572, %v9672
  %v9865 = vsub.f32 %v9573, %v9673
  %v9866 = vsub.f32 %v9574, %v9674
  %v9867 = vsub.f32 %v9575, %v9675
  %v9868 = vsub.f32 %v9576, %v9676
  %v9869 = vsub.f32 %v9577, %v9677
  %v9870 = vsub.f32 %v9578, %v9678
  %v9871 = vsub.f32 %v9579, %v9679
  %v9872 = vsub.f32 %v9580, %v9680
  %v9873 = vsub.f32 %v9581, %v9681
  %v9874 = vsub.f32 %v9582, %v9682
  %v9875 = vsub.f32 %v9583, %v9683
  %v9876 = vsub.f32 %v9584, %v9684
  %v9877 = vsub.f32 %v9585, %v9685
  %v9878 = vsub.f32 %v9586, %v9686
  %v9879 = vsub.f32 %v9587, %v9687
  %v9880 = vsub.f32 %v9588, %v9688
  %v9881 = vsub.f32 %v9589, %v9689
  %v9882 = vsub.f32 %v9590, %v9690
  %v9883 = vsub.f32 %v9591, %v9691
  %v9884 = vsub.f32 %v9592, %v9692
  %v9885 = vsub.f32 %v9593, %v9693
  %v9886 = vsub.f32 %v9594, %v9694
  %v9887 = vadd.f32 %v9839, 1e-05
  %v9888 = vadd.f32 %v9840, 1e-05
  %v9889 = vadd.f32 %v9841, 1e-05
  %v9890 = vadd.f32 %v9842, 1e-05
  %v9891 = vadd.f32 %v9843, 1e-05
  %v9892 = vadd.f32 %v9844, 1e-05
  %v9893 = vadd.f32 %v9845, 1e-05
  %v9894 = vadd.f32 %v9846, 1e-05
  %v9895 = vadd.f32 %v9847, 1e-05
  %v9896 = vadd.f32 %v9848, 1e-05
  %v9897 = vadd.f32 %v9849, 1e-05
  %v9898 = vadd.f32 %v9850, 1e-05
  %v9899 = vadd.f32 %v9851, 1e-05
  %v9900 = vadd.f32 %v9852, 1e-05
  %v9901 = vadd.f32 %v9853, 1e-05
  %v9902 = vadd.f32 %v9854, 1e-05
  %v9903 = vadd.f32 %v9855, 1e-05
  %v9904 = vadd.f32 %v9856, 1e-05
  %v9905 = vadd.f32 %v9857, 1e-05
  %v9906 = vadd.f32 %v9858, 1e-05
  %v9907 = vadd.f32 %v9859, 1e-05
  %v9908 = vadd.f32 %v9860, 1e-05
  %v9909 = vadd.f32 %v9861, 1e-05
  %v9910 = vadd.f32 %v9862, 1e-05
  %v9911 = vrsqrt.pop %v9887
  %v9912 = vmul.f32 %v9911, %v9887
  %v9913 = vmul.f32 %v9912, %v9911
  %v9914 = vmul.f32 0.5, %v9913
  %v9915 = vsub.f32 1.5, %v9914
  %v9916 = vmul.f32 %v9911, %v9915
  %vm9917 = vweird.f32 %v9887
  %vm9918 = vweird.f32 %v9911
  %vm9919 = vmor %vm9917, %vm9918
  %v9920 = vsel %vm9919, %v9911, %v9916
  %v9921 = vrsqrt.pop %v9888
  %v9922 = vmul.f32 %v9921, %v9888
  %v9923 = vmul.f32 %v9922, %v9921
  %v9924 = vmul.f32 0.5, %v9923
  %v9925 = vsub.f32 1.5, %v9924
  %v9926 = vmul.f32 %v9921, %v9925
  %vm9927 = vweird.f32 %v9888
  %vm9928 = vweird.f32 %v9921
  %vm9929 = vmor %vm9927, %vm9928
  %v9930 = vsel %vm9929, %v9921, %v9926
  %v9931 = vrsqrt.pop %v9889
  %v9932 = vmul.f32 %v9931, %v9889
  %v9933 = vmul.f32 %v9932, %v9931
  %v9934 = vmul.f32 0.5, %v9933
  %v9935 = vsub.f32 1.5, %v9934
  %v9936 = vmul.f32 %v9931, %v9935
  %vm9937 = vweird.f32 %v9889
  %vm9938 = vweird.f32 %v9931
  %vm9939 = vmor %vm9937, %vm9938
  %v9940 = vsel %vm9939, %v9931, %v9936
  %v9941 = vrsqrt.pop %v9890
  %v9942 = vmul.f32 %v9941, %v9890
  %v9943 = vmul.f32 %v9942, %v9941
  %v9944 = vmul.f32 0.5, %v9943
  %v9945 = vsub.f32 1.5, %v9944
  %v9946 = vmul.f32 %v9941, %v9945
  %vm9947 = vweird.f32 %v9890
  %vm9948 = vweird.f32 %v9941
  %vm9949 = vmor %vm9947, %vm9948
  %v9950 = vsel %vm9949, %v9941, %v9946
  %v9951 = vrsqrt.pop %v9891
  %v9952 = vmul.f32 %v9951, %v9891
  %v9953 = vmul.f32 %v9952, %v9951
  %v9954 = vmul.f32 0.5, %v9953
  %v9955 = vsub.f32 1.5, %v9954
  %v9956 = vmul.f32 %v9951, %v9955
  %vm9957 = vweird.f32 %v9891
  %vm9958 = vweird.f32 %v9951
  %vm9959 = vmor %vm9957, %vm9958
  %v9960 = vsel %vm9959, %v9951, %v9956
  %v9961 = vrsqrt.pop %v9892
  %v9962 = vmul.f32 %v9961, %v9892
  %v9963 = vmul.f32 %v9962, %v9961
  %v9964 = vmul.f32 0.5, %v9963
  %v9965 = vsub.f32 1.5, %v9964
  %v9966 = vmul.f32 %v9961, %v9965
  %vm9967 = vweird.f32 %v9892
  %vm9968 = vweird.f32 %v9961
  %vm9969 = vmor %vm9967, %vm9968
  %v9970 = vsel %vm9969, %v9961, %v9966
  %v9971 = vrsqrt.pop %v9893
  %v9972 = vmul.f32 %v9971, %v9893
  %v9973 = vmul.f32 %v9972, %v9971
  %v9974 = vmul.f32 0.5, %v9973
  %v9975 = vsub.f32 1.5, %v9974
  %v9976 = vmul.f32 %v9971, %v9975
  %vm9977 = vweird.f32 %v9893
  %vm9978 = vweird.f32 %v9971
  %vm9979 = vmor %vm9977, %vm9978
  %v9980 = vsel %vm9979, %v9971, %v9976
  %v9981 = vrsqrt.pop %v9894
  %v9982 = vmul.f32 %v9981, %v9894
  %v9983 = vmul.f32 %v9982, %v9981
  %v9984 = vmul.f32 0.5, %v9983
  %v9985 = vsub.f32 1.5, %v9984
  %v9986 = vmul.f32 %v9981, %v9985
  %vm9987 = vweird.f32 %v9894
  %vm9988 = vweird.f32 %v9981
  %vm9989 = vmor %vm9987, %vm9988
  %v9990 = vsel %vm9989, %v9981, %v9986
  %v9991 = vrsqrt.pop %v9895
  %v9992 = vmul.f32 %v9991, %v9895
  %v9993 = vmul.f32 %v9992, %v9991
  %v9994 = vmul.f32 0.5, %v9993
  %v9995 = vsub.f32 1.5, %v9994
  %v9996 = vmul.f32 %v9991, %v9995
  %vm9997 = vweird.f32 %v9895
  %vm9998 = vweird.f32 %v9991
  %vm9999 = vmor %vm9997, %vm9998
  %v10000 = vsel %vm9999, %v9991, %v9996
  %v10001 = vrsqrt.pop %v9896
  %v10002 = vmul.f32 %v10001, %v9896
  %v10003 = vmul.f32 %v10002, %v10001
  %v10004 = vmul.f32 0.5, %v10003
  %v10005 = vsub.f32 1.5, %v10004
  %v10006 = vmul.f32 %v10001, %v10005
  %vm10007 = vweird.f32 %v9896
  %vm10008 = vweird.f32 %v10001
  %vm10009 = vmor %vm10007, %vm10008
  %v10010 = vsel %vm10009, %v10001, %v10006
  %v10011 = vrsqrt.pop %v9897
  %v10012 = vmul.f32 %v10011, %v9897
  %v10013 = vmul.f32 %v10012, %v10011
  %v10014 = vmul.f32 0.5, %v10013
  %v10015 = vsub.f32 1.5, %v10014
  %v10016 = vmul.f32 %v10011, %v10015
  %vm10017 = vweird.f32 %v9897
  %vm10018 = vweird.f32 %v10011
  %vm10019 = vmor %vm10017, %vm10018
  %v10020 = vsel %vm10019, %v10011, %v10016
  %v10021 = vrsqrt.pop %v9898
  %v10022 = vmul.f32 %v10021, %v9898
  %v10023 = vmul.f32 %v10022, %v10021
  %v10024 = vmul.f32 0.5, %v10023
  %v10025 = vsub.f32 1.5, %v10024
  %v10026 = vmul.f32 %v10021, %v10025
  %vm10027 = vweird.f32 %v9898
  %vm10028 = vweird.f32 %v10021
  %vm10029 = vmor %vm10027, %vm10028
  %v10030 = vsel %vm10029, %v10021, %v10026
  %v10031 = vrsqrt.pop %v9899
  %v10032 = vmul.f32 %v10031, %v9899
  %v10033 = vmul.f32 %v10032, %v10031
  %v10034 = vmul.f32 0.5, %v10033
  %v10035 = vsub.f32 1.5, %v10034
  %v10036 = vmul.f32 %v10031, %v10035
  %vm10037 = vweird.f32 %v9899
  %vm10038 = vweird.f32 %v10031
  %vm10039 = vmor %vm10037, %vm10038
  %v10040 = vsel %vm10039, %v10031, %v10036
  %v10041 = vrsqrt.pop %v9900
  %v10042 = vmul.f32 %v10041, %v9900
  %v10043 = vmul.f32 %v10042, %v10041
  %v10044 = vmul.f32 0.5, %v10043
  %v10045 = vsub.f32 1.5, %v10044
  %v10046 = vmul.f32 %v10041, %v10045
  %vm10047 = vweird.f32 %v9900
  %vm10048 = vweird.f32 %v10041
  %vm10049 = vmor %vm10047, %vm10048
  %v10050 = vsel %vm10049, %v10041, %v10046
  %v10051 = vrsqrt.pop %v9901
  %v10052 = vmul.f32 %v10051, %v9901
  %v10053 = vmul.f32 %v10052, %v10051
  %v10054 = vmul.f32 0.5, %v10053
  %v10055 = vsub.f32 1.5, %v10054
  %v10056 = vmul.f32 %v10051, %v10055
  %vm10057 = vweird.f32 %v9901
  %vm10058 = vweird.f32 %v10051
  %vm10059 = vmor %vm10057, %vm10058
  %v10060 = vsel %vm10059, %v10051, %v10056
  %v10061 = vrsqrt.pop %v9902
  %v10062 = vmul.f32 %v10061, %v9902
  %v10063 = vmul.f32 %v10062, %v10061
  %v10064 = vmul.f32 0.5, %v10063
  %v10065 = vsub.f32 1.5, %v10064
  %v10066 = vmul.f32 %v10061, %v10065
  %vm10067 = vweird.f32 %v9902
  %vm10068 = vweird.f32 %v10061
  %vm10069 = vmor %vm10067, %vm10068
  %v10070 = vsel %vm10069, %v10061, %v10066
  %v10071 = vrsqrt.pop %v9903
  %v10072 = vmul.f32 %v10071, %v9903
  %v10073 = vmul.f32 %v10072, %v10071
  %v10074 = vmul.f32 0.5, %v10073
  %v10075 = vsub.f32 1.5, %v10074
  %v10076 = vmul.f32 %v10071, %v10075
  %vm10077 = vweird.f32 %v9903
  %vm10078 = vweird.f32 %v10071
  %vm10079 = vmor %vm10077, %vm10078
  %v10080 = vsel %vm10079, %v10071, %v10076
  %v10081 = vrsqrt.pop %v9904
  %v10082 = vmul.f32 %v10081, %v9904
  %v10083 = vmul.f32 %v10082, %v10081
  %v10084 = vmul.f32 0.5, %v10083
  %v10085 = vsub.f32 1.5, %v10084
  %v10086 = vmul.f32 %v10081, %v10085
  %vm10087 = vweird.f32 %v9904
  %vm10088 = vweird.f32 %v10081
  %vm10089 = vmor %vm10087, %vm10088
  %v10090 = vsel %vm10089, %v10081, %v10086
  %v10091 = vrsqrt.pop %v9905
  %v10092 = vmul.f32 %v10091, %v9905
  %v10093 = vmul.f32 %v10092, %v10091
  %v10094 = vmul.f32 0.5, %v10093
  %v10095 = vsub.f32 1.5, %v10094
  %v10096 = vmul.f32 %v10091, %v10095
  %vm10097 = vweird.f32 %v9905
  %vm10098 = vweird.f32 %v10091
  %vm10099 = vmor %vm10097, %vm10098
  %v10100 = vsel %vm10099, %v10091, %v10096
  %v10101 = vrsqrt.pop %v9906
  %v10102 = vmul.f32 %v10101, %v9906
  %v10103 = vmul.f32 %v10102, %v10101
  %v10104 = vmul.f32 0.5, %v10103
  %v10105 = vsub.f32 1.5, %v10104
  %v10106 = vmul.f32 %v10101, %v10105
  %vm10107 = vweird.f32 %v9906
  %vm10108 = vweird.f32 %v10101
  %vm10109 = vmor %vm10107, %vm10108
  %v10110 = vsel %vm10109, %v10101, %v10106
  %v10111 = vrsqrt.pop %v9907
  %v10112 = vmul.f32 %v10111, %v9907
  %v10113 = vmul.f32 %v10112, %v10111
  %v10114 = vmul.f32 0.5, %v10113
  %v10115 = vsub.f32 1.5, %v10114
  %v10116 = vmul.f32 %v10111, %v10115
  %vm10117 = vweird.f32 %v9907
  %vm10118 = vweird.f32 %v10111
  %vm10119 = vmor %vm10117, %vm10118
  %v10120 = vsel %vm10119, %v10111, %v10116
  %v10121 = vrsqrt.pop %v9908
  %v10122 = vmul.f32 %v10121, %v9908
  %v10123 = vmul.f32 %v10122, %v10121
  %v10124 = vmul.f32 0.5, %v10123
  %v10125 = vsub.f32 1.5, %v10124
  %v10126 = vmul.f32 %v10121, %v10125
  %vm10127 = vweird.f32 %v9908
  %vm10128 = vweird.f32 %v10121
  %vm10129 = vmor %vm10127, %vm10128
  %v10130 = vsel %vm10129, %v10121, %v10126
  %v10131 = vrsqrt.pop %v9909
  %v10132 = vmul.f32 %v10131, %v9909
  %v10133 = vmul.f32 %v10132, %v10131
  %v10134 = vmul.f32 0.5, %v10133
  %v10135 = vsub.f32 1.5, %v10134
  %v10136 = vmul.f32 %v10131, %v10135
  %vm10137 = vweird.f32 %v9909
  %vm10138 = vweird.f32 %v10131
  %vm10139 = vmor %vm10137, %vm10138
  %v10140 = vsel %vm10139, %v10131, %v10136
  %v10141 = vrsqrt.pop %v9910
  %v10142 = vmul.f32 %v10141, %v9910
  %v10143 = vmul.f32 %v10142, %v10141
  %v10144 = vmul.f32 0.5, %v10143
  %v10145 = vsub.f32 1.5, %v10144
  %v10146 = vmul.f32 %v10141, %v10145
  %vm10147 = vweird.f32 %v9910
  %vm10148 = vweird.f32 %v10141
  %vm10149 = vmor %vm10147, %vm10148
  %v10150 = vsel %vm10149, %v10141, %v10146
  %v10151 = vmul.f32 %v9863, %v9920
  %v10152 = vmul.f32 %v9864, %v9930
  %v10153 = vmul.f32 %v9865, %v9940
  %v10154 = vmul.f32 %v9866, %v9950
  %v10155 = vmul.f32 %v9867, %v9960
  %v10156 = vmul.f32 %v9868, %v9970
  %v10157 = vmul.f32 %v9869, %v9980
  %v10158 = vmul.f32 %v9870, %v9990
  %v10159 = vmul.f32 %v9871, %v10000
  %v10160 = vmul.f32 %v9872, %v10010
  %v10161 = vmul.f32 %v9873, %v10020
  %v10162 = vmul.f32 %v9874, %v10030
  %v10163 = vmul.f32 %v9875, %v10040
  %v10164 = vmul.f32 %v9876, %v10050
  %v10165 = vmul.f32 %v9877, %v10060
  %v10166 = vmul.f32 %v9878, %v10070
  %v10167 = vmul.f32 %v9879, %v10080
  %v10168 = vmul.f32 %v9880, %v10090
  %v10169 = vmul.f32 %v9881, %v10100
  %v10170 = vmul.f32 %v9882, %v10110
  %v10171 = vmul.f32 %v9883, %v10120
  %v10172 = vmul.f32 %v9884, %v10130
  %v10173 = vmul.f32 %v9885, %v10140
  %v10174 = vmul.f32 %v9886, %v10150
  %v10176 = vperm.slane %v9596, 0
  %v10178 = vmul.f32 %v10151, %v10176
  %v10179 = vmul.f32 %v10152, %v10176
  %v10180 = vmul.f32 %v10153, %v10176
  %v10181 = vmul.f32 %v10154, %v10176
  %v10182 = vmul.f32 %v10155, %v10176
  %v10183 = vmul.f32 %v10156, %v10176
  %v10184 = vmul.f32 %v10157, %v10176
  %v10185 = vmul.f32 %v10158, %v10176
  %v10186 = vmul.f32 %v10159, %v10176
  %v10187 = vmul.f32 %v10160, %v10176
  %v10188 = vmul.f32 %v10161, %v10176
  %v10189 = vmul.f32 %v10162, %v10176
  %v10190 = vmul.f32 %v10163, %v10176
  %v10191 = vmul.f32 %v10164, %v10176
  %v10192 = vmul.f32 %v10165, %v10176
  %v10193 = vmul.f32 %v10166, %v10176
  %v10194 = vmul.f32 %v10167, %v10176
  %v10195 = vmul.f32 %v10168, %v10176
  %v10196 = vmul.f32 %v10169, %v10176
  %v10197 = vmul.f32 %v10170, %v10176
  %v10198 = vmul.f32 %v10171, %v10176
  %v10199 = vmul.f32 %v10172, %v10176
  %v10200 = vmul.f32 %v10173, %v10176
  %v10201 = vmul.f32 %v10174, %v10176
  %v10203 = vperm.slane %v9598, 0
  %v10205 = vadd.f32 %v10178, %v10203
  %v10206 = vadd.f32 %v10179, %v10203
  %v10207 = vadd.f32 %v10180, %v10203
  %v10208 = vadd.f32 %v10181, %v10203
  %v10209 = vadd.f32 %v10182, %v10203
  %v10210 = vadd.f32 %v10183, %v10203
  %v10211 = vadd.f32 %v10184, %v10203
  %v10212 = vadd.f32 %v10185, %v10203
  %v10213 = vadd.f32 %v10186, %v10203
  %v10214 = vadd.f32 %v10187, %v10203
  %v10215 = vadd.f32 %v10188, %v10203
  %v10216 = vadd.f32 %v10189, %v10203
  %v10217 = vadd.f32 %v10190, %v10203
  %v10218 = vadd.f32 %v10191, %v10203
  %v10219 = vadd.f32 %v10192, %v10203
  %v10220 = vadd.f32 %v10193, %v10203
  %v10221 = vadd.f32 %v10194, %v10203
  %v10222 = vadd.f32 %v10195, %v10203
  %v10223 = vadd.f32 %v10196, %v10203
  %v10224 = vadd.f32 %v10197, %v10203
  %v10225 = vadd.f32 %v10198, %v10203
  %v10226 = vadd.f32 %v10199, %v10203
  %v10227 = vadd.f32 %v10200, %v10203
  %v10228 = vadd.f32 %v10201, %v10203
  %v10229 = vpack.c.bf16 %v10206, %v10205
  %v10230 = vpack.c.bf16 %v10208, %v10207
  %v10231 = vpack.c.bf16 %v10210, %v10209
  %v10232 = vpack.c.bf16 %v10212, %v10211
  %v10233 = vpack.c.bf16 %v10214, %v10213
  %v10234 = vpack.c.bf16 %v10216, %v10215
  %v10235 = vpack.c.bf16 %v10218, %v10217
  %v10236 = vpack.c.bf16 %v10220, %v10219
  %v10237 = vpack.c.bf16 %v10222, %v10221
  %v10238 = vpack.c.bf16 %v10224, %v10223
  %v10239 = vpack.c.bf16 %v10226, %v10225
  %v10240 = vpack.c.bf16 %v10228, %v10227
  %s10241 = scalar_lea.vmem %s11, 16
  %v10242 = vld [vmem:[%s10241] sm:$0xf]
  %v10243 = vld [vmem:[%s10241 + $0x4] sm:$0xf]
  %v10244 = vld [vmem:[%s10241 + $0x8] sm:$0xf]
  %v10245 = vld [vmem:[%s10241 + $0xc] sm:$0xf]
  %s10246 = scalar_lea.vmem %s12, 1
  %v10247 = vld [vmem:[%s10246] sm:$0x1]
  %v10249 = vperm.slane %v10247, 0
  %v10255 = vunpack.c.l.b16 %v10242
  %v10256 = vunpack.c.l.b16 %v10243
  %v10257 = vunpack.c.l.b16 %v10244
  %v10258 = vunpack.c.l.b16 %v10245
  %v10259 = vpack.c.b16 %v10256, %v10255
  %v10260 = vpack.c.b16 %v10258, %v10257
  %v10264 = vsel %vm247, %v10229, 0
  %v10267 = vsel %vm247, %v10230, 0
  %v10270 = vsel %vm247, %v10231, 0
  %v10273 = vsel %vm247, %v10232, 0
  %v10276 = vsel %vm247, %v10233, 0
  %v10279 = vsel %vm247, %v10234, 0
  %v10282 = vsel %vm247, %v10235, 0
  %v10285 = vsel %vm247, %v10236, 0
  %v10288 = vsel %vm247, %v10237, 0
  %v10291 = vsel %vm247, %v10238, 0
  %v10294 = vsel %vm247, %v10239, 0
  %v10297 = vsel %vm247, %v10240, 0
  %10299 = vmatpush.bf16.msra.mxu0 0
  %10300 = vmatpush.bf16.msra.mxu0 0
  %10301 = vmatpush.bf16.msra.mxu0 0
  %10302 = vmatpush.bf16.msra.mxu0 0
  %10303 = vmatpush.bf16.msra.mxu0 0
  %10304 = vmatpush.bf16.msra.mxu0 0
  %10305 = vmatpush.bf16.msra.mxu0 %v10260
  %10306 = vmatpush.bf16.msra.mxu0 %v10259
  %10307 = vmatmul.bf16.gmra.mxu0 %v10264
  %v10308 = vpop.f32.mrf.mxu0
  %v10309 = vadd.f32 %v10249, %v10308
  %v10310 = vpop.f32.mrf.mxu0
  %v10311 = vadd.f32 %v10249, %v10310
  %10312 = vmatmul.bf16.gmra.mxu0 %v10267
  %v10313 = vpop.f32.mrf.mxu0
  %v10314 = vadd.f32 %v10249, %v10313
  %v10315 = vpop.f32.mrf.mxu0
  %v10316 = vadd.f32 %v10249, %v10315
  %10317 = vmatmul.bf16.gmra.mxu0 %v10270
  %v10318 = vpop.f32.mrf.mxu0
  %v10319 = vadd.f32 %v10249, %v10318
  %v10320 = vpop.f32.mrf.mxu0
  %v10321 = vadd.f32 %v10249, %v10320
  %10322 = vmatmul.bf16.gmra.mxu0 %v10273
  %v10323 = vpop.f32.mrf.mxu0
  %v10324 = vadd.f32 %v10249, %v10323
  %v10325 = vpop.f32.mrf.mxu0
  %v10326 = vadd.f32 %v10249, %v10325
  %10327 = vmatmul.bf16.gmra.mxu0 %v10276
  %v10328 = vpop.f32.mrf.mxu0
  %v10329 = vadd.f32 %v10249, %v10328
  %v10330 = vpop.f32.mrf.mxu0
  %v10331 = vadd.f32 %v10249, %v10330
  %10332 = vmatmul.bf16.gmra.mxu0 %v10279
  %v10333 = vpop.f32.mrf.mxu0
  %v10334 = vadd.f32 %v10249, %v10333
  %v10335 = vpop.f32.mrf.mxu0
  %v10336 = vadd.f32 %v10249, %v10335
  %10337 = vmatmul.bf16.gmra.mxu0 %v10282
  %v10338 = vpop.f32.mrf.mxu0
  %v10339 = vadd.f32 %v10249, %v10338
  %v10340 = vpop.f32.mrf.mxu0
  %v10341 = vadd.f32 %v10249, %v10340
  %10342 = vmatmul.bf16.gmra.mxu0 %v10285
  %v10343 = vpop.f32.mrf.mxu0
  %v10344 = vadd.f32 %v10249, %v10343
  %v10345 = vpop.f32.mrf.mxu0
  %v10346 = vadd.f32 %v10249, %v10345
  %10347 = vmatmul.bf16.gmra.mxu0 %v10288
  %v10348 = vpop.f32.mrf.mxu0
  %v10349 = vadd.f32 %v10249, %v10348
  %v10350 = vpop.f32.mrf.mxu0
  %v10351 = vadd.f32 %v10249, %v10350
  %10352 = vmatmul.bf16.gmra.mxu0 %v10291
  %v10353 = vpop.f32.mrf.mxu0
  %v10354 = vadd.f32 %v10249, %v10353
  %v10355 = vpop.f32.mrf.mxu0
  %v10356 = vadd.f32 %v10249, %v10355
  %10357 = vmatmul.bf16.gmra.mxu0 %v10294
  %v10358 = vpop.f32.mrf.mxu0
  %v10359 = vadd.f32 %v10249, %v10358
  %v10360 = vpop.f32.mrf.mxu0
  %v10361 = vadd.f32 %v10249, %v10360
  %10362 = vmatmul.bf16.gmra.mxu0 %v10297
  %v10363 = vpop.f32.mrf.mxu0
  %v10364 = vadd.f32 %v10249, %v10363
  %v10365 = vpop.f32.mrf.mxu0
  %v10366 = vadd.f32 %v10249, %v10365
  %10367 = vdwg.mxu0
  %v10368 = vmul.f32 %v10309, 0.5
  %v10369 = vmul.f32 %v10311, 0.5
  %v10370 = vmul.f32 %v10314, 0.5
  %v10371 = vmul.f32 %v10316, 0.5
  %v10372 = vmul.f32 %v10319, 0.5
  %v10373 = vmul.f32 %v10321, 0.5
  %v10374 = vmul.f32 %v10324, 0.5
  %v10375 = vmul.f32 %v10326, 0.5
  %v10376 = vmul.f32 %v10329, 0.5
  %v10377 = vmul.f32 %v10331, 0.5
  %v10378 = vmul.f32 %v10334, 0.5
  %v10379 = vmul.f32 %v10336, 0.5
  %v10380 = vmul.f32 %v10339, 0.5
  %v10381 = vmul.f32 %v10341, 0.5
  %v10382 = vmul.f32 %v10344, 0.5
  %v10383 = vmul.f32 %v10346, 0.5
  %v10384 = vmul.f32 %v10349, 0.5
  %v10385 = vmul.f32 %v10351, 0.5
  %v10386 = vmul.f32 %v10354, 0.5
  %v10387 = vmul.f32 %v10356, 0.5
  %v10388 = vmul.f32 %v10359, 0.5
  %v10389 = vmul.f32 %v10361, 0.5
  %v10390 = vmul.f32 %v10364, 0.5
  %v10391 = vmul.f32 %v10366, 0.5
  %v10392 = vmul.f32 %v10309, 0.044715
  %v10393 = vmul.f32 %v10311, 0.044715
  %v10394 = vmul.f32 %v10314, 0.044715
  %v10395 = vmul.f32 %v10316, 0.044715
  %v10396 = vmul.f32 %v10319, 0.044715
  %v10397 = vmul.f32 %v10321, 0.044715
  %v10398 = vmul.f32 %v10324, 0.044715
  %v10399 = vmul.f32 %v10326, 0.044715
  %v10400 = vmul.f32 %v10329, 0.044715
  %v10401 = vmul.f32 %v10331, 0.044715
  %v10402 = vmul.f32 %v10334, 0.044715
  %v10403 = vmul.f32 %v10336, 0.044715
  %v10404 = vmul.f32 %v10339, 0.044715
  %v10405 = vmul.f32 %v10341, 0.044715
  %v10406 = vmul.f32 %v10344, 0.044715
  %v10407 = vmul.f32 %v10346, 0.044715
  %v10408 = vmul.f32 %v10349, 0.044715
  %v10409 = vmul.f32 %v10351, 0.044715
  %v10410 = vmul.f32 %v10354, 0.044715
  %v10411 = vmul.f32 %v10356, 0.044715
  %v10412 = vmul.f32 %v10359, 0.044715
  %v10413 = vmul.f32 %v10361, 0.044715
  %v10414 = vmul.f32 %v10364, 0.044715
  %v10415 = vmul.f32 %v10366, 0.044715
  %v10416 = vmul.f32 %v10392, %v10309
  %v10417 = vmul.f32 %v10393, %v10311
  %v10418 = vmul.f32 %v10394, %v10314
  %v10419 = vmul.f32 %v10395, %v10316
  %v10420 = vmul.f32 %v10396, %v10319
  %v10421 = vmul.f32 %v10397, %v10321
  %v10422 = vmul.f32 %v10398, %v10324
  %v10423 = vmul.f32 %v10399, %v10326
  %v10424 = vmul.f32 %v10400, %v10329
  %v10425 = vmul.f32 %v10401, %v10331
  %v10426 = vmul.f32 %v10402, %v10334
  %v10427 = vmul.f32 %v10403, %v10336
  %v10428 = vmul.f32 %v10404, %v10339
  %v10429 = vmul.f32 %v10405, %v10341
  %v10430 = vmul.f32 %v10406, %v10344
  %v10431 = vmul.f32 %v10407, %v10346
  %v10432 = vmul.f32 %v10408, %v10349
  %v10433 = vmul.f32 %v10409, %v10351
  %v10434 = vmul.f32 %v10410, %v10354
  %v10435 = vmul.f32 %v10411, %v10356
  %v10436 = vmul.f32 %v10412, %v10359
  %v10437 = vmul.f32 %v10413, %v10361
  %v10438 = vmul.f32 %v10414, %v10364
  %v10439 = vmul.f32 %v10415, %v10366
  %v10440 = vmul.f32 %v10416, %v10309
  %v10441 = vmul.f32 %v10417, %v10311
  %v10442 = vmul.f32 %v10418, %v10314
  %v10443 = vmul.f32 %v10419, %v10316
  %v10444 = vmul.f32 %v10420, %v10319
  %v10445 = vmul.f32 %v10421, %v10321
  %v10446 = vmul.f32 %v10422, %v10324
  %v10447 = vmul.f32 %v10423, %v10326
  %v10448 = vmul.f32 %v10424, %v10329
  %v10449 = vmul.f32 %v10425, %v10331
  %v10450 = vmul.f32 %v10426, %v10334
  %v10451 = vmul.f32 %v10427, %v10336
  %v10452 = vmul.f32 %v10428, %v10339
  %v10453 = vmul.f32 %v10429, %v10341
  %v10454 = vmul.f32 %v10430, %v10344
  %v10455 = vmul.f32 %v10431, %v10346
  %v10456 = vmul.f32 %v10432, %v10349
  %v10457 = vmul.f32 %v10433, %v10351
  %v10458 = vmul.f32 %v10434, %v10354
  %v10459 = vmul.f32 %v10435, %v10356
  %v10460 = vmul.f32 %v10436, %v10359
  %v10461 = vmul.f32 %v10437, %v10361
  %v10462 = vmul.f32 %v10438, %v10364
  %v10463 = vmul.f32 %v10439, %v10366
  %v10464 = vadd.f32 %v10309, %v10440
  %v10465 = vadd.f32 %v10311, %v10441
  %v10466 = vadd.f32 %v10314, %v10442
  %v10467 = vadd.f32 %v10316, %v10443
  %v10468 = vadd.f32 %v10319, %v10444
  %v10469 = vadd.f32 %v10321, %v10445
  %v10470 = vadd.f32 %v10324, %v10446
  %v10471 = vadd.f32 %v10326, %v10447
  %v10472 = vadd.f32 %v10329, %v10448
  %v10473 = vadd.f32 %v10331, %v10449
  %v10474 = vadd.f32 %v10334, %v10450
  %v10475 = vadd.f32 %v10336, %v10451
  %v10476 = vadd.f32 %v10339, %v10452
  %v10477 = vadd.f32 %v10341, %v10453
  %v10478 = vadd.f32 %v10344, %v10454
  %v10479 = vadd.f32 %v10346, %v10455
  %v10480 = vadd.f32 %v10349, %v10456
  %v10481 = vadd.f32 %v10351, %v10457
  %v10482 = vadd.f32 %v10354, %v10458
  %v10483 = vadd.f32 %v10356, %v10459
  %v10484 = vadd.f32 %v10359, %v10460
  %v10485 = vadd.f32 %v10361, %v10461
  %v10486 = vadd.f32 %v10364, %v10462
  %v10487 = vadd.f32 %v10366, %v10463
  %v10488 = vmul.f32 %v10464, 0.7978846
  %v10489 = vmul.f32 %v10465, 0.7978846
  %v10490 = vmul.f32 %v10466, 0.7978846
  %v10491 = vmul.f32 %v10467, 0.7978846
  %v10492 = vmul.f32 %v10468, 0.7978846
  %v10493 = vmul.f32 %v10469, 0.7978846
  %v10494 = vmul.f32 %v10470, 0.7978846
  %v10495 = vmul.f32 %v10471, 0.7978846
  %v10496 = vmul.f32 %v10472, 0.7978846
  %v10497 = vmul.f32 %v10473, 0.7978846
  %v10498 = vmul.f32 %v10474, 0.7978846
  %v10499 = vmul.f32 %v10475, 0.7978846
  %v10500 = vmul.f32 %v10476, 0.7978846
  %v10501 = vmul.f32 %v10477, 0.7978846
  %v10502 = vmul.f32 %v10478, 0.7978846
  %v10503 = vmul.f32 %v10479, 0.7978846
  %v10504 = vmul.f32 %v10480, 0.7978846
  %v10505 = vmul.f32 %v10481, 0.7978846
  %v10506 = vmul.f32 %v10482, 0.7978846
  %v10507 = vmul.f32 %v10483, 0.7978846
  %v10508 = vmul.f32 %v10484, 0.7978846
  %v10509 = vmul.f32 %v10485, 0.7978846
  %v10510 = vmul.f32 %v10486, 0.7978846
  %v10511 = vmul.f32 %v10487, 0.7978846
  %v10512 = vtanh.pop %v10488
  %v10513 = vtanh.pop %v10489
  %v10514 = vtanh.pop %v10490
  %v10515 = vtanh.pop %v10491
  %v10516 = vtanh.pop %v10492
  %v10517 = vtanh.pop %v10493
  %v10518 = vtanh.pop %v10494
  %v10519 = vtanh.pop %v10495
  %v10520 = vtanh.pop %v10496
  %v10521 = vtanh.pop %v10497
  %v10522 = vtanh.pop %v10498
  %v10523 = vtanh.pop %v10499
  %v10524 = vtanh.pop %v10500
  %v10525 = vtanh.pop %v10501
  %v10526 = vtanh.pop %v10502
  %v10527 = vtanh.pop %v10503
  %v10528 = vtanh.pop %v10504
  %v10529 = vtanh.pop %v10505
  %v10530 = vtanh.pop %v10506
  %v10531 = vtanh.pop %v10507
  %v10532 = vtanh.pop %v10508
  %v10533 = vtanh.pop %v10509
  %v10534 = vtanh.pop %v10510
  %v10535 = vtanh.pop %v10511
  %v10536 = vadd.f32 %v10512, 1.0
  %v10537 = vadd.f32 %v10513, 1.0
  %v10538 = vadd.f32 %v10514, 1.0
  %v10539 = vadd.f32 %v10515, 1.0
  %v10540 = vadd.f32 %v10516, 1.0
  %v10541 = vadd.f32 %v10517, 1.0
  %v10542 = vadd.f32 %v10518, 1.0
  %v10543 = vadd.f32 %v10519, 1.0
  %v10544 = vadd.f32 %v10520, 1.0
  %v10545 = vadd.f32 %v10521, 1.0
  %v10546 = vadd.f32 %v10522, 1.0
  %v10547 = vadd.f32 %v10523, 1.0
  %v10548 = vadd.f32 %v10524, 1.0
  %v10549 = vadd.f32 %v10525, 1.0
  %v10550 = vadd.f32 %v10526, 1.0
  %v10551 = vadd.f32 %v10527, 1.0
  %v10552 = vadd.f32 %v10528, 1.0
  %v10553 = vadd.f32 %v10529, 1.0
  %v10554 = vadd.f32 %v10530, 1.0
  %v10555 = vadd.f32 %v10531, 1.0
  %v10556 = vadd.f32 %v10532, 1.0
  %v10557 = vadd.f32 %v10533, 1.0
  %v10558 = vadd.f32 %v10534, 1.0
  %v10559 = vadd.f32 %v10535, 1.0
  %v10560 = vmul.f32 %v10368, %v10536
  %v10561 = vmul.f32 %v10369, %v10537
  %v10562 = vmul.f32 %v10370, %v10538
  %v10563 = vmul.f32 %v10371, %v10539
  %v10564 = vmul.f32 %v10372, %v10540
  %v10565 = vmul.f32 %v10373, %v10541
  %v10566 = vmul.f32 %v10374, %v10542
  %v10567 = vmul.f32 %v10375, %v10543
  %v10568 = vmul.f32 %v10376, %v10544
  %v10569 = vmul.f32 %v10377, %v10545
  %v10570 = vmul.f32 %v10378, %v10546
  %v10571 = vmul.f32 %v10379, %v10547
  %v10572 = vmul.f32 %v10380, %v10548
  %v10573 = vmul.f32 %v10381, %v10549
  %v10574 = vmul.f32 %v10382, %v10550
  %v10575 = vmul.f32 %v10383, %v10551
  %v10576 = vmul.f32 %v10384, %v10552
  %v10577 = vmul.f32 %v10385, %v10553
  %v10578 = vmul.f32 %v10386, %v10554
  %v10579 = vmul.f32 %v10387, %v10555
  %v10580 = vmul.f32 %v10388, %v10556
  %v10581 = vmul.f32 %v10389, %v10557
  %v10582 = vmul.f32 %v10390, %v10558
  %v10583 = vmul.f32 %v10391, %v10559
  %v10584 = vpack.c.bf16 %v10561, %v10560
  %v10585 = vpack.c.bf16 %v10563, %v10562
  %v10586 = vpack.c.bf16 %v10565, %v10564
  %v10587 = vpack.c.bf16 %v10567, %v10566
  %v10588 = vpack.c.bf16 %v10569, %v10568
  %v10589 = vpack.c.bf16 %v10571, %v10570
  %v10590 = vpack.c.bf16 %v10573, %v10572
  %v10591 = vpack.c.bf16 %v10575, %v10574
  %v10592 = vpack.c.bf16 %v10577, %v10576
  %v10593 = vpack.c.bf16 %v10579, %v10578
  %v10594 = vpack.c.bf16 %v10581, %v10580
  %v10595 = vpack.c.bf16 %v10583, %v10582
  %s10596 = scalar_lea.vmem %s13, 64
  %v10597 = vld [vmem:[%s10596] sm:$0xf]
  %v10598 = vld [vmem:[%s10596 + $0x4] sm:$0xf]
  %v10599 = vld [vmem:[%s10596 + $0x8] sm:$0xf]
  %v10600 = vld [vmem:[%s10596 + $0xc] sm:$0xf]
  %v10601 = vld [vmem:[%s10596 + $0x10] sm:$0xf]
  %v10602 = vld [vmem:[%s10596 + $0x14] sm:$0xf]
  %v10603 = vld [vmem:[%s10596 + $0x18] sm:$0xf]
  %v10604 = vld [vmem:[%s10596 + $0x1c] sm:$0xf]
  %v10605 = vld [vmem:[%s10596 + $0x20] sm:$0xf]
  %v10606 = vld [vmem:[%s10596 + $0x24] sm:$0xf]
  %v10607 = vld [vmem:[%s10596 + $0x28] sm:$0xf]
  %v10608 = vld [vmem:[%s10596 + $0x2c] sm:$0xf]
  %v10609 = vld [vmem:[%s10596 + $0x30] sm:$0xf]
  %v10610 = vld [vmem:[%s10596 + $0x34] sm:$0xf]
  %v10611 = vld [vmem:[%s10596 + $0x38] sm:$0xf]
  %v10612 = vld [vmem:[%s10596 + $0x3c] sm:$0xf]
  %v10629 = vunpack.c.l.b16 %v10597
  %v10630 = vunpack.c.l.b16 %v10598
  %v10631 = vunpack.c.l.b16 %v10599
  %v10632 = vunpack.c.l.b16 %v10600
  %v10633 = vunpack.c.l.b16 %v10601
  %v10634 = vunpack.c.l.b16 %v10602
  %v10635 = vunpack.c.l.b16 %v10603
  %v10636 = vunpack.c.l.b16 %v10604
  %v10637 = vunpack.c.l.b16 %v10605
  %v10638 = vunpack.c.l.b16 %v10606
  %v10639 = vunpack.c.l.b16 %v10607
  %v10640 = vunpack.c.l.b16 %v10608
  %v10641 = vunpack.c.l.b16 %v10609
  %v10642 = vunpack.c.l.b16 %v10610
  %v10643 = vunpack.c.l.b16 %v10611
  %v10644 = vunpack.c.l.b16 %v10612
  %v10645 = vpack.c.b16 %v10630, %v10629
  %v10646 = vpack.c.b16 %v10632, %v10631
  %v10647 = vpack.c.b16 %v10634, %v10633
  %v10648 = vpack.c.b16 %v10636, %v10635
  %v10649 = vpack.c.b16 %v10638, %v10637
  %v10650 = vpack.c.b16 %v10640, %v10639
  %v10651 = vpack.c.b16 %v10642, %v10641
  %v10652 = vpack.c.b16 %v10644, %v10643
  %10661 = vmatpush.bf16.msra.mxu0 %v10652
  %10662 = vmatpush.bf16.msra.mxu0 %v10651
  %10663 = vmatpush.bf16.msra.mxu0 %v10650
  %10664 = vmatpush.bf16.msra.mxu0 %v10649
  %10665 = vmatpush.bf16.msra.mxu0 %v10648
  %10666 = vmatpush.bf16.msra.mxu0 %v10647
  %10667 = vmatpush.bf16.msra.mxu0 %v10646
  %10668 = vmatpush.bf16.msra.mxu0 %v10645
  %10669 = vmatmul.bf16.gmra.mxu0 %v10584
  %v10670 = vpop.f32.mrf.mxu0
  %v10671 = vadd.f32 0.0, %v10670
  %v10672 = vpop.f32.mrf.mxu0
  %v10673 = vadd.f32 0.0, %v10672
  %10674 = vmatmul.bf16.gmra.mxu0 %v10585
  %v10675 = vpop.f32.mrf.mxu0
  %v10676 = vadd.f32 0.0, %v10675
  %v10677 = vpop.f32.mrf.mxu0
  %v10678 = vadd.f32 0.0, %v10677
  %10679 = vmatmul.bf16.gmra.mxu0 %v10586
  %v10680 = vpop.f32.mrf.mxu0
  %v10681 = vadd.f32 0.0, %v10680
  %v10682 = vpop.f32.mrf.mxu0
  %v10683 = vadd.f32 0.0, %v10682
  %10684 = vmatmul.bf16.gmra.mxu0 %v10587
  %v10685 = vpop.f32.mrf.mxu0
  %v10686 = vadd.f32 0.0, %v10685
  %v10687 = vpop.f32.mrf.mxu0
  %v10688 = vadd.f32 0.0, %v10687
  %10689 = vmatmul.bf16.gmra.mxu0 %v10588
  %v10690 = vpop.f32.mrf.mxu0
  %v10691 = vadd.f32 0.0, %v10690
  %v10692 = vpop.f32.mrf.mxu0
  %v10693 = vadd.f32 0.0, %v10692
  %10694 = vmatmul.bf16.gmra.mxu0 %v10589
  %v10695 = vpop.f32.mrf.mxu0
  %v10696 = vadd.f32 0.0, %v10695
  %v10697 = vpop.f32.mrf.mxu0
  %v10698 = vadd.f32 0.0, %v10697
  %10699 = vmatmul.bf16.gmra.mxu0 %v10590
  %v10700 = vpop.f32.mrf.mxu0
  %v10701 = vadd.f32 0.0, %v10700
  %v10702 = vpop.f32.mrf.mxu0
  %v10703 = vadd.f32 0.0, %v10702
  %10704 = vmatmul.bf16.gmra.mxu0 %v10591
  %v10705 = vpop.f32.mrf.mxu0
  %v10706 = vadd.f32 0.0, %v10705
  %v10707 = vpop.f32.mrf.mxu0
  %v10708 = vadd.f32 0.0, %v10707
  %10709 = vmatmul.bf16.gmra.mxu0 %v10592
  %v10710 = vpop.f32.mrf.mxu0
  %v10711 = vadd.f32 0.0, %v10710
  %v10712 = vpop.f32.mrf.mxu0
  %v10713 = vadd.f32 0.0, %v10712
  %10714 = vmatmul.bf16.gmra.mxu0 %v10593
  %v10715 = vpop.f32.mrf.mxu0
  %v10716 = vadd.f32 0.0, %v10715
  %v10717 = vpop.f32.mrf.mxu0
  %v10718 = vadd.f32 0.0, %v10717
  %10719 = vmatmul.bf16.gmra.mxu0 %v10594
  %v10720 = vpop.f32.mrf.mxu0
  %v10721 = vadd.f32 0.0, %v10720
  %v10722 = vpop.f32.mrf.mxu0
  %v10723 = vadd.f32 0.0, %v10722
  %10724 = vmatmul.bf16.gmra.mxu0 %v10595
  %v10725 = vpop.f32.mrf.mxu0
  %v10726 = vadd.f32 0.0, %v10725
  %v10727 = vpop.f32.mrf.mxu0
  %v10728 = vadd.f32 0.0, %v10727
  %10729 = vdwg.mxu0
  %v10730 = vadd.f32 %v9571, %v10671
  %v10731 = vadd.f32 %v9572, %v10673
  %v10732 = vadd.f32 %v9573, %v10676
  %v10733 = vadd.f32 %v9574, %v10678
  %v10734 = vadd.f32 %v9575, %v10681
  %v10735 = vadd.f32 %v9576, %v10683
  %v10736 = vadd.f32 %v9577, %v10686
  %v10737 = vadd.f32 %v9578, %v10688
  %v10738 = vadd.f32 %v9579, %v10691
  %v10739 = vadd.f32 %v9580, %v10693
  %v10740 = vadd.f32 %v9581, %v10696
  %v10741 = vadd.f32 %v9582, %v10698
  %v10742 = vadd.f32 %v9583, %v10701
  %v10743 = vadd.f32 %v9584, %v10703
  %v10744 = vadd.f32 %v9585, %v10706
  %v10745 = vadd.f32 %v9586, %v10708
  %v10746 = vadd.f32 %v9587, %v10711
  %v10747 = vadd.f32 %v9588, %v10713
  %v10748 = vadd.f32 %v9589, %v10716
  %v10749 = vadd.f32 %v9590, %v10718
  %v10750 = vadd.f32 %v9591, %v10721
  %v10751 = vadd.f32 %v9592, %v10723
  %v10752 = vadd.f32 %v9593, %v10726
  %v10753 = vadd.f32 %v9594, %v10728
  %s10754 = scalar_lea.vmem %s14, 1
  %v10755 = vld [vmem:[%s10754] sm:$0x1]
  %v10757 = vperm.slane %v10755, 0
  %v10759 = vadd.f32 %v10730, %v10757
  %v10760 = vadd.f32 %v10731, %v10757
  %v10761 = vadd.f32 %v10732, %v10757
  %v10762 = vadd.f32 %v10733, %v10757
  %v10763 = vadd.f32 %v10734, %v10757
  %v10764 = vadd.f32 %v10735, %v10757
  %v10765 = vadd.f32 %v10736, %v10757
  %v10766 = vadd.f32 %v10737, %v10757
  %v10767 = vadd.f32 %v10738, %v10757
  %v10768 = vadd.f32 %v10739, %v10757
  %v10769 = vadd.f32 %v10740, %v10757
  %v10770 = vadd.f32 %v10741, %v10757
  %v10771 = vadd.f32 %v10742, %v10757
  %v10772 = vadd.f32 %v10743, %v10757
  %v10773 = vadd.f32 %v10744, %v10757
  %v10774 = vadd.f32 %v10745, %v10757
  %v10775 = vadd.f32 %v10746, %v10757
  %v10776 = vadd.f32 %v10747, %v10757
  %v10777 = vadd.f32 %v10748, %v10757
  %v10778 = vadd.f32 %v10749, %v10757
  %v10779 = vadd.f32 %v10750, %v10757
  %v10780 = vadd.f32 %v10751, %v10757
  %v10781 = vadd.f32 %v10752, %v10757
  %v10782 = vadd.f32 %v10753, %v10757
  %10783 = vst.msk [vmem:[%s17] sm:$0xff] %vm247, %v10759
  %10784 = vst.msk [vmem:[%s17 + $0x8] sm:$0xff] %vm247, %v10760
  %10785 = vst.msk [vmem:[%s17 + $0x10] sm:$0xff] %vm247, %v10761
  %10786 = vst.msk [vmem:[%s17 + $0x18] sm:$0xff] %vm247, %v10762
  %10787 = vst.msk [vmem:[%s17 + $0x20] sm:$0xff] %vm247, %v10763
  %10788 = vst.msk [vmem:[%s17 + $0x28] sm:$0xff] %vm247, %v10764
  %10789 = vst.msk [vmem:[%s17 + $0x30] sm:$0xff] %vm247, %v10765
  %10790 = vst.msk [vmem:[%s17 + $0x38] sm:$0xff] %vm247, %v10766
  %10791 = vst.msk [vmem:[%s17 + $0x40] sm:$0xff] %vm247, %v10767
  %10792 = vst.msk [vmem:[%s17 + $0x48] sm:$0xff] %vm247, %v10768
  %10793 = vst.msk [vmem:[%s17 + $0x50] sm:$0xff] %vm247, %v10769
  %10794 = vst.msk [vmem:[%s17 + $0x58] sm:$0xff] %vm247, %v10770
  %10795 = vst.msk [vmem:[%s17 + $0x60] sm:$0xff] %vm247, %v10771
  %10796 = vst.msk [vmem:[%s17 + $0x68] sm:$0xff] %vm247, %v10772
  %10797 = vst.msk [vmem:[%s17 + $0x70] sm:$0xff] %vm247, %v10773
  %10798 = vst.msk [vmem:[%s17 + $0x78] sm:$0xff] %vm247, %v10774
  %10799 = vst.msk [vmem:[%s17 + $0x80] sm:$0xff] %vm247, %v10775
  %10800 = vst.msk [vmem:[%s17 + $0x88] sm:$0xff] %vm247, %v10776
  %10801 = vst.msk [vmem:[%s17 + $0x90] sm:$0xff] %vm247, %v10777
  %10802 = vst.msk [vmem:[%s17 + $0x98] sm:$0xff] %vm247, %v10778
  %10803 = vst.msk [vmem:[%s17 + $0xa0] sm:$0xff] %vm247, %v10779
  %10804 = vst.msk [vmem:[%s17 + $0xa8] sm:$0xff] %vm247, %v10780
  %10805 = vst.msk [vmem:[%s17 + $0xb0] sm:$0xff] %vm247, %v10781
  %10806 = vst.msk [vmem:[%s17 + $0xb8] sm:$0xff] %vm247, %v10782
  %v10807 = vld [vmem:[%s17] sm:$0xff]
  %v10808 = vld [vmem:[%s17 + $0x8] sm:$0xff]
  %v10809 = vld [vmem:[%s17 + $0x10] sm:$0xff]
  %v10810 = vld [vmem:[%s17 + $0x18] sm:$0xff]
  %v10811 = vld [vmem:[%s17 + $0x20] sm:$0xff]
  %v10812 = vld [vmem:[%s17 + $0x28] sm:$0xff]
  %v10813 = vld [vmem:[%s17 + $0x30] sm:$0xff]
  %v10814 = vld [vmem:[%s17 + $0x38] sm:$0xff]
  %v10815 = vld [vmem:[%s17 + $0x40] sm:$0xff]
  %v10816 = vld [vmem:[%s17 + $0x48] sm:$0xff]
  %v10817 = vld [vmem:[%s17 + $0x50] sm:$0xff]
  %v10818 = vld [vmem:[%s17 + $0x58] sm:$0xff]
  %v10819 = vld [vmem:[%s17 + $0x60] sm:$0xff]
  %v10820 = vld [vmem:[%s17 + $0x68] sm:$0xff]
  %v10821 = vld [vmem:[%s17 + $0x70] sm:$0xff]
  %v10822 = vld [vmem:[%s17 + $0x78] sm:$0xff]
  %v10823 = vld [vmem:[%s17 + $0x80] sm:$0xff]
  %v10824 = vld [vmem:[%s17 + $0x88] sm:$0xff]
  %v10825 = vld [vmem:[%s17 + $0x90] sm:$0xff]
  %v10826 = vld [vmem:[%s17 + $0x98] sm:$0xff]
  %v10827 = vld [vmem:[%s17 + $0xa0] sm:$0xff]
  %v10828 = vld [vmem:[%s17 + $0xa8] sm:$0xff]
  %v10829 = vld [vmem:[%s17 + $0xb0] sm:$0xff]
  %v10830 = vld [vmem:[%s17 + $0xb8] sm:$0xff]
  %v10831 = vld [vmem:[%s15] sm:$0x1]
  %v10832 = vld [vmem:[%s16] sm:$0x1]
  %v10833 = vsel %vm247, %v10807, 0.0
  %10834 = vadd.xlane.f32.xlu0 %v10833
  %v10835 = vpop.xlane.xlu0 %10834
  %v10836 = vsel %vm247, %v10808, 0.0
  %10837 = vadd.xlane.f32.xlu0 %v10836
  %v10838 = vpop.xlane.xlu0 %10837
  %v10839 = vsel %vm247, %v10809, 0.0
  %10840 = vadd.xlane.f32.xlu0 %v10839
  %v10841 = vpop.xlane.xlu0 %10840
  %v10842 = vsel %vm247, %v10810, 0.0
  %10843 = vadd.xlane.f32.xlu0 %v10842
  %v10844 = vpop.xlane.xlu0 %10843
  %v10845 = vsel %vm247, %v10811, 0.0
  %10846 = vadd.xlane.f32.xlu0 %v10845
  %v10847 = vpop.xlane.xlu0 %10846
  %v10848 = vsel %vm247, %v10812, 0.0
  %10849 = vadd.xlane.f32.xlu0 %v10848
  %v10850 = vpop.xlane.xlu0 %10849
  %v10851 = vsel %vm247, %v10813, 0.0
  %10852 = vadd.xlane.f32.xlu0 %v10851
  %v10853 = vpop.xlane.xlu0 %10852
  %v10854 = vsel %vm247, %v10814, 0.0
  %10855 = vadd.xlane.f32.xlu0 %v10854
  %v10856 = vpop.xlane.xlu0 %10855
  %v10857 = vsel %vm247, %v10815, 0.0
  %10858 = vadd.xlane.f32.xlu0 %v10857
  %v10859 = vpop.xlane.xlu0 %10858
  %v10860 = vsel %vm247, %v10816, 0.0
  %10861 = vadd.xlane.f32.xlu0 %v10860
  %v10862 = vpop.xlane.xlu0 %10861
  %v10863 = vsel %vm247, %v10817, 0.0
  %10864 = vadd.xlane.f32.xlu0 %v10863
  %v10865 = vpop.xlane.xlu0 %10864
  %v10866 = vsel %vm247, %v10818, 0.0
  %10867 = vadd.xlane.f32.xlu0 %v10866
  %v10868 = vpop.xlane.xlu0 %10867
  %v10869 = vsel %vm247, %v10819, 0.0
  %10870 = vadd.xlane.f32.xlu0 %v10869
  %v10871 = vpop.xlane.xlu0 %10870
  %v10872 = vsel %vm247, %v10820, 0.0
  %10873 = vadd.xlane.f32.xlu0 %v10872
  %v10874 = vpop.xlane.xlu0 %10873
  %v10875 = vsel %vm247, %v10821, 0.0
  %10876 = vadd.xlane.f32.xlu0 %v10875
  %v10877 = vpop.xlane.xlu0 %10876
  %v10878 = vsel %vm247, %v10822, 0.0
  %10879 = vadd.xlane.f32.xlu0 %v10878
  %v10880 = vpop.xlane.xlu0 %10879
  %v10881 = vsel %vm247, %v10823, 0.0
  %10882 = vadd.xlane.f32.xlu0 %v10881
  %v10883 = vpop.xlane.xlu0 %10882
  %v10884 = vsel %vm247, %v10824, 0.0
  %10885 = vadd.xlane.f32.xlu0 %v10884
  %v10886 = vpop.xlane.xlu0 %10885
  %v10887 = vsel %vm247, %v10825, 0.0
  %10888 = vadd.xlane.f32.xlu0 %v10887
  %v10889 = vpop.xlane.xlu0 %10888
  %v10890 = vsel %vm247, %v10826, 0.0
  %10891 = vadd.xlane.f32.xlu0 %v10890
  %v10892 = vpop.xlane.xlu0 %10891
  %v10893 = vsel %vm247, %v10827, 0.0
  %10894 = vadd.xlane.f32.xlu0 %v10893
  %v10895 = vpop.xlane.xlu0 %10894
  %v10896 = vsel %vm247, %v10828, 0.0
  %10897 = vadd.xlane.f32.xlu0 %v10896
  %v10898 = vpop.xlane.xlu0 %10897
  %v10899 = vsel %vm247, %v10829, 0.0
  %10900 = vadd.xlane.f32.xlu0 %v10899
  %v10901 = vpop.xlane.xlu0 %10900
  %v10902 = vsel %vm247, %v10830, 0.0
  %10903 = vadd.xlane.f32.xlu0 %v10902
  %v10904 = vpop.xlane.xlu0 %10903
  %v10905 = vmul.f32 %v10835, %v376
  %v10906 = vmul.f32 %v10838, %v376
  %v10907 = vmul.f32 %v10841, %v376
  %v10908 = vmul.f32 %v10844, %v376
  %v10909 = vmul.f32 %v10847, %v376
  %v10910 = vmul.f32 %v10850, %v376
  %v10911 = vmul.f32 %v10853, %v376
  %v10912 = vmul.f32 %v10856, %v376
  %v10913 = vmul.f32 %v10859, %v376
  %v10914 = vmul.f32 %v10862, %v376
  %v10915 = vmul.f32 %v10865, %v376
  %v10916 = vmul.f32 %v10868, %v376
  %v10917 = vmul.f32 %v10871, %v376
  %v10918 = vmul.f32 %v10874, %v376
  %v10919 = vmul.f32 %v10877, %v376
  %v10920 = vmul.f32 %v10880, %v376
  %v10921 = vmul.f32 %v10883, %v376
  %v10922 = vmul.f32 %v10886, %v376
  %v10923 = vmul.f32 %v10889, %v376
  %v10924 = vmul.f32 %v10892, %v376
  %v10925 = vmul.f32 %v10895, %v376
  %v10926 = vmul.f32 %v10898, %v376
  %v10927 = vmul.f32 %v10901, %v376
  %v10928 = vmul.f32 %v10904, %v376
  %v10929 = vmul.f32 %v10807, %v10807
  %v10930 = vmul.f32 %v10808, %v10808
  %v10931 = vmul.f32 %v10809, %v10809
  %v10932 = vmul.f32 %v10810, %v10810
  %v10933 = vmul.f32 %v10811, %v10811
  %v10934 = vmul.f32 %v10812, %v10812
  %v10935 = vmul.f32 %v10813, %v10813
  %v10936 = vmul.f32 %v10814, %v10814
  %v10937 = vmul.f32 %v10815, %v10815
  %v10938 = vmul.f32 %v10816, %v10816
  %v10939 = vmul.f32 %v10817, %v10817
  %v10940 = vmul.f32 %v10818, %v10818
  %v10941 = vmul.f32 %v10819, %v10819
  %v10942 = vmul.f32 %v10820, %v10820
  %v10943 = vmul.f32 %v10821, %v10821
  %v10944 = vmul.f32 %v10822, %v10822
  %v10945 = vmul.f32 %v10823, %v10823
  %v10946 = vmul.f32 %v10824, %v10824
  %v10947 = vmul.f32 %v10825, %v10825
  %v10948 = vmul.f32 %v10826, %v10826
  %v10949 = vmul.f32 %v10827, %v10827
  %v10950 = vmul.f32 %v10828, %v10828
  %v10951 = vmul.f32 %v10829, %v10829
  %v10952 = vmul.f32 %v10830, %v10830
  %v10953 = vsel %vm247, %v10929, 0.0
  %10954 = vadd.xlane.f32.xlu0 %v10953
  %v10955 = vpop.xlane.xlu0 %10954
  %v10956 = vsel %vm247, %v10930, 0.0
  %10957 = vadd.xlane.f32.xlu0 %v10956
  %v10958 = vpop.xlane.xlu0 %10957
  %v10959 = vsel %vm247, %v10931, 0.0
  %10960 = vadd.xlane.f32.xlu0 %v10959
  %v10961 = vpop.xlane.xlu0 %10960
  %v10962 = vsel %vm247, %v10932, 0.0
  %10963 = vadd.xlane.f32.xlu0 %v10962
  %v10964 = vpop.xlane.xlu0 %10963
  %v10965 = vsel %vm247, %v10933, 0.0
  %10966 = vadd.xlane.f32.xlu0 %v10965
  %v10967 = vpop.xlane.xlu0 %10966
  %v10968 = vsel %vm247, %v10934, 0.0
  %10969 = vadd.xlane.f32.xlu0 %v10968
  %v10970 = vpop.xlane.xlu0 %10969
  %v10971 = vsel %vm247, %v10935, 0.0
  %10972 = vadd.xlane.f32.xlu0 %v10971
  %v10973 = vpop.xlane.xlu0 %10972
  %v10974 = vsel %vm247, %v10936, 0.0
  %10975 = vadd.xlane.f32.xlu0 %v10974
  %v10976 = vpop.xlane.xlu0 %10975
  %v10977 = vsel %vm247, %v10937, 0.0
  %10978 = vadd.xlane.f32.xlu0 %v10977
  %v10979 = vpop.xlane.xlu0 %10978
  %v10980 = vsel %vm247, %v10938, 0.0
  %10981 = vadd.xlane.f32.xlu0 %v10980
  %v10982 = vpop.xlane.xlu0 %10981
  %v10983 = vsel %vm247, %v10939, 0.0
  %10984 = vadd.xlane.f32.xlu0 %v10983
  %v10985 = vpop.xlane.xlu0 %10984
  %v10986 = vsel %vm247, %v10940, 0.0
  %10987 = vadd.xlane.f32.xlu0 %v10986
  %v10988 = vpop.xlane.xlu0 %10987
  %v10989 = vsel %vm247, %v10941, 0.0
  %10990 = vadd.xlane.f32.xlu0 %v10989
  %v10991 = vpop.xlane.xlu0 %10990
  %v10992 = vsel %vm247, %v10942, 0.0
  %10993 = vadd.xlane.f32.xlu0 %v10992
  %v10994 = vpop.xlane.xlu0 %10993
  %v10995 = vsel %vm247, %v10943, 0.0
  %10996 = vadd.xlane.f32.xlu0 %v10995
  %v10997 = vpop.xlane.xlu0 %10996
  %v10998 = vsel %vm247, %v10944, 0.0
  %10999 = vadd.xlane.f32.xlu0 %v10998
  %v11000 = vpop.xlane.xlu0 %10999
  %v11001 = vsel %vm247, %v10945, 0.0
  %11002 = vadd.xlane.f32.xlu0 %v11001
  %v11003 = vpop.xlane.xlu0 %11002
  %v11004 = vsel %vm247, %v10946, 0.0
  %11005 = vadd.xlane.f32.xlu0 %v11004
  %v11006 = vpop.xlane.xlu0 %11005
  %v11007 = vsel %vm247, %v10947, 0.0
  %11008 = vadd.xlane.f32.xlu0 %v11007
  %v11009 = vpop.xlane.xlu0 %11008
  %v11010 = vsel %vm247, %v10948, 0.0
  %11011 = vadd.xlane.f32.xlu0 %v11010
  %v11012 = vpop.xlane.xlu0 %11011
  %v11013 = vsel %vm247, %v10949, 0.0
  %11014 = vadd.xlane.f32.xlu0 %v11013
  %v11015 = vpop.xlane.xlu0 %11014
  %v11016 = vsel %vm247, %v10950, 0.0
  %11017 = vadd.xlane.f32.xlu0 %v11016
  %v11018 = vpop.xlane.xlu0 %11017
  %v11019 = vsel %vm247, %v10951, 0.0
  %11020 = vadd.xlane.f32.xlu0 %v11019
  %v11021 = vpop.xlane.xlu0 %11020
  %v11022 = vsel %vm247, %v10952, 0.0
  %11023 = vadd.xlane.f32.xlu0 %v11022
  %v11024 = vpop.xlane.xlu0 %11023
  %v11025 = vmul.f32 %v10955, %v376
  %v11026 = vmul.f32 %v10958, %v376
  %v11027 = vmul.f32 %v10961, %v376
  %v11028 = vmul.f32 %v10964, %v376
  %v11029 = vmul.f32 %v10967, %v376
  %v11030 = vmul.f32 %v10970, %v376
  %v11031 = vmul.f32 %v10973, %v376
  %v11032 = vmul.f32 %v10976, %v376
  %v11033 = vmul.f32 %v10979, %v376
  %v11034 = vmul.f32 %v10982, %v376
  %v11035 = vmul.f32 %v10985, %v376
  %v11036 = vmul.f32 %v10988, %v376
  %v11037 = vmul.f32 %v10991, %v376
  %v11038 = vmul.f32 %v10994, %v376
  %v11039 = vmul.f32 %v10997, %v376
  %v11040 = vmul.f32 %v11000, %v376
  %v11041 = vmul.f32 %v11003, %v376
  %v11042 = vmul.f32 %v11006, %v376
  %v11043 = vmul.f32 %v11009, %v376
  %v11044 = vmul.f32 %v11012, %v376
  %v11045 = vmul.f32 %v11015, %v376
  %v11046 = vmul.f32 %v11018, %v376
  %v11047 = vmul.f32 %v11021, %v376
  %v11048 = vmul.f32 %v11024, %v376
  %v11049 = vmul.f32 %v10905, %v10905
  %v11050 = vmul.f32 %v10906, %v10906
  %v11051 = vmul.f32 %v10907, %v10907
  %v11052 = vmul.f32 %v10908, %v10908
  %v11053 = vmul.f32 %v10909, %v10909
  %v11054 = vmul.f32 %v10910, %v10910
  %v11055 = vmul.f32 %v10911, %v10911
  %v11056 = vmul.f32 %v10912, %v10912
  %v11057 = vmul.f32 %v10913, %v10913
  %v11058 = vmul.f32 %v10914, %v10914
  %v11059 = vmul.f32 %v10915, %v10915
  %v11060 = vmul.f32 %v10916, %v10916
  %v11061 = vmul.f32 %v10917, %v10917
  %v11062 = vmul.f32 %v10918, %v10918
  %v11063 = vmul.f32 %v10919, %v10919
  %v11064 = vmul.f32 %v10920, %v10920
  %v11065 = vmul.f32 %v10921, %v10921
  %v11066 = vmul.f32 %v10922, %v10922
  %v11067 = vmul.f32 %v10923, %v10923
  %v11068 = vmul.f32 %v10924, %v10924
  %v11069 = vmul.f32 %v10925, %v10925
  %v11070 = vmul.f32 %v10926, %v10926
  %v11071 = vmul.f32 %v10927, %v10927
  %v11072 = vmul.f32 %v10928, %v10928
  %v11073 = vsub.f32 %v11025, %v11049
  %v11074 = vsub.f32 %v11026, %v11050
  %v11075 = vsub.f32 %v11027, %v11051
  %v11076 = vsub.f32 %v11028, %v11052
  %v11077 = vsub.f32 %v11029, %v11053
  %v11078 = vsub.f32 %v11030, %v11054
  %v11079 = vsub.f32 %v11031, %v11055
  %v11080 = vsub.f32 %v11032, %v11056
  %v11081 = vsub.f32 %v11033, %v11057
  %v11082 = vsub.f32 %v11034, %v11058
  %v11083 = vsub.f32 %v11035, %v11059
  %v11084 = vsub.f32 %v11036, %v11060
  %v11085 = vsub.f32 %v11037, %v11061
  %v11086 = vsub.f32 %v11038, %v11062
  %v11087 = vsub.f32 %v11039, %v11063
  %v11088 = vsub.f32 %v11040, %v11064
  %v11089 = vsub.f32 %v11041, %v11065
  %v11090 = vsub.f32 %v11042, %v11066
  %v11091 = vsub.f32 %v11043, %v11067
  %v11092 = vsub.f32 %v11044, %v11068
  %v11093 = vsub.f32 %v11045, %v11069
  %v11094 = vsub.f32 %v11046, %v11070
  %v11095 = vsub.f32 %v11047, %v11071
  %v11096 = vsub.f32 %v11048, %v11072
  %v11097 = vsub.f32 %v10807, %v10905
  %v11098 = vsub.f32 %v10808, %v10906
  %v11099 = vsub.f32 %v10809, %v10907
  %v11100 = vsub.f32 %v10810, %v10908
  %v11101 = vsub.f32 %v10811, %v10909
  %v11102 = vsub.f32 %v10812, %v10910
  %v11103 = vsub.f32 %v10813, %v10911
  %v11104 = vsub.f32 %v10814, %v10912
  %v11105 = vsub.f32 %v10815, %v10913
  %v11106 = vsub.f32 %v10816, %v10914
  %v11107 = vsub.f32 %v10817, %v10915
  %v11108 = vsub.f32 %v10818, %v10916
  %v11109 = vsub.f32 %v10819, %v10917
  %v11110 = vsub.f32 %v10820, %v10918
  %v11111 = vsub.f32 %v10821, %v10919
  %v11112 = vsub.f32 %v10822, %v10920
  %v11113 = vsub.f32 %v10823, %v10921
  %v11114 = vsub.f32 %v10824, %v10922
  %v11115 = vsub.f32 %v10825, %v10923
  %v11116 = vsub.f32 %v10826, %v10924
  %v11117 = vsub.f32 %v10827, %v10925
  %v11118 = vsub.f32 %v10828, %v10926
  %v11119 = vsub.f32 %v10829, %v10927
  %v11120 = vsub.f32 %v10830, %v10928
  %v11121 = vadd.f32 %v11073, 1e-05
  %v11122 = vadd.f32 %v11074, 1e-05
  %v11123 = vadd.f32 %v11075, 1e-05
  %v11124 = vadd.f32 %v11076, 1e-05
  %v11125 = vadd.f32 %v11077, 1e-05
  %v11126 = vadd.f32 %v11078, 1e-05
  %v11127 = vadd.f32 %v11079, 1e-05
  %v11128 = vadd.f32 %v11080, 1e-05
  %v11129 = vadd.f32 %v11081, 1e-05
  %v11130 = vadd.f32 %v11082, 1e-05
  %v11131 = vadd.f32 %v11083, 1e-05
  %v11132 = vadd.f32 %v11084, 1e-05
  %v11133 = vadd.f32 %v11085, 1e-05
  %v11134 = vadd.f32 %v11086, 1e-05
  %v11135 = vadd.f32 %v11087, 1e-05
  %v11136 = vadd.f32 %v11088, 1e-05
  %v11137 = vadd.f32 %v11089, 1e-05
  %v11138 = vadd.f32 %v11090, 1e-05
  %v11139 = vadd.f32 %v11091, 1e-05
  %v11140 = vadd.f32 %v11092, 1e-05
  %v11141 = vadd.f32 %v11093, 1e-05
  %v11142 = vadd.f32 %v11094, 1e-05
  %v11143 = vadd.f32 %v11095, 1e-05
  %v11144 = vadd.f32 %v11096, 1e-05
  %v11145 = vrsqrt.pop %v11121
  %v11146 = vmul.f32 %v11145, %v11121
  %v11147 = vmul.f32 %v11146, %v11145
  %v11148 = vmul.f32 0.5, %v11147
  %v11149 = vsub.f32 1.5, %v11148
  %v11150 = vmul.f32 %v11145, %v11149
  %vm11151 = vweird.f32 %v11121
  %vm11152 = vweird.f32 %v11145
  %vm11153 = vmor %vm11151, %vm11152
  %v11154 = vsel %vm11153, %v11145, %v11150
  %v11155 = vrsqrt.pop %v11122
  %v11156 = vmul.f32 %v11155, %v11122
  %v11157 = vmul.f32 %v11156, %v11155
  %v11158 = vmul.f32 0.5, %v11157
  %v11159 = vsub.f32 1.5, %v11158
  %v11160 = vmul.f32 %v11155, %v11159
  %vm11161 = vweird.f32 %v11122
  %vm11162 = vweird.f32 %v11155
  %vm11163 = vmor %vm11161, %vm11162
  %v11164 = vsel %vm11163, %v11155, %v11160
  %v11165 = vrsqrt.pop %v11123
  %v11166 = vmul.f32 %v11165, %v11123
  %v11167 = vmul.f32 %v11166, %v11165
  %v11168 = vmul.f32 0.5, %v11167
  %v11169 = vsub.f32 1.5, %v11168
  %v11170 = vmul.f32 %v11165, %v11169
  %vm11171 = vweird.f32 %v11123
  %vm11172 = vweird.f32 %v11165
  %vm11173 = vmor %vm11171, %vm11172
  %v11174 = vsel %vm11173, %v11165, %v11170
  %v11175 = vrsqrt.pop %v11124
  %v11176 = vmul.f32 %v11175, %v11124
  %v11177 = vmul.f32 %v11176, %v11175
  %v11178 = vmul.f32 0.5, %v11177
  %v11179 = vsub.f32 1.5, %v11178
  %v11180 = vmul.f32 %v11175, %v11179
  %vm11181 = vweird.f32 %v11124
  %vm11182 = vweird.f32 %v11175
  %vm11183 = vmor %vm11181, %vm11182
  %v11184 = vsel %vm11183, %v11175, %v11180
  %v11185 = vrsqrt.pop %v11125
  %v11186 = vmul.f32 %v11185, %v11125
  %v11187 = vmul.f32 %v11186, %v11185
  %v11188 = vmul.f32 0.5, %v11187
  %v11189 = vsub.f32 1.5, %v11188
  %v11190 = vmul.f32 %v11185, %v11189
  %vm11191 = vweird.f32 %v11125
  %vm11192 = vweird.f32 %v11185
  %vm11193 = vmor %vm11191, %vm11192
  %v11194 = vsel %vm11193, %v11185, %v11190
  %v11195 = vrsqrt.pop %v11126
  %v11196 = vmul.f32 %v11195, %v11126
  %v11197 = vmul.f32 %v11196, %v11195
  %v11198 = vmul.f32 0.5, %v11197
  %v11199 = vsub.f32 1.5, %v11198
  %v11200 = vmul.f32 %v11195, %v11199
  %vm11201 = vweird.f32 %v11126
  %vm11202 = vweird.f32 %v11195
  %vm11203 = vmor %vm11201, %vm11202
  %v11204 = vsel %vm11203, %v11195, %v11200
  %v11205 = vrsqrt.pop %v11127
  %v11206 = vmul.f32 %v11205, %v11127
  %v11207 = vmul.f32 %v11206, %v11205
  %v11208 = vmul.f32 0.5, %v11207
  %v11209 = vsub.f32 1.5, %v11208
  %v11210 = vmul.f32 %v11205, %v11209
  %vm11211 = vweird.f32 %v11127
  %vm11212 = vweird.f32 %v11205
  %vm11213 = vmor %vm11211, %vm11212
  %v11214 = vsel %vm11213, %v11205, %v11210
  %v11215 = vrsqrt.pop %v11128
  %v11216 = vmul.f32 %v11215, %v11128
  %v11217 = vmul.f32 %v11216, %v11215
  %v11218 = vmul.f32 0.5, %v11217
  %v11219 = vsub.f32 1.5, %v11218
  %v11220 = vmul.f32 %v11215, %v11219
  %vm11221 = vweird.f32 %v11128
  %vm11222 = vweird.f32 %v11215
  %vm11223 = vmor %vm11221, %vm11222
  %v11224 = vsel %vm11223, %v11215, %v11220
  %v11225 = vrsqrt.pop %v11129
  %v11226 = vmul.f32 %v11225, %v11129
  %v11227 = vmul.f32 %v11226, %v11225
  %v11228 = vmul.f32 0.5, %v11227
  %v11229 = vsub.f32 1.5, %v11228
  %v11230 = vmul.f32 %v11225, %v11229
  %vm11231 = vweird.f32 %v11129
  %vm11232 = vweird.f32 %v11225
  %vm11233 = vmor %vm11231, %vm11232
  %v11234 = vsel %vm11233, %v11225, %v11230
  %v11235 = vrsqrt.pop %v11130
  %v11236 = vmul.f32 %v11235, %v11130
  %v11237 = vmul.f32 %v11236, %v11235
  %v11238 = vmul.f32 0.5, %v11237
  %v11239 = vsub.f32 1.5, %v11238
  %v11240 = vmul.f32 %v11235, %v11239
  %vm11241 = vweird.f32 %v11130
  %vm11242 = vweird.f32 %v11235
  %vm11243 = vmor %vm11241, %vm11242
  %v11244 = vsel %vm11243, %v11235, %v11240
  %v11245 = vrsqrt.pop %v11131
  %v11246 = vmul.f32 %v11245, %v11131
  %v11247 = vmul.f32 %v11246, %v11245
  %v11248 = vmul.f32 0.5, %v11247
  %v11249 = vsub.f32 1.5, %v11248
  %v11250 = vmul.f32 %v11245, %v11249
  %vm11251 = vweird.f32 %v11131
  %vm11252 = vweird.f32 %v11245
  %vm11253 = vmor %vm11251, %vm11252
  %v11254 = vsel %vm11253, %v11245, %v11250
  %v11255 = vrsqrt.pop %v11132
  %v11256 = vmul.f32 %v11255, %v11132
  %v11257 = vmul.f32 %v11256, %v11255
  %v11258 = vmul.f32 0.5, %v11257
  %v11259 = vsub.f32 1.5, %v11258
  %v11260 = vmul.f32 %v11255, %v11259
  %vm11261 = vweird.f32 %v11132
  %vm11262 = vweird.f32 %v11255
  %vm11263 = vmor %vm11261, %vm11262
  %v11264 = vsel %vm11263, %v11255, %v11260
  %v11265 = vrsqrt.pop %v11133
  %v11266 = vmul.f32 %v11265, %v11133
  %v11267 = vmul.f32 %v11266, %v11265
  %v11268 = vmul.f32 0.5, %v11267
  %v11269 = vsub.f32 1.5, %v11268
  %v11270 = vmul.f32 %v11265, %v11269
  %vm11271 = vweird.f32 %v11133
  %vm11272 = vweird.f32 %v11265
  %vm11273 = vmor %vm11271, %vm11272
  %v11274 = vsel %vm11273, %v11265, %v11270
  %v11275 = vrsqrt.pop %v11134
  %v11276 = vmul.f32 %v11275, %v11134
  %v11277 = vmul.f32 %v11276, %v11275
  %v11278 = vmul.f32 0.5, %v11277
  %v11279 = vsub.f32 1.5, %v11278
  %v11280 = vmul.f32 %v11275, %v11279
  %vm11281 = vweird.f32 %v11134
  %vm11282 = vweird.f32 %v11275
  %vm11283 = vmor %vm11281, %vm11282
  %v11284 = vsel %vm11283, %v11275, %v11280
  %v11285 = vrsqrt.pop %v11135
  %v11286 = vmul.f32 %v11285, %v11135
  %v11287 = vmul.f32 %v11286, %v11285
  %v11288 = vmul.f32 0.5, %v11287
  %v11289 = vsub.f32 1.5, %v11288
  %v11290 = vmul.f32 %v11285, %v11289
  %vm11291 = vweird.f32 %v11135
  %vm11292 = vweird.f32 %v11285
  %vm11293 = vmor %vm11291, %vm11292
  %v11294 = vsel %vm11293, %v11285, %v11290
  %v11295 = vrsqrt.pop %v11136
  %v11296 = vmul.f32 %v11295, %v11136
  %v11297 = vmul.f32 %v11296, %v11295
  %v11298 = vmul.f32 0.5, %v11297
  %v11299 = vsub.f32 1.5, %v11298
  %v11300 = vmul.f32 %v11295, %v11299
  %vm11301 = vweird.f32 %v11136
  %vm11302 = vweird.f32 %v11295
  %vm11303 = vmor %vm11301, %vm11302
  %v11304 = vsel %vm11303, %v11295, %v11300
  %v11305 = vrsqrt.pop %v11137
  %v11306 = vmul.f32 %v11305, %v11137
  %v11307 = vmul.f32 %v11306, %v11305
  %v11308 = vmul.f32 0.5, %v11307
  %v11309 = vsub.f32 1.5, %v11308
  %v11310 = vmul.f32 %v11305, %v11309
  %vm11311 = vweird.f32 %v11137
  %vm11312 = vweird.f32 %v11305
  %vm11313 = vmor %vm11311, %vm11312
  %v11314 = vsel %vm11313, %v11305, %v11310
  %v11315 = vrsqrt.pop %v11138
  %v11316 = vmul.f32 %v11315, %v11138
  %v11317 = vmul.f32 %v11316, %v11315
  %v11318 = vmul.f32 0.5, %v11317
  %v11319 = vsub.f32 1.5, %v11318
  %v11320 = vmul.f32 %v11315, %v11319
  %vm11321 = vweird.f32 %v11138
  %vm11322 = vweird.f32 %v11315
  %vm11323 = vmor %vm11321, %vm11322
  %v11324 = vsel %vm11323, %v11315, %v11320
  %v11325 = vrsqrt.pop %v11139
  %v11326 = vmul.f32 %v11325, %v11139
  %v11327 = vmul.f32 %v11326, %v11325
  %v11328 = vmul.f32 0.5, %v11327
  %v11329 = vsub.f32 1.5, %v11328
  %v11330 = vmul.f32 %v11325, %v11329
  %vm11331 = vweird.f32 %v11139
  %vm11332 = vweird.f32 %v11325
  %vm11333 = vmor %vm11331, %vm11332
  %v11334 = vsel %vm11333, %v11325, %v11330
  %v11335 = vrsqrt.pop %v11140
  %v11336 = vmul.f32 %v11335, %v11140
  %v11337 = vmul.f32 %v11336, %v11335
  %v11338 = vmul.f32 0.5, %v11337
  %v11339 = vsub.f32 1.5, %v11338
  %v11340 = vmul.f32 %v11335, %v11339
  %vm11341 = vweird.f32 %v11140
  %vm11342 = vweird.f32 %v11335
  %vm11343 = vmor %vm11341, %vm11342
  %v11344 = vsel %vm11343, %v11335, %v11340
  %v11345 = vrsqrt.pop %v11141
  %v11346 = vmul.f32 %v11345, %v11141
  %v11347 = vmul.f32 %v11346, %v11345
  %v11348 = vmul.f32 0.5, %v11347
  %v11349 = vsub.f32 1.5, %v11348
  %v11350 = vmul.f32 %v11345, %v11349
  %vm11351 = vweird.f32 %v11141
  %vm11352 = vweird.f32 %v11345
  %vm11353 = vmor %vm11351, %vm11352
  %v11354 = vsel %vm11353, %v11345, %v11350
  %v11355 = vrsqrt.pop %v11142
  %v11356 = vmul.f32 %v11355, %v11142
  %v11357 = vmul.f32 %v11356, %v11355
  %v11358 = vmul.f32 0.5, %v11357
  %v11359 = vsub.f32 1.5, %v11358
  %v11360 = vmul.f32 %v11355, %v11359
  %vm11361 = vweird.f32 %v11142
  %vm11362 = vweird.f32 %v11355
  %vm11363 = vmor %vm11361, %vm11362
  %v11364 = vsel %vm11363, %v11355, %v11360
  %v11365 = vrsqrt.pop %v11143
  %v11366 = vmul.f32 %v11365, %v11143
  %v11367 = vmul.f32 %v11366, %v11365
  %v11368 = vmul.f32 0.5, %v11367
  %v11369 = vsub.f32 1.5, %v11368
  %v11370 = vmul.f32 %v11365, %v11369
  %vm11371 = vweird.f32 %v11143
  %vm11372 = vweird.f32 %v11365
  %vm11373 = vmor %vm11371, %vm11372
  %v11374 = vsel %vm11373, %v11365, %v11370
  %v11375 = vrsqrt.pop %v11144
  %v11376 = vmul.f32 %v11375, %v11144
  %v11377 = vmul.f32 %v11376, %v11375
  %v11378 = vmul.f32 0.5, %v11377
  %v11379 = vsub.f32 1.5, %v11378
  %v11380 = vmul.f32 %v11375, %v11379
  %vm11381 = vweird.f32 %v11144
  %vm11382 = vweird.f32 %v11375
  %vm11383 = vmor %vm11381, %vm11382
  %v11384 = vsel %vm11383, %v11375, %v11380
  %v11385 = vmul.f32 %v11097, %v11154
  %v11386 = vmul.f32 %v11098, %v11164
  %v11387 = vmul.f32 %v11099, %v11174
  %v11388 = vmul.f32 %v11100, %v11184
  %v11389 = vmul.f32 %v11101, %v11194
  %v11390 = vmul.f32 %v11102, %v11204
  %v11391 = vmul.f32 %v11103, %v11214
  %v11392 = vmul.f32 %v11104, %v11224
  %v11393 = vmul.f32 %v11105, %v11234
  %v11394 = vmul.f32 %v11106, %v11244
  %v11395 = vmul.f32 %v11107, %v11254
  %v11396 = vmul.f32 %v11108, %v11264
  %v11397 = vmul.f32 %v11109, %v11274
  %v11398 = vmul.f32 %v11110, %v11284
  %v11399 = vmul.f32 %v11111, %v11294
  %v11400 = vmul.f32 %v11112, %v11304
  %v11401 = vmul.f32 %v11113, %v11314
  %v11402 = vmul.f32 %v11114, %v11324
  %v11403 = vmul.f32 %v11115, %v11334
  %v11404 = vmul.f32 %v11116, %v11344
  %v11405 = vmul.f32 %v11117, %v11354
  %v11406 = vmul.f32 %v11118, %v11364
  %v11407 = vmul.f32 %v11119, %v11374
  %v11408 = vmul.f32 %v11120, %v11384
  %v11410 = vperm.slane %v10831, 0
  %v11412 = vmul.f32 %v11385, %v11410
  %v11413 = vmul.f32 %v11386, %v11410
  %v11414 = vmul.f32 %v11387, %v11410
  %v11415 = vmul.f32 %v11388, %v11410
  %v11416 = vmul.f32 %v11389, %v11410
  %v11417 = vmul.f32 %v11390, %v11410
  %v11418 = vmul.f32 %v11391, %v11410
  %v11419 = vmul.f32 %v11392, %v11410
  %v11420 = vmul.f32 %v11393, %v11410
  %v11421 = vmul.f32 %v11394, %v11410
  %v11422 = vmul.f32 %v11395, %v11410
  %v11423 = vmul.f32 %v11396, %v11410
  %v11424 = vmul.f32 %v11397, %v11410
  %v11425 = vmul.f32 %v11398, %v11410
  %v11426 = vmul.f32 %v11399, %v11410
  %v11427 = vmul.f32 %v11400, %v11410
  %v11428 = vmul.f32 %v11401, %v11410
  %v11429 = vmul.f32 %v11402, %v11410
  %v11430 = vmul.f32 %v11403, %v11410
  %v11431 = vmul.f32 %v11404, %v11410
  %v11432 = vmul.f32 %v11405, %v11410
  %v11433 = vmul.f32 %v11406, %v11410
  %v11434 = vmul.f32 %v11407, %v11410
  %v11435 = vmul.f32 %v11408, %v11410
  %v11437 = vperm.slane %v10832, 0
  %v11439 = vadd.f32 %v11412, %v11437
  %v11440 = vadd.f32 %v11413, %v11437
  %v11441 = vadd.f32 %v11414, %v11437
  %v11442 = vadd.f32 %v11415, %v11437
  %v11443 = vadd.f32 %v11416, %v11437
  %v11444 = vadd.f32 %v11417, %v11437
  %v11445 = vadd.f32 %v11418, %v11437
  %v11446 = vadd.f32 %v11419, %v11437
  %v11447 = vadd.f32 %v11420, %v11437
  %v11448 = vadd.f32 %v11421, %v11437
  %v11449 = vadd.f32 %v11422, %v11437
  %v11450 = vadd.f32 %v11423, %v11437
  %v11451 = vadd.f32 %v11424, %v11437
  %v11452 = vadd.f32 %v11425, %v11437
  %v11453 = vadd.f32 %v11426, %v11437
  %v11454 = vadd.f32 %v11427, %v11437
  %v11455 = vadd.f32 %v11428, %v11437
  %v11456 = vadd.f32 %v11429, %v11437
  %v11457 = vadd.f32 %v11430, %v11437
  %v11458 = vadd.f32 %v11431, %v11437
  %v11459 = vadd.f32 %v11432, %v11437
  %v11460 = vadd.f32 %v11433, %v11437
  %v11461 = vadd.f32 %v11434, %v11437
  %v11462 = vadd.f32 %v11435, %v11437
  %11463 = vst.msk [vmem:[%s17] sm:$0xff] %vm247, %v11439
  %11464 = vst.msk [vmem:[%s17 + $0x8] sm:$0xff] %vm247, %v11440
  %11465 = vst.msk [vmem:[%s17 + $0x10] sm:$0xff] %vm247, %v11441
  %11466 = vst.msk [vmem:[%s17 + $0x18] sm:$0xff] %vm247, %v11442
  %11467 = vst.msk [vmem:[%s17 + $0x20] sm:$0xff] %vm247, %v11443
  %11468 = vst.msk [vmem:[%s17 + $0x28] sm:$0xff] %vm247, %v11444
  %11469 = vst.msk [vmem:[%s17 + $0x30] sm:$0xff] %vm247, %v11445
  %11470 = vst.msk [vmem:[%s17 + $0x38] sm:$0xff] %vm247, %v11446
  %11471 = vst.msk [vmem:[%s17 + $0x40] sm:$0xff] %vm247, %v11447
  %11472 = vst.msk [vmem:[%s17 + $0x48] sm:$0xff] %vm247, %v11448
  %11473 = vst.msk [vmem:[%s17 + $0x50] sm:$0xff] %vm247, %v11449
  %11474 = vst.msk [vmem:[%s17 + $0x58] sm:$0xff] %vm247, %v11450
  %11475 = vst.msk [vmem:[%s17 + $0x60] sm:$0xff] %vm247, %v11451
  %11476 = vst.msk [vmem:[%s17 + $0x68] sm:$0xff] %vm247, %v11452
  %11477 = vst.msk [vmem:[%s17 + $0x70] sm:$0xff] %vm247, %v11453
  %11478 = vst.msk [vmem:[%s17 + $0x78] sm:$0xff] %vm247, %v11454
  %11479 = vst.msk [vmem:[%s17 + $0x80] sm:$0xff] %vm247, %v11455
  %11480 = vst.msk [vmem:[%s17 + $0x88] sm:$0xff] %vm247, %v11456
  %11481 = vst.msk [vmem:[%s17 + $0x90] sm:$0xff] %vm247, %v11457
  %11482 = vst.msk [vmem:[%s17 + $0x98] sm:$0xff] %vm247, %v11458
  %11483 = vst.msk [vmem:[%s17 + $0xa0] sm:$0xff] %vm247, %v11459
  %11484 = vst.msk [vmem:[%s17 + $0xa8] sm:$0xff] %vm247, %v11460
  %11485 = vst.msk [vmem:[%s17 + $0xb0] sm:$0xff] %vm247, %v11461
  %11486 = vst.msk [vmem:[%s17 + $0xb8] sm:$0xff] %vm247, %v11462
  // Predicated region
  $region70: #{vit_forward.1} parent=0 // pred_check
    _
  $region71: #{vit_forward.1} parent=0 // pred_check_branch
    %11488 = sbr.rel (0) target = $region73
  $region72: #{vit_forward.1} parent=0 // pred_region
    _
  $region73: #{vit_forward.1} parent=0 // pred_fallthru
    _
  // Predicated region
  $region74: #{vit_forward.1} parent=0 // pred_check
    _
  $region75: #{vit_forward.1} parent=0 // pred_check_branch
    %11490 = sbr.rel (0) target = $region77
  $region76: #{vit_forward.1} parent=0 // pred_region
    _
  $region77: #{vit_forward.1} parent=0 // pred_fallthru
    _

</llo_original>
